<compile_context>
chip_gen: v5e
topology: v5e:2x2
jax: 0.10.0
libtpu: 0.0.40
codegen_flags: <defaults>
</compile_context>

<pallas_src>
import jax
import jax.numpy as jnp
from jax.experimental import pallas as pl
from jax.experimental.pallas import tpu as pltpu

SIZE = 20            # conv1 in-channels (module default `size`)
NUM_CLASSES = 5
L_IN = 342           # sequence length implied by fc = Linear(64 * (342 // 4), num_classes)
C1, C2 = 32, 64
P1 = L_IN // 2       # 171 after first maxpool(2,2)
P2 = P1 // 2         # 85 after second maxpool(2,2) (floor mode, conv2 row 170 dropped)
NEG_SLOPE = 0.01     # F.leaky_relu default

J = 88               # 8-aligned quarter length: ceil(342/4)=86 -> 88
K1 = 3 * SIZE        # 60: tap-concatenated conv1 contraction dim
BT_MAX = 32          # max batch tile folded into the matmul M dimension

MATMUL_DTYPE = jnp.float32   # flip to jnp.bfloat16 after re-validation (see TODO above)


def _choose_bt(batch):
    # Multiple of 8, <= BT_MAX, and >= 2 grid steps once batch >= 16 (both v7x TensorCores busy).
    return int(min(BT_MAX, max(8, 8 * (batch // 16))))


def _kernel(x_ref, w1_ref, b1_ref, w2_ref, b2_ref, wfc_ref, bfc_ref, out_ref, lhs_ref):
    bt = x_ref.shape[0]

    def leaky(v):
        return jnp.where(v > 0, v, NEG_SLOPE * v)

    # ---- conv1: all 4 length phases and the batch tile folded into one matmul ----
    lhs1 = x_ref[...].reshape(bt * 4 * J, K1)                          # (BT*4*88, 60)
    h = jnp.dot(lhs1, w1_ref[...], preferred_element_type=jnp.float32)
    h = leaky(h + b1_ref[...]).reshape(bt, 4, J, C1)                   # (BT, 4, 88, 32)

    # ---- maxpool1(2,2): pooled1[2j]=max(h[4j],h[4j+1]); pooled1[2j+1]=max(h[4j+2],h[4j+3]) ----
    poolE = jnp.maximum(h[:, 0], h[:, 1])                              # (BT, J, C1) even rows
    poolO = jnp.maximum(h[:, 2], h[:, 3])                              # (BT, J, C1) odd rows

    # ---- conv2 LHS = [pe | poolE | poolO | po1] on lanes 0..127 (4 lane-offset stores) ----
    #   pe[i]  = pooled1[2i-1] = poolO[i-1]  (zero at i=0)    : conv2 even-row left tap
    #   po1[i] = pooled1[2i+2] = poolE[i+1]  (zero at i=J-1)  : conv2 odd-row right tap
    dt = lhs_ref.dtype
    zrow = jnp.zeros((bt, 1, C1), dt)
    lhs_ref[:, 0:1, 0:C1] = zrow
    lhs_ref[:, 1:J, 0:C1] = poolO[:, 0:J - 1, :].astype(dt)
    lhs_ref[:, :, C1:2 * C1] = poolE.astype(dt)
    lhs_ref[:, :, 2 * C1:3 * C1] = poolO.astype(dt)
    lhs_ref[:, 0:J - 1, 3 * C1:4 * C1] = poolE[:, 1:J, :].astype(dt)
    lhs_ref[:, J - 1:J, 3 * C1:4 * C1] = zrow

    # ---- conv2 (both output parities) as one lane-dense (BT*J,128)@(128,128) matmul ----
    lhs2 = lhs_ref[...].reshape(bt * J, 4 * C1)
    c2out = jnp.dot(lhs2, w2_ref[...], preferred_element_type=jnp.float32)
    c2out = leaky(c2out + b2_ref[...])                                 # (BT*J, 128) = [even|odd]

    # ---- maxpool2 (floor mode, conv2 row 170 dropped): max of the two 64-lane halves ----
    pooled2 = jnp.maximum(c2out[:, 0:C2], c2out[:, C2:2 * C2]).reshape(bt, J, C2)
    # rows >= 85 are junk; the matching (zero-padded) wfc rows contribute nothing.

    # ---- fc + relu: one streaming pass per class, one dense (BT, 5) store ----
    lane = jax.lax.broadcasted_iota(jnp.int32, (bt, NUM_CLASSES), 1)
    logits = jnp.zeros((bt, NUM_CLASSES), jnp.float32)
    for n in range(NUM_CLASSES):
        t = jnp.sum(pooled2 * wfc_ref[n], axis=1)                      # (BT, C2)
        s = jnp.sum(t, axis=1, keepdims=True)                          # (BT, 1)
        logits = logits + jnp.where(lane == n, s, 0.0)
    out_ref[...] = jnp.maximum(logits + bfc_ref[...], 0.0)


def _prep_inputs(x):
    # x: (B, SIZE, L_IN) NCL -> batch-major phase-split im2col (B, 4, J, 60)
    B = x.shape[0]
    x_lc = jnp.transpose(x, (0, 2, 1)).astype(jnp.float32)             # (B, 342, 20)
    total = 4 * J + 2                                                  # 354 padded rows
    x_zp = jnp.pad(x_lc, ((0, 0), (1, total - L_IN - 1), (0, 0)))      # (B, 354, 20)
    # im2col for k=3: row l holds taps (l, l+1, l+2) of x_zp -> conv1 output row l
    x_unf = jnp.concatenate([x_zp[:, d:d + 4 * J, :] for d in range(3)], axis=-1)  # (B, 352, 60)
    # split length into (phase p, j): row 4j+p -> x_q[b, p, j, :]  (batch-major, contiguous slab)
    x_q = x_unf.reshape(B, J, 4, K1).transpose(0, 2, 1, 3)             # (B, 4, J, 60)
    return x_q.astype(MATMUL_DTYPE)


def prepare_params(params):
    # Hoisted out of the per-call path: transposed / padded weights are computed once.
    w1 = jnp.asarray(params["w1"], jnp.float32)                        # (C1, SIZE, 3)
    w2 = jnp.asarray(params["w2"], jnp.float32)                        # (C2, C1, 3)
    wfc = jnp.asarray(params["wfc"], jnp.float32)                      # (N, C2*P2)

    w1cat = jnp.transpose(w1, (2, 1, 0)).reshape(K1, C1)               # row d*SIZE + c
    w2t = jnp.transpose(w2, (2, 1, 0))                                 # (3, C1, C2): tap matrices

    # Block-structured conv2 RHS: even-output cols 0..63 use K rows 0..95 (taps pe,poolE,poolO),
    # odd-output cols 64..127 use K rows 32..127 (taps poolE,poolO,po1); zeros elsewhere.
    w2big = jnp.zeros((4 * C1, 2 * C2), jnp.float32)
    w2big = w2big.at[0 * C1:1 * C1, 0:C2].set(w2t[0])
    w2big = w2big.at[1 * C1:2 * C1, 0:C2].set(w2t[1])
    w2big = w2big.at[2 * C1:3 * C1, 0:C2].set(w2t[2])
    w2big = w2big.at[1 * C1:2 * C1, C2:2 * C2].set(w2t[0])
    w2big = w2big.at[2 * C1:3 * C1, C2:2 * C2].set(w2t[1])
    w2big = w2big.at[3 * C1:4 * C1, C2:2 * C2].set(w2t[2])

    b1 = jnp.asarray(params["b1"], jnp.float32).reshape(1, C1)
    b2 = jnp.asarray(params["b2"], jnp.float32).reshape(1, C2)
    b2big = jnp.concatenate([b2, b2], axis=1)                          # (1, 128): even | odd bias

    # torch flatten is channel-major: flat[c*P2 + l] -> wfc_k[n, l, c]; pad l: 85 -> J with zeros
    wfc_k = jnp.transpose(wfc.reshape(NUM_CLASSES, C2, P2), (0, 2, 1))
    wfc_k = jnp.pad(wfc_k, ((0, 0), (0, J - P2), (0, 0)))              # (N, J, C2)
    bfc = jnp.asarray(params["bfc"], jnp.float32).reshape(1, NUM_CLASSES)

    return {
        "w1": w1cat.astype(MATMUL_DTYPE),
        "b1": b1,
        "w2": w2big.astype(MATMUL_DTYPE),
        "b2": b2big,
        "wfc": wfc_k,
        "bfc": bfc,
    }


@jax.jit
def abundance_disentangler(x, prepped):
    # x: (B, SIZE, 342) -- PyTorch NCL layout
    B = x.shape[0]
    bt = _choose_bt(B)
    Bp = ((B + bt - 1) // bt) * bt

    x_q = _prep_inputs(x)
    if Bp != B:
        x_q = jnp.pad(x_q, ((0, Bp - B), (0, 0), (0, 0), (0, 0)))

    grid_spec = pltpu.PrefetchScalarGridSpec(
        num_scalar_prefetch=0,
        grid=(Bp // bt,),
        in_specs=[
            pl.BlockSpec((bt, 4, J, K1), lambda g: (g, 0, 0, 0)),      # contiguous batch slab
            pl.BlockSpec((K1, C1), lambda g: (0, 0)),
            pl.BlockSpec((1, C1), lambda g: (0, 0)),
            pl.BlockSpec((4 * C1, 2 * C2), lambda g: (0, 0)),
            pl.BlockSpec((1, 2 * C2), lambda g: (0, 0)),
            pl.BlockSpec((NUM_CLASSES, J, C2), lambda g: (0, 0, 0)),
            pl.BlockSpec((1, NUM_CLASSES), lambda g: (0, 0)),
        ],
        out_specs=pl.BlockSpec((bt, NUM_CLASSES), lambda g: (g, 0)),
        scratch_shapes=[
            pltpu.VMEM((bt, J, 4 * C1), MATMUL_DTYPE),   # fused conv2 LHS [pe|poolE|poolO|po1]
        ],
    )
    out = pl.pallas_call(
        _kernel,
        out_shape=jax.ShapeDtypeStruct((Bp, NUM_CLASSES), jnp.float32),
        grid_spec=grid_spec,
        compiler_params=pltpu.CompilerParams(
            dimension_semantics=("parallel",),
            vmem_limit_bytes=48 * 1024 * 1024,   # headroom for BT=32 (v5e default is 16 MiB)
        ),
    )(x_q, prepped["w1"], prepped["b1"], prepped["w2"], prepped["b2"],
      prepped["wfc"], prepped["bfc"])
    return out[:B]


def init_params(key, size=SIZE, num_classes=NUM_CLASSES):
    ks = jax.random.split(key, 6)

    def u(k, shape, fan_in):
        bound = 1.0 / float(fan_in) ** 0.5
        return jax.random.uniform(k, shape, jnp.float32, -bound, bound)

    return {
        "w1": u(ks[0], (C1, size, 3), size * 3),           # Conv1d(size, 32, 3)
        "b1": u(ks[1], (C1,), size * 3),
        "w2": u(ks[2], (C2, C1, 3), C1 * 3),               # Conv1d(32, 64, 3)
        "b2": u(ks[3], (C2,), C1 * 3),
        "wfc": u(ks[4], (num_classes, C2 * P2), C2 * P2),  # Linear(64*85, num_classes)
        "bfc": u(ks[5], (num_classes,), C2 * P2),
    }


def reference(x, p):
    # pure-JAX reference matching the PyTorch forward
    def conv1d(h, w, b):
        L = h.shape[2]
        hp = jnp.pad(h, ((0, 0), (0, 0), (1, 1)))
        out = sum(jnp.einsum("bcl,oc->bol", hp[:, :, j:j + L], w[:, :, j]) for j in range(3))
        return out + b[None, :, None]

    h = conv1d(x, p["w1"], p["b1"])
    h = jnp.where(h > 0, h, NEG_SLOPE * h)
    h = jnp.max(h.reshape(h.shape[0], h.shape[1], h.shape[2] // 2, 2), axis=-1)
    h = conv1d(h, p["w2"], p["b2"])
    h = jnp.where(h > 0, h, NEG_SLOPE * h)
    Lp = (h.shape[2] // 2) * 2
    h = jnp.max(h[:, :, :Lp].reshape(h.shape[0], h.shape[1], Lp // 2, 2), axis=-1)
    flat = h.reshape(h.shape[0], -1)
    return jnp.maximum(flat @ p["wfc"].T + p["bfc"][None, :], 0.0)


if __name__ == "__main__":
    key = jax.random.PRNGKey(0)
    kx, kx2, kp = jax.random.split(key, 3)
    params = init_params(kp)
    prepped = prepare_params(params)

    # B=2, channels=20 (module default `size`), seq=342 (required by the fc layer)
    x = jax.random.normal(kx, (2, SIZE, L_IN), dtype=jnp.float32)
    out = abundance_disentangler(x, prepped)
    jax.block_until_ready(out)
    ref = reference(x, params)
    assert out.shape == (2, NUM_CLASSES)
    if not bool(jnp.allclose(out, ref, atol=2e-3, rtol=2e-3)):
        raise AssertionError(f"mismatch (B=2): max abs err {float(jnp.max(jnp.abs(out - ref)))}")

    # second check: exercises multi-step grid + batch padding (B=20 -> BT=8, 3 grid steps)
    x2 = jax.random.normal(kx2, (20, SIZE, L_IN), dtype=jnp.float32)
    out2 = abundance_disentangler(x2, prepped)
    jax.block_until_ready(out2)
    ref2 = reference(x2, params)
    if not bool(jnp.allclose(out2, ref2, atol=2e-3, rtol=2e-3)):
        raise AssertionError(f"mismatch (B=20): max abs err {float(jnp.max(jnp.abs(out2 - ref2)))}")

    print("KERNEL_OK")
</pallas_src>

<mosaic_0001>
module attributes {stable_mosaic.version = 11 : i64} {
  func.func @_kernel(%arg0: i32, %arg1: memref<8x4x88x60xf32, #tpu.memory_space<vmem>>, %arg2: memref<60x32xf32, #tpu.memory_space<vmem>>, %arg3: memref<1x32xf32, #tpu.memory_space<vmem>>, %arg4: memref<128x128xf32, #tpu.memory_space<vmem>>, %arg5: memref<1x128xf32, #tpu.memory_space<vmem>>, %arg6: memref<5x88x64xf32, #tpu.memory_space<vmem>>, %arg7: memref<1x5xf32, #tpu.memory_space<vmem>>, %arg8: memref<8x5xf32, #tpu.memory_space<vmem>>, %arg9: memref<8x88x128xf32, #tpu.memory_space<vmem>>) attributes {dimension_semantics = [#tpu.dimension_semantics<parallel>], iteration_bounds = array<i64: 1>, scalar_prefetch = 0 : i64, scratch_operands = 1 : i64, tpu.core_type = #tpu.core_type<tc>, window_params = [{transform_indices = @transform_0, window_bounds = array<i64: 8, 4, 88, 60>}, {pipeline_mode = #tpu.pipeline_mode<synchronous>, transform_indices = @transform_1, window_bounds = array<i64: 60, 32>}, {pipeline_mode = #tpu.pipeline_mode<synchronous>, transform_indices = @transform_2, window_bounds = array<i64: 1, 32>}, {pipeline_mode = #tpu.pipeline_mode<synchronous>, transform_indices = @transform_3, window_bounds = array<i64: 128, 128>}, {pipeline_mode = #tpu.pipeline_mode<synchronous>, transform_indices = @transform_4, window_bounds = array<i64: 1, 128>}, {pipeline_mode = #tpu.pipeline_mode<synchronous>, transform_indices = @transform_5, window_bounds = array<i64: 5, 88, 64>}, {pipeline_mode = #tpu.pipeline_mode<synchronous>, transform_indices = @transform_6, window_bounds = array<i64: 1, 5>}, {transform_indices = @transform_7, window_bounds = array<i64: 8, 5>}]} {
    %c0 = arith.constant 0 : index
    %c0_0 = arith.constant 0 : index
    %c0_1 = arith.constant 0 : index
    %c0_2 = arith.constant 0 : index
    %0 = vector.load %arg1[%c0, %c0_0, %c0_1, %c0_2] : memref<8x4x88x60xf32, #tpu.memory_space<vmem>>, vector<8x4x88x60xf32>
    %1 = vector.shape_cast %0 : vector<8x4x88x60xf32> to vector<2816x60xf32>
    %c0_3 = arith.constant 0 : index
    %c0_4 = arith.constant 0 : index
    %2 = vector.load %arg2[%c0_3, %c0_4] : memref<60x32xf32, #tpu.memory_space<vmem>>, vector<60x32xf32>
    %cst = arith.constant dense<0.000000e+00> : vector<2816x32xf32>
    %3 = tpu.matmul %1, %2, %cst {dimension_numbers = #tpu.dot_dimension_numbers<[1], [0], [0], [1], [0, 0, 1, 1], [], []>} : vector<2816x60xf32>, vector<60x32xf32>, vector<2816x32xf32> -> vector<2816x32xf32>
    %c0_5 = arith.constant 0 : index
    %c0_6 = arith.constant 0 : index
    %4 = vector.load %arg3[%c0_5, %c0_6] : memref<1x32xf32, #tpu.memory_space<vmem>>, vector<1x32xf32>
    %5 = vector.broadcast %4 : vector<1x32xf32> to vector<2816x32xf32>
    %6 = arith.addf %3, %5 : vector<2816x32xf32>
    %cst_7 = arith.constant 0.000000e+00 : f32
    %7 = vector.broadcast %cst_7 : f32 to vector<2816x32xf32>
    %8 = arith.cmpf ogt, %6, %7 : vector<2816x32xf32>
    %cst_8 = arith.constant 0.00999999977 : f32
    %9 = vector.broadcast %cst_8 : f32 to vector<2816x32xf32>
    %10 = arith.mulf %9, %6 : vector<2816x32xf32>
    %11 = arith.select %8, %6, %10 : vector<2816x32xi1>, vector<2816x32xf32>
    %12 = vector.shape_cast %11 : vector<2816x32xf32> to vector<8x4x88x32xf32>
    %13 = vector.extract_strided_slice %12 {offsets = [0, 0, 0, 0], sizes = [8, 1, 88, 32], strides = [1, 1, 1, 1]} : vector<8x4x88x32xf32> to vector<8x1x88x32xf32>
    %14 = vector.shape_cast %13 : vector<8x1x88x32xf32> to vector<8x88x32xf32>
    %15 = vector.extract_strided_slice %12 {offsets = [0, 1, 0, 0], sizes = [8, 1, 88, 32], strides = [1, 1, 1, 1]} : vector<8x4x88x32xf32> to vector<8x1x88x32xf32>
    %16 = vector.shape_cast %15 : vector<8x1x88x32xf32> to vector<8x88x32xf32>
    %17 = arith.maximumf %14, %16 : vector<8x88x32xf32>
    %18 = vector.extract_strided_slice %12 {offsets = [0, 2, 0, 0], sizes = [8, 1, 88, 32], strides = [1, 1, 1, 1]} : vector<8x4x88x32xf32> to vector<8x1x88x32xf32>
    %19 = vector.shape_cast %18 : vector<8x1x88x32xf32> to vector<8x88x32xf32>
    %20 = vector.extract_strided_slice %12 {offsets = [0, 3, 0, 0], sizes = [8, 1, 88, 32], strides = [1, 1, 1, 1]} : vector<8x4x88x32xf32> to vector<8x1x88x32xf32>
    %21 = vector.shape_cast %20 : vector<8x1x88x32xf32> to vector<8x88x32xf32>
    %22 = arith.maximumf %19, %21 : vector<8x88x32xf32>
    %cst_9 = arith.constant 0.000000e+00 : f32
    %23 = vector.broadcast %cst_9 : f32 to vector<8x1x32xf32>
    %c0_10 = arith.constant 0 : index
    %c0_11 = arith.constant 0 : index
    %c0_12 = arith.constant 0 : index
    %24 = vector.load %arg9[%c0_10, %c0_11, %c0_12] : memref<8x88x128xf32, #tpu.memory_space<vmem>>, vector<8x1x32xf32>
    tpu.vector_store %arg9[%c0_10, %c0_11, %c0_12], %23 {strides = array<i32>} : memref<8x88x128xf32, #tpu.memory_space<vmem>>, vector<8x1x32xf32>,
    %25 = vector.extract_strided_slice %22 {offsets = [0, 0, 0], sizes = [8, 87, 32], strides = [1, 1, 1]} : vector<8x88x32xf32> to vector<8x87x32xf32>
    %c0_13 = arith.constant 0 : index
    %c1 = arith.constant 1 : index
    %c0_14 = arith.constant 0 : index
    %26 = vector.load %arg9[%c0_13, %c1, %c0_14] : memref<8x88x128xf32, #tpu.memory_space<vmem>>, vector<8x87x32xf32>
    tpu.vector_store %arg9[%c0_13, %c1, %c0_14], %25 {strides = array<i32>} : memref<8x88x128xf32, #tpu.memory_space<vmem>>, vector<8x87x32xf32>,
    %c0_15 = arith.constant 0 : index
    %c0_16 = arith.constant 0 : index
    %c32 = arith.constant 32 : index
    %27 = vector.load %arg9[%c0_15, %c0_16, %c32] : memref<8x88x128xf32, #tpu.memory_space<vmem>>, vector<8x88x32xf32>
    tpu.vector_store %arg9[%c0_15, %c0_16, %c32], %17 {strides = array<i32>} : memref<8x88x128xf32, #tpu.memory_space<vmem>>, vector<8x88x32xf32>,
    %c0_17 = arith.constant 0 : index
    %c0_18 = arith.constant 0 : index
    %c64 = arith.constant 64 : index
    %28 = vector.load %arg9[%c0_17, %c0_18, %c64] : memref<8x88x128xf32, #tpu.memory_space<vmem>>, vector<8x88x32xf32>
    tpu.vector_store %arg9[%c0_17, %c0_18, %c64], %22 {strides = array<i32>} : memref<8x88x128xf32, #tpu.memory_space<vmem>>, vector<8x88x32xf32>,
    %29 = vector.extract_strided_slice %17 {offsets = [0, 1, 0], sizes = [8, 87, 32], strides = [1, 1, 1]} : vector<8x88x32xf32> to vector<8x87x32xf32>
    %c0_19 = arith.constant 0 : index
    %c0_20 = arith.constant 0 : index
    %c96 = arith.constant 96 : index
    %30 = vector.load %arg9[%c0_19, %c0_20, %c96] : memref<8x88x128xf32, #tpu.memory_space<vmem>>, vector<8x87x32xf32>
    tpu.vector_store %arg9[%c0_19, %c0_20, %c96], %29 {strides = array<i32>} : memref<8x88x128xf32, #tpu.memory_space<vmem>>, vector<8x87x32xf32>,
    %c0_21 = arith.constant 0 : index
    %c87 = arith.constant 87 : index
    %c96_22 = arith.constant 96 : index
    %31 = vector.load %arg9[%c0_21, %c87, %c96_22] : memref<8x88x128xf32, #tpu.memory_space<vmem>>, vector<8x1x32xf32>
    tpu.vector_store %arg9[%c0_21, %c87, %c96_22], %23 {strides = array<i32>} : memref<8x88x128xf32, #tpu.memory_space<vmem>>, vector<8x1x32xf32>,
    %c0_23 = arith.constant 0 : index
    %c0_24 = arith.constant 0 : index
    %c0_25 = arith.constant 0 : index
    %32 = vector.load %arg9[%c0_23, %c0_24, %c0_25] : memref<8x88x128xf32, #tpu.memory_space<vmem>>, vector<8x88x128xf32>
    %33 = vector.shape_cast %32 : vector<8x88x128xf32> to vector<704x128xf32>
    %c0_26 = arith.constant 0 : index
    %c0_27 = arith.constant 0 : index
    %34 = vector.load %arg4[%c0_26, %c0_27] : memref<128x128xf32, #tpu.memory_space<vmem>>, vector<128x128xf32>
    %cst_28 = arith.constant dense<0.000000e+00> : vector<704x128xf32>
    %35 = tpu.matmul %33, %34, %cst_28 {dimension_numbers = #tpu.dot_dimension_numbers<[1], [0], [0], [1], [0, 0, 1, 1], [], []>} : vector<704x128xf32>, vector<128x128xf32>, vector<704x128xf32> -> vector<704x128xf32>
    %c0_29 = arith.constant 0 : index
    %c0_30 = arith.constant 0 : index
    %36 = vector.load %arg5[%c0_29, %c0_30] : memref<1x128xf32, #tpu.memory_space<vmem>>, vector<1x128xf32>
    %37 = vector.broadcast %36 : vector<1x128xf32> to vector<704x128xf32>
    %38 = arith.addf %35, %37 : vector<704x128xf32>
    %cst_31 = arith.constant 0.000000e+00 : f32
    %39 = vector.broadcast %cst_31 : f32 to vector<704x128xf32>
    %40 = arith.cmpf ogt, %38, %39 : vector<704x128xf32>
    %cst_32 = arith.constant 0.00999999977 : f32
    %41 = vector.broadcast %cst_32 : f32 to vector<704x128xf32>
    %42 = arith.mulf %41, %38 : vector<704x128xf32>
    %43 = arith.select %40, %38, %42 : vector<704x128xi1>, vector<704x128xf32>
    %44 = vector.extract_strided_slice %43 {offsets = [0, 0], sizes = [704, 64], strides = [1, 1]} : vector<704x128xf32> to vector<704x64xf32>
    %45 = vector.extract_strided_slice %43 {offsets = [0, 64], sizes = [704, 64], strides = [1, 1]} : vector<704x128xf32> to vector<704x64xf32>
    %46 = arith.maximumf %44, %45 : vector<704x64xf32>
    %47 = vector.shape_cast %46 : vector<704x64xf32> to vector<8x88x64xf32>
    %48 = tpu.iota {dimensions = array<i32: 1>} : vector<8x5xi32>
    %cst_33 = arith.constant 0.000000e+00 : f32
    %49 = vector.broadcast %cst_33 : f32 to vector<8x5xf32>
    %c0_34 = arith.constant 0 : index
    %c0_35 = arith.constant 0 : index
    %c0_36 = arith.constant 0 : index
    %50 = vector.load %arg6[%c0_34, %c0_35, %c0_36] : memref<5x88x64xf32, #tpu.memory_space<vmem>>, vector<1x88x64xf32>
    %51 = vector.shape_cast %50 : vector<1x88x64xf32> to vector<88x64xf32>
    %52 = vector.shape_cast %51 : vector<88x64xf32> to vector<1x88x64xf32>
    %53 = vector.broadcast %52 : vector<1x88x64xf32> to vector<8x88x64xf32>
    %54 = arith.mulf %47, %53 : vector<8x88x64xf32>
    %cst_37 = arith.constant dense<0.000000e+00> : vector<8x64xf32>
    %55 = vector.multi_reduction <add>, %54, %cst_37 [1] : vector<8x88x64xf32> to vector<8x64xf32>
    %cst_38 = arith.constant dense<0.000000e+00> : vector<8xf32>
    %56 = vector.multi_reduction <add>, %55, %cst_38 [1] : vector<8x64xf32> to vector<8xf32>
    %57 = vector.shape_cast %56 : vector<8xf32> to vector<8x1xf32>
    %c0_i32 = arith.constant 0 : i32
    %58 = vector.broadcast %c0_i32 : i32 to vector<8x5xi32>
    %59 = arith.cmpi eq, %48, %58 : vector<8x5xi32>
    %cst_39 = arith.constant 0.000000e+00 : f32
    %60 = vector.shape_cast %57 : vector<8x1xf32> to vector<8x1xf32>
    %61 = vector.broadcast %60 : vector<8x1xf32> to vector<8x5xf32>
    %62 = vector.broadcast %cst_39 : f32 to vector<8x5xf32>
    %63 = arith.select %59, %61, %62 : vector<8x5xi1>, vector<8x5xf32>
    %64 = arith.addf %49, %63 : vector<8x5xf32>
    %c1_40 = arith.constant 1 : index
    %c0_41 = arith.constant 0 : index
    %c0_42 = arith.constant 0 : index
    %65 = vector.load %arg6[%c1_40, %c0_41, %c0_42] : memref<5x88x64xf32, #tpu.memory_space<vmem>>, vector<1x88x64xf32>
    %66 = vector.shape_cast %65 : vector<1x88x64xf32> to vector<88x64xf32>
    %67 = vector.shape_cast %66 : vector<88x64xf32> to vector<1x88x64xf32>
    %68 = vector.broadcast %67 : vector<1x88x64xf32> to vector<8x88x64xf32>
    %69 = arith.mulf %47, %68 : vector<8x88x64xf32>
    %cst_43 = arith.constant dense<0.000000e+00> : vector<8x64xf32>
    %70 = vector.multi_reduction <add>, %69, %cst_43 [1] : vector<8x88x64xf32> to vector<8x64xf32>
    %cst_44 = arith.constant dense<0.000000e+00> : vector<8xf32>
    %71 = vector.multi_reduction <add>, %70, %cst_44 [1] : vector<8x64xf32> to vector<8xf32>
    %72 = vector.shape_cast %71 : vector<8xf32> to vector<8x1xf32>
    %c1_i32 = arith.constant 1 : i32
    %73 = vector.broadcast %c1_i32 : i32 to vector<8x5xi32>
    %74 = arith.cmpi eq, %48, %73 : vector<8x5xi32>
    %cst_45 = arith.constant 0.000000e+00 : f32
    %75 = vector.shape_cast %72 : vector<8x1xf32> to vector<8x1xf32>
    %76 = vector.broadcast %75 : vector<8x1xf32> to vector<8x5xf32>
    %77 = vector.broadcast %cst_45 : f32 to vector<8x5xf32>
    %78 = arith.select %74, %76, %77 : vector<8x5xi1>, vector<8x5xf32>
    %79 = arith.addf %64, %78 : vector<8x5xf32>
    %c2 = arith.constant 2 : index
    %c0_46 = arith.constant 0 : index
    %c0_47 = arith.constant 0 : index
    %80 = vector.load %arg6[%c2, %c0_46, %c0_47] : memref<5x88x64xf32, #tpu.memory_space<vmem>>, vector<1x88x64xf32>
    %81 = vector.shape_cast %80 : vector<1x88x64xf32> to vector<88x64xf32>
    %82 = vector.shape_cast %81 : vector<88x64xf32> to vector<1x88x64xf32>
    %83 = vector.broadcast %82 : vector<1x88x64xf32> to vector<8x88x64xf32>
    %84 = arith.mulf %47, %83 : vector<8x88x64xf32>
    %cst_48 = arith.constant dense<0.000000e+00> : vector<8x64xf32>
    %85 = vector.multi_reduction <add>, %84, %cst_48 [1] : vector<8x88x64xf32> to vector<8x64xf32>
    %cst_49 = arith.constant dense<0.000000e+00> : vector<8xf32>
    %86 = vector.multi_reduction <add>, %85, %cst_49 [1] : vector<8x64xf32> to vector<8xf32>
    %87 = vector.shape_cast %86 : vector<8xf32> to vector<8x1xf32>
    %c2_i32 = arith.constant 2 : i32
    %88 = vector.broadcast %c2_i32 : i32 to vector<8x5xi32>
    %89 = arith.cmpi eq, %48, %88 : vector<8x5xi32>
    %cst_50 = arith.constant 0.000000e+00 : f32
    %90 = vector.shape_cast %87 : vector<8x1xf32> to vector<8x1xf32>
    %91 = vector.broadcast %90 : vector<8x1xf32> to vector<8x5xf32>
    %92 = vector.broadcast %cst_50 : f32 to vector<8x5xf32>
    %93 = arith.select %89, %91, %92 : vector<8x5xi1>, vector<8x5xf32>
    %94 = arith.addf %79, %93 : vector<8x5xf32>
    %c3 = arith.constant 3 : index
    %c0_51 = arith.constant 0 : index
    %c0_52 = arith.constant 0 : index
    %95 = vector.load %arg6[%c3, %c0_51, %c0_52] : memref<5x88x64xf32, #tpu.memory_space<vmem>>, vector<1x88x64xf32>
    %96 = vector.shape_cast %95 : vector<1x88x64xf32> to vector<88x64xf32>
    %97 = vector.shape_cast %96 : vector<88x64xf32> to vector<1x88x64xf32>
    %98 = vector.broadcast %97 : vector<1x88x64xf32> to vector<8x88x64xf32>
    %99 = arith.mulf %47, %98 : vector<8x88x64xf32>
    %cst_53 = arith.constant dense<0.000000e+00> : vector<8x64xf32>
    %100 = vector.multi_reduction <add>, %99, %cst_53 [1] : vector<8x88x64xf32> to vector<8x64xf32>
    %cst_54 = arith.constant dense<0.000000e+00> : vector<8xf32>
    %101 = vector.multi_reduction <add>, %100, %cst_54 [1] : vector<8x64xf32> to vector<8xf32>
    %102 = vector.shape_cast %101 : vector<8xf32> to vector<8x1xf32>
    %c3_i32 = arith.constant 3 : i32
    %103 = vector.broadcast %c3_i32 : i32 to vector<8x5xi32>
    %104 = arith.cmpi eq, %48, %103 : vector<8x5xi32>
    %cst_55 = arith.constant 0.000000e+00 : f32
    %105 = vector.shape_cast %102 : vector<8x1xf32> to vector<8x1xf32>
    %106 = vector.broadcast %105 : vector<8x1xf32> to vector<8x5xf32>
    %107 = vector.broadcast %cst_55 : f32 to vector<8x5xf32>
    %108 = arith.select %104, %106, %107 : vector<8x5xi1>, vector<8x5xf32>
    %109 = arith.addf %94, %108 : vector<8x5xf32>
    %c4 = arith.constant 4 : index
    %c0_56 = arith.constant 0 : index
    %c0_57 = arith.constant 0 : index
    %110 = vector.load %arg6[%c4, %c0_56, %c0_57] : memref<5x88x64xf32, #tpu.memory_space<vmem>>, vector<1x88x64xf32>
    %111 = vector.shape_cast %110 : vector<1x88x64xf32> to vector<88x64xf32>
    %112 = vector.shape_cast %111 : vector<88x64xf32> to vector<1x88x64xf32>
    %113 = vector.broadcast %112 : vector<1x88x64xf32> to vector<8x88x64xf32>
    %114 = arith.mulf %47, %113 : vector<8x88x64xf32>
    %cst_58 = arith.constant dense<0.000000e+00> : vector<8x64xf32>
    %115 = vector.multi_reduction <add>, %114, %cst_58 [1] : vector<8x88x64xf32> to vector<8x64xf32>
    %cst_59 = arith.constant dense<0.000000e+00> : vector<8xf32>
    %116 = vector.multi_reduction <add>, %115, %cst_59 [1] : vector<8x64xf32> to vector<8xf32>
    %117 = vector.shape_cast %116 : vector<8xf32> to vector<8x1xf32>
    %c4_i32 = arith.constant 4 : i32
    %118 = vector.broadcast %c4_i32 : i32 to vector<8x5xi32>
    %119 = arith.cmpi eq, %48, %118 : vector<8x5xi32>
    %cst_60 = arith.constant 0.000000e+00 : f32
    %120 = vector.shape_cast %117 : vector<8x1xf32> to vector<8x1xf32>
    %121 = vector.broadcast %120 : vector<8x1xf32> to vector<8x5xf32>
    %122 = vector.broadcast %cst_60 : f32 to vector<8x5xf32>
    %123 = arith.select %119, %121, %122 : vector<8x5xi1>, vector<8x5xf32>
    %124 = arith.addf %109, %123 : vector<8x5xf32>
    %c0_61 = arith.constant 0 : index
    %c0_62 = arith.constant 0 : index
    %125 = vector.load %arg7[%c0_61, %c0_62] : memref<1x5xf32, #tpu.memory_space<vmem>>, vector<1x5xf32>
    %126 = vector.broadcast %125 : vector<1x5xf32> to vector<8x5xf32>
    %127 = arith.addf %124, %126 : vector<8x5xf32>
    %cst_63 = arith.constant 0.000000e+00 : f32
    %128 = vector.broadcast %cst_63 : f32 to vector<8x5xf32>
    %129 = arith.maximumf %127, %128 : vector<8x5xf32>
    %c0_64 = arith.constant 0 : index
    %c0_65 = arith.constant 0 : index
    %130 = vector.load %arg8[%c0_64, %c0_65] : memref<8x5xf32, #tpu.memory_space<vmem>>, vector<8x5xf32>
    tpu.vector_store %arg8[%c0_64, %c0_65], %129 {strides = array<i32>} : memref<8x5xf32, #tpu.memory_space<vmem>>, vector<8x5xf32>,
    return
  }
  func.func @transform_0(%arg0: i32) -> (i32, i32, i32, i32) {
    %c0_i32 = arith.constant 0 : i32
    %c0_i32_0 = arith.constant 0 : i32
    %c0_i32_1 = arith.constant 0 : i32
    %c0_i32_2 = arith.constant 0 : i32
    return %arg0, %c0_i32, %c0_i32_0, %c0_i32_1 : i32, i32, i32, i32
  }
  func.func @transform_1(%arg0: i32) -> (i32, i32) {
    %c0_i32 = arith.constant 0 : i32
    %c0_i32_0 = arith.constant 0 : i32
    %c0_i32_1 = arith.constant 0 : i32
    return %c0_i32, %c0_i32_0 : i32, i32
  }
  func.func @transform_2(%arg0: i32) -> (i32, i32) {
    %c0_i32 = arith.constant 0 : i32
    %c0_i32_0 = arith.constant 0 : i32
    %c0_i32_1 = arith.constant 0 : i32
    return %c0_i32, %c0_i32_0 : i32, i32
  }
  func.func @transform_3(%arg0: i32) -> (i32, i32) {
    %c0_i32 = arith.constant 0 : i32
    %c0_i32_0 = arith.constant 0 : i32
    %c0_i32_1 = arith.constant 0 : i32
    return %c0_i32, %c0_i32_0 : i32, i32
  }
  func.func @transform_4(%arg0: i32) -> (i32, i32) {
    %c0_i32 = arith.constant 0 : i32
    %c0_i32_0 = arith.constant 0 : i32
    %c0_i32_1 = arith.constant 0 : i32
    return %c0_i32, %c0_i32_0 : i32, i32
  }
  func.func @transform_5(%arg0: i32) -> (i32, i32, i32) {
    %c0_i32 = arith.constant 0 : i32
    %c0_i32_0 = arith.constant 0 : i32
    %c0_i32_1 = arith.constant 0 : i32
    %c0_i32_2 = arith.constant 0 : i32
    return %c0_i32, %c0_i32_0, %c0_i32_1 : i32, i32, i32
  }
  func.func @transform_6(%arg0: i32) -> (i32, i32) {
    %c0_i32 = arith.constant 0 : i32
    %c0_i32_0 = arith.constant 0 : i32
    %c0_i32_1 = arith.constant 0 : i32
    return %c0_i32, %c0_i32_0 : i32, i32
  }
  func.func @transform_7(%arg0: i32) -> (i32, i32) {
    %c0_i32 = arith.constant 0 : i32
    %c0_i32_0 = arith.constant 0 : i32
    return %arg0, %c0_i32 : i32, i32
  }
}

</mosaic_0001>

<llo_original>
// kernel: abundance_disentangler.1
$region0: #{abundance_disentangler.1}
  #allocation0 [shape = 'u32[]', space=smem, size = 0x4, offset = 0x4, fixed_abs, tag = 'smem constant byte address 0x4 - core index']
  #allocation1 [shape = 'u32[72,128]{1,0:T(1,128)}', space=vmem, size = 0x9000, scoped, tag = 'internal scratch']
  #allocation2 [shape = 'f32[8,88,128]{2,1,0:T(8,128)}', space=vmem, size = 0x58000, scoped, tag = 'scratch operand']
  %s0 = inlined_call_operand.vmem [shape: f32[8,4,88,60], index: 0, kind: input, shape index: {}]
  %s1 = inlined_call_operand.vmem [shape: f32[60,32], index: 1, kind: input, shape index: {}]
  %s2 = inlined_call_operand.vmem [shape: f32[1,32], index: 2, kind: input, shape index: {}]
  %s3 = inlined_call_operand.vmem [shape: f32[128,128], index: 3, kind: input, shape index: {}]
  %s4 = inlined_call_operand.vmem [shape: f32[1,128], index: 4, kind: input, shape index: {}]
  %s5 = inlined_call_operand.vmem [shape: f32[5,88,64], index: 5, kind: input, shape index: {}]
  %s6 = inlined_call_operand.vmem [shape: f32[1,5], index: 6, kind: input, shape index: {}]
  %s7 = inlined_call_operand.vmem [shape: f32[8,5], index: 7, kind: output, shape index: {}]
  %s8 = sld [smem:[#allocation0]]
  $region38: #{abundance_disentangler.1} parent=0
    _
  %s10 = ssub.s32 1, %s8
  %s11 = scalar_select 0, %s10, %s8
  // Predicated region
  $region2: #{abundance_disentangler.1} parent=0 // pred_check
    _
  $region3: #{abundance_disentangler.1} parent=0 // pred_check_branch
    %13 = sbr.rel (0) target = $region5
  $region4: #{abundance_disentangler.1} parent=0 // pred_region
    _
  $region5: #{abundance_disentangler.1} parent=0 // pred_fallthru
    _
  // Predicated region
  $region6: #{abundance_disentangler.1} parent=0 // pred_check
    _
  $region7: #{abundance_disentangler.1} parent=0 // pred_check_branch
    %15 = sbr.rel (0) target = $region9
  $region8: #{abundance_disentangler.1} parent=0 // pred_region
    _
  $region9: #{abundance_disentangler.1} parent=0 // pred_fallthru
    _
  // Predicated region
  $region10: #{abundance_disentangler.1} parent=0 // pred_check
    _
  $region11: #{abundance_disentangler.1} parent=0 // pred_check_branch
    %17 = sbr.rel (0) target = $region13
  $region12: #{abundance_disentangler.1} parent=0 // pred_region
    _
  $region13: #{abundance_disentangler.1} parent=0 // pred_fallthru
    _
  // Predicated region
  $region14: #{abundance_disentangler.1} parent=0 // pred_check
    _
  $region15: #{abundance_disentangler.1} parent=0 // pred_check_branch
    %19 = sbr.rel (0) target = $region17
  $region16: #{abundance_disentangler.1} parent=0 // pred_region
    _
  $region17: #{abundance_disentangler.1} parent=0 // pred_fallthru
    _
  // Predicated region
  $region18: #{abundance_disentangler.1} parent=0 // pred_check
    _
  $region19: #{abundance_disentangler.1} parent=0 // pred_check_branch
    %21 = sbr.rel (0) target = $region21
  $region20: #{abundance_disentangler.1} parent=0 // pred_region
    _
  $region21: #{abundance_disentangler.1} parent=0 // pred_fallthru
    _
  // Predicated region
  $region22: #{abundance_disentangler.1} parent=0 // pred_check
    _
  $region23: #{abundance_disentangler.1} parent=0 // pred_check_branch
    %23 = sbr.rel (0) target = $region25
  $region24: #{abundance_disentangler.1} parent=0 // pred_region
    _
  $region25: #{abundance_disentangler.1} parent=0 // pred_fallthru
    _
  // Predicated region
  $region26: #{abundance_disentangler.1} parent=0 // pred_check
    _
  $region27: #{abundance_disentangler.1} parent=0 // pred_check_branch
    %25 = sbr.rel (0) target = $region29
  $region28: #{abundance_disentangler.1} parent=0 // pred_region
    _
  $region29: #{abundance_disentangler.1} parent=0 // pred_fallthru
    _
  %v26 = vld [vmem:[%s0] sm:$0xff]
  %v27 = vld [vmem:[%s0 + $0x8] sm:$0xff]
  %v28 = vld [vmem:[%s0 + $0x10] sm:$0xff]
  %v29 = vld [vmem:[%s0 + $0x18] sm:$0xff]
  %v30 = vld [vmem:[%s0 + $0x20] sm:$0xff]
  %v31 = vld [vmem:[%s0 + $0x28] sm:$0xff]
  %v32 = vld [vmem:[%s0 + $0x30] sm:$0xff]
  %v33 = vld [vmem:[%s0 + $0x38] sm:$0xff]
  %v34 = vld [vmem:[%s0 + $0x40] sm:$0xff]
  %v35 = vld [vmem:[%s0 + $0x48] sm:$0xff]
  %v36 = vld [vmem:[%s0 + $0x50] sm:$0xff]
  %v37 = vld [vmem:[%s0 + $0x58] sm:$0xff]
  %v38 = vld [vmem:[%s0 + $0x60] sm:$0xff]
  %v39 = vld [vmem:[%s0 + $0x68] sm:$0xff]
  %v40 = vld [vmem:[%s0 + $0x70] sm:$0xff]
  %v41 = vld [vmem:[%s0 + $0x78] sm:$0xff]
  %v42 = vld [vmem:[%s0 + $0x80] sm:$0xff]
  %v43 = vld [vmem:[%s0 + $0x88] sm:$0xff]
  %v44 = vld [vmem:[%s0 + $0x90] sm:$0xff]
  %v45 = vld [vmem:[%s0 + $0x98] sm:$0xff]
  %v46 = vld [vmem:[%s0 + $0xa0] sm:$0xff]
  %v47 = vld [vmem:[%s0 + $0xa8] sm:$0xff]
  %v48 = vld [vmem:[%s0 + $0xb0] sm:$0xff]
  %v49 = vld [vmem:[%s0 + $0xb8] sm:$0xff]
  %v50 = vld [vmem:[%s0 + $0xc0] sm:$0xff]
  %v51 = vld [vmem:[%s0 + $0xc8] sm:$0xff]
  %v52 = vld [vmem:[%s0 + $0xd0] sm:$0xff]
  %v53 = vld [vmem:[%s0 + $0xd8] sm:$0xff]
  %v54 = vld [vmem:[%s0 + $0xe0] sm:$0xff]
  %v55 = vld [vmem:[%s0 + $0xe8] sm:$0xff]
  %v56 = vld [vmem:[%s0 + $0xf0] sm:$0xff]
  %v57 = vld [vmem:[%s0 + $0xf8] sm:$0xff]
  %v58 = vld [vmem:[%s0 + $0x100] sm:$0xff]
  %v59 = vld [vmem:[%s0 + $0x108] sm:$0xff]
  %v60 = vld [vmem:[%s0 + $0x110] sm:$0xff]
  %v61 = vld [vmem:[%s0 + $0x118] sm:$0xff]
  %v62 = vld [vmem:[%s0 + $0x120] sm:$0xff]
  %v63 = vld [vmem:[%s0 + $0x128] sm:$0xff]
  %v64 = vld [vmem:[%s0 + $0x130] sm:$0xff]
  %v65 = vld [vmem:[%s0 + $0x138] sm:$0xff]
  %v66 = vld [vmem:[%s0 + $0x140] sm:$0xff]
  %v67 = vld [vmem:[%s0 + $0x148] sm:$0xff]
  %v68 = vld [vmem:[%s0 + $0x150] sm:$0xff]
  %v69 = vld [vmem:[%s0 + $0x158] sm:$0xff]
  %v70 = vld [vmem:[%s0 + $0x160] sm:$0xff]
  %v71 = vld [vmem:[%s0 + $0x168] sm:$0xff]
  %v72 = vld [vmem:[%s0 + $0x170] sm:$0xff]
  %v73 = vld [vmem:[%s0 + $0x178] sm:$0xff]
  %v74 = vld [vmem:[%s0 + $0x180] sm:$0xff]
  %v75 = vld [vmem:[%s0 + $0x188] sm:$0xff]
  %v76 = vld [vmem:[%s0 + $0x190] sm:$0xff]
  %v77 = vld [vmem:[%s0 + $0x198] sm:$0xff]
  %v78 = vld [vmem:[%s0 + $0x1a0] sm:$0xff]
  %v79 = vld [vmem:[%s0 + $0x1a8] sm:$0xff]
  %v80 = vld [vmem:[%s0 + $0x1b0] sm:$0xff]
  %v81 = vld [vmem:[%s0 + $0x1b8] sm:$0xff]
  %v82 = vld [vmem:[%s0 + $0x1c0] sm:$0xff]
  %v83 = vld [vmem:[%s0 + $0x1c8] sm:$0xff]
  %v84 = vld [vmem:[%s0 + $0x1d0] sm:$0xff]
  %v85 = vld [vmem:[%s0 + $0x1d8] sm:$0xff]
  %v86 = vld [vmem:[%s0 + $0x1e0] sm:$0xff]
  %v87 = vld [vmem:[%s0 + $0x1e8] sm:$0xff]
  %v88 = vld [vmem:[%s0 + $0x1f0] sm:$0xff]
  %v89 = vld [vmem:[%s0 + $0x1f8] sm:$0xff]
  %v90 = vld [vmem:[%s0 + $0x200] sm:$0xff]
  %v91 = vld [vmem:[%s0 + $0x208] sm:$0xff]
  %v92 = vld [vmem:[%s0 + $0x210] sm:$0xff]
  %v93 = vld [vmem:[%s0 + $0x218] sm:$0xff]
  %v94 = vld [vmem:[%s0 + $0x220] sm:$0xff]
  %v95 = vld [vmem:[%s0 + $0x228] sm:$0xff]
  %v96 = vld [vmem:[%s0 + $0x230] sm:$0xff]
  %v97 = vld [vmem:[%s0 + $0x238] sm:$0xff]
  %v98 = vld [vmem:[%s0 + $0x240] sm:$0xff]
  %v99 = vld [vmem:[%s0 + $0x248] sm:$0xff]
  %v100 = vld [vmem:[%s0 + $0x250] sm:$0xff]
  %v101 = vld [vmem:[%s0 + $0x258] sm:$0xff]
  %v102 = vld [vmem:[%s0 + $0x260] sm:$0xff]
  %v103 = vld [vmem:[%s0 + $0x268] sm:$0xff]
  %v104 = vld [vmem:[%s0 + $0x270] sm:$0xff]
  %v105 = vld [vmem:[%s0 + $0x278] sm:$0xff]
  %v106 = vld [vmem:[%s0 + $0x280] sm:$0xff]
  %v107 = vld [vmem:[%s0 + $0x288] sm:$0xff]
  %v108 = vld [vmem:[%s0 + $0x290] sm:$0xff]
  %v109 = vld [vmem:[%s0 + $0x298] sm:$0xff]
  %v110 = vld [vmem:[%s0 + $0x2a0] sm:$0xff]
  %v111 = vld [vmem:[%s0 + $0x2a8] sm:$0xff]
  %v112 = vld [vmem:[%s0 + $0x2b0] sm:$0xff]
  %v113 = vld [vmem:[%s0 + $0x2b8] sm:$0xff]
  %v114 = vld [vmem:[%s0 + $0x2c0] sm:$0xff]
  %v115 = vld [vmem:[%s0 + $0x2c8] sm:$0xff]
  %v116 = vld [vmem:[%s0 + $0x2d0] sm:$0xff]
  %v117 = vld [vmem:[%s0 + $0x2d8] sm:$0xff]
  %v118 = vld [vmem:[%s0 + $0x2e0] sm:$0xff]
  %v119 = vld [vmem:[%s0 + $0x2e8] sm:$0xff]
  %v120 = vld [vmem:[%s0 + $0x2f0] sm:$0xff]
  %v121 = vld [vmem:[%s0 + $0x2f8] sm:$0xff]
  %v122 = vld [vmem:[%s0 + $0x300] sm:$0xff]
  %v123 = vld [vmem:[%s0 + $0x308] sm:$0xff]
  %v124 = vld [vmem:[%s0 + $0x310] sm:$0xff]
  %v125 = vld [vmem:[%s0 + $0x318] sm:$0xff]
  %v126 = vld [vmem:[%s0 + $0x320] sm:$0xff]
  %v127 = vld [vmem:[%s0 + $0x328] sm:$0xff]
  %v128 = vld [vmem:[%s0 + $0x330] sm:$0xff]
  %v129 = vld [vmem:[%s0 + $0x338] sm:$0xff]
  %v130 = vld [vmem:[%s0 + $0x340] sm:$0xff]
  %v131 = vld [vmem:[%s0 + $0x348] sm:$0xff]
  %v132 = vld [vmem:[%s0 + $0x350] sm:$0xff]
  %v133 = vld [vmem:[%s0 + $0x358] sm:$0xff]
  %v134 = vld [vmem:[%s0 + $0x360] sm:$0xff]
  %v135 = vld [vmem:[%s0 + $0x368] sm:$0xff]
  %v136 = vld [vmem:[%s0 + $0x370] sm:$0xff]
  %v137 = vld [vmem:[%s0 + $0x378] sm:$0xff]
  %v138 = vld [vmem:[%s0 + $0x380] sm:$0xff]
  %v139 = vld [vmem:[%s0 + $0x388] sm:$0xff]
  %v140 = vld [vmem:[%s0 + $0x390] sm:$0xff]
  %v141 = vld [vmem:[%s0 + $0x398] sm:$0xff]
  %v142 = vld [vmem:[%s0 + $0x3a0] sm:$0xff]
  %v143 = vld [vmem:[%s0 + $0x3a8] sm:$0xff]
  %v144 = vld [vmem:[%s0 + $0x3b0] sm:$0xff]
  %v145 = vld [vmem:[%s0 + $0x3b8] sm:$0xff]
  %v146 = vld [vmem:[%s0 + $0x3c0] sm:$0xff]
  %v147 = vld [vmem:[%s0 + $0x3c8] sm:$0xff]
  %v148 = vld [vmem:[%s0 + $0x3d0] sm:$0xff]
  %v149 = vld [vmem:[%s0 + $0x3d8] sm:$0xff]
  %v150 = vld [vmem:[%s0 + $0x3e0] sm:$0xff]
  %v151 = vld [vmem:[%s0 + $0x3e8] sm:$0xff]
  %v152 = vld [vmem:[%s0 + $0x3f0] sm:$0xff]
  %v153 = vld [vmem:[%s0 + $0x3f8] sm:$0xff]
  %v154 = vld [vmem:[%s0 + $0x400] sm:$0xff]
  %v155 = vld [vmem:[%s0 + $0x408] sm:$0xff]
  %v156 = vld [vmem:[%s0 + $0x410] sm:$0xff]
  %v157 = vld [vmem:[%s0 + $0x418] sm:$0xff]
  %v158 = vld [vmem:[%s0 + $0x420] sm:$0xff]
  %v159 = vld [vmem:[%s0 + $0x428] sm:$0xff]
  %v160 = vld [vmem:[%s0 + $0x430] sm:$0xff]
  %v161 = vld [vmem:[%s0 + $0x438] sm:$0xff]
  %v162 = vld [vmem:[%s0 + $0x440] sm:$0xff]
  %v163 = vld [vmem:[%s0 + $0x448] sm:$0xff]
  %v164 = vld [vmem:[%s0 + $0x450] sm:$0xff]
  %v165 = vld [vmem:[%s0 + $0x458] sm:$0xff]
  %v166 = vld [vmem:[%s0 + $0x460] sm:$0xff]
  %v167 = vld [vmem:[%s0 + $0x468] sm:$0xff]
  %v168 = vld [vmem:[%s0 + $0x470] sm:$0xff]
  %v169 = vld [vmem:[%s0 + $0x478] sm:$0xff]
  %v170 = vld [vmem:[%s0 + $0x480] sm:$0xff]
  %v171 = vld [vmem:[%s0 + $0x488] sm:$0xff]
  %v172 = vld [vmem:[%s0 + $0x490] sm:$0xff]
  %v173 = vld [vmem:[%s0 + $0x498] sm:$0xff]
  %v174 = vld [vmem:[%s0 + $0x4a0] sm:$0xff]
  %v175 = vld [vmem:[%s0 + $0x4a8] sm:$0xff]
  %v176 = vld [vmem:[%s0 + $0x4b0] sm:$0xff]
  %v177 = vld [vmem:[%s0 + $0x4b8] sm:$0xff]
  %v178 = vld [vmem:[%s0 + $0x4c0] sm:$0xff]
  %v179 = vld [vmem:[%s0 + $0x4c8] sm:$0xff]
  %v180 = vld [vmem:[%s0 + $0x4d0] sm:$0xff]
  %v181 = vld [vmem:[%s0 + $0x4d8] sm:$0xff]
  %v182 = vld [vmem:[%s0 + $0x4e0] sm:$0xff]
  %v183 = vld [vmem:[%s0 + $0x4e8] sm:$0xff]
  %v184 = vld [vmem:[%s0 + $0x4f0] sm:$0xff]
  %v185 = vld [vmem:[%s0 + $0x4f8] sm:$0xff]
  %v186 = vld [vmem:[%s0 + $0x500] sm:$0xff]
  %v187 = vld [vmem:[%s0 + $0x508] sm:$0xff]
  %v188 = vld [vmem:[%s0 + $0x510] sm:$0xff]
  %v189 = vld [vmem:[%s0 + $0x518] sm:$0xff]
  %v190 = vld [vmem:[%s0 + $0x520] sm:$0xff]
  %v191 = vld [vmem:[%s0 + $0x528] sm:$0xff]
  %v192 = vld [vmem:[%s0 + $0x530] sm:$0xff]
  %v193 = vld [vmem:[%s0 + $0x538] sm:$0xff]
  %v194 = vld [vmem:[%s0 + $0x540] sm:$0xff]
  %v195 = vld [vmem:[%s0 + $0x548] sm:$0xff]
  %v196 = vld [vmem:[%s0 + $0x550] sm:$0xff]
  %v197 = vld [vmem:[%s0 + $0x558] sm:$0xff]
  %v198 = vld [vmem:[%s0 + $0x560] sm:$0xff]
  %v199 = vld [vmem:[%s0 + $0x568] sm:$0xff]
  %v200 = vld [vmem:[%s0 + $0x570] sm:$0xff]
  %v201 = vld [vmem:[%s0 + $0x578] sm:$0xff]
  %v202 = vld [vmem:[%s0 + $0x580] sm:$0xff]
  %v203 = vld [vmem:[%s0 + $0x588] sm:$0xff]
  %v204 = vld [vmem:[%s0 + $0x590] sm:$0xff]
  %v205 = vld [vmem:[%s0 + $0x598] sm:$0xff]
  %v206 = vld [vmem:[%s0 + $0x5a0] sm:$0xff]
  %v207 = vld [vmem:[%s0 + $0x5a8] sm:$0xff]
  %v208 = vld [vmem:[%s0 + $0x5b0] sm:$0xff]
  %v209 = vld [vmem:[%s0 + $0x5b8] sm:$0xff]
  %v210 = vld [vmem:[%s0 + $0x5c0] sm:$0xff]
  %v211 = vld [vmem:[%s0 + $0x5c8] sm:$0xff]
  %v212 = vld [vmem:[%s0 + $0x5d0] sm:$0xff]
  %v213 = vld [vmem:[%s0 + $0x5d8] sm:$0xff]
  %v214 = vld [vmem:[%s0 + $0x5e0] sm:$0xff]
  %v215 = vld [vmem:[%s0 + $0x5e8] sm:$0xff]
  %v216 = vld [vmem:[%s0 + $0x5f0] sm:$0xff]
  %v217 = vld [vmem:[%s0 + $0x5f8] sm:$0xff]
  %v218 = vld [vmem:[%s0 + $0x600] sm:$0xff]
  %v219 = vld [vmem:[%s0 + $0x608] sm:$0xff]
  %v220 = vld [vmem:[%s0 + $0x610] sm:$0xff]
  %v221 = vld [vmem:[%s0 + $0x618] sm:$0xff]
  %v222 = vld [vmem:[%s0 + $0x620] sm:$0xff]
  %v223 = vld [vmem:[%s0 + $0x628] sm:$0xff]
  %v224 = vld [vmem:[%s0 + $0x630] sm:$0xff]
  %v225 = vld [vmem:[%s0 + $0x638] sm:$0xff]
  %v226 = vld [vmem:[%s0 + $0x640] sm:$0xff]
  %v227 = vld [vmem:[%s0 + $0x648] sm:$0xff]
  %v228 = vld [vmem:[%s0 + $0x650] sm:$0xff]
  %v229 = vld [vmem:[%s0 + $0x658] sm:$0xff]
  %v230 = vld [vmem:[%s0 + $0x660] sm:$0xff]
  %v231 = vld [vmem:[%s0 + $0x668] sm:$0xff]
  %v232 = vld [vmem:[%s0 + $0x670] sm:$0xff]
  %v233 = vld [vmem:[%s0 + $0x678] sm:$0xff]
  %v234 = vld [vmem:[%s0 + $0x680] sm:$0xff]
  %v235 = vld [vmem:[%s0 + $0x688] sm:$0xff]
  %v236 = vld [vmem:[%s0 + $0x690] sm:$0xff]
  %v237 = vld [vmem:[%s0 + $0x698] sm:$0xff]
  %v238 = vld [vmem:[%s0 + $0x6a0] sm:$0xff]
  %v239 = vld [vmem:[%s0 + $0x6a8] sm:$0xff]
  %v240 = vld [vmem:[%s0 + $0x6b0] sm:$0xff]
  %v241 = vld [vmem:[%s0 + $0x6b8] sm:$0xff]
  %v242 = vld [vmem:[%s0 + $0x6c0] sm:$0xff]
  %v243 = vld [vmem:[%s0 + $0x6c8] sm:$0xff]
  %v244 = vld [vmem:[%s0 + $0x6d0] sm:$0xff]
  %v245 = vld [vmem:[%s0 + $0x6d8] sm:$0xff]
  %v246 = vld [vmem:[%s0 + $0x6e0] sm:$0xff]
  %v247 = vld [vmem:[%s0 + $0x6e8] sm:$0xff]
  %v248 = vld [vmem:[%s0 + $0x6f0] sm:$0xff]
  %v249 = vld [vmem:[%s0 + $0x6f8] sm:$0xff]
  %v250 = vld [vmem:[%s0 + $0x700] sm:$0xff]
  %v251 = vld [vmem:[%s0 + $0x708] sm:$0xff]
  %v252 = vld [vmem:[%s0 + $0x710] sm:$0xff]
  %v253 = vld [vmem:[%s0 + $0x718] sm:$0xff]
  %v254 = vld [vmem:[%s0 + $0x720] sm:$0xff]
  %v255 = vld [vmem:[%s0 + $0x728] sm:$0xff]
  %v256 = vld [vmem:[%s0 + $0x730] sm:$0xff]
  %v257 = vld [vmem:[%s0 + $0x738] sm:$0xff]
  %v258 = vld [vmem:[%s0 + $0x740] sm:$0xff]
  %v259 = vld [vmem:[%s0 + $0x748] sm:$0xff]
  %v260 = vld [vmem:[%s0 + $0x750] sm:$0xff]
  %v261 = vld [vmem:[%s0 + $0x758] sm:$0xff]
  %v262 = vld [vmem:[%s0 + $0x760] sm:$0xff]
  %v263 = vld [vmem:[%s0 + $0x768] sm:$0xff]
  %v264 = vld [vmem:[%s0 + $0x770] sm:$0xff]
  %v265 = vld [vmem:[%s0 + $0x778] sm:$0xff]
  %v266 = vld [vmem:[%s0 + $0x780] sm:$0xff]
  %v267 = vld [vmem:[%s0 + $0x788] sm:$0xff]
  %v268 = vld [vmem:[%s0 + $0x790] sm:$0xff]
  %v269 = vld [vmem:[%s0 + $0x798] sm:$0xff]
  %v270 = vld [vmem:[%s0 + $0x7a0] sm:$0xff]
  %v271 = vld [vmem:[%s0 + $0x7a8] sm:$0xff]
  %v272 = vld [vmem:[%s0 + $0x7b0] sm:$0xff]
  %v273 = vld [vmem:[%s0 + $0x7b8] sm:$0xff]
  %v274 = vld [vmem:[%s0 + $0x7c0] sm:$0xff]
  %v275 = vld [vmem:[%s0 + $0x7c8] sm:$0xff]
  %v276 = vld [vmem:[%s0 + $0x7d0] sm:$0xff]
  %v277 = vld [vmem:[%s0 + $0x7d8] sm:$0xff]
  %v278 = vld [vmem:[%s0 + $0x7e0] sm:$0xff]
  %v279 = vld [vmem:[%s0 + $0x7e8] sm:$0xff]
  %v280 = vld [vmem:[%s0 + $0x7f0] sm:$0xff]
  %v281 = vld [vmem:[%s0 + $0x7f8] sm:$0xff]
  %v282 = vld [vmem:[%s0 + $0x800] sm:$0xff]
  %v283 = vld [vmem:[%s0 + $0x808] sm:$0xff]
  %v284 = vld [vmem:[%s0 + $0x810] sm:$0xff]
  %v285 = vld [vmem:[%s0 + $0x818] sm:$0xff]
  %v286 = vld [vmem:[%s0 + $0x820] sm:$0xff]
  %v287 = vld [vmem:[%s0 + $0x828] sm:$0xff]
  %v288 = vld [vmem:[%s0 + $0x830] sm:$0xff]
  %v289 = vld [vmem:[%s0 + $0x838] sm:$0xff]
  %v290 = vld [vmem:[%s0 + $0x840] sm:$0xff]
  %v291 = vld [vmem:[%s0 + $0x848] sm:$0xff]
  %v292 = vld [vmem:[%s0 + $0x850] sm:$0xff]
  %v293 = vld [vmem:[%s0 + $0x858] sm:$0xff]
  %v294 = vld [vmem:[%s0 + $0x860] sm:$0xff]
  %v295 = vld [vmem:[%s0 + $0x868] sm:$0xff]
  %v296 = vld [vmem:[%s0 + $0x870] sm:$0xff]
  %v297 = vld [vmem:[%s0 + $0x878] sm:$0xff]
  %v298 = vld [vmem:[%s0 + $0x880] sm:$0xff]
  %v299 = vld [vmem:[%s0 + $0x888] sm:$0xff]
  %v300 = vld [vmem:[%s0 + $0x890] sm:$0xff]
  %v301 = vld [vmem:[%s0 + $0x898] sm:$0xff]
  %v302 = vld [vmem:[%s0 + $0x8a0] sm:$0xff]
  %v303 = vld [vmem:[%s0 + $0x8a8] sm:$0xff]
  %v304 = vld [vmem:[%s0 + $0x8b0] sm:$0xff]
  %v305 = vld [vmem:[%s0 + $0x8b8] sm:$0xff]
  %v306 = vld [vmem:[%s0 + $0x8c0] sm:$0xff]
  %v307 = vld [vmem:[%s0 + $0x8c8] sm:$0xff]
  %v308 = vld [vmem:[%s0 + $0x8d0] sm:$0xff]
  %v309 = vld [vmem:[%s0 + $0x8d8] sm:$0xff]
  %v310 = vld [vmem:[%s0 + $0x8e0] sm:$0xff]
  %v311 = vld [vmem:[%s0 + $0x8e8] sm:$0xff]
  %v312 = vld [vmem:[%s0 + $0x8f0] sm:$0xff]
  %v313 = vld [vmem:[%s0 + $0x8f8] sm:$0xff]
  %v314 = vld [vmem:[%s0 + $0x900] sm:$0xff]
  %v315 = vld [vmem:[%s0 + $0x908] sm:$0xff]
  %v316 = vld [vmem:[%s0 + $0x910] sm:$0xff]
  %v317 = vld [vmem:[%s0 + $0x918] sm:$0xff]
  %v318 = vld [vmem:[%s0 + $0x920] sm:$0xff]
  %v319 = vld [vmem:[%s0 + $0x928] sm:$0xff]
  %v320 = vld [vmem:[%s0 + $0x930] sm:$0xff]
  %v321 = vld [vmem:[%s0 + $0x938] sm:$0xff]
  %v322 = vld [vmem:[%s0 + $0x940] sm:$0xff]
  %v323 = vld [vmem:[%s0 + $0x948] sm:$0xff]
  %v324 = vld [vmem:[%s0 + $0x950] sm:$0xff]
  %v325 = vld [vmem:[%s0 + $0x958] sm:$0xff]
  %v326 = vld [vmem:[%s0 + $0x960] sm:$0xff]
  %v327 = vld [vmem:[%s0 + $0x968] sm:$0xff]
  %v328 = vld [vmem:[%s0 + $0x970] sm:$0xff]
  %v329 = vld [vmem:[%s0 + $0x978] sm:$0xff]
  %v330 = vld [vmem:[%s0 + $0x980] sm:$0xff]
  %v331 = vld [vmem:[%s0 + $0x988] sm:$0xff]
  %v332 = vld [vmem:[%s0 + $0x990] sm:$0xff]
  %v333 = vld [vmem:[%s0 + $0x998] sm:$0xff]
  %v334 = vld [vmem:[%s0 + $0x9a0] sm:$0xff]
  %v335 = vld [vmem:[%s0 + $0x9a8] sm:$0xff]
  %v336 = vld [vmem:[%s0 + $0x9b0] sm:$0xff]
  %v337 = vld [vmem:[%s0 + $0x9b8] sm:$0xff]
  %v338 = vld [vmem:[%s0 + $0x9c0] sm:$0xff]
  %v339 = vld [vmem:[%s0 + $0x9c8] sm:$0xff]
  %v340 = vld [vmem:[%s0 + $0x9d0] sm:$0xff]
  %v341 = vld [vmem:[%s0 + $0x9d8] sm:$0xff]
  %v342 = vld [vmem:[%s0 + $0x9e0] sm:$0xff]
  %v343 = vld [vmem:[%s0 + $0x9e8] sm:$0xff]
  %v344 = vld [vmem:[%s0 + $0x9f0] sm:$0xff]
  %v345 = vld [vmem:[%s0 + $0x9f8] sm:$0xff]
  %v346 = vld [vmem:[%s0 + $0xa00] sm:$0xff]
  %v347 = vld [vmem:[%s0 + $0xa08] sm:$0xff]
  %v348 = vld [vmem:[%s0 + $0xa10] sm:$0xff]
  %v349 = vld [vmem:[%s0 + $0xa18] sm:$0xff]
  %v350 = vld [vmem:[%s0 + $0xa20] sm:$0xff]
  %v351 = vld [vmem:[%s0 + $0xa28] sm:$0xff]
  %v352 = vld [vmem:[%s0 + $0xa30] sm:$0xff]
  %v353 = vld [vmem:[%s0 + $0xa38] sm:$0xff]
  %v354 = vld [vmem:[%s0 + $0xa40] sm:$0xff]
  %v355 = vld [vmem:[%s0 + $0xa48] sm:$0xff]
  %v356 = vld [vmem:[%s0 + $0xa50] sm:$0xff]
  %v357 = vld [vmem:[%s0 + $0xa58] sm:$0xff]
  %v358 = vld [vmem:[%s0 + $0xa60] sm:$0xff]
  %v359 = vld [vmem:[%s0 + $0xa68] sm:$0xff]
  %v360 = vld [vmem:[%s0 + $0xa70] sm:$0xff]
  %v361 = vld [vmem:[%s0 + $0xa78] sm:$0xff]
  %v362 = vld [vmem:[%s0 + $0xa80] sm:$0xff]
  %v363 = vld [vmem:[%s0 + $0xa88] sm:$0xff]
  %v364 = vld [vmem:[%s0 + $0xa90] sm:$0xff]
  %v365 = vld [vmem:[%s0 + $0xa98] sm:$0xff]
  %v366 = vld [vmem:[%s0 + $0xaa0] sm:$0xff]
  %v367 = vld [vmem:[%s0 + $0xaa8] sm:$0xff]
  %v368 = vld [vmem:[%s0 + $0xab0] sm:$0xff]
  %v369 = vld [vmem:[%s0 + $0xab8] sm:$0xff]
  %v370 = vld [vmem:[%s0 + $0xac0] sm:$0xff]
  %v371 = vld [vmem:[%s0 + $0xac8] sm:$0xff]
  %v372 = vld [vmem:[%s0 + $0xad0] sm:$0xff]
  %v373 = vld [vmem:[%s0 + $0xad8] sm:$0xff]
  %v374 = vld [vmem:[%s0 + $0xae0] sm:$0xff]
  %v375 = vld [vmem:[%s0 + $0xae8] sm:$0xff]
  %v376 = vld [vmem:[%s0 + $0xaf0] sm:$0xff]
  %v377 = vld [vmem:[%s0 + $0xaf8] sm:$0xff]
  %v378 = vld [vmem:[%s1] sm:$0xff]
  %v379 = vld [vmem:[%s1 + $0x8] sm:$0xff]
  %v380 = vld [vmem:[%s1 + $0x10] sm:$0xff]
  %v381 = vld [vmem:[%s1 + $0x18] sm:$0xff]
  %v382 = vld [vmem:[%s1 + $0x20] sm:$0xff]
  %v383 = vld [vmem:[%s1 + $0x28] sm:$0xff]
  %v384 = vld [vmem:[%s1 + $0x30] sm:$0xff]
  %v385 = vld [vmem:[%s1 + $0x38] sm:$0xf]
  %v386 = vld [vmem:[%s2] sm:$0x1]
  %v388 = vperm.slane %v386, 0
  %vm390 = vcmask 490496
  %v392 = vsel %vm390, %v26, 0
  %v395 = vsel %vm390, %v27, 0
  %v398 = vsel %vm390, %v28, 0
  %v401 = vsel %vm390, %v29, 0
  %v404 = vsel %vm390, %v30, 0
  %v407 = vsel %vm390, %v31, 0
  %v410 = vsel %vm390, %v32, 0
  %v413 = vsel %vm390, %v33, 0
  %v416 = vsel %vm390, %v34, 0
  %v419 = vsel %vm390, %v35, 0
  %v422 = vsel %vm390, %v36, 0
  %v425 = vsel %vm390, %v37, 0
  %v428 = vsel %vm390, %v38, 0
  %v431 = vsel %vm390, %v39, 0
  %v434 = vsel %vm390, %v40, 0
  %v437 = vsel %vm390, %v41, 0
  %v440 = vsel %vm390, %v42, 0
  %v443 = vsel %vm390, %v43, 0
  %v446 = vsel %vm390, %v44, 0
  %v449 = vsel %vm390, %v45, 0
  %v452 = vsel %vm390, %v46, 0
  %v455 = vsel %vm390, %v47, 0
  %v458 = vsel %vm390, %v48, 0
  %v461 = vsel %vm390, %v49, 0
  %v464 = vsel %vm390, %v50, 0
  %v467 = vsel %vm390, %v51, 0
  %v470 = vsel %vm390, %v52, 0
  %v473 = vsel %vm390, %v53, 0
  %v476 = vsel %vm390, %v54, 0
  %v479 = vsel %vm390, %v55, 0
  %v482 = vsel %vm390, %v56, 0
  %v485 = vsel %vm390, %v57, 0
  %v488 = vsel %vm390, %v58, 0
  %v491 = vsel %vm390, %v59, 0
  %v494 = vsel %vm390, %v60, 0
  %v497 = vsel %vm390, %v61, 0
  %v500 = vsel %vm390, %v62, 0
  %v503 = vsel %vm390, %v63, 0
  %v506 = vsel %vm390, %v64, 0
  %v509 = vsel %vm390, %v65, 0
  %v512 = vsel %vm390, %v66, 0
  %v515 = vsel %vm390, %v67, 0
  %v518 = vsel %vm390, %v68, 0
  %v521 = vsel %vm390, %v69, 0
  %v524 = vsel %vm390, %v70, 0
  %v527 = vsel %vm390, %v71, 0
  %v530 = vsel %vm390, %v72, 0
  %v533 = vsel %vm390, %v73, 0
  %v536 = vsel %vm390, %v74, 0
  %v539 = vsel %vm390, %v75, 0
  %v542 = vsel %vm390, %v76, 0
  %v545 = vsel %vm390, %v77, 0
  %v548 = vsel %vm390, %v78, 0
  %v551 = vsel %vm390, %v79, 0
  %v554 = vsel %vm390, %v80, 0
  %v557 = vsel %vm390, %v81, 0
  %v560 = vsel %vm390, %v82, 0
  %v563 = vsel %vm390, %v83, 0
  %v566 = vsel %vm390, %v84, 0
  %v569 = vsel %vm390, %v85, 0
  %v572 = vsel %vm390, %v86, 0
  %v575 = vsel %vm390, %v87, 0
  %v578 = vsel %vm390, %v88, 0
  %v581 = vsel %vm390, %v89, 0
  %v584 = vsel %vm390, %v90, 0
  %v587 = vsel %vm390, %v91, 0
  %v590 = vsel %vm390, %v92, 0
  %v593 = vsel %vm390, %v93, 0
  %v596 = vsel %vm390, %v94, 0
  %v599 = vsel %vm390, %v95, 0
  %v602 = vsel %vm390, %v96, 0
  %v605 = vsel %vm390, %v97, 0
  %v608 = vsel %vm390, %v98, 0
  %v611 = vsel %vm390, %v99, 0
  %v614 = vsel %vm390, %v100, 0
  %v617 = vsel %vm390, %v101, 0
  %v620 = vsel %vm390, %v102, 0
  %v623 = vsel %vm390, %v103, 0
  %v626 = vsel %vm390, %v104, 0
  %v629 = vsel %vm390, %v105, 0
  %v632 = vsel %vm390, %v106, 0
  %v635 = vsel %vm390, %v107, 0
  %v638 = vsel %vm390, %v108, 0
  %v641 = vsel %vm390, %v109, 0
  %v644 = vsel %vm390, %v110, 0
  %v647 = vsel %vm390, %v111, 0
  %v650 = vsel %vm390, %v112, 0
  %v653 = vsel %vm390, %v113, 0
  %v656 = vsel %vm390, %v114, 0
  %v659 = vsel %vm390, %v115, 0
  %v662 = vsel %vm390, %v116, 0
  %v665 = vsel %vm390, %v117, 0
  %v668 = vsel %vm390, %v118, 0
  %v671 = vsel %vm390, %v119, 0
  %v674 = vsel %vm390, %v120, 0
  %v677 = vsel %vm390, %v121, 0
  %v680 = vsel %vm390, %v122, 0
  %v683 = vsel %vm390, %v123, 0
  %v686 = vsel %vm390, %v124, 0
  %v689 = vsel %vm390, %v125, 0
  %v692 = vsel %vm390, %v126, 0
  %v695 = vsel %vm390, %v127, 0
  %v698 = vsel %vm390, %v128, 0
  %v701 = vsel %vm390, %v129, 0
  %v704 = vsel %vm390, %v130, 0
  %v707 = vsel %vm390, %v131, 0
  %v710 = vsel %vm390, %v132, 0
  %v713 = vsel %vm390, %v133, 0
  %v716 = vsel %vm390, %v134, 0
  %v719 = vsel %vm390, %v135, 0
  %v722 = vsel %vm390, %v136, 0
  %v725 = vsel %vm390, %v137, 0
  %v728 = vsel %vm390, %v138, 0
  %v731 = vsel %vm390, %v139, 0
  %v734 = vsel %vm390, %v140, 0
  %v737 = vsel %vm390, %v141, 0
  %v740 = vsel %vm390, %v142, 0
  %v743 = vsel %vm390, %v143, 0
  %v746 = vsel %vm390, %v144, 0
  %v749 = vsel %vm390, %v145, 0
  %v752 = vsel %vm390, %v146, 0
  %v755 = vsel %vm390, %v147, 0
  %v758 = vsel %vm390, %v148, 0
  %v761 = vsel %vm390, %v149, 0
  %v764 = vsel %vm390, %v150, 0
  %v767 = vsel %vm390, %v151, 0
  %v770 = vsel %vm390, %v152, 0
  %v773 = vsel %vm390, %v153, 0
  %v776 = vsel %vm390, %v154, 0
  %v779 = vsel %vm390, %v155, 0
  %v782 = vsel %vm390, %v156, 0
  %v785 = vsel %vm390, %v157, 0
  %v788 = vsel %vm390, %v158, 0
  %v791 = vsel %vm390, %v159, 0
  %v794 = vsel %vm390, %v160, 0
  %v797 = vsel %vm390, %v161, 0
  %v800 = vsel %vm390, %v162, 0
  %v803 = vsel %vm390, %v163, 0
  %v806 = vsel %vm390, %v164, 0
  %v809 = vsel %vm390, %v165, 0
  %v812 = vsel %vm390, %v166, 0
  %v815 = vsel %vm390, %v167, 0
  %v818 = vsel %vm390, %v168, 0
  %v821 = vsel %vm390, %v169, 0
  %v824 = vsel %vm390, %v170, 0
  %v827 = vsel %vm390, %v171, 0
  %v830 = vsel %vm390, %v172, 0
  %v833 = vsel %vm390, %v173, 0
  %v836 = vsel %vm390, %v174, 0
  %v839 = vsel %vm390, %v175, 0
  %v842 = vsel %vm390, %v176, 0
  %v845 = vsel %vm390, %v177, 0
  %v848 = vsel %vm390, %v178, 0
  %v851 = vsel %vm390, %v179, 0
  %v854 = vsel %vm390, %v180, 0
  %v857 = vsel %vm390, %v181, 0
  %v860 = vsel %vm390, %v182, 0
  %v863 = vsel %vm390, %v183, 0
  %v866 = vsel %vm390, %v184, 0
  %v869 = vsel %vm390, %v185, 0
  %v872 = vsel %vm390, %v186, 0
  %v875 = vsel %vm390, %v187, 0
  %v878 = vsel %vm390, %v188, 0
  %v881 = vsel %vm390, %v189, 0
  %v884 = vsel %vm390, %v190, 0
  %v887 = vsel %vm390, %v191, 0
  %v890 = vsel %vm390, %v192, 0
  %v893 = vsel %vm390, %v193, 0
  %v896 = vsel %vm390, %v194, 0
  %v899 = vsel %vm390, %v195, 0
  %v902 = vsel %vm390, %v196, 0
  %v905 = vsel %vm390, %v197, 0
  %v908 = vsel %vm390, %v198, 0
  %v911 = vsel %vm390, %v199, 0
  %v914 = vsel %vm390, %v200, 0
  %v917 = vsel %vm390, %v201, 0
  %v920 = vsel %vm390, %v202, 0
  %v923 = vsel %vm390, %v203, 0
  %v926 = vsel %vm390, %v204, 0
  %v929 = vsel %vm390, %v205, 0
  %v932 = vsel %vm390, %v206, 0
  %v935 = vsel %vm390, %v207, 0
  %v938 = vsel %vm390, %v208, 0
  %v941 = vsel %vm390, %v209, 0
  %v944 = vsel %vm390, %v210, 0
  %v947 = vsel %vm390, %v211, 0
  %v950 = vsel %vm390, %v212, 0
  %v953 = vsel %vm390, %v213, 0
  %v956 = vsel %vm390, %v214, 0
  %v959 = vsel %vm390, %v215, 0
  %v962 = vsel %vm390, %v216, 0
  %v965 = vsel %vm390, %v217, 0
  %v968 = vsel %vm390, %v218, 0
  %v971 = vsel %vm390, %v219, 0
  %v974 = vsel %vm390, %v220, 0
  %v977 = vsel %vm390, %v221, 0
  %v980 = vsel %vm390, %v222, 0
  %v983 = vsel %vm390, %v223, 0
  %v986 = vsel %vm390, %v224, 0
  %v989 = vsel %vm390, %v225, 0
  %v992 = vsel %vm390, %v226, 0
  %v995 = vsel %vm390, %v227, 0
  %v998 = vsel %vm390, %v228, 0
  %v1001 = vsel %vm390, %v229, 0
  %v1004 = vsel %vm390, %v230, 0
  %v1007 = vsel %vm390, %v231, 0
  %v1010 = vsel %vm390, %v232, 0
  %v1013 = vsel %vm390, %v233, 0
  %v1016 = vsel %vm390, %v234, 0
  %v1019 = vsel %vm390, %v235, 0
  %v1022 = vsel %vm390, %v236, 0
  %v1025 = vsel %vm390, %v237, 0
  %v1028 = vsel %vm390, %v238, 0
  %v1031 = vsel %vm390, %v239, 0
  %v1034 = vsel %vm390, %v240, 0
  %v1037 = vsel %vm390, %v241, 0
  %v1040 = vsel %vm390, %v242, 0
  %v1043 = vsel %vm390, %v243, 0
  %v1046 = vsel %vm390, %v244, 0
  %v1049 = vsel %vm390, %v245, 0
  %v1052 = vsel %vm390, %v246, 0
  %v1055 = vsel %vm390, %v247, 0
  %v1058 = vsel %vm390, %v248, 0
  %v1061 = vsel %vm390, %v249, 0
  %v1064 = vsel %vm390, %v250, 0
  %v1067 = vsel %vm390, %v251, 0
  %v1070 = vsel %vm390, %v252, 0
  %v1073 = vsel %vm390, %v253, 0
  %v1076 = vsel %vm390, %v254, 0
  %v1079 = vsel %vm390, %v255, 0
  %v1082 = vsel %vm390, %v256, 0
  %v1085 = vsel %vm390, %v257, 0
  %v1088 = vsel %vm390, %v258, 0
  %v1091 = vsel %vm390, %v259, 0
  %v1094 = vsel %vm390, %v260, 0
  %v1097 = vsel %vm390, %v261, 0
  %v1100 = vsel %vm390, %v262, 0
  %v1103 = vsel %vm390, %v263, 0
  %v1106 = vsel %vm390, %v264, 0
  %v1109 = vsel %vm390, %v265, 0
  %v1112 = vsel %vm390, %v266, 0
  %v1115 = vsel %vm390, %v267, 0
  %v1118 = vsel %vm390, %v268, 0
  %v1121 = vsel %vm390, %v269, 0
  %v1124 = vsel %vm390, %v270, 0
  %v1127 = vsel %vm390, %v271, 0
  %v1130 = vsel %vm390, %v272, 0
  %v1133 = vsel %vm390, %v273, 0
  %v1136 = vsel %vm390, %v274, 0
  %v1139 = vsel %vm390, %v275, 0
  %v1142 = vsel %vm390, %v276, 0
  %v1145 = vsel %vm390, %v277, 0
  %v1148 = vsel %vm390, %v278, 0
  %v1151 = vsel %vm390, %v279, 0
  %v1154 = vsel %vm390, %v280, 0
  %v1157 = vsel %vm390, %v281, 0
  %v1160 = vsel %vm390, %v282, 0
  %v1163 = vsel %vm390, %v283, 0
  %v1166 = vsel %vm390, %v284, 0
  %v1169 = vsel %vm390, %v285, 0
  %v1172 = vsel %vm390, %v286, 0
  %v1175 = vsel %vm390, %v287, 0
  %v1178 = vsel %vm390, %v288, 0
  %v1181 = vsel %vm390, %v289, 0
  %v1184 = vsel %vm390, %v290, 0
  %v1187 = vsel %vm390, %v291, 0
  %v1190 = vsel %vm390, %v292, 0
  %v1193 = vsel %vm390, %v293, 0
  %v1196 = vsel %vm390, %v294, 0
  %v1199 = vsel %vm390, %v295, 0
  %v1202 = vsel %vm390, %v296, 0
  %v1205 = vsel %vm390, %v297, 0
  %v1208 = vsel %vm390, %v298, 0
  %v1211 = vsel %vm390, %v299, 0
  %v1214 = vsel %vm390, %v300, 0
  %v1217 = vsel %vm390, %v301, 0
  %v1220 = vsel %vm390, %v302, 0
  %v1223 = vsel %vm390, %v303, 0
  %v1226 = vsel %vm390, %v304, 0
  %v1229 = vsel %vm390, %v305, 0
  %v1232 = vsel %vm390, %v306, 0
  %v1235 = vsel %vm390, %v307, 0
  %v1238 = vsel %vm390, %v308, 0
  %v1241 = vsel %vm390, %v309, 0
  %v1244 = vsel %vm390, %v310, 0
  %v1247 = vsel %vm390, %v311, 0
  %v1250 = vsel %vm390, %v312, 0
  %v1253 = vsel %vm390, %v313, 0
  %v1256 = vsel %vm390, %v314, 0
  %v1259 = vsel %vm390, %v315, 0
  %v1262 = vsel %vm390, %v316, 0
  %v1265 = vsel %vm390, %v317, 0
  %v1268 = vsel %vm390, %v318, 0
  %v1271 = vsel %vm390, %v319, 0
  %v1274 = vsel %vm390, %v320, 0
  %v1277 = vsel %vm390, %v321, 0
  %v1280 = vsel %vm390, %v322, 0
  %v1283 = vsel %vm390, %v323, 0
  %v1286 = vsel %vm390, %v324, 0
  %v1289 = vsel %vm390, %v325, 0
  %v1292 = vsel %vm390, %v326, 0
  %v1295 = vsel %vm390, %v327, 0
  %v1298 = vsel %vm390, %v328, 0
  %v1301 = vsel %vm390, %v329, 0
  %v1304 = vsel %vm390, %v330, 0
  %v1307 = vsel %vm390, %v331, 0
  %v1310 = vsel %vm390, %v332, 0
  %v1313 = vsel %vm390, %v333, 0
  %v1316 = vsel %vm390, %v334, 0
  %v1319 = vsel %vm390, %v335, 0
  %v1322 = vsel %vm390, %v336, 0
  %v1325 = vsel %vm390, %v337, 0
  %v1328 = vsel %vm390, %v338, 0
  %v1331 = vsel %vm390, %v339, 0
  %v1334 = vsel %vm390, %v340, 0
  %v1337 = vsel %vm390, %v341, 0
  %v1340 = vsel %vm390, %v342, 0
  %v1343 = vsel %vm390, %v343, 0
  %v1346 = vsel %vm390, %v344, 0
  %v1349 = vsel %vm390, %v345, 0
  %v1352 = vsel %vm390, %v346, 0
  %v1355 = vsel %vm390, %v347, 0
  %v1358 = vsel %vm390, %v348, 0
  %v1361 = vsel %vm390, %v349, 0
  %v1364 = vsel %vm390, %v350, 0
  %v1367 = vsel %vm390, %v351, 0
  %v1370 = vsel %vm390, %v352, 0
  %v1373 = vsel %vm390, %v353, 0
  %v1376 = vsel %vm390, %v354, 0
  %v1379 = vsel %vm390, %v355, 0
  %v1382 = vsel %vm390, %v356, 0
  %v1385 = vsel %vm390, %v357, 0
  %v1388 = vsel %vm390, %v358, 0
  %v1391 = vsel %vm390, %v359, 0
  %v1394 = vsel %vm390, %v360, 0
  %v1397 = vsel %vm390, %v361, 0
  %v1400 = vsel %vm390, %v362, 0
  %v1403 = vsel %vm390, %v363, 0
  %v1406 = vsel %vm390, %v364, 0
  %v1409 = vsel %vm390, %v365, 0
  %v1412 = vsel %vm390, %v366, 0
  %v1415 = vsel %vm390, %v367, 0
  %v1418 = vsel %vm390, %v368, 0
  %v1421 = vsel %vm390, %v369, 0
  %v1424 = vsel %vm390, %v370, 0
  %v1427 = vsel %vm390, %v371, 0
  %v1430 = vsel %vm390, %v372, 0
  %v1433 = vsel %vm390, %v373, 0
  %v1436 = vsel %vm390, %v374, 0
  %v1439 = vsel %vm390, %v375, 0
  %v1442 = vsel %vm390, %v376, 0
  %v1445 = vsel %vm390, %v377, 0
  %vm1447 = vcmask 1043456
  %v1449 = vsel %vm1447, %v385, 0
  %1451 = vmatpush.msra.mxu0 0.0
  %1452 = vmatpush.msra.mxu0 0.0
  %1453 = vmatpush.msra.mxu0 0.0
  %1454 = vmatpush.msra.mxu0 0.0
  %1455 = vmatpush.msra.mxu0 0.0
  %1456 = vmatpush.msra.mxu0 0.0
  %1457 = vmatpush.msra.mxu0 0.0
  %1458 = vmatpush.msra.mxu0 0.0
  %1459 = vmatpush.msra.mxu0 %v1449
  %1460 = vmatpush.msra.mxu0 %v384
  %1461 = vmatpush.msra.mxu0 %v383
  %1462 = vmatpush.msra.mxu0 %v382
  %1463 = vmatpush.msra.mxu0 %v381
  %1464 = vmatpush.msra.mxu0 %v380
  %1465 = vmatpush.msra.mxu0 %v379
  %1466 = vmatpush.msra.mxu0 %v378
  %1467 = vmatmul.f32.gmra.mxu0 %v392
  %v1468 = vpop.f32.mrf.mxu0
  %v1469 = vadd.f32 %v388, %v1468
  %1470 = vmatmul.f32.gmra.mxu0 %v395
  %v1471 = vpop.f32.mrf.mxu0
  %v1472 = vadd.f32 %v388, %v1471
  %1473 = vmatmul.f32.gmra.mxu0 %v398
  %v1474 = vpop.f32.mrf.mxu0
  %v1475 = vadd.f32 %v388, %v1474
  %1476 = vmatmul.f32.gmra.mxu0 %v401
  %v1477 = vpop.f32.mrf.mxu0
  %v1478 = vadd.f32 %v388, %v1477
  %1479 = vmatmul.f32.gmra.mxu0 %v404
  %v1480 = vpop.f32.mrf.mxu0
  %v1481 = vadd.f32 %v388, %v1480
  %1482 = vmatmul.f32.gmra.mxu0 %v407
  %v1483 = vpop.f32.mrf.mxu0
  %v1484 = vadd.f32 %v388, %v1483
  %1485 = vmatmul.f32.gmra.mxu0 %v410
  %v1486 = vpop.f32.mrf.mxu0
  %v1487 = vadd.f32 %v388, %v1486
  %1488 = vmatmul.f32.gmra.mxu0 %v413
  %v1489 = vpop.f32.mrf.mxu0
  %v1490 = vadd.f32 %v388, %v1489
  %1491 = vmatmul.f32.gmra.mxu0 %v416
  %v1492 = vpop.f32.mrf.mxu0
  %v1493 = vadd.f32 %v388, %v1492
  %1494 = vmatmul.f32.gmra.mxu0 %v419
  %v1495 = vpop.f32.mrf.mxu0
  %v1496 = vadd.f32 %v388, %v1495
  %1497 = vmatmul.f32.gmra.mxu0 %v422
  %v1498 = vpop.f32.mrf.mxu0
  %v1499 = vadd.f32 %v388, %v1498
  %1500 = vmatmul.f32.gmra.mxu0 %v425
  %v1501 = vpop.f32.mrf.mxu0
  %v1502 = vadd.f32 %v388, %v1501
  %1503 = vmatmul.f32.gmra.mxu0 %v428
  %v1504 = vpop.f32.mrf.mxu0
  %v1505 = vadd.f32 %v388, %v1504
  %1506 = vmatmul.f32.gmra.mxu0 %v431
  %v1507 = vpop.f32.mrf.mxu0
  %v1508 = vadd.f32 %v388, %v1507
  %1509 = vmatmul.f32.gmra.mxu0 %v434
  %v1510 = vpop.f32.mrf.mxu0
  %v1511 = vadd.f32 %v388, %v1510
  %1512 = vmatmul.f32.gmra.mxu0 %v437
  %v1513 = vpop.f32.mrf.mxu0
  %v1514 = vadd.f32 %v388, %v1513
  %1515 = vmatmul.f32.gmra.mxu0 %v440
  %v1516 = vpop.f32.mrf.mxu0
  %v1517 = vadd.f32 %v388, %v1516
  %1518 = vmatmul.f32.gmra.mxu0 %v443
  %v1519 = vpop.f32.mrf.mxu0
  %v1520 = vadd.f32 %v388, %v1519
  %1521 = vmatmul.f32.gmra.mxu0 %v446
  %v1522 = vpop.f32.mrf.mxu0
  %v1523 = vadd.f32 %v388, %v1522
  %1524 = vmatmul.f32.gmra.mxu0 %v449
  %v1525 = vpop.f32.mrf.mxu0
  %v1526 = vadd.f32 %v388, %v1525
  %1527 = vmatmul.f32.gmra.mxu0 %v452
  %v1528 = vpop.f32.mrf.mxu0
  %v1529 = vadd.f32 %v388, %v1528
  %1530 = vmatmul.f32.gmra.mxu0 %v455
  %v1531 = vpop.f32.mrf.mxu0
  %v1532 = vadd.f32 %v388, %v1531
  %1533 = vmatmul.f32.gmra.mxu0 %v458
  %v1534 = vpop.f32.mrf.mxu0
  %v1535 = vadd.f32 %v388, %v1534
  %1536 = vmatmul.f32.gmra.mxu0 %v461
  %v1537 = vpop.f32.mrf.mxu0
  %v1538 = vadd.f32 %v388, %v1537
  %1539 = vmatmul.f32.gmra.mxu0 %v464
  %v1540 = vpop.f32.mrf.mxu0
  %v1541 = vadd.f32 %v388, %v1540
  %1542 = vmatmul.f32.gmra.mxu0 %v467
  %v1543 = vpop.f32.mrf.mxu0
  %v1544 = vadd.f32 %v388, %v1543
  %1545 = vmatmul.f32.gmra.mxu0 %v470
  %v1546 = vpop.f32.mrf.mxu0
  %v1547 = vadd.f32 %v388, %v1546
  %1548 = vmatmul.f32.gmra.mxu0 %v473
  %v1549 = vpop.f32.mrf.mxu0
  %v1550 = vadd.f32 %v388, %v1549
  %1551 = vmatmul.f32.gmra.mxu0 %v476
  %v1552 = vpop.f32.mrf.mxu0
  %v1553 = vadd.f32 %v388, %v1552
  %1554 = vmatmul.f32.gmra.mxu0 %v479
  %v1555 = vpop.f32.mrf.mxu0
  %v1556 = vadd.f32 %v388, %v1555
  %1557 = vmatmul.f32.gmra.mxu0 %v482
  %v1558 = vpop.f32.mrf.mxu0
  %v1559 = vadd.f32 %v388, %v1558
  %1560 = vmatmul.f32.gmra.mxu0 %v485
  %v1561 = vpop.f32.mrf.mxu0
  %v1562 = vadd.f32 %v388, %v1561
  %1563 = vmatmul.f32.gmra.mxu0 %v488
  %v1564 = vpop.f32.mrf.mxu0
  %v1565 = vadd.f32 %v388, %v1564
  %1566 = vmatmul.f32.gmra.mxu0 %v491
  %v1567 = vpop.f32.mrf.mxu0
  %v1568 = vadd.f32 %v388, %v1567
  %1569 = vmatmul.f32.gmra.mxu0 %v494
  %v1570 = vpop.f32.mrf.mxu0
  %v1571 = vadd.f32 %v388, %v1570
  %1572 = vmatmul.f32.gmra.mxu0 %v497
  %v1573 = vpop.f32.mrf.mxu0
  %v1574 = vadd.f32 %v388, %v1573
  %1575 = vmatmul.f32.gmra.mxu0 %v500
  %v1576 = vpop.f32.mrf.mxu0
  %v1577 = vadd.f32 %v388, %v1576
  %1578 = vmatmul.f32.gmra.mxu0 %v503
  %v1579 = vpop.f32.mrf.mxu0
  %v1580 = vadd.f32 %v388, %v1579
  %1581 = vmatmul.f32.gmra.mxu0 %v506
  %v1582 = vpop.f32.mrf.mxu0
  %v1583 = vadd.f32 %v388, %v1582
  %1584 = vmatmul.f32.gmra.mxu0 %v509
  %v1585 = vpop.f32.mrf.mxu0
  %v1586 = vadd.f32 %v388, %v1585
  %1587 = vmatmul.f32.gmra.mxu0 %v512
  %v1588 = vpop.f32.mrf.mxu0
  %v1589 = vadd.f32 %v388, %v1588
  %1590 = vmatmul.f32.gmra.mxu0 %v515
  %v1591 = vpop.f32.mrf.mxu0
  %v1592 = vadd.f32 %v388, %v1591
  %1593 = vmatmul.f32.gmra.mxu0 %v518
  %v1594 = vpop.f32.mrf.mxu0
  %v1595 = vadd.f32 %v388, %v1594
  %1596 = vmatmul.f32.gmra.mxu0 %v521
  %v1597 = vpop.f32.mrf.mxu0
  %v1598 = vadd.f32 %v388, %v1597
  %1599 = vmatmul.f32.gmra.mxu0 %v524
  %v1600 = vpop.f32.mrf.mxu0
  %v1601 = vadd.f32 %v388, %v1600
  %1602 = vmatmul.f32.gmra.mxu0 %v527
  %v1603 = vpop.f32.mrf.mxu0
  %v1604 = vadd.f32 %v388, %v1603
  %1605 = vmatmul.f32.gmra.mxu0 %v530
  %v1606 = vpop.f32.mrf.mxu0
  %v1607 = vadd.f32 %v388, %v1606
  %1608 = vmatmul.f32.gmra.mxu0 %v533
  %v1609 = vpop.f32.mrf.mxu0
  %v1610 = vadd.f32 %v388, %v1609
  %1611 = vmatmul.f32.gmra.mxu0 %v536
  %v1612 = vpop.f32.mrf.mxu0
  %v1613 = vadd.f32 %v388, %v1612
  %1614 = vmatmul.f32.gmra.mxu0 %v539
  %v1615 = vpop.f32.mrf.mxu0
  %v1616 = vadd.f32 %v388, %v1615
  %1617 = vmatmul.f32.gmra.mxu0 %v542
  %v1618 = vpop.f32.mrf.mxu0
  %v1619 = vadd.f32 %v388, %v1618
  %1620 = vmatmul.f32.gmra.mxu0 %v545
  %v1621 = vpop.f32.mrf.mxu0
  %v1622 = vadd.f32 %v388, %v1621
  %1623 = vmatmul.f32.gmra.mxu0 %v548
  %v1624 = vpop.f32.mrf.mxu0
  %v1625 = vadd.f32 %v388, %v1624
  %1626 = vmatmul.f32.gmra.mxu0 %v551
  %v1627 = vpop.f32.mrf.mxu0
  %v1628 = vadd.f32 %v388, %v1627
  %1629 = vmatmul.f32.gmra.mxu0 %v554
  %v1630 = vpop.f32.mrf.mxu0
  %v1631 = vadd.f32 %v388, %v1630
  %1632 = vmatmul.f32.gmra.mxu0 %v557
  %v1633 = vpop.f32.mrf.mxu0
  %v1634 = vadd.f32 %v388, %v1633
  %1635 = vmatmul.f32.gmra.mxu0 %v560
  %v1636 = vpop.f32.mrf.mxu0
  %v1637 = vadd.f32 %v388, %v1636
  %1638 = vmatmul.f32.gmra.mxu0 %v563
  %v1639 = vpop.f32.mrf.mxu0
  %v1640 = vadd.f32 %v388, %v1639
  %1641 = vmatmul.f32.gmra.mxu0 %v566
  %v1642 = vpop.f32.mrf.mxu0
  %v1643 = vadd.f32 %v388, %v1642
  %1644 = vmatmul.f32.gmra.mxu0 %v569
  %v1645 = vpop.f32.mrf.mxu0
  %v1646 = vadd.f32 %v388, %v1645
  %1647 = vmatmul.f32.gmra.mxu0 %v572
  %v1648 = vpop.f32.mrf.mxu0
  %v1649 = vadd.f32 %v388, %v1648
  %1650 = vmatmul.f32.gmra.mxu0 %v575
  %v1651 = vpop.f32.mrf.mxu0
  %v1652 = vadd.f32 %v388, %v1651
  %1653 = vmatmul.f32.gmra.mxu0 %v578
  %v1654 = vpop.f32.mrf.mxu0
  %v1655 = vadd.f32 %v388, %v1654
  %1656 = vmatmul.f32.gmra.mxu0 %v581
  %v1657 = vpop.f32.mrf.mxu0
  %v1658 = vadd.f32 %v388, %v1657
  %1659 = vmatmul.f32.gmra.mxu0 %v584
  %v1660 = vpop.f32.mrf.mxu0
  %v1661 = vadd.f32 %v388, %v1660
  %1662 = vmatmul.f32.gmra.mxu0 %v587
  %v1663 = vpop.f32.mrf.mxu0
  %v1664 = vadd.f32 %v388, %v1663
  %1665 = vmatmul.f32.gmra.mxu0 %v590
  %v1666 = vpop.f32.mrf.mxu0
  %v1667 = vadd.f32 %v388, %v1666
  %1668 = vmatmul.f32.gmra.mxu0 %v593
  %v1669 = vpop.f32.mrf.mxu0
  %v1670 = vadd.f32 %v388, %v1669
  %1671 = vmatmul.f32.gmra.mxu0 %v596
  %v1672 = vpop.f32.mrf.mxu0
  %v1673 = vadd.f32 %v388, %v1672
  %1674 = vmatmul.f32.gmra.mxu0 %v599
  %v1675 = vpop.f32.mrf.mxu0
  %v1676 = vadd.f32 %v388, %v1675
  %1677 = vmatmul.f32.gmra.mxu0 %v602
  %v1678 = vpop.f32.mrf.mxu0
  %v1679 = vadd.f32 %v388, %v1678
  %1680 = vmatmul.f32.gmra.mxu0 %v605
  %v1681 = vpop.f32.mrf.mxu0
  %v1682 = vadd.f32 %v388, %v1681
  %1683 = vmatmul.f32.gmra.mxu0 %v608
  %v1684 = vpop.f32.mrf.mxu0
  %v1685 = vadd.f32 %v388, %v1684
  %1686 = vmatmul.f32.gmra.mxu0 %v611
  %v1687 = vpop.f32.mrf.mxu0
  %v1688 = vadd.f32 %v388, %v1687
  %1689 = vmatmul.f32.gmra.mxu0 %v614
  %v1690 = vpop.f32.mrf.mxu0
  %v1691 = vadd.f32 %v388, %v1690
  %1692 = vmatmul.f32.gmra.mxu0 %v617
  %v1693 = vpop.f32.mrf.mxu0
  %v1694 = vadd.f32 %v388, %v1693
  %1695 = vmatmul.f32.gmra.mxu0 %v620
  %v1696 = vpop.f32.mrf.mxu0
  %v1697 = vadd.f32 %v388, %v1696
  %1698 = vmatmul.f32.gmra.mxu0 %v623
  %v1699 = vpop.f32.mrf.mxu0
  %v1700 = vadd.f32 %v388, %v1699
  %1701 = vmatmul.f32.gmra.mxu0 %v626
  %v1702 = vpop.f32.mrf.mxu0
  %v1703 = vadd.f32 %v388, %v1702
  %1704 = vmatmul.f32.gmra.mxu0 %v629
  %v1705 = vpop.f32.mrf.mxu0
  %v1706 = vadd.f32 %v388, %v1705
  %1707 = vmatmul.f32.gmra.mxu0 %v632
  %v1708 = vpop.f32.mrf.mxu0
  %v1709 = vadd.f32 %v388, %v1708
  %1710 = vmatmul.f32.gmra.mxu0 %v635
  %v1711 = vpop.f32.mrf.mxu0
  %v1712 = vadd.f32 %v388, %v1711
  %1713 = vmatmul.f32.gmra.mxu0 %v638
  %v1714 = vpop.f32.mrf.mxu0
  %v1715 = vadd.f32 %v388, %v1714
  %1716 = vmatmul.f32.gmra.mxu0 %v641
  %v1717 = vpop.f32.mrf.mxu0
  %v1718 = vadd.f32 %v388, %v1717
  %1719 = vmatmul.f32.gmra.mxu0 %v644
  %v1720 = vpop.f32.mrf.mxu0
  %v1721 = vadd.f32 %v388, %v1720
  %1722 = vmatmul.f32.gmra.mxu0 %v647
  %v1723 = vpop.f32.mrf.mxu0
  %v1724 = vadd.f32 %v388, %v1723
  %1725 = vmatmul.f32.gmra.mxu0 %v650
  %v1726 = vpop.f32.mrf.mxu0
  %v1727 = vadd.f32 %v388, %v1726
  %1728 = vmatmul.f32.gmra.mxu0 %v653
  %v1729 = vpop.f32.mrf.mxu0
  %v1730 = vadd.f32 %v388, %v1729
  %1731 = vmatmul.f32.gmra.mxu0 %v656
  %v1732 = vpop.f32.mrf.mxu0
  %v1733 = vadd.f32 %v388, %v1732
  %1734 = vmatmul.f32.gmra.mxu0 %v659
  %v1735 = vpop.f32.mrf.mxu0
  %v1736 = vadd.f32 %v388, %v1735
  %1737 = vmatmul.f32.gmra.mxu0 %v662
  %v1738 = vpop.f32.mrf.mxu0
  %v1739 = vadd.f32 %v388, %v1738
  %1740 = vmatmul.f32.gmra.mxu0 %v665
  %v1741 = vpop.f32.mrf.mxu0
  %v1742 = vadd.f32 %v388, %v1741
  %1743 = vmatmul.f32.gmra.mxu0 %v668
  %v1744 = vpop.f32.mrf.mxu0
  %v1745 = vadd.f32 %v388, %v1744
  %1746 = vmatmul.f32.gmra.mxu0 %v671
  %v1747 = vpop.f32.mrf.mxu0
  %v1748 = vadd.f32 %v388, %v1747
  %1749 = vmatmul.f32.gmra.mxu0 %v674
  %v1750 = vpop.f32.mrf.mxu0
  %v1751 = vadd.f32 %v388, %v1750
  %1752 = vmatmul.f32.gmra.mxu0 %v677
  %v1753 = vpop.f32.mrf.mxu0
  %v1754 = vadd.f32 %v388, %v1753
  %1755 = vmatmul.f32.gmra.mxu0 %v680
  %v1756 = vpop.f32.mrf.mxu0
  %v1757 = vadd.f32 %v388, %v1756
  %1758 = vmatmul.f32.gmra.mxu0 %v683
  %v1759 = vpop.f32.mrf.mxu0
  %v1760 = vadd.f32 %v388, %v1759
  %1761 = vmatmul.f32.gmra.mxu0 %v686
  %v1762 = vpop.f32.mrf.mxu0
  %v1763 = vadd.f32 %v388, %v1762
  %1764 = vmatmul.f32.gmra.mxu0 %v689
  %v1765 = vpop.f32.mrf.mxu0
  %v1766 = vadd.f32 %v388, %v1765
  %1767 = vmatmul.f32.gmra.mxu0 %v692
  %v1768 = vpop.f32.mrf.mxu0
  %v1769 = vadd.f32 %v388, %v1768
  %1770 = vmatmul.f32.gmra.mxu0 %v695
  %v1771 = vpop.f32.mrf.mxu0
  %v1772 = vadd.f32 %v388, %v1771
  %1773 = vmatmul.f32.gmra.mxu0 %v698
  %v1774 = vpop.f32.mrf.mxu0
  %v1775 = vadd.f32 %v388, %v1774
  %1776 = vmatmul.f32.gmra.mxu0 %v701
  %v1777 = vpop.f32.mrf.mxu0
  %v1778 = vadd.f32 %v388, %v1777
  %1779 = vmatmul.f32.gmra.mxu0 %v704
  %v1780 = vpop.f32.mrf.mxu0
  %v1781 = vadd.f32 %v388, %v1780
  %1782 = vmatmul.f32.gmra.mxu0 %v707
  %v1783 = vpop.f32.mrf.mxu0
  %v1784 = vadd.f32 %v388, %v1783
  %1785 = vmatmul.f32.gmra.mxu0 %v710
  %v1786 = vpop.f32.mrf.mxu0
  %v1787 = vadd.f32 %v388, %v1786
  %1788 = vmatmul.f32.gmra.mxu0 %v713
  %v1789 = vpop.f32.mrf.mxu0
  %v1790 = vadd.f32 %v388, %v1789
  %1791 = vmatmul.f32.gmra.mxu0 %v716
  %v1792 = vpop.f32.mrf.mxu0
  %v1793 = vadd.f32 %v388, %v1792
  %1794 = vmatmul.f32.gmra.mxu0 %v719
  %v1795 = vpop.f32.mrf.mxu0
  %v1796 = vadd.f32 %v388, %v1795
  %1797 = vmatmul.f32.gmra.mxu0 %v722
  %v1798 = vpop.f32.mrf.mxu0
  %v1799 = vadd.f32 %v388, %v1798
  %1800 = vmatmul.f32.gmra.mxu0 %v725
  %v1801 = vpop.f32.mrf.mxu0
  %v1802 = vadd.f32 %v388, %v1801
  %1803 = vmatmul.f32.gmra.mxu0 %v728
  %v1804 = vpop.f32.mrf.mxu0
  %v1805 = vadd.f32 %v388, %v1804
  %1806 = vmatmul.f32.gmra.mxu0 %v731
  %v1807 = vpop.f32.mrf.mxu0
  %v1808 = vadd.f32 %v388, %v1807
  %1809 = vmatmul.f32.gmra.mxu0 %v734
  %v1810 = vpop.f32.mrf.mxu0
  %v1811 = vadd.f32 %v388, %v1810
  %1812 = vmatmul.f32.gmra.mxu0 %v737
  %v1813 = vpop.f32.mrf.mxu0
  %v1814 = vadd.f32 %v388, %v1813
  %1815 = vmatmul.f32.gmra.mxu0 %v740
  %v1816 = vpop.f32.mrf.mxu0
  %v1817 = vadd.f32 %v388, %v1816
  %1818 = vmatmul.f32.gmra.mxu0 %v743
  %v1819 = vpop.f32.mrf.mxu0
  %v1820 = vadd.f32 %v388, %v1819
  %1821 = vmatmul.f32.gmra.mxu0 %v746
  %v1822 = vpop.f32.mrf.mxu0
  %v1823 = vadd.f32 %v388, %v1822
  %1824 = vmatmul.f32.gmra.mxu0 %v749
  %v1825 = vpop.f32.mrf.mxu0
  %v1826 = vadd.f32 %v388, %v1825
  %1827 = vmatmul.f32.gmra.mxu0 %v752
  %v1828 = vpop.f32.mrf.mxu0
  %v1829 = vadd.f32 %v388, %v1828
  %1830 = vmatmul.f32.gmra.mxu0 %v755
  %v1831 = vpop.f32.mrf.mxu0
  %v1832 = vadd.f32 %v388, %v1831
  %1833 = vmatmul.f32.gmra.mxu0 %v758
  %v1834 = vpop.f32.mrf.mxu0
  %v1835 = vadd.f32 %v388, %v1834
  %1836 = vmatmul.f32.gmra.mxu0 %v761
  %v1837 = vpop.f32.mrf.mxu0
  %v1838 = vadd.f32 %v388, %v1837
  %1839 = vmatmul.f32.gmra.mxu0 %v764
  %v1840 = vpop.f32.mrf.mxu0
  %v1841 = vadd.f32 %v388, %v1840
  %1842 = vmatmul.f32.gmra.mxu0 %v767
  %v1843 = vpop.f32.mrf.mxu0
  %v1844 = vadd.f32 %v388, %v1843
  %1845 = vmatmul.f32.gmra.mxu0 %v770
  %v1846 = vpop.f32.mrf.mxu0
  %v1847 = vadd.f32 %v388, %v1846
  %1848 = vmatmul.f32.gmra.mxu0 %v773
  %v1849 = vpop.f32.mrf.mxu0
  %v1850 = vadd.f32 %v388, %v1849
  %1851 = vmatmul.f32.gmra.mxu0 %v776
  %v1852 = vpop.f32.mrf.mxu0
  %v1853 = vadd.f32 %v388, %v1852
  %1854 = vmatmul.f32.gmra.mxu0 %v779
  %v1855 = vpop.f32.mrf.mxu0
  %v1856 = vadd.f32 %v388, %v1855
  %1857 = vmatmul.f32.gmra.mxu0 %v782
  %v1858 = vpop.f32.mrf.mxu0
  %v1859 = vadd.f32 %v388, %v1858
  %1860 = vmatmul.f32.gmra.mxu0 %v785
  %v1861 = vpop.f32.mrf.mxu0
  %v1862 = vadd.f32 %v388, %v1861
  %1863 = vmatmul.f32.gmra.mxu0 %v788
  %v1864 = vpop.f32.mrf.mxu0
  %v1865 = vadd.f32 %v388, %v1864
  %1866 = vmatmul.f32.gmra.mxu0 %v791
  %v1867 = vpop.f32.mrf.mxu0
  %v1868 = vadd.f32 %v388, %v1867
  %1869 = vmatmul.f32.gmra.mxu0 %v794
  %v1870 = vpop.f32.mrf.mxu0
  %v1871 = vadd.f32 %v388, %v1870
  %1872 = vmatmul.f32.gmra.mxu0 %v797
  %v1873 = vpop.f32.mrf.mxu0
  %v1874 = vadd.f32 %v388, %v1873
  %1875 = vmatmul.f32.gmra.mxu0 %v800
  %v1876 = vpop.f32.mrf.mxu0
  %v1877 = vadd.f32 %v388, %v1876
  %1878 = vmatmul.f32.gmra.mxu0 %v803
  %v1879 = vpop.f32.mrf.mxu0
  %v1880 = vadd.f32 %v388, %v1879
  %1881 = vmatmul.f32.gmra.mxu0 %v806
  %v1882 = vpop.f32.mrf.mxu0
  %v1883 = vadd.f32 %v388, %v1882
  %1884 = vmatmul.f32.gmra.mxu0 %v809
  %v1885 = vpop.f32.mrf.mxu0
  %v1886 = vadd.f32 %v388, %v1885
  %1887 = vmatmul.f32.gmra.mxu0 %v812
  %v1888 = vpop.f32.mrf.mxu0
  %v1889 = vadd.f32 %v388, %v1888
  %1890 = vmatmul.f32.gmra.mxu0 %v815
  %v1891 = vpop.f32.mrf.mxu0
  %v1892 = vadd.f32 %v388, %v1891
  %1893 = vmatmul.f32.gmra.mxu0 %v818
  %v1894 = vpop.f32.mrf.mxu0
  %v1895 = vadd.f32 %v388, %v1894
  %1896 = vmatmul.f32.gmra.mxu0 %v821
  %v1897 = vpop.f32.mrf.mxu0
  %v1898 = vadd.f32 %v388, %v1897
  %1899 = vmatmul.f32.gmra.mxu0 %v824
  %v1900 = vpop.f32.mrf.mxu0
  %v1901 = vadd.f32 %v388, %v1900
  %1902 = vmatmul.f32.gmra.mxu0 %v827
  %v1903 = vpop.f32.mrf.mxu0
  %v1904 = vadd.f32 %v388, %v1903
  %1905 = vmatmul.f32.gmra.mxu0 %v830
  %v1906 = vpop.f32.mrf.mxu0
  %v1907 = vadd.f32 %v388, %v1906
  %1908 = vmatmul.f32.gmra.mxu0 %v833
  %v1909 = vpop.f32.mrf.mxu0
  %v1910 = vadd.f32 %v388, %v1909
  %1911 = vmatmul.f32.gmra.mxu0 %v836
  %v1912 = vpop.f32.mrf.mxu0
  %v1913 = vadd.f32 %v388, %v1912
  %1914 = vmatmul.f32.gmra.mxu0 %v839
  %v1915 = vpop.f32.mrf.mxu0
  %v1916 = vadd.f32 %v388, %v1915
  %1917 = vmatmul.f32.gmra.mxu0 %v842
  %v1918 = vpop.f32.mrf.mxu0
  %v1919 = vadd.f32 %v388, %v1918
  %1920 = vmatmul.f32.gmra.mxu0 %v845
  %v1921 = vpop.f32.mrf.mxu0
  %v1922 = vadd.f32 %v388, %v1921
  %1923 = vmatmul.f32.gmra.mxu0 %v848
  %v1924 = vpop.f32.mrf.mxu0
  %v1925 = vadd.f32 %v388, %v1924
  %1926 = vmatmul.f32.gmra.mxu0 %v851
  %v1927 = vpop.f32.mrf.mxu0
  %v1928 = vadd.f32 %v388, %v1927
  %1929 = vmatmul.f32.gmra.mxu0 %v854
  %v1930 = vpop.f32.mrf.mxu0
  %v1931 = vadd.f32 %v388, %v1930
  %1932 = vmatmul.f32.gmra.mxu0 %v857
  %v1933 = vpop.f32.mrf.mxu0
  %v1934 = vadd.f32 %v388, %v1933
  %1935 = vmatmul.f32.gmra.mxu0 %v860
  %v1936 = vpop.f32.mrf.mxu0
  %v1937 = vadd.f32 %v388, %v1936
  %1938 = vmatmul.f32.gmra.mxu0 %v863
  %v1939 = vpop.f32.mrf.mxu0
  %v1940 = vadd.f32 %v388, %v1939
  %1941 = vmatmul.f32.gmra.mxu0 %v866
  %v1942 = vpop.f32.mrf.mxu0
  %v1943 = vadd.f32 %v388, %v1942
  %1944 = vmatmul.f32.gmra.mxu0 %v869
  %v1945 = vpop.f32.mrf.mxu0
  %v1946 = vadd.f32 %v388, %v1945
  %1947 = vmatmul.f32.gmra.mxu0 %v872
  %v1948 = vpop.f32.mrf.mxu0
  %v1949 = vadd.f32 %v388, %v1948
  %1950 = vmatmul.f32.gmra.mxu0 %v875
  %v1951 = vpop.f32.mrf.mxu0
  %v1952 = vadd.f32 %v388, %v1951
  %1953 = vmatmul.f32.gmra.mxu0 %v878
  %v1954 = vpop.f32.mrf.mxu0
  %v1955 = vadd.f32 %v388, %v1954
  %1956 = vmatmul.f32.gmra.mxu0 %v881
  %v1957 = vpop.f32.mrf.mxu0
  %v1958 = vadd.f32 %v388, %v1957
  %1959 = vmatmul.f32.gmra.mxu0 %v884
  %v1960 = vpop.f32.mrf.mxu0
  %v1961 = vadd.f32 %v388, %v1960
  %1962 = vmatmul.f32.gmra.mxu0 %v887
  %v1963 = vpop.f32.mrf.mxu0
  %v1964 = vadd.f32 %v388, %v1963
  %1965 = vmatmul.f32.gmra.mxu0 %v890
  %v1966 = vpop.f32.mrf.mxu0
  %v1967 = vadd.f32 %v388, %v1966
  %1968 = vmatmul.f32.gmra.mxu0 %v893
  %v1969 = vpop.f32.mrf.mxu0
  %v1970 = vadd.f32 %v388, %v1969
  %1971 = vmatmul.f32.gmra.mxu0 %v896
  %v1972 = vpop.f32.mrf.mxu0
  %v1973 = vadd.f32 %v388, %v1972
  %1974 = vmatmul.f32.gmra.mxu0 %v899
  %v1975 = vpop.f32.mrf.mxu0
  %v1976 = vadd.f32 %v388, %v1975
  %1977 = vmatmul.f32.gmra.mxu0 %v902
  %v1978 = vpop.f32.mrf.mxu0
  %v1979 = vadd.f32 %v388, %v1978
  %1980 = vmatmul.f32.gmra.mxu0 %v905
  %v1981 = vpop.f32.mrf.mxu0
  %v1982 = vadd.f32 %v388, %v1981
  %1983 = vmatmul.f32.gmra.mxu0 %v908
  %v1984 = vpop.f32.mrf.mxu0
  %v1985 = vadd.f32 %v388, %v1984
  %1986 = vmatmul.f32.gmra.mxu0 %v911
  %v1987 = vpop.f32.mrf.mxu0
  %v1988 = vadd.f32 %v388, %v1987
  %1989 = vmatmul.f32.gmra.mxu0 %v914
  %v1990 = vpop.f32.mrf.mxu0
  %v1991 = vadd.f32 %v388, %v1990
  %1992 = vmatmul.f32.gmra.mxu0 %v917
  %v1993 = vpop.f32.mrf.mxu0
  %v1994 = vadd.f32 %v388, %v1993
  %1995 = vmatmul.f32.gmra.mxu0 %v920
  %v1996 = vpop.f32.mrf.mxu0
  %v1997 = vadd.f32 %v388, %v1996
  %1998 = vmatmul.f32.gmra.mxu0 %v923
  %v1999 = vpop.f32.mrf.mxu0
  %v2000 = vadd.f32 %v388, %v1999
  %2001 = vmatmul.f32.gmra.mxu0 %v926
  %v2002 = vpop.f32.mrf.mxu0
  %v2003 = vadd.f32 %v388, %v2002
  %2004 = vmatmul.f32.gmra.mxu0 %v929
  %v2005 = vpop.f32.mrf.mxu0
  %v2006 = vadd.f32 %v388, %v2005
  %2007 = vmatmul.f32.gmra.mxu0 %v932
  %v2008 = vpop.f32.mrf.mxu0
  %v2009 = vadd.f32 %v388, %v2008
  %2010 = vmatmul.f32.gmra.mxu0 %v935
  %v2011 = vpop.f32.mrf.mxu0
  %v2012 = vadd.f32 %v388, %v2011
  %2013 = vmatmul.f32.gmra.mxu0 %v938
  %v2014 = vpop.f32.mrf.mxu0
  %v2015 = vadd.f32 %v388, %v2014
  %2016 = vmatmul.f32.gmra.mxu0 %v941
  %v2017 = vpop.f32.mrf.mxu0
  %v2018 = vadd.f32 %v388, %v2017
  %2019 = vmatmul.f32.gmra.mxu0 %v944
  %v2020 = vpop.f32.mrf.mxu0
  %v2021 = vadd.f32 %v388, %v2020
  %2022 = vmatmul.f32.gmra.mxu0 %v947
  %v2023 = vpop.f32.mrf.mxu0
  %v2024 = vadd.f32 %v388, %v2023
  %2025 = vmatmul.f32.gmra.mxu0 %v950
  %v2026 = vpop.f32.mrf.mxu0
  %v2027 = vadd.f32 %v388, %v2026
  %2028 = vmatmul.f32.gmra.mxu0 %v953
  %v2029 = vpop.f32.mrf.mxu0
  %v2030 = vadd.f32 %v388, %v2029
  %2031 = vmatmul.f32.gmra.mxu0 %v956
  %v2032 = vpop.f32.mrf.mxu0
  %v2033 = vadd.f32 %v388, %v2032
  %2034 = vmatmul.f32.gmra.mxu0 %v959
  %v2035 = vpop.f32.mrf.mxu0
  %v2036 = vadd.f32 %v388, %v2035
  %2037 = vmatmul.f32.gmra.mxu0 %v962
  %v2038 = vpop.f32.mrf.mxu0
  %v2039 = vadd.f32 %v388, %v2038
  %2040 = vmatmul.f32.gmra.mxu0 %v965
  %v2041 = vpop.f32.mrf.mxu0
  %v2042 = vadd.f32 %v388, %v2041
  %2043 = vmatmul.f32.gmra.mxu0 %v968
  %v2044 = vpop.f32.mrf.mxu0
  %v2045 = vadd.f32 %v388, %v2044
  %2046 = vmatmul.f32.gmra.mxu0 %v971
  %v2047 = vpop.f32.mrf.mxu0
  %v2048 = vadd.f32 %v388, %v2047
  %2049 = vmatmul.f32.gmra.mxu0 %v974
  %v2050 = vpop.f32.mrf.mxu0
  %v2051 = vadd.f32 %v388, %v2050
  %2052 = vmatmul.f32.gmra.mxu0 %v977
  %v2053 = vpop.f32.mrf.mxu0
  %v2054 = vadd.f32 %v388, %v2053
  %2055 = vmatmul.f32.gmra.mxu0 %v980
  %v2056 = vpop.f32.mrf.mxu0
  %v2057 = vadd.f32 %v388, %v2056
  %2058 = vmatmul.f32.gmra.mxu0 %v983
  %v2059 = vpop.f32.mrf.mxu0
  %v2060 = vadd.f32 %v388, %v2059
  %2061 = vmatmul.f32.gmra.mxu0 %v986
  %v2062 = vpop.f32.mrf.mxu0
  %v2063 = vadd.f32 %v388, %v2062
  %2064 = vmatmul.f32.gmra.mxu0 %v989
  %v2065 = vpop.f32.mrf.mxu0
  %v2066 = vadd.f32 %v388, %v2065
  %2067 = vmatmul.f32.gmra.mxu0 %v992
  %v2068 = vpop.f32.mrf.mxu0
  %v2069 = vadd.f32 %v388, %v2068
  %2070 = vmatmul.f32.gmra.mxu0 %v995
  %v2071 = vpop.f32.mrf.mxu0
  %v2072 = vadd.f32 %v388, %v2071
  %2073 = vmatmul.f32.gmra.mxu0 %v998
  %v2074 = vpop.f32.mrf.mxu0
  %v2075 = vadd.f32 %v388, %v2074
  %2076 = vmatmul.f32.gmra.mxu0 %v1001
  %v2077 = vpop.f32.mrf.mxu0
  %v2078 = vadd.f32 %v388, %v2077
  %2079 = vmatmul.f32.gmra.mxu0 %v1004
  %v2080 = vpop.f32.mrf.mxu0
  %v2081 = vadd.f32 %v388, %v2080
  %2082 = vmatmul.f32.gmra.mxu0 %v1007
  %v2083 = vpop.f32.mrf.mxu0
  %v2084 = vadd.f32 %v388, %v2083
  %2085 = vmatmul.f32.gmra.mxu0 %v1010
  %v2086 = vpop.f32.mrf.mxu0
  %v2087 = vadd.f32 %v388, %v2086
  %2088 = vmatmul.f32.gmra.mxu0 %v1013
  %v2089 = vpop.f32.mrf.mxu0
  %v2090 = vadd.f32 %v388, %v2089
  %2091 = vmatmul.f32.gmra.mxu0 %v1016
  %v2092 = vpop.f32.mrf.mxu0
  %v2093 = vadd.f32 %v388, %v2092
  %2094 = vmatmul.f32.gmra.mxu0 %v1019
  %v2095 = vpop.f32.mrf.mxu0
  %v2096 = vadd.f32 %v388, %v2095
  %2097 = vmatmul.f32.gmra.mxu0 %v1022
  %v2098 = vpop.f32.mrf.mxu0
  %v2099 = vadd.f32 %v388, %v2098
  %2100 = vmatmul.f32.gmra.mxu0 %v1025
  %v2101 = vpop.f32.mrf.mxu0
  %v2102 = vadd.f32 %v388, %v2101
  %2103 = vmatmul.f32.gmra.mxu0 %v1028
  %v2104 = vpop.f32.mrf.mxu0
  %v2105 = vadd.f32 %v388, %v2104
  %2106 = vmatmul.f32.gmra.mxu0 %v1031
  %v2107 = vpop.f32.mrf.mxu0
  %v2108 = vadd.f32 %v388, %v2107
  %2109 = vmatmul.f32.gmra.mxu0 %v1034
  %v2110 = vpop.f32.mrf.mxu0
  %v2111 = vadd.f32 %v388, %v2110
  %2112 = vmatmul.f32.gmra.mxu0 %v1037
  %v2113 = vpop.f32.mrf.mxu0
  %v2114 = vadd.f32 %v388, %v2113
  %2115 = vmatmul.f32.gmra.mxu0 %v1040
  %v2116 = vpop.f32.mrf.mxu0
  %v2117 = vadd.f32 %v388, %v2116
  %2118 = vmatmul.f32.gmra.mxu0 %v1043
  %v2119 = vpop.f32.mrf.mxu0
  %v2120 = vadd.f32 %v388, %v2119
  %2121 = vmatmul.f32.gmra.mxu0 %v1046
  %v2122 = vpop.f32.mrf.mxu0
  %v2123 = vadd.f32 %v388, %v2122
  %2124 = vmatmul.f32.gmra.mxu0 %v1049
  %v2125 = vpop.f32.mrf.mxu0
  %v2126 = vadd.f32 %v388, %v2125
  %2127 = vmatmul.f32.gmra.mxu0 %v1052
  %v2128 = vpop.f32.mrf.mxu0
  %v2129 = vadd.f32 %v388, %v2128
  %2130 = vmatmul.f32.gmra.mxu0 %v1055
  %v2131 = vpop.f32.mrf.mxu0
  %v2132 = vadd.f32 %v388, %v2131
  %2133 = vmatmul.f32.gmra.mxu0 %v1058
  %v2134 = vpop.f32.mrf.mxu0
  %v2135 = vadd.f32 %v388, %v2134
  %2136 = vmatmul.f32.gmra.mxu0 %v1061
  %v2137 = vpop.f32.mrf.mxu0
  %v2138 = vadd.f32 %v388, %v2137
  %2139 = vmatmul.f32.gmra.mxu0 %v1064
  %v2140 = vpop.f32.mrf.mxu0
  %v2141 = vadd.f32 %v388, %v2140
  %2142 = vmatmul.f32.gmra.mxu0 %v1067
  %v2143 = vpop.f32.mrf.mxu0
  %v2144 = vadd.f32 %v388, %v2143
  %2145 = vmatmul.f32.gmra.mxu0 %v1070
  %v2146 = vpop.f32.mrf.mxu0
  %v2147 = vadd.f32 %v388, %v2146
  %2148 = vmatmul.f32.gmra.mxu0 %v1073
  %v2149 = vpop.f32.mrf.mxu0
  %v2150 = vadd.f32 %v388, %v2149
  %2151 = vmatmul.f32.gmra.mxu0 %v1076
  %v2152 = vpop.f32.mrf.mxu0
  %v2153 = vadd.f32 %v388, %v2152
  %2154 = vmatmul.f32.gmra.mxu0 %v1079
  %v2155 = vpop.f32.mrf.mxu0
  %v2156 = vadd.f32 %v388, %v2155
  %2157 = vmatmul.f32.gmra.mxu0 %v1082
  %v2158 = vpop.f32.mrf.mxu0
  %v2159 = vadd.f32 %v388, %v2158
  %2160 = vmatmul.f32.gmra.mxu0 %v1085
  %v2161 = vpop.f32.mrf.mxu0
  %v2162 = vadd.f32 %v388, %v2161
  %2163 = vmatmul.f32.gmra.mxu0 %v1088
  %v2164 = vpop.f32.mrf.mxu0
  %v2165 = vadd.f32 %v388, %v2164
  %2166 = vmatmul.f32.gmra.mxu0 %v1091
  %v2167 = vpop.f32.mrf.mxu0
  %v2168 = vadd.f32 %v388, %v2167
  %2169 = vmatmul.f32.gmra.mxu0 %v1094
  %v2170 = vpop.f32.mrf.mxu0
  %v2171 = vadd.f32 %v388, %v2170
  %2172 = vmatmul.f32.gmra.mxu0 %v1097
  %v2173 = vpop.f32.mrf.mxu0
  %v2174 = vadd.f32 %v388, %v2173
  %2175 = vmatmul.f32.gmra.mxu0 %v1100
  %v2176 = vpop.f32.mrf.mxu0
  %v2177 = vadd.f32 %v388, %v2176
  %2178 = vmatmul.f32.gmra.mxu0 %v1103
  %v2179 = vpop.f32.mrf.mxu0
  %v2180 = vadd.f32 %v388, %v2179
  %2181 = vmatmul.f32.gmra.mxu0 %v1106
  %v2182 = vpop.f32.mrf.mxu0
  %v2183 = vadd.f32 %v388, %v2182
  %2184 = vmatmul.f32.gmra.mxu0 %v1109
  %v2185 = vpop.f32.mrf.mxu0
  %v2186 = vadd.f32 %v388, %v2185
  %2187 = vmatmul.f32.gmra.mxu0 %v1112
  %v2188 = vpop.f32.mrf.mxu0
  %v2189 = vadd.f32 %v388, %v2188
  %2190 = vmatmul.f32.gmra.mxu0 %v1115
  %v2191 = vpop.f32.mrf.mxu0
  %v2192 = vadd.f32 %v388, %v2191
  %2193 = vmatmul.f32.gmra.mxu0 %v1118
  %v2194 = vpop.f32.mrf.mxu0
  %v2195 = vadd.f32 %v388, %v2194
  %2196 = vmatmul.f32.gmra.mxu0 %v1121
  %v2197 = vpop.f32.mrf.mxu0
  %v2198 = vadd.f32 %v388, %v2197
  %2199 = vmatmul.f32.gmra.mxu0 %v1124
  %v2200 = vpop.f32.mrf.mxu0
  %v2201 = vadd.f32 %v388, %v2200
  %2202 = vmatmul.f32.gmra.mxu0 %v1127
  %v2203 = vpop.f32.mrf.mxu0
  %v2204 = vadd.f32 %v388, %v2203
  %2205 = vmatmul.f32.gmra.mxu0 %v1130
  %v2206 = vpop.f32.mrf.mxu0
  %v2207 = vadd.f32 %v388, %v2206
  %2208 = vmatmul.f32.gmra.mxu0 %v1133
  %v2209 = vpop.f32.mrf.mxu0
  %v2210 = vadd.f32 %v388, %v2209
  %2211 = vmatmul.f32.gmra.mxu0 %v1136
  %v2212 = vpop.f32.mrf.mxu0
  %v2213 = vadd.f32 %v388, %v2212
  %2214 = vmatmul.f32.gmra.mxu0 %v1139
  %v2215 = vpop.f32.mrf.mxu0
  %v2216 = vadd.f32 %v388, %v2215
  %2217 = vmatmul.f32.gmra.mxu0 %v1142
  %v2218 = vpop.f32.mrf.mxu0
  %v2219 = vadd.f32 %v388, %v2218
  %2220 = vmatmul.f32.gmra.mxu0 %v1145
  %v2221 = vpop.f32.mrf.mxu0
  %v2222 = vadd.f32 %v388, %v2221
  %2223 = vmatmul.f32.gmra.mxu0 %v1148
  %v2224 = vpop.f32.mrf.mxu0
  %v2225 = vadd.f32 %v388, %v2224
  %2226 = vmatmul.f32.gmra.mxu0 %v1151
  %v2227 = vpop.f32.mrf.mxu0
  %v2228 = vadd.f32 %v388, %v2227
  %2229 = vmatmul.f32.gmra.mxu0 %v1154
  %v2230 = vpop.f32.mrf.mxu0
  %v2231 = vadd.f32 %v388, %v2230
  %2232 = vmatmul.f32.gmra.mxu0 %v1157
  %v2233 = vpop.f32.mrf.mxu0
  %v2234 = vadd.f32 %v388, %v2233
  %2235 = vmatmul.f32.gmra.mxu0 %v1160
  %v2236 = vpop.f32.mrf.mxu0
  %v2237 = vadd.f32 %v388, %v2236
  %2238 = vmatmul.f32.gmra.mxu0 %v1163
  %v2239 = vpop.f32.mrf.mxu0
  %v2240 = vadd.f32 %v388, %v2239
  %2241 = vmatmul.f32.gmra.mxu0 %v1166
  %v2242 = vpop.f32.mrf.mxu0
  %v2243 = vadd.f32 %v388, %v2242
  %2244 = vmatmul.f32.gmra.mxu0 %v1169
  %v2245 = vpop.f32.mrf.mxu0
  %v2246 = vadd.f32 %v388, %v2245
  %2247 = vmatmul.f32.gmra.mxu0 %v1172
  %v2248 = vpop.f32.mrf.mxu0
  %v2249 = vadd.f32 %v388, %v2248
  %2250 = vmatmul.f32.gmra.mxu0 %v1175
  %v2251 = vpop.f32.mrf.mxu0
  %v2252 = vadd.f32 %v388, %v2251
  %2253 = vmatmul.f32.gmra.mxu0 %v1178
  %v2254 = vpop.f32.mrf.mxu0
  %v2255 = vadd.f32 %v388, %v2254
  %2256 = vmatmul.f32.gmra.mxu0 %v1181
  %v2257 = vpop.f32.mrf.mxu0
  %v2258 = vadd.f32 %v388, %v2257
  %2259 = vmatmul.f32.gmra.mxu0 %v1184
  %v2260 = vpop.f32.mrf.mxu0
  %v2261 = vadd.f32 %v388, %v2260
  %2262 = vmatmul.f32.gmra.mxu0 %v1187
  %v2263 = vpop.f32.mrf.mxu0
  %v2264 = vadd.f32 %v388, %v2263
  %2265 = vmatmul.f32.gmra.mxu0 %v1190
  %v2266 = vpop.f32.mrf.mxu0
  %v2267 = vadd.f32 %v388, %v2266
  %2268 = vmatmul.f32.gmra.mxu0 %v1193
  %v2269 = vpop.f32.mrf.mxu0
  %v2270 = vadd.f32 %v388, %v2269
  %2271 = vmatmul.f32.gmra.mxu0 %v1196
  %v2272 = vpop.f32.mrf.mxu0
  %v2273 = vadd.f32 %v388, %v2272
  %2274 = vmatmul.f32.gmra.mxu0 %v1199
  %v2275 = vpop.f32.mrf.mxu0
  %v2276 = vadd.f32 %v388, %v2275
  %2277 = vmatmul.f32.gmra.mxu0 %v1202
  %v2278 = vpop.f32.mrf.mxu0
  %v2279 = vadd.f32 %v388, %v2278
  %2280 = vmatmul.f32.gmra.mxu0 %v1205
  %v2281 = vpop.f32.mrf.mxu0
  %v2282 = vadd.f32 %v388, %v2281
  %2283 = vmatmul.f32.gmra.mxu0 %v1208
  %v2284 = vpop.f32.mrf.mxu0
  %v2285 = vadd.f32 %v388, %v2284
  %2286 = vmatmul.f32.gmra.mxu0 %v1211
  %v2287 = vpop.f32.mrf.mxu0
  %v2288 = vadd.f32 %v388, %v2287
  %2289 = vmatmul.f32.gmra.mxu0 %v1214
  %v2290 = vpop.f32.mrf.mxu0
  %v2291 = vadd.f32 %v388, %v2290
  %2292 = vmatmul.f32.gmra.mxu0 %v1217
  %v2293 = vpop.f32.mrf.mxu0
  %v2294 = vadd.f32 %v388, %v2293
  %2295 = vmatmul.f32.gmra.mxu0 %v1220
  %v2296 = vpop.f32.mrf.mxu0
  %v2297 = vadd.f32 %v388, %v2296
  %2298 = vmatmul.f32.gmra.mxu0 %v1223
  %v2299 = vpop.f32.mrf.mxu0
  %v2300 = vadd.f32 %v388, %v2299
  %2301 = vmatmul.f32.gmra.mxu0 %v1226
  %v2302 = vpop.f32.mrf.mxu0
  %v2303 = vadd.f32 %v388, %v2302
  %2304 = vmatmul.f32.gmra.mxu0 %v1229
  %v2305 = vpop.f32.mrf.mxu0
  %v2306 = vadd.f32 %v388, %v2305
  %2307 = vmatmul.f32.gmra.mxu0 %v1232
  %v2308 = vpop.f32.mrf.mxu0
  %v2309 = vadd.f32 %v388, %v2308
  %2310 = vmatmul.f32.gmra.mxu0 %v1235
  %v2311 = vpop.f32.mrf.mxu0
  %v2312 = vadd.f32 %v388, %v2311
  %2313 = vmatmul.f32.gmra.mxu0 %v1238
  %v2314 = vpop.f32.mrf.mxu0
  %v2315 = vadd.f32 %v388, %v2314
  %2316 = vmatmul.f32.gmra.mxu0 %v1241
  %v2317 = vpop.f32.mrf.mxu0
  %v2318 = vadd.f32 %v388, %v2317
  %2319 = vmatmul.f32.gmra.mxu0 %v1244
  %v2320 = vpop.f32.mrf.mxu0
  %v2321 = vadd.f32 %v388, %v2320
  %2322 = vmatmul.f32.gmra.mxu0 %v1247
  %v2323 = vpop.f32.mrf.mxu0
  %v2324 = vadd.f32 %v388, %v2323
  %2325 = vmatmul.f32.gmra.mxu0 %v1250
  %v2326 = vpop.f32.mrf.mxu0
  %v2327 = vadd.f32 %v388, %v2326
  %2328 = vmatmul.f32.gmra.mxu0 %v1253
  %v2329 = vpop.f32.mrf.mxu0
  %v2330 = vadd.f32 %v388, %v2329
  %2331 = vmatmul.f32.gmra.mxu0 %v1256
  %v2332 = vpop.f32.mrf.mxu0
  %v2333 = vadd.f32 %v388, %v2332
  %2334 = vmatmul.f32.gmra.mxu0 %v1259
  %v2335 = vpop.f32.mrf.mxu0
  %v2336 = vadd.f32 %v388, %v2335
  %2337 = vmatmul.f32.gmra.mxu0 %v1262
  %v2338 = vpop.f32.mrf.mxu0
  %v2339 = vadd.f32 %v388, %v2338
  %2340 = vmatmul.f32.gmra.mxu0 %v1265
  %v2341 = vpop.f32.mrf.mxu0
  %v2342 = vadd.f32 %v388, %v2341
  %2343 = vmatmul.f32.gmra.mxu0 %v1268
  %v2344 = vpop.f32.mrf.mxu0
  %v2345 = vadd.f32 %v388, %v2344
  %2346 = vmatmul.f32.gmra.mxu0 %v1271
  %v2347 = vpop.f32.mrf.mxu0
  %v2348 = vadd.f32 %v388, %v2347
  %2349 = vmatmul.f32.gmra.mxu0 %v1274
  %v2350 = vpop.f32.mrf.mxu0
  %v2351 = vadd.f32 %v388, %v2350
  %2352 = vmatmul.f32.gmra.mxu0 %v1277
  %v2353 = vpop.f32.mrf.mxu0
  %v2354 = vadd.f32 %v388, %v2353
  %2355 = vmatmul.f32.gmra.mxu0 %v1280
  %v2356 = vpop.f32.mrf.mxu0
  %v2357 = vadd.f32 %v388, %v2356
  %2358 = vmatmul.f32.gmra.mxu0 %v1283
  %v2359 = vpop.f32.mrf.mxu0
  %v2360 = vadd.f32 %v388, %v2359
  %2361 = vmatmul.f32.gmra.mxu0 %v1286
  %v2362 = vpop.f32.mrf.mxu0
  %v2363 = vadd.f32 %v388, %v2362
  %2364 = vmatmul.f32.gmra.mxu0 %v1289
  %v2365 = vpop.f32.mrf.mxu0
  %v2366 = vadd.f32 %v388, %v2365
  %2367 = vmatmul.f32.gmra.mxu0 %v1292
  %v2368 = vpop.f32.mrf.mxu0
  %v2369 = vadd.f32 %v388, %v2368
  %2370 = vmatmul.f32.gmra.mxu0 %v1295
  %v2371 = vpop.f32.mrf.mxu0
  %v2372 = vadd.f32 %v388, %v2371
  %2373 = vmatmul.f32.gmra.mxu0 %v1298
  %v2374 = vpop.f32.mrf.mxu0
  %v2375 = vadd.f32 %v388, %v2374
  %2376 = vmatmul.f32.gmra.mxu0 %v1301
  %v2377 = vpop.f32.mrf.mxu0
  %v2378 = vadd.f32 %v388, %v2377
  %2379 = vmatmul.f32.gmra.mxu0 %v1304
  %v2380 = vpop.f32.mrf.mxu0
  %v2381 = vadd.f32 %v388, %v2380
  %2382 = vmatmul.f32.gmra.mxu0 %v1307
  %v2383 = vpop.f32.mrf.mxu0
  %v2384 = vadd.f32 %v388, %v2383
  %2385 = vmatmul.f32.gmra.mxu0 %v1310
  %v2386 = vpop.f32.mrf.mxu0
  %v2387 = vadd.f32 %v388, %v2386
  %2388 = vmatmul.f32.gmra.mxu0 %v1313
  %v2389 = vpop.f32.mrf.mxu0
  %v2390 = vadd.f32 %v388, %v2389
  %2391 = vmatmul.f32.gmra.mxu0 %v1316
  %v2392 = vpop.f32.mrf.mxu0
  %v2393 = vadd.f32 %v388, %v2392
  %2394 = vmatmul.f32.gmra.mxu0 %v1319
  %v2395 = vpop.f32.mrf.mxu0
  %v2396 = vadd.f32 %v388, %v2395
  %2397 = vmatmul.f32.gmra.mxu0 %v1322
  %v2398 = vpop.f32.mrf.mxu0
  %v2399 = vadd.f32 %v388, %v2398
  %2400 = vmatmul.f32.gmra.mxu0 %v1325
  %v2401 = vpop.f32.mrf.mxu0
  %v2402 = vadd.f32 %v388, %v2401
  %2403 = vmatmul.f32.gmra.mxu0 %v1328
  %v2404 = vpop.f32.mrf.mxu0
  %v2405 = vadd.f32 %v388, %v2404
  %2406 = vmatmul.f32.gmra.mxu0 %v1331
  %v2407 = vpop.f32.mrf.mxu0
  %v2408 = vadd.f32 %v388, %v2407
  %2409 = vmatmul.f32.gmra.mxu0 %v1334
  %v2410 = vpop.f32.mrf.mxu0
  %v2411 = vadd.f32 %v388, %v2410
  %2412 = vmatmul.f32.gmra.mxu0 %v1337
  %v2413 = vpop.f32.mrf.mxu0
  %v2414 = vadd.f32 %v388, %v2413
  %2415 = vmatmul.f32.gmra.mxu0 %v1340
  %v2416 = vpop.f32.mrf.mxu0
  %v2417 = vadd.f32 %v388, %v2416
  %2418 = vmatmul.f32.gmra.mxu0 %v1343
  %v2419 = vpop.f32.mrf.mxu0
  %v2420 = vadd.f32 %v388, %v2419
  %2421 = vmatmul.f32.gmra.mxu0 %v1346
  %v2422 = vpop.f32.mrf.mxu0
  %v2423 = vadd.f32 %v388, %v2422
  %2424 = vmatmul.f32.gmra.mxu0 %v1349
  %v2425 = vpop.f32.mrf.mxu0
  %v2426 = vadd.f32 %v388, %v2425
  %2427 = vmatmul.f32.gmra.mxu0 %v1352
  %v2428 = vpop.f32.mrf.mxu0
  %v2429 = vadd.f32 %v388, %v2428
  %2430 = vmatmul.f32.gmra.mxu0 %v1355
  %v2431 = vpop.f32.mrf.mxu0
  %v2432 = vadd.f32 %v388, %v2431
  %2433 = vmatmul.f32.gmra.mxu0 %v1358
  %v2434 = vpop.f32.mrf.mxu0
  %v2435 = vadd.f32 %v388, %v2434
  %2436 = vmatmul.f32.gmra.mxu0 %v1361
  %v2437 = vpop.f32.mrf.mxu0
  %v2438 = vadd.f32 %v388, %v2437
  %2439 = vmatmul.f32.gmra.mxu0 %v1364
  %v2440 = vpop.f32.mrf.mxu0
  %v2441 = vadd.f32 %v388, %v2440
  %2442 = vmatmul.f32.gmra.mxu0 %v1367
  %v2443 = vpop.f32.mrf.mxu0
  %v2444 = vadd.f32 %v388, %v2443
  %2445 = vmatmul.f32.gmra.mxu0 %v1370
  %v2446 = vpop.f32.mrf.mxu0
  %v2447 = vadd.f32 %v388, %v2446
  %2448 = vmatmul.f32.gmra.mxu0 %v1373
  %v2449 = vpop.f32.mrf.mxu0
  %v2450 = vadd.f32 %v388, %v2449
  %2451 = vmatmul.f32.gmra.mxu0 %v1376
  %v2452 = vpop.f32.mrf.mxu0
  %v2453 = vadd.f32 %v388, %v2452
  %2454 = vmatmul.f32.gmra.mxu0 %v1379
  %v2455 = vpop.f32.mrf.mxu0
  %v2456 = vadd.f32 %v388, %v2455
  %2457 = vmatmul.f32.gmra.mxu0 %v1382
  %v2458 = vpop.f32.mrf.mxu0
  %v2459 = vadd.f32 %v388, %v2458
  %2460 = vmatmul.f32.gmra.mxu0 %v1385
  %v2461 = vpop.f32.mrf.mxu0
  %v2462 = vadd.f32 %v388, %v2461
  %2463 = vmatmul.f32.gmra.mxu0 %v1388
  %v2464 = vpop.f32.mrf.mxu0
  %v2465 = vadd.f32 %v388, %v2464
  %2466 = vmatmul.f32.gmra.mxu0 %v1391
  %v2467 = vpop.f32.mrf.mxu0
  %v2468 = vadd.f32 %v388, %v2467
  %2469 = vmatmul.f32.gmra.mxu0 %v1394
  %v2470 = vpop.f32.mrf.mxu0
  %v2471 = vadd.f32 %v388, %v2470
  %2472 = vmatmul.f32.gmra.mxu0 %v1397
  %v2473 = vpop.f32.mrf.mxu0
  %v2474 = vadd.f32 %v388, %v2473
  %2475 = vmatmul.f32.gmra.mxu0 %v1400
  %v2476 = vpop.f32.mrf.mxu0
  %v2477 = vadd.f32 %v388, %v2476
  %2478 = vmatmul.f32.gmra.mxu0 %v1403
  %v2479 = vpop.f32.mrf.mxu0
  %v2480 = vadd.f32 %v388, %v2479
  %2481 = vmatmul.f32.gmra.mxu0 %v1406
  %v2482 = vpop.f32.mrf.mxu0
  %v2483 = vadd.f32 %v388, %v2482
  %2484 = vmatmul.f32.gmra.mxu0 %v1409
  %v2485 = vpop.f32.mrf.mxu0
  %v2486 = vadd.f32 %v388, %v2485
  %2487 = vmatmul.f32.gmra.mxu0 %v1412
  %v2488 = vpop.f32.mrf.mxu0
  %v2489 = vadd.f32 %v388, %v2488
  %2490 = vmatmul.f32.gmra.mxu0 %v1415
  %v2491 = vpop.f32.mrf.mxu0
  %v2492 = vadd.f32 %v388, %v2491
  %2493 = vmatmul.f32.gmra.mxu0 %v1418
  %v2494 = vpop.f32.mrf.mxu0
  %v2495 = vadd.f32 %v388, %v2494
  %2496 = vmatmul.f32.gmra.mxu0 %v1421
  %v2497 = vpop.f32.mrf.mxu0
  %v2498 = vadd.f32 %v388, %v2497
  %2499 = vmatmul.f32.gmra.mxu0 %v1424
  %v2500 = vpop.f32.mrf.mxu0
  %v2501 = vadd.f32 %v388, %v2500
  %2502 = vmatmul.f32.gmra.mxu0 %v1427
  %v2503 = vpop.f32.mrf.mxu0
  %v2504 = vadd.f32 %v388, %v2503
  %2505 = vmatmul.f32.gmra.mxu0 %v1430
  %v2506 = vpop.f32.mrf.mxu0
  %v2507 = vadd.f32 %v388, %v2506
  %2508 = vmatmul.f32.gmra.mxu0 %v1433
  %v2509 = vpop.f32.mrf.mxu0
  %v2510 = vadd.f32 %v388, %v2509
  %2511 = vmatmul.f32.gmra.mxu0 %v1436
  %v2512 = vpop.f32.mrf.mxu0
  %v2513 = vadd.f32 %v388, %v2512
  %2514 = vmatmul.f32.gmra.mxu0 %v1439
  %v2515 = vpop.f32.mrf.mxu0
  %v2516 = vadd.f32 %v388, %v2515
  %2517 = vmatmul.f32.gmra.mxu0 %v1442
  %v2518 = vpop.f32.mrf.mxu0
  %v2519 = vadd.f32 %v388, %v2518
  %2520 = vmatmul.f32.gmra.mxu0 %v1445
  %v2521 = vpop.f32.mrf.mxu0
  %v2522 = vadd.f32 %v388, %v2521
  %2523 = vdwg.mxu0
  %vm2524 = vcmp.gt.f32.partialorder %v1469, 0.0
  %vm2525 = vcmp.gt.f32.partialorder %v1472, 0.0
  %vm2526 = vcmp.gt.f32.partialorder %v1475, 0.0
  %vm2527 = vcmp.gt.f32.partialorder %v1478, 0.0
  %vm2528 = vcmp.gt.f32.partialorder %v1481, 0.0
  %vm2529 = vcmp.gt.f32.partialorder %v1484, 0.0
  %vm2530 = vcmp.gt.f32.partialorder %v1487, 0.0
  %vm2531 = vcmp.gt.f32.partialorder %v1490, 0.0
  %vm2532 = vcmp.gt.f32.partialorder %v1493, 0.0
  %vm2533 = vcmp.gt.f32.partialorder %v1496, 0.0
  %vm2534 = vcmp.gt.f32.partialorder %v1499, 0.0
  %vm2535 = vcmp.gt.f32.partialorder %v1502, 0.0
  %vm2536 = vcmp.gt.f32.partialorder %v1505, 0.0
  %vm2537 = vcmp.gt.f32.partialorder %v1508, 0.0
  %vm2538 = vcmp.gt.f32.partialorder %v1511, 0.0
  %vm2539 = vcmp.gt.f32.partialorder %v1514, 0.0
  %vm2540 = vcmp.gt.f32.partialorder %v1517, 0.0
  %vm2541 = vcmp.gt.f32.partialorder %v1520, 0.0
  %vm2542 = vcmp.gt.f32.partialorder %v1523, 0.0
  %vm2543 = vcmp.gt.f32.partialorder %v1526, 0.0
  %vm2544 = vcmp.gt.f32.partialorder %v1529, 0.0
  %vm2545 = vcmp.gt.f32.partialorder %v1532, 0.0
  %vm2546 = vcmp.gt.f32.partialorder %v1535, 0.0
  %vm2547 = vcmp.gt.f32.partialorder %v1538, 0.0
  %vm2548 = vcmp.gt.f32.partialorder %v1541, 0.0
  %vm2549 = vcmp.gt.f32.partialorder %v1544, 0.0
  %vm2550 = vcmp.gt.f32.partialorder %v1547, 0.0
  %vm2551 = vcmp.gt.f32.partialorder %v1550, 0.0
  %vm2552 = vcmp.gt.f32.partialorder %v1553, 0.0
  %vm2553 = vcmp.gt.f32.partialorder %v1556, 0.0
  %vm2554 = vcmp.gt.f32.partialorder %v1559, 0.0
  %vm2555 = vcmp.gt.f32.partialorder %v1562, 0.0
  %vm2556 = vcmp.gt.f32.partialorder %v1565, 0.0
  %vm2557 = vcmp.gt.f32.partialorder %v1568, 0.0
  %vm2558 = vcmp.gt.f32.partialorder %v1571, 0.0
  %vm2559 = vcmp.gt.f32.partialorder %v1574, 0.0
  %vm2560 = vcmp.gt.f32.partialorder %v1577, 0.0
  %vm2561 = vcmp.gt.f32.partialorder %v1580, 0.0
  %vm2562 = vcmp.gt.f32.partialorder %v1583, 0.0
  %vm2563 = vcmp.gt.f32.partialorder %v1586, 0.0
  %vm2564 = vcmp.gt.f32.partialorder %v1589, 0.0
  %vm2565 = vcmp.gt.f32.partialorder %v1592, 0.0
  %vm2566 = vcmp.gt.f32.partialorder %v1595, 0.0
  %vm2567 = vcmp.gt.f32.partialorder %v1598, 0.0
  %vm2568 = vcmp.gt.f32.partialorder %v1601, 0.0
  %vm2569 = vcmp.gt.f32.partialorder %v1604, 0.0
  %vm2570 = vcmp.gt.f32.partialorder %v1607, 0.0
  %vm2571 = vcmp.gt.f32.partialorder %v1610, 0.0
  %vm2572 = vcmp.gt.f32.partialorder %v1613, 0.0
  %vm2573 = vcmp.gt.f32.partialorder %v1616, 0.0
  %vm2574 = vcmp.gt.f32.partialorder %v1619, 0.0
  %vm2575 = vcmp.gt.f32.partialorder %v1622, 0.0
  %vm2576 = vcmp.gt.f32.partialorder %v1625, 0.0
  %vm2577 = vcmp.gt.f32.partialorder %v1628, 0.0
  %vm2578 = vcmp.gt.f32.partialorder %v1631, 0.0
  %vm2579 = vcmp.gt.f32.partialorder %v1634, 0.0
  %vm2580 = vcmp.gt.f32.partialorder %v1637, 0.0
  %vm2581 = vcmp.gt.f32.partialorder %v1640, 0.0
  %vm2582 = vcmp.gt.f32.partialorder %v1643, 0.0
  %vm2583 = vcmp.gt.f32.partialorder %v1646, 0.0
  %vm2584 = vcmp.gt.f32.partialorder %v1649, 0.0
  %vm2585 = vcmp.gt.f32.partialorder %v1652, 0.0
  %vm2586 = vcmp.gt.f32.partialorder %v1655, 0.0
  %vm2587 = vcmp.gt.f32.partialorder %v1658, 0.0
  %vm2588 = vcmp.gt.f32.partialorder %v1661, 0.0
  %vm2589 = vcmp.gt.f32.partialorder %v1664, 0.0
  %vm2590 = vcmp.gt.f32.partialorder %v1667, 0.0
  %vm2591 = vcmp.gt.f32.partialorder %v1670, 0.0
  %vm2592 = vcmp.gt.f32.partialorder %v1673, 0.0
  %vm2593 = vcmp.gt.f32.partialorder %v1676, 0.0
  %vm2594 = vcmp.gt.f32.partialorder %v1679, 0.0
  %vm2595 = vcmp.gt.f32.partialorder %v1682, 0.0
  %vm2596 = vcmp.gt.f32.partialorder %v1685, 0.0
  %vm2597 = vcmp.gt.f32.partialorder %v1688, 0.0
  %vm2598 = vcmp.gt.f32.partialorder %v1691, 0.0
  %vm2599 = vcmp.gt.f32.partialorder %v1694, 0.0
  %vm2600 = vcmp.gt.f32.partialorder %v1697, 0.0
  %vm2601 = vcmp.gt.f32.partialorder %v1700, 0.0
  %vm2602 = vcmp.gt.f32.partialorder %v1703, 0.0
  %vm2603 = vcmp.gt.f32.partialorder %v1706, 0.0
  %vm2604 = vcmp.gt.f32.partialorder %v1709, 0.0
  %vm2605 = vcmp.gt.f32.partialorder %v1712, 0.0
  %vm2606 = vcmp.gt.f32.partialorder %v1715, 0.0
  %vm2607 = vcmp.gt.f32.partialorder %v1718, 0.0
  %vm2608 = vcmp.gt.f32.partialorder %v1721, 0.0
  %vm2609 = vcmp.gt.f32.partialorder %v1724, 0.0
  %vm2610 = vcmp.gt.f32.partialorder %v1727, 0.0
  %vm2611 = vcmp.gt.f32.partialorder %v1730, 0.0
  %vm2612 = vcmp.gt.f32.partialorder %v1733, 0.0
  %vm2613 = vcmp.gt.f32.partialorder %v1736, 0.0
  %vm2614 = vcmp.gt.f32.partialorder %v1739, 0.0
  %vm2615 = vcmp.gt.f32.partialorder %v1742, 0.0
  %vm2616 = vcmp.gt.f32.partialorder %v1745, 0.0
  %vm2617 = vcmp.gt.f32.partialorder %v1748, 0.0
  %vm2618 = vcmp.gt.f32.partialorder %v1751, 0.0
  %vm2619 = vcmp.gt.f32.partialorder %v1754, 0.0
  %vm2620 = vcmp.gt.f32.partialorder %v1757, 0.0
  %vm2621 = vcmp.gt.f32.partialorder %v1760, 0.0
  %vm2622 = vcmp.gt.f32.partialorder %v1763, 0.0
  %vm2623 = vcmp.gt.f32.partialorder %v1766, 0.0
  %vm2624 = vcmp.gt.f32.partialorder %v1769, 0.0
  %vm2625 = vcmp.gt.f32.partialorder %v1772, 0.0
  %vm2626 = vcmp.gt.f32.partialorder %v1775, 0.0
  %vm2627 = vcmp.gt.f32.partialorder %v1778, 0.0
  %vm2628 = vcmp.gt.f32.partialorder %v1781, 0.0
  %vm2629 = vcmp.gt.f32.partialorder %v1784, 0.0
  %vm2630 = vcmp.gt.f32.partialorder %v1787, 0.0
  %vm2631 = vcmp.gt.f32.partialorder %v1790, 0.0
  %vm2632 = vcmp.gt.f32.partialorder %v1793, 0.0
  %vm2633 = vcmp.gt.f32.partialorder %v1796, 0.0
  %vm2634 = vcmp.gt.f32.partialorder %v1799, 0.0
  %vm2635 = vcmp.gt.f32.partialorder %v1802, 0.0
  %vm2636 = vcmp.gt.f32.partialorder %v1805, 0.0
  %vm2637 = vcmp.gt.f32.partialorder %v1808, 0.0
  %vm2638 = vcmp.gt.f32.partialorder %v1811, 0.0
  %vm2639 = vcmp.gt.f32.partialorder %v1814, 0.0
  %vm2640 = vcmp.gt.f32.partialorder %v1817, 0.0
  %vm2641 = vcmp.gt.f32.partialorder %v1820, 0.0
  %vm2642 = vcmp.gt.f32.partialorder %v1823, 0.0
  %vm2643 = vcmp.gt.f32.partialorder %v1826, 0.0
  %vm2644 = vcmp.gt.f32.partialorder %v1829, 0.0
  %vm2645 = vcmp.gt.f32.partialorder %v1832, 0.0
  %vm2646 = vcmp.gt.f32.partialorder %v1835, 0.0
  %vm2647 = vcmp.gt.f32.partialorder %v1838, 0.0
  %vm2648 = vcmp.gt.f32.partialorder %v1841, 0.0
  %vm2649 = vcmp.gt.f32.partialorder %v1844, 0.0
  %vm2650 = vcmp.gt.f32.partialorder %v1847, 0.0
  %vm2651 = vcmp.gt.f32.partialorder %v1850, 0.0
  %vm2652 = vcmp.gt.f32.partialorder %v1853, 0.0
  %vm2653 = vcmp.gt.f32.partialorder %v1856, 0.0
  %vm2654 = vcmp.gt.f32.partialorder %v1859, 0.0
  %vm2655 = vcmp.gt.f32.partialorder %v1862, 0.0
  %vm2656 = vcmp.gt.f32.partialorder %v1865, 0.0
  %vm2657 = vcmp.gt.f32.partialorder %v1868, 0.0
  %vm2658 = vcmp.gt.f32.partialorder %v1871, 0.0
  %vm2659 = vcmp.gt.f32.partialorder %v1874, 0.0
  %vm2660 = vcmp.gt.f32.partialorder %v1877, 0.0
  %vm2661 = vcmp.gt.f32.partialorder %v1880, 0.0
  %vm2662 = vcmp.gt.f32.partialorder %v1883, 0.0
  %vm2663 = vcmp.gt.f32.partialorder %v1886, 0.0
  %vm2664 = vcmp.gt.f32.partialorder %v1889, 0.0
  %vm2665 = vcmp.gt.f32.partialorder %v1892, 0.0
  %vm2666 = vcmp.gt.f32.partialorder %v1895, 0.0
  %vm2667 = vcmp.gt.f32.partialorder %v1898, 0.0
  %vm2668 = vcmp.gt.f32.partialorder %v1901, 0.0
  %vm2669 = vcmp.gt.f32.partialorder %v1904, 0.0
  %vm2670 = vcmp.gt.f32.partialorder %v1907, 0.0
  %vm2671 = vcmp.gt.f32.partialorder %v1910, 0.0
  %vm2672 = vcmp.gt.f32.partialorder %v1913, 0.0
  %vm2673 = vcmp.gt.f32.partialorder %v1916, 0.0
  %vm2674 = vcmp.gt.f32.partialorder %v1919, 0.0
  %vm2675 = vcmp.gt.f32.partialorder %v1922, 0.0
  %vm2676 = vcmp.gt.f32.partialorder %v1925, 0.0
  %vm2677 = vcmp.gt.f32.partialorder %v1928, 0.0
  %vm2678 = vcmp.gt.f32.partialorder %v1931, 0.0
  %vm2679 = vcmp.gt.f32.partialorder %v1934, 0.0
  %vm2680 = vcmp.gt.f32.partialorder %v1937, 0.0
  %vm2681 = vcmp.gt.f32.partialorder %v1940, 0.0
  %vm2682 = vcmp.gt.f32.partialorder %v1943, 0.0
  %vm2683 = vcmp.gt.f32.partialorder %v1946, 0.0
  %vm2684 = vcmp.gt.f32.partialorder %v1949, 0.0
  %vm2685 = vcmp.gt.f32.partialorder %v1952, 0.0
  %vm2686 = vcmp.gt.f32.partialorder %v1955, 0.0
  %vm2687 = vcmp.gt.f32.partialorder %v1958, 0.0
  %vm2688 = vcmp.gt.f32.partialorder %v1961, 0.0
  %vm2689 = vcmp.gt.f32.partialorder %v1964, 0.0
  %vm2690 = vcmp.gt.f32.partialorder %v1967, 0.0
  %vm2691 = vcmp.gt.f32.partialorder %v1970, 0.0
  %vm2692 = vcmp.gt.f32.partialorder %v1973, 0.0
  %vm2693 = vcmp.gt.f32.partialorder %v1976, 0.0
  %vm2694 = vcmp.gt.f32.partialorder %v1979, 0.0
  %vm2695 = vcmp.gt.f32.partialorder %v1982, 0.0
  %vm2696 = vcmp.gt.f32.partialorder %v1985, 0.0
  %vm2697 = vcmp.gt.f32.partialorder %v1988, 0.0
  %vm2698 = vcmp.gt.f32.partialorder %v1991, 0.0
  %vm2699 = vcmp.gt.f32.partialorder %v1994, 0.0
  %vm2700 = vcmp.gt.f32.partialorder %v1997, 0.0
  %vm2701 = vcmp.gt.f32.partialorder %v2000, 0.0
  %vm2702 = vcmp.gt.f32.partialorder %v2003, 0.0
  %vm2703 = vcmp.gt.f32.partialorder %v2006, 0.0
  %vm2704 = vcmp.gt.f32.partialorder %v2009, 0.0
  %vm2705 = vcmp.gt.f32.partialorder %v2012, 0.0
  %vm2706 = vcmp.gt.f32.partialorder %v2015, 0.0
  %vm2707 = vcmp.gt.f32.partialorder %v2018, 0.0
  %vm2708 = vcmp.gt.f32.partialorder %v2021, 0.0
  %vm2709 = vcmp.gt.f32.partialorder %v2024, 0.0
  %vm2710 = vcmp.gt.f32.partialorder %v2027, 0.0
  %vm2711 = vcmp.gt.f32.partialorder %v2030, 0.0
  %vm2712 = vcmp.gt.f32.partialorder %v2033, 0.0
  %vm2713 = vcmp.gt.f32.partialorder %v2036, 0.0
  %vm2714 = vcmp.gt.f32.partialorder %v2039, 0.0
  %vm2715 = vcmp.gt.f32.partialorder %v2042, 0.0
  %vm2716 = vcmp.gt.f32.partialorder %v2045, 0.0
  %vm2717 = vcmp.gt.f32.partialorder %v2048, 0.0
  %vm2718 = vcmp.gt.f32.partialorder %v2051, 0.0
  %vm2719 = vcmp.gt.f32.partialorder %v2054, 0.0
  %vm2720 = vcmp.gt.f32.partialorder %v2057, 0.0
  %vm2721 = vcmp.gt.f32.partialorder %v2060, 0.0
  %vm2722 = vcmp.gt.f32.partialorder %v2063, 0.0
  %vm2723 = vcmp.gt.f32.partialorder %v2066, 0.0
  %vm2724 = vcmp.gt.f32.partialorder %v2069, 0.0
  %vm2725 = vcmp.gt.f32.partialorder %v2072, 0.0
  %vm2726 = vcmp.gt.f32.partialorder %v2075, 0.0
  %vm2727 = vcmp.gt.f32.partialorder %v2078, 0.0
  %vm2728 = vcmp.gt.f32.partialorder %v2081, 0.0
  %vm2729 = vcmp.gt.f32.partialorder %v2084, 0.0
  %vm2730 = vcmp.gt.f32.partialorder %v2087, 0.0
  %vm2731 = vcmp.gt.f32.partialorder %v2090, 0.0
  %vm2732 = vcmp.gt.f32.partialorder %v2093, 0.0
  %vm2733 = vcmp.gt.f32.partialorder %v2096, 0.0
  %vm2734 = vcmp.gt.f32.partialorder %v2099, 0.0
  %vm2735 = vcmp.gt.f32.partialorder %v2102, 0.0
  %vm2736 = vcmp.gt.f32.partialorder %v2105, 0.0
  %vm2737 = vcmp.gt.f32.partialorder %v2108, 0.0
  %vm2738 = vcmp.gt.f32.partialorder %v2111, 0.0
  %vm2739 = vcmp.gt.f32.partialorder %v2114, 0.0
  %vm2740 = vcmp.gt.f32.partialorder %v2117, 0.0
  %vm2741 = vcmp.gt.f32.partialorder %v2120, 0.0
  %vm2742 = vcmp.gt.f32.partialorder %v2123, 0.0
  %vm2743 = vcmp.gt.f32.partialorder %v2126, 0.0
  %vm2744 = vcmp.gt.f32.partialorder %v2129, 0.0
  %vm2745 = vcmp.gt.f32.partialorder %v2132, 0.0
  %vm2746 = vcmp.gt.f32.partialorder %v2135, 0.0
  %vm2747 = vcmp.gt.f32.partialorder %v2138, 0.0
  %vm2748 = vcmp.gt.f32.partialorder %v2141, 0.0
  %vm2749 = vcmp.gt.f32.partialorder %v2144, 0.0
  %vm2750 = vcmp.gt.f32.partialorder %v2147, 0.0
  %vm2751 = vcmp.gt.f32.partialorder %v2150, 0.0
  %vm2752 = vcmp.gt.f32.partialorder %v2153, 0.0
  %vm2753 = vcmp.gt.f32.partialorder %v2156, 0.0
  %vm2754 = vcmp.gt.f32.partialorder %v2159, 0.0
  %vm2755 = vcmp.gt.f32.partialorder %v2162, 0.0
  %vm2756 = vcmp.gt.f32.partialorder %v2165, 0.0
  %vm2757 = vcmp.gt.f32.partialorder %v2168, 0.0
  %vm2758 = vcmp.gt.f32.partialorder %v2171, 0.0
  %vm2759 = vcmp.gt.f32.partialorder %v2174, 0.0
  %vm2760 = vcmp.gt.f32.partialorder %v2177, 0.0
  %vm2761 = vcmp.gt.f32.partialorder %v2180, 0.0
  %vm2762 = vcmp.gt.f32.partialorder %v2183, 0.0
  %vm2763 = vcmp.gt.f32.partialorder %v2186, 0.0
  %vm2764 = vcmp.gt.f32.partialorder %v2189, 0.0
  %vm2765 = vcmp.gt.f32.partialorder %v2192, 0.0
  %vm2766 = vcmp.gt.f32.partialorder %v2195, 0.0
  %vm2767 = vcmp.gt.f32.partialorder %v2198, 0.0
  %vm2768 = vcmp.gt.f32.partialorder %v2201, 0.0
  %vm2769 = vcmp.gt.f32.partialorder %v2204, 0.0
  %vm2770 = vcmp.gt.f32.partialorder %v2207, 0.0
  %vm2771 = vcmp.gt.f32.partialorder %v2210, 0.0
  %vm2772 = vcmp.gt.f32.partialorder %v2213, 0.0
  %vm2773 = vcmp.gt.f32.partialorder %v2216, 0.0
  %vm2774 = vcmp.gt.f32.partialorder %v2219, 0.0
  %vm2775 = vcmp.gt.f32.partialorder %v2222, 0.0
  %vm2776 = vcmp.gt.f32.partialorder %v2225, 0.0
  %vm2777 = vcmp.gt.f32.partialorder %v2228, 0.0
  %vm2778 = vcmp.gt.f32.partialorder %v2231, 0.0
  %vm2779 = vcmp.gt.f32.partialorder %v2234, 0.0
  %vm2780 = vcmp.gt.f32.partialorder %v2237, 0.0
  %vm2781 = vcmp.gt.f32.partialorder %v2240, 0.0
  %vm2782 = vcmp.gt.f32.partialorder %v2243, 0.0
  %vm2783 = vcmp.gt.f32.partialorder %v2246, 0.0
  %vm2784 = vcmp.gt.f32.partialorder %v2249, 0.0
  %vm2785 = vcmp.gt.f32.partialorder %v2252, 0.0
  %vm2786 = vcmp.gt.f32.partialorder %v2255, 0.0
  %vm2787 = vcmp.gt.f32.partialorder %v2258, 0.0
  %vm2788 = vcmp.gt.f32.partialorder %v2261, 0.0
  %vm2789 = vcmp.gt.f32.partialorder %v2264, 0.0
  %vm2790 = vcmp.gt.f32.partialorder %v2267, 0.0
  %vm2791 = vcmp.gt.f32.partialorder %v2270, 0.0
  %vm2792 = vcmp.gt.f32.partialorder %v2273, 0.0
  %vm2793 = vcmp.gt.f32.partialorder %v2276, 0.0
  %vm2794 = vcmp.gt.f32.partialorder %v2279, 0.0
  %vm2795 = vcmp.gt.f32.partialorder %v2282, 0.0
  %vm2796 = vcmp.gt.f32.partialorder %v2285, 0.0
  %vm2797 = vcmp.gt.f32.partialorder %v2288, 0.0
  %vm2798 = vcmp.gt.f32.partialorder %v2291, 0.0
  %vm2799 = vcmp.gt.f32.partialorder %v2294, 0.0
  %vm2800 = vcmp.gt.f32.partialorder %v2297, 0.0
  %vm2801 = vcmp.gt.f32.partialorder %v2300, 0.0
  %vm2802 = vcmp.gt.f32.partialorder %v2303, 0.0
  %vm2803 = vcmp.gt.f32.partialorder %v2306, 0.0
  %vm2804 = vcmp.gt.f32.partialorder %v2309, 0.0
  %vm2805 = vcmp.gt.f32.partialorder %v2312, 0.0
  %vm2806 = vcmp.gt.f32.partialorder %v2315, 0.0
  %vm2807 = vcmp.gt.f32.partialorder %v2318, 0.0
  %vm2808 = vcmp.gt.f32.partialorder %v2321, 0.0
  %vm2809 = vcmp.gt.f32.partialorder %v2324, 0.0
  %vm2810 = vcmp.gt.f32.partialorder %v2327, 0.0
  %vm2811 = vcmp.gt.f32.partialorder %v2330, 0.0
  %vm2812 = vcmp.gt.f32.partialorder %v2333, 0.0
  %vm2813 = vcmp.gt.f32.partialorder %v2336, 0.0
  %vm2814 = vcmp.gt.f32.partialorder %v2339, 0.0
  %vm2815 = vcmp.gt.f32.partialorder %v2342, 0.0
  %vm2816 = vcmp.gt.f32.partialorder %v2345, 0.0
  %vm2817 = vcmp.gt.f32.partialorder %v2348, 0.0
  %vm2818 = vcmp.gt.f32.partialorder %v2351, 0.0
  %vm2819 = vcmp.gt.f32.partialorder %v2354, 0.0
  %vm2820 = vcmp.gt.f32.partialorder %v2357, 0.0
  %vm2821 = vcmp.gt.f32.partialorder %v2360, 0.0
  %vm2822 = vcmp.gt.f32.partialorder %v2363, 0.0
  %vm2823 = vcmp.gt.f32.partialorder %v2366, 0.0
  %vm2824 = vcmp.gt.f32.partialorder %v2369, 0.0
  %vm2825 = vcmp.gt.f32.partialorder %v2372, 0.0
  %vm2826 = vcmp.gt.f32.partialorder %v2375, 0.0
  %vm2827 = vcmp.gt.f32.partialorder %v2378, 0.0
  %vm2828 = vcmp.gt.f32.partialorder %v2381, 0.0
  %vm2829 = vcmp.gt.f32.partialorder %v2384, 0.0
  %vm2830 = vcmp.gt.f32.partialorder %v2387, 0.0
  %vm2831 = vcmp.gt.f32.partialorder %v2390, 0.0
  %vm2832 = vcmp.gt.f32.partialorder %v2393, 0.0
  %vm2833 = vcmp.gt.f32.partialorder %v2396, 0.0
  %vm2834 = vcmp.gt.f32.partialorder %v2399, 0.0
  %vm2835 = vcmp.gt.f32.partialorder %v2402, 0.0
  %vm2836 = vcmp.gt.f32.partialorder %v2405, 0.0
  %vm2837 = vcmp.gt.f32.partialorder %v2408, 0.0
  %vm2838 = vcmp.gt.f32.partialorder %v2411, 0.0
  %vm2839 = vcmp.gt.f32.partialorder %v2414, 0.0
  %vm2840 = vcmp.gt.f32.partialorder %v2417, 0.0
  %vm2841 = vcmp.gt.f32.partialorder %v2420, 0.0
  %vm2842 = vcmp.gt.f32.partialorder %v2423, 0.0
  %vm2843 = vcmp.gt.f32.partialorder %v2426, 0.0
  %vm2844 = vcmp.gt.f32.partialorder %v2429, 0.0
  %vm2845 = vcmp.gt.f32.partialorder %v2432, 0.0
  %vm2846 = vcmp.gt.f32.partialorder %v2435, 0.0
  %vm2847 = vcmp.gt.f32.partialorder %v2438, 0.0
  %vm2848 = vcmp.gt.f32.partialorder %v2441, 0.0
  %vm2849 = vcmp.gt.f32.partialorder %v2444, 0.0
  %vm2850 = vcmp.gt.f32.partialorder %v2447, 0.0
  %vm2851 = vcmp.gt.f32.partialorder %v2450, 0.0
  %vm2852 = vcmp.gt.f32.partialorder %v2453, 0.0
  %vm2853 = vcmp.gt.f32.partialorder %v2456, 0.0
  %vm2854 = vcmp.gt.f32.partialorder %v2459, 0.0
  %vm2855 = vcmp.gt.f32.partialorder %v2462, 0.0
  %vm2856 = vcmp.gt.f32.partialorder %v2465, 0.0
  %vm2857 = vcmp.gt.f32.partialorder %v2468, 0.0
  %vm2858 = vcmp.gt.f32.partialorder %v2471, 0.0
  %vm2859 = vcmp.gt.f32.partialorder %v2474, 0.0
  %vm2860 = vcmp.gt.f32.partialorder %v2477, 0.0
  %vm2861 = vcmp.gt.f32.partialorder %v2480, 0.0
  %vm2862 = vcmp.gt.f32.partialorder %v2483, 0.0
  %vm2863 = vcmp.gt.f32.partialorder %v2486, 0.0
  %vm2864 = vcmp.gt.f32.partialorder %v2489, 0.0
  %vm2865 = vcmp.gt.f32.partialorder %v2492, 0.0
  %vm2866 = vcmp.gt.f32.partialorder %v2495, 0.0
  %vm2867 = vcmp.gt.f32.partialorder %v2498, 0.0
  %vm2868 = vcmp.gt.f32.partialorder %v2501, 0.0
  %vm2869 = vcmp.gt.f32.partialorder %v2504, 0.0
  %vm2870 = vcmp.gt.f32.partialorder %v2507, 0.0
  %vm2871 = vcmp.gt.f32.partialorder %v2510, 0.0
  %vm2872 = vcmp.gt.f32.partialorder %v2513, 0.0
  %vm2873 = vcmp.gt.f32.partialorder %v2516, 0.0
  %vm2874 = vcmp.gt.f32.partialorder %v2519, 0.0
  %vm2875 = vcmp.gt.f32.partialorder %v2522, 0.0
  %v2876 = vmul.f32 %v1469, 0.01
  %v2877 = vmul.f32 %v1472, 0.01
  %v2878 = vmul.f32 %v1475, 0.01
  %v2879 = vmul.f32 %v1478, 0.01
  %v2880 = vmul.f32 %v1481, 0.01
  %v2881 = vmul.f32 %v1484, 0.01
  %v2882 = vmul.f32 %v1487, 0.01
  %v2883 = vmul.f32 %v1490, 0.01
  %v2884 = vmul.f32 %v1493, 0.01
  %v2885 = vmul.f32 %v1496, 0.01
  %v2886 = vmul.f32 %v1499, 0.01
  %v2887 = vmul.f32 %v1502, 0.01
  %v2888 = vmul.f32 %v1505, 0.01
  %v2889 = vmul.f32 %v1508, 0.01
  %v2890 = vmul.f32 %v1511, 0.01
  %v2891 = vmul.f32 %v1514, 0.01
  %v2892 = vmul.f32 %v1517, 0.01
  %v2893 = vmul.f32 %v1520, 0.01
  %v2894 = vmul.f32 %v1523, 0.01
  %v2895 = vmul.f32 %v1526, 0.01
  %v2896 = vmul.f32 %v1529, 0.01
  %v2897 = vmul.f32 %v1532, 0.01
  %v2898 = vmul.f32 %v1535, 0.01
  %v2899 = vmul.f32 %v1538, 0.01
  %v2900 = vmul.f32 %v1541, 0.01
  %v2901 = vmul.f32 %v1544, 0.01
  %v2902 = vmul.f32 %v1547, 0.01
  %v2903 = vmul.f32 %v1550, 0.01
  %v2904 = vmul.f32 %v1553, 0.01
  %v2905 = vmul.f32 %v1556, 0.01
  %v2906 = vmul.f32 %v1559, 0.01
  %v2907 = vmul.f32 %v1562, 0.01
  %v2908 = vmul.f32 %v1565, 0.01
  %v2909 = vmul.f32 %v1568, 0.01
  %v2910 = vmul.f32 %v1571, 0.01
  %v2911 = vmul.f32 %v1574, 0.01
  %v2912 = vmul.f32 %v1577, 0.01
  %v2913 = vmul.f32 %v1580, 0.01
  %v2914 = vmul.f32 %v1583, 0.01
  %v2915 = vmul.f32 %v1586, 0.01
  %v2916 = vmul.f32 %v1589, 0.01
  %v2917 = vmul.f32 %v1592, 0.01
  %v2918 = vmul.f32 %v1595, 0.01
  %v2919 = vmul.f32 %v1598, 0.01
  %v2920 = vmul.f32 %v1601, 0.01
  %v2921 = vmul.f32 %v1604, 0.01
  %v2922 = vmul.f32 %v1607, 0.01
  %v2923 = vmul.f32 %v1610, 0.01
  %v2924 = vmul.f32 %v1613, 0.01
  %v2925 = vmul.f32 %v1616, 0.01
  %v2926 = vmul.f32 %v1619, 0.01
  %v2927 = vmul.f32 %v1622, 0.01
  %v2928 = vmul.f32 %v1625, 0.01
  %v2929 = vmul.f32 %v1628, 0.01
  %v2930 = vmul.f32 %v1631, 0.01
  %v2931 = vmul.f32 %v1634, 0.01
  %v2932 = vmul.f32 %v1637, 0.01
  %v2933 = vmul.f32 %v1640, 0.01
  %v2934 = vmul.f32 %v1643, 0.01
  %v2935 = vmul.f32 %v1646, 0.01
  %v2936 = vmul.f32 %v1649, 0.01
  %v2937 = vmul.f32 %v1652, 0.01
  %v2938 = vmul.f32 %v1655, 0.01
  %v2939 = vmul.f32 %v1658, 0.01
  %v2940 = vmul.f32 %v1661, 0.01
  %v2941 = vmul.f32 %v1664, 0.01
  %v2942 = vmul.f32 %v1667, 0.01
  %v2943 = vmul.f32 %v1670, 0.01
  %v2944 = vmul.f32 %v1673, 0.01
  %v2945 = vmul.f32 %v1676, 0.01
  %v2946 = vmul.f32 %v1679, 0.01
  %v2947 = vmul.f32 %v1682, 0.01
  %v2948 = vmul.f32 %v1685, 0.01
  %v2949 = vmul.f32 %v1688, 0.01
  %v2950 = vmul.f32 %v1691, 0.01
  %v2951 = vmul.f32 %v1694, 0.01
  %v2952 = vmul.f32 %v1697, 0.01
  %v2953 = vmul.f32 %v1700, 0.01
  %v2954 = vmul.f32 %v1703, 0.01
  %v2955 = vmul.f32 %v1706, 0.01
  %v2956 = vmul.f32 %v1709, 0.01
  %v2957 = vmul.f32 %v1712, 0.01
  %v2958 = vmul.f32 %v1715, 0.01
  %v2959 = vmul.f32 %v1718, 0.01
  %v2960 = vmul.f32 %v1721, 0.01
  %v2961 = vmul.f32 %v1724, 0.01
  %v2962 = vmul.f32 %v1727, 0.01
  %v2963 = vmul.f32 %v1730, 0.01
  %v2964 = vmul.f32 %v1733, 0.01
  %v2965 = vmul.f32 %v1736, 0.01
  %v2966 = vmul.f32 %v1739, 0.01
  %v2967 = vmul.f32 %v1742, 0.01
  %v2968 = vmul.f32 %v1745, 0.01
  %v2969 = vmul.f32 %v1748, 0.01
  %v2970 = vmul.f32 %v1751, 0.01
  %v2971 = vmul.f32 %v1754, 0.01
  %v2972 = vmul.f32 %v1757, 0.01
  %v2973 = vmul.f32 %v1760, 0.01
  %v2974 = vmul.f32 %v1763, 0.01
  %v2975 = vmul.f32 %v1766, 0.01
  %v2976 = vmul.f32 %v1769, 0.01
  %v2977 = vmul.f32 %v1772, 0.01
  %v2978 = vmul.f32 %v1775, 0.01
  %v2979 = vmul.f32 %v1778, 0.01
  %v2980 = vmul.f32 %v1781, 0.01
  %v2981 = vmul.f32 %v1784, 0.01
  %v2982 = vmul.f32 %v1787, 0.01
  %v2983 = vmul.f32 %v1790, 0.01
  %v2984 = vmul.f32 %v1793, 0.01
  %v2985 = vmul.f32 %v1796, 0.01
  %v2986 = vmul.f32 %v1799, 0.01
  %v2987 = vmul.f32 %v1802, 0.01
  %v2988 = vmul.f32 %v1805, 0.01
  %v2989 = vmul.f32 %v1808, 0.01
  %v2990 = vmul.f32 %v1811, 0.01
  %v2991 = vmul.f32 %v1814, 0.01
  %v2992 = vmul.f32 %v1817, 0.01
  %v2993 = vmul.f32 %v1820, 0.01
  %v2994 = vmul.f32 %v1823, 0.01
  %v2995 = vmul.f32 %v1826, 0.01
  %v2996 = vmul.f32 %v1829, 0.01
  %v2997 = vmul.f32 %v1832, 0.01
  %v2998 = vmul.f32 %v1835, 0.01
  %v2999 = vmul.f32 %v1838, 0.01
  %v3000 = vmul.f32 %v1841, 0.01
  %v3001 = vmul.f32 %v1844, 0.01
  %v3002 = vmul.f32 %v1847, 0.01
  %v3003 = vmul.f32 %v1850, 0.01
  %v3004 = vmul.f32 %v1853, 0.01
  %v3005 = vmul.f32 %v1856, 0.01
  %v3006 = vmul.f32 %v1859, 0.01
  %v3007 = vmul.f32 %v1862, 0.01
  %v3008 = vmul.f32 %v1865, 0.01
  %v3009 = vmul.f32 %v1868, 0.01
  %v3010 = vmul.f32 %v1871, 0.01
  %v3011 = vmul.f32 %v1874, 0.01
  %v3012 = vmul.f32 %v1877, 0.01
  %v3013 = vmul.f32 %v1880, 0.01
  %v3014 = vmul.f32 %v1883, 0.01
  %v3015 = vmul.f32 %v1886, 0.01
  %v3016 = vmul.f32 %v1889, 0.01
  %v3017 = vmul.f32 %v1892, 0.01
  %v3018 = vmul.f32 %v1895, 0.01
  %v3019 = vmul.f32 %v1898, 0.01
  %v3020 = vmul.f32 %v1901, 0.01
  %v3021 = vmul.f32 %v1904, 0.01
  %v3022 = vmul.f32 %v1907, 0.01
  %v3023 = vmul.f32 %v1910, 0.01
  %v3024 = vmul.f32 %v1913, 0.01
  %v3025 = vmul.f32 %v1916, 0.01
  %v3026 = vmul.f32 %v1919, 0.01
  %v3027 = vmul.f32 %v1922, 0.01
  %v3028 = vmul.f32 %v1925, 0.01
  %v3029 = vmul.f32 %v1928, 0.01
  %v3030 = vmul.f32 %v1931, 0.01
  %v3031 = vmul.f32 %v1934, 0.01
  %v3032 = vmul.f32 %v1937, 0.01
  %v3033 = vmul.f32 %v1940, 0.01
  %v3034 = vmul.f32 %v1943, 0.01
  %v3035 = vmul.f32 %v1946, 0.01
  %v3036 = vmul.f32 %v1949, 0.01
  %v3037 = vmul.f32 %v1952, 0.01
  %v3038 = vmul.f32 %v1955, 0.01
  %v3039 = vmul.f32 %v1958, 0.01
  %v3040 = vmul.f32 %v1961, 0.01
  %v3041 = vmul.f32 %v1964, 0.01
  %v3042 = vmul.f32 %v1967, 0.01
  %v3043 = vmul.f32 %v1970, 0.01
  %v3044 = vmul.f32 %v1973, 0.01
  %v3045 = vmul.f32 %v1976, 0.01
  %v3046 = vmul.f32 %v1979, 0.01
  %v3047 = vmul.f32 %v1982, 0.01
  %v3048 = vmul.f32 %v1985, 0.01
  %v3049 = vmul.f32 %v1988, 0.01
  %v3050 = vmul.f32 %v1991, 0.01
  %v3051 = vmul.f32 %v1994, 0.01
  %v3052 = vmul.f32 %v1997, 0.01
  %v3053 = vmul.f32 %v2000, 0.01
  %v3054 = vmul.f32 %v2003, 0.01
  %v3055 = vmul.f32 %v2006, 0.01
  %v3056 = vmul.f32 %v2009, 0.01
  %v3057 = vmul.f32 %v2012, 0.01
  %v3058 = vmul.f32 %v2015, 0.01
  %v3059 = vmul.f32 %v2018, 0.01
  %v3060 = vmul.f32 %v2021, 0.01
  %v3061 = vmul.f32 %v2024, 0.01
  %v3062 = vmul.f32 %v2027, 0.01
  %v3063 = vmul.f32 %v2030, 0.01
  %v3064 = vmul.f32 %v2033, 0.01
  %v3065 = vmul.f32 %v2036, 0.01
  %v3066 = vmul.f32 %v2039, 0.01
  %v3067 = vmul.f32 %v2042, 0.01
  %v3068 = vmul.f32 %v2045, 0.01
  %v3069 = vmul.f32 %v2048, 0.01
  %v3070 = vmul.f32 %v2051, 0.01
  %v3071 = vmul.f32 %v2054, 0.01
  %v3072 = vmul.f32 %v2057, 0.01
  %v3073 = vmul.f32 %v2060, 0.01
  %v3074 = vmul.f32 %v2063, 0.01
  %v3075 = vmul.f32 %v2066, 0.01
  %v3076 = vmul.f32 %v2069, 0.01
  %v3077 = vmul.f32 %v2072, 0.01
  %v3078 = vmul.f32 %v2075, 0.01
  %v3079 = vmul.f32 %v2078, 0.01
  %v3080 = vmul.f32 %v2081, 0.01
  %v3081 = vmul.f32 %v2084, 0.01
  %v3082 = vmul.f32 %v2087, 0.01
  %v3083 = vmul.f32 %v2090, 0.01
  %v3084 = vmul.f32 %v2093, 0.01
  %v3085 = vmul.f32 %v2096, 0.01
  %v3086 = vmul.f32 %v2099, 0.01
  %v3087 = vmul.f32 %v2102, 0.01
  %v3088 = vmul.f32 %v2105, 0.01
  %v3089 = vmul.f32 %v2108, 0.01
  %v3090 = vmul.f32 %v2111, 0.01
  %v3091 = vmul.f32 %v2114, 0.01
  %v3092 = vmul.f32 %v2117, 0.01
  %v3093 = vmul.f32 %v2120, 0.01
  %v3094 = vmul.f32 %v2123, 0.01
  %v3095 = vmul.f32 %v2126, 0.01
  %v3096 = vmul.f32 %v2129, 0.01
  %v3097 = vmul.f32 %v2132, 0.01
  %v3098 = vmul.f32 %v2135, 0.01
  %v3099 = vmul.f32 %v2138, 0.01
  %v3100 = vmul.f32 %v2141, 0.01
  %v3101 = vmul.f32 %v2144, 0.01
  %v3102 = vmul.f32 %v2147, 0.01
  %v3103 = vmul.f32 %v2150, 0.01
  %v3104 = vmul.f32 %v2153, 0.01
  %v3105 = vmul.f32 %v2156, 0.01
  %v3106 = vmul.f32 %v2159, 0.01
  %v3107 = vmul.f32 %v2162, 0.01
  %v3108 = vmul.f32 %v2165, 0.01
  %v3109 = vmul.f32 %v2168, 0.01
  %v3110 = vmul.f32 %v2171, 0.01
  %v3111 = vmul.f32 %v2174, 0.01
  %v3112 = vmul.f32 %v2177, 0.01
  %v3113 = vmul.f32 %v2180, 0.01
  %v3114 = vmul.f32 %v2183, 0.01
  %v3115 = vmul.f32 %v2186, 0.01
  %v3116 = vmul.f32 %v2189, 0.01
  %v3117 = vmul.f32 %v2192, 0.01
  %v3118 = vmul.f32 %v2195, 0.01
  %v3119 = vmul.f32 %v2198, 0.01
  %v3120 = vmul.f32 %v2201, 0.01
  %v3121 = vmul.f32 %v2204, 0.01
  %v3122 = vmul.f32 %v2207, 0.01
  %v3123 = vmul.f32 %v2210, 0.01
  %v3124 = vmul.f32 %v2213, 0.01
  %v3125 = vmul.f32 %v2216, 0.01
  %v3126 = vmul.f32 %v2219, 0.01
  %v3127 = vmul.f32 %v2222, 0.01
  %v3128 = vmul.f32 %v2225, 0.01
  %v3129 = vmul.f32 %v2228, 0.01
  %v3130 = vmul.f32 %v2231, 0.01
  %v3131 = vmul.f32 %v2234, 0.01
  %v3132 = vmul.f32 %v2237, 0.01
  %v3133 = vmul.f32 %v2240, 0.01
  %v3134 = vmul.f32 %v2243, 0.01
  %v3135 = vmul.f32 %v2246, 0.01
  %v3136 = vmul.f32 %v2249, 0.01
  %v3137 = vmul.f32 %v2252, 0.01
  %v3138 = vmul.f32 %v2255, 0.01
  %v3139 = vmul.f32 %v2258, 0.01
  %v3140 = vmul.f32 %v2261, 0.01
  %v3141 = vmul.f32 %v2264, 0.01
  %v3142 = vmul.f32 %v2267, 0.01
  %v3143 = vmul.f32 %v2270, 0.01
  %v3144 = vmul.f32 %v2273, 0.01
  %v3145 = vmul.f32 %v2276, 0.01
  %v3146 = vmul.f32 %v2279, 0.01
  %v3147 = vmul.f32 %v2282, 0.01
  %v3148 = vmul.f32 %v2285, 0.01
  %v3149 = vmul.f32 %v2288, 0.01
  %v3150 = vmul.f32 %v2291, 0.01
  %v3151 = vmul.f32 %v2294, 0.01
  %v3152 = vmul.f32 %v2297, 0.01
  %v3153 = vmul.f32 %v2300, 0.01
  %v3154 = vmul.f32 %v2303, 0.01
  %v3155 = vmul.f32 %v2306, 0.01
  %v3156 = vmul.f32 %v2309, 0.01
  %v3157 = vmul.f32 %v2312, 0.01
  %v3158 = vmul.f32 %v2315, 0.01
  %v3159 = vmul.f32 %v2318, 0.01
  %v3160 = vmul.f32 %v2321, 0.01
  %v3161 = vmul.f32 %v2324, 0.01
  %v3162 = vmul.f32 %v2327, 0.01
  %v3163 = vmul.f32 %v2330, 0.01
  %v3164 = vmul.f32 %v2333, 0.01
  %v3165 = vmul.f32 %v2336, 0.01
  %v3166 = vmul.f32 %v2339, 0.01
  %v3167 = vmul.f32 %v2342, 0.01
  %v3168 = vmul.f32 %v2345, 0.01
  %v3169 = vmul.f32 %v2348, 0.01
  %v3170 = vmul.f32 %v2351, 0.01
  %v3171 = vmul.f32 %v2354, 0.01
  %v3172 = vmul.f32 %v2357, 0.01
  %v3173 = vmul.f32 %v2360, 0.01
  %v3174 = vmul.f32 %v2363, 0.01
  %v3175 = vmul.f32 %v2366, 0.01
  %v3176 = vmul.f32 %v2369, 0.01
  %v3177 = vmul.f32 %v2372, 0.01
  %v3178 = vmul.f32 %v2375, 0.01
  %v3179 = vmul.f32 %v2378, 0.01
  %v3180 = vmul.f32 %v2381, 0.01
  %v3181 = vmul.f32 %v2384, 0.01
  %v3182 = vmul.f32 %v2387, 0.01
  %v3183 = vmul.f32 %v2390, 0.01
  %v3184 = vmul.f32 %v2393, 0.01
  %v3185 = vmul.f32 %v2396, 0.01
  %v3186 = vmul.f32 %v2399, 0.01
  %v3187 = vmul.f32 %v2402, 0.01
  %v3188 = vmul.f32 %v2405, 0.01
  %v3189 = vmul.f32 %v2408, 0.01
  %v3190 = vmul.f32 %v2411, 0.01
  %v3191 = vmul.f32 %v2414, 0.01
  %v3192 = vmul.f32 %v2417, 0.01
  %v3193 = vmul.f32 %v2420, 0.01
  %v3194 = vmul.f32 %v2423, 0.01
  %v3195 = vmul.f32 %v2426, 0.01
  %v3196 = vmul.f32 %v2429, 0.01
  %v3197 = vmul.f32 %v2432, 0.01
  %v3198 = vmul.f32 %v2435, 0.01
  %v3199 = vmul.f32 %v2438, 0.01
  %v3200 = vmul.f32 %v2441, 0.01
  %v3201 = vmul.f32 %v2444, 0.01
  %v3202 = vmul.f32 %v2447, 0.01
  %v3203 = vmul.f32 %v2450, 0.01
  %v3204 = vmul.f32 %v2453, 0.01
  %v3205 = vmul.f32 %v2456, 0.01
  %v3206 = vmul.f32 %v2459, 0.01
  %v3207 = vmul.f32 %v2462, 0.01
  %v3208 = vmul.f32 %v2465, 0.01
  %v3209 = vmul.f32 %v2468, 0.01
  %v3210 = vmul.f32 %v2471, 0.01
  %v3211 = vmul.f32 %v2474, 0.01
  %v3212 = vmul.f32 %v2477, 0.01
  %v3213 = vmul.f32 %v2480, 0.01
  %v3214 = vmul.f32 %v2483, 0.01
  %v3215 = vmul.f32 %v2486, 0.01
  %v3216 = vmul.f32 %v2489, 0.01
  %v3217 = vmul.f32 %v2492, 0.01
  %v3218 = vmul.f32 %v2495, 0.01
  %v3219 = vmul.f32 %v2498, 0.01
  %v3220 = vmul.f32 %v2501, 0.01
  %v3221 = vmul.f32 %v2504, 0.01
  %v3222 = vmul.f32 %v2507, 0.01
  %v3223 = vmul.f32 %v2510, 0.01
  %v3224 = vmul.f32 %v2513, 0.01
  %v3225 = vmul.f32 %v2516, 0.01
  %v3226 = vmul.f32 %v2519, 0.01
  %v3227 = vmul.f32 %v2522, 0.01
  %v3228 = vsel %vm2524, %v1469, %v2876
  %v3229 = vsel %vm2525, %v1472, %v2877
  %v3230 = vsel %vm2526, %v1475, %v2878
  %v3231 = vsel %vm2527, %v1478, %v2879
  %v3232 = vsel %vm2528, %v1481, %v2880
  %v3233 = vsel %vm2529, %v1484, %v2881
  %v3234 = vsel %vm2530, %v1487, %v2882
  %v3235 = vsel %vm2531, %v1490, %v2883
  %v3236 = vsel %vm2532, %v1493, %v2884
  %v3237 = vsel %vm2533, %v1496, %v2885
  %v3238 = vsel %vm2534, %v1499, %v2886
  %v3239 = vsel %vm2535, %v1502, %v2887
  %v3240 = vsel %vm2536, %v1505, %v2888
  %v3241 = vsel %vm2537, %v1508, %v2889
  %v3242 = vsel %vm2538, %v1511, %v2890
  %v3243 = vsel %vm2539, %v1514, %v2891
  %v3244 = vsel %vm2540, %v1517, %v2892
  %v3245 = vsel %vm2541, %v1520, %v2893
  %v3246 = vsel %vm2542, %v1523, %v2894
  %v3247 = vsel %vm2543, %v1526, %v2895
  %v3248 = vsel %vm2544, %v1529, %v2896
  %v3249 = vsel %vm2545, %v1532, %v2897
  %v3250 = vsel %vm2546, %v1535, %v2898
  %v3251 = vsel %vm2547, %v1538, %v2899
  %v3252 = vsel %vm2548, %v1541, %v2900
  %v3253 = vsel %vm2549, %v1544, %v2901
  %v3254 = vsel %vm2550, %v1547, %v2902
  %v3255 = vsel %vm2551, %v1550, %v2903
  %v3256 = vsel %vm2552, %v1553, %v2904
  %v3257 = vsel %vm2553, %v1556, %v2905
  %v3258 = vsel %vm2554, %v1559, %v2906
  %v3259 = vsel %vm2555, %v1562, %v2907
  %v3260 = vsel %vm2556, %v1565, %v2908
  %v3261 = vsel %vm2557, %v1568, %v2909
  %v3262 = vsel %vm2558, %v1571, %v2910
  %v3263 = vsel %vm2559, %v1574, %v2911
  %v3264 = vsel %vm2560, %v1577, %v2912
  %v3265 = vsel %vm2561, %v1580, %v2913
  %v3266 = vsel %vm2562, %v1583, %v2914
  %v3267 = vsel %vm2563, %v1586, %v2915
  %v3268 = vsel %vm2564, %v1589, %v2916
  %v3269 = vsel %vm2565, %v1592, %v2917
  %v3270 = vsel %vm2566, %v1595, %v2918
  %v3271 = vsel %vm2567, %v1598, %v2919
  %v3272 = vsel %vm2568, %v1601, %v2920
  %v3273 = vsel %vm2569, %v1604, %v2921
  %v3274 = vsel %vm2570, %v1607, %v2922
  %v3275 = vsel %vm2571, %v1610, %v2923
  %v3276 = vsel %vm2572, %v1613, %v2924
  %v3277 = vsel %vm2573, %v1616, %v2925
  %v3278 = vsel %vm2574, %v1619, %v2926
  %v3279 = vsel %vm2575, %v1622, %v2927
  %v3280 = vsel %vm2576, %v1625, %v2928
  %v3281 = vsel %vm2577, %v1628, %v2929
  %v3282 = vsel %vm2578, %v1631, %v2930
  %v3283 = vsel %vm2579, %v1634, %v2931
  %v3284 = vsel %vm2580, %v1637, %v2932
  %v3285 = vsel %vm2581, %v1640, %v2933
  %v3286 = vsel %vm2582, %v1643, %v2934
  %v3287 = vsel %vm2583, %v1646, %v2935
  %v3288 = vsel %vm2584, %v1649, %v2936
  %v3289 = vsel %vm2585, %v1652, %v2937
  %v3290 = vsel %vm2586, %v1655, %v2938
  %v3291 = vsel %vm2587, %v1658, %v2939
  %v3292 = vsel %vm2588, %v1661, %v2940
  %v3293 = vsel %vm2589, %v1664, %v2941
  %v3294 = vsel %vm2590, %v1667, %v2942
  %v3295 = vsel %vm2591, %v1670, %v2943
  %v3296 = vsel %vm2592, %v1673, %v2944
  %v3297 = vsel %vm2593, %v1676, %v2945
  %v3298 = vsel %vm2594, %v1679, %v2946
  %v3299 = vsel %vm2595, %v1682, %v2947
  %v3300 = vsel %vm2596, %v1685, %v2948
  %v3301 = vsel %vm2597, %v1688, %v2949
  %v3302 = vsel %vm2598, %v1691, %v2950
  %v3303 = vsel %vm2599, %v1694, %v2951
  %v3304 = vsel %vm2600, %v1697, %v2952
  %v3305 = vsel %vm2601, %v1700, %v2953
  %v3306 = vsel %vm2602, %v1703, %v2954
  %v3307 = vsel %vm2603, %v1706, %v2955
  %v3308 = vsel %vm2604, %v1709, %v2956
  %v3309 = vsel %vm2605, %v1712, %v2957
  %v3310 = vsel %vm2606, %v1715, %v2958
  %v3311 = vsel %vm2607, %v1718, %v2959
  %v3312 = vsel %vm2608, %v1721, %v2960
  %v3313 = vsel %vm2609, %v1724, %v2961
  %v3314 = vsel %vm2610, %v1727, %v2962
  %v3315 = vsel %vm2611, %v1730, %v2963
  %v3316 = vsel %vm2612, %v1733, %v2964
  %v3317 = vsel %vm2613, %v1736, %v2965
  %v3318 = vsel %vm2614, %v1739, %v2966
  %v3319 = vsel %vm2615, %v1742, %v2967
  %v3320 = vsel %vm2616, %v1745, %v2968
  %v3321 = vsel %vm2617, %v1748, %v2969
  %v3322 = vsel %vm2618, %v1751, %v2970
  %v3323 = vsel %vm2619, %v1754, %v2971
  %v3324 = vsel %vm2620, %v1757, %v2972
  %v3325 = vsel %vm2621, %v1760, %v2973
  %v3326 = vsel %vm2622, %v1763, %v2974
  %v3327 = vsel %vm2623, %v1766, %v2975
  %v3328 = vsel %vm2624, %v1769, %v2976
  %v3329 = vsel %vm2625, %v1772, %v2977
  %v3330 = vsel %vm2626, %v1775, %v2978
  %v3331 = vsel %vm2627, %v1778, %v2979
  %v3332 = vsel %vm2628, %v1781, %v2980
  %v3333 = vsel %vm2629, %v1784, %v2981
  %v3334 = vsel %vm2630, %v1787, %v2982
  %v3335 = vsel %vm2631, %v1790, %v2983
  %v3336 = vsel %vm2632, %v1793, %v2984
  %v3337 = vsel %vm2633, %v1796, %v2985
  %v3338 = vsel %vm2634, %v1799, %v2986
  %v3339 = vsel %vm2635, %v1802, %v2987
  %v3340 = vsel %vm2636, %v1805, %v2988
  %v3341 = vsel %vm2637, %v1808, %v2989
  %v3342 = vsel %vm2638, %v1811, %v2990
  %v3343 = vsel %vm2639, %v1814, %v2991
  %v3344 = vsel %vm2640, %v1817, %v2992
  %v3345 = vsel %vm2641, %v1820, %v2993
  %v3346 = vsel %vm2642, %v1823, %v2994
  %v3347 = vsel %vm2643, %v1826, %v2995
  %v3348 = vsel %vm2644, %v1829, %v2996
  %v3349 = vsel %vm2645, %v1832, %v2997
  %v3350 = vsel %vm2646, %v1835, %v2998
  %v3351 = vsel %vm2647, %v1838, %v2999
  %v3352 = vsel %vm2648, %v1841, %v3000
  %v3353 = vsel %vm2649, %v1844, %v3001
  %v3354 = vsel %vm2650, %v1847, %v3002
  %v3355 = vsel %vm2651, %v1850, %v3003
  %v3356 = vsel %vm2652, %v1853, %v3004
  %v3357 = vsel %vm2653, %v1856, %v3005
  %v3358 = vsel %vm2654, %v1859, %v3006
  %v3359 = vsel %vm2655, %v1862, %v3007
  %v3360 = vsel %vm2656, %v1865, %v3008
  %v3361 = vsel %vm2657, %v1868, %v3009
  %v3362 = vsel %vm2658, %v1871, %v3010
  %v3363 = vsel %vm2659, %v1874, %v3011
  %v3364 = vsel %vm2660, %v1877, %v3012
  %v3365 = vsel %vm2661, %v1880, %v3013
  %v3366 = vsel %vm2662, %v1883, %v3014
  %v3367 = vsel %vm2663, %v1886, %v3015
  %v3368 = vsel %vm2664, %v1889, %v3016
  %v3369 = vsel %vm2665, %v1892, %v3017
  %v3370 = vsel %vm2666, %v1895, %v3018
  %v3371 = vsel %vm2667, %v1898, %v3019
  %v3372 = vsel %vm2668, %v1901, %v3020
  %v3373 = vsel %vm2669, %v1904, %v3021
  %v3374 = vsel %vm2670, %v1907, %v3022
  %v3375 = vsel %vm2671, %v1910, %v3023
  %v3376 = vsel %vm2672, %v1913, %v3024
  %v3377 = vsel %vm2673, %v1916, %v3025
  %v3378 = vsel %vm2674, %v1919, %v3026
  %v3379 = vsel %vm2675, %v1922, %v3027
  %v3380 = vsel %vm2676, %v1925, %v3028
  %v3381 = vsel %vm2677, %v1928, %v3029
  %v3382 = vsel %vm2678, %v1931, %v3030
  %v3383 = vsel %vm2679, %v1934, %v3031
  %v3384 = vsel %vm2680, %v1937, %v3032
  %v3385 = vsel %vm2681, %v1940, %v3033
  %v3386 = vsel %vm2682, %v1943, %v3034
  %v3387 = vsel %vm2683, %v1946, %v3035
  %v3388 = vsel %vm2684, %v1949, %v3036
  %v3389 = vsel %vm2685, %v1952, %v3037
  %v3390 = vsel %vm2686, %v1955, %v3038
  %v3391 = vsel %vm2687, %v1958, %v3039
  %v3392 = vsel %vm2688, %v1961, %v3040
  %v3393 = vsel %vm2689, %v1964, %v3041
  %v3394 = vsel %vm2690, %v1967, %v3042
  %v3395 = vsel %vm2691, %v1970, %v3043
  %v3396 = vsel %vm2692, %v1973, %v3044
  %v3397 = vsel %vm2693, %v1976, %v3045
  %v3398 = vsel %vm2694, %v1979, %v3046
  %v3399 = vsel %vm2695, %v1982, %v3047
  %v3400 = vsel %vm2696, %v1985, %v3048
  %v3401 = vsel %vm2697, %v1988, %v3049
  %v3402 = vsel %vm2698, %v1991, %v3050
  %v3403 = vsel %vm2699, %v1994, %v3051
  %v3404 = vsel %vm2700, %v1997, %v3052
  %v3405 = vsel %vm2701, %v2000, %v3053
  %v3406 = vsel %vm2702, %v2003, %v3054
  %v3407 = vsel %vm2703, %v2006, %v3055
  %v3408 = vsel %vm2704, %v2009, %v3056
  %v3409 = vsel %vm2705, %v2012, %v3057
  %v3410 = vsel %vm2706, %v2015, %v3058
  %v3411 = vsel %vm2707, %v2018, %v3059
  %v3412 = vsel %vm2708, %v2021, %v3060
  %v3413 = vsel %vm2709, %v2024, %v3061
  %v3414 = vsel %vm2710, %v2027, %v3062
  %v3415 = vsel %vm2711, %v2030, %v3063
  %v3416 = vsel %vm2712, %v2033, %v3064
  %v3417 = vsel %vm2713, %v2036, %v3065
  %v3418 = vsel %vm2714, %v2039, %v3066
  %v3419 = vsel %vm2715, %v2042, %v3067
  %v3420 = vsel %vm2716, %v2045, %v3068
  %v3421 = vsel %vm2717, %v2048, %v3069
  %v3422 = vsel %vm2718, %v2051, %v3070
  %v3423 = vsel %vm2719, %v2054, %v3071
  %v3424 = vsel %vm2720, %v2057, %v3072
  %v3425 = vsel %vm2721, %v2060, %v3073
  %v3426 = vsel %vm2722, %v2063, %v3074
  %v3427 = vsel %vm2723, %v2066, %v3075
  %v3428 = vsel %vm2724, %v2069, %v3076
  %v3429 = vsel %vm2725, %v2072, %v3077
  %v3430 = vsel %vm2726, %v2075, %v3078
  %v3431 = vsel %vm2727, %v2078, %v3079
  %v3432 = vsel %vm2728, %v2081, %v3080
  %v3433 = vsel %vm2729, %v2084, %v3081
  %v3434 = vsel %vm2730, %v2087, %v3082
  %v3435 = vsel %vm2731, %v2090, %v3083
  %v3436 = vsel %vm2732, %v2093, %v3084
  %v3437 = vsel %vm2733, %v2096, %v3085
  %v3438 = vsel %vm2734, %v2099, %v3086
  %v3439 = vsel %vm2735, %v2102, %v3087
  %v3440 = vsel %vm2736, %v2105, %v3088
  %v3441 = vsel %vm2737, %v2108, %v3089
  %v3442 = vsel %vm2738, %v2111, %v3090
  %v3443 = vsel %vm2739, %v2114, %v3091
  %v3444 = vsel %vm2740, %v2117, %v3092
  %v3445 = vsel %vm2741, %v2120, %v3093
  %v3446 = vsel %vm2742, %v2123, %v3094
  %v3447 = vsel %vm2743, %v2126, %v3095
  %v3448 = vsel %vm2744, %v2129, %v3096
  %v3449 = vsel %vm2745, %v2132, %v3097
  %v3450 = vsel %vm2746, %v2135, %v3098
  %v3451 = vsel %vm2747, %v2138, %v3099
  %v3452 = vsel %vm2748, %v2141, %v3100
  %v3453 = vsel %vm2749, %v2144, %v3101
  %v3454 = vsel %vm2750, %v2147, %v3102
  %v3455 = vsel %vm2751, %v2150, %v3103
  %v3456 = vsel %vm2752, %v2153, %v3104
  %v3457 = vsel %vm2753, %v2156, %v3105
  %v3458 = vsel %vm2754, %v2159, %v3106
  %v3459 = vsel %vm2755, %v2162, %v3107
  %v3460 = vsel %vm2756, %v2165, %v3108
  %v3461 = vsel %vm2757, %v2168, %v3109
  %v3462 = vsel %vm2758, %v2171, %v3110
  %v3463 = vsel %vm2759, %v2174, %v3111
  %v3464 = vsel %vm2760, %v2177, %v3112
  %v3465 = vsel %vm2761, %v2180, %v3113
  %v3466 = vsel %vm2762, %v2183, %v3114
  %v3467 = vsel %vm2763, %v2186, %v3115
  %v3468 = vsel %vm2764, %v2189, %v3116
  %v3469 = vsel %vm2765, %v2192, %v3117
  %v3470 = vsel %vm2766, %v2195, %v3118
  %v3471 = vsel %vm2767, %v2198, %v3119
  %v3472 = vsel %vm2768, %v2201, %v3120
  %v3473 = vsel %vm2769, %v2204, %v3121
  %v3474 = vsel %vm2770, %v2207, %v3122
  %v3475 = vsel %vm2771, %v2210, %v3123
  %v3476 = vsel %vm2772, %v2213, %v3124
  %v3477 = vsel %vm2773, %v2216, %v3125
  %v3478 = vsel %vm2774, %v2219, %v3126
  %v3479 = vsel %vm2775, %v2222, %v3127
  %v3480 = vsel %vm2776, %v2225, %v3128
  %v3481 = vsel %vm2777, %v2228, %v3129
  %v3482 = vsel %vm2778, %v2231, %v3130
  %v3483 = vsel %vm2779, %v2234, %v3131
  %v3484 = vsel %vm2780, %v2237, %v3132
  %v3485 = vsel %vm2781, %v2240, %v3133
  %v3486 = vsel %vm2782, %v2243, %v3134
  %v3487 = vsel %vm2783, %v2246, %v3135
  %v3488 = vsel %vm2784, %v2249, %v3136
  %v3489 = vsel %vm2785, %v2252, %v3137
  %v3490 = vsel %vm2786, %v2255, %v3138
  %v3491 = vsel %vm2787, %v2258, %v3139
  %v3492 = vsel %vm2788, %v2261, %v3140
  %v3493 = vsel %vm2789, %v2264, %v3141
  %v3494 = vsel %vm2790, %v2267, %v3142
  %v3495 = vsel %vm2791, %v2270, %v3143
  %v3496 = vsel %vm2792, %v2273, %v3144
  %v3497 = vsel %vm2793, %v2276, %v3145
  %v3498 = vsel %vm2794, %v2279, %v3146
  %v3499 = vsel %vm2795, %v2282, %v3147
  %v3500 = vsel %vm2796, %v2285, %v3148
  %v3501 = vsel %vm2797, %v2288, %v3149
  %v3502 = vsel %vm2798, %v2291, %v3150
  %v3503 = vsel %vm2799, %v2294, %v3151
  %v3504 = vsel %vm2800, %v2297, %v3152
  %v3505 = vsel %vm2801, %v2300, %v3153
  %v3506 = vsel %vm2802, %v2303, %v3154
  %v3507 = vsel %vm2803, %v2306, %v3155
  %v3508 = vsel %vm2804, %v2309, %v3156
  %v3509 = vsel %vm2805, %v2312, %v3157
  %v3510 = vsel %vm2806, %v2315, %v3158
  %v3511 = vsel %vm2807, %v2318, %v3159
  %v3512 = vsel %vm2808, %v2321, %v3160
  %v3513 = vsel %vm2809, %v2324, %v3161
  %v3514 = vsel %vm2810, %v2327, %v3162
  %v3515 = vsel %vm2811, %v2330, %v3163
  %v3516 = vsel %vm2812, %v2333, %v3164
  %v3517 = vsel %vm2813, %v2336, %v3165
  %v3518 = vsel %vm2814, %v2339, %v3166
  %v3519 = vsel %vm2815, %v2342, %v3167
  %v3520 = vsel %vm2816, %v2345, %v3168
  %v3521 = vsel %vm2817, %v2348, %v3169
  %v3522 = vsel %vm2818, %v2351, %v3170
  %v3523 = vsel %vm2819, %v2354, %v3171
  %v3524 = vsel %vm2820, %v2357, %v3172
  %v3525 = vsel %vm2821, %v2360, %v3173
  %v3526 = vsel %vm2822, %v2363, %v3174
  %v3527 = vsel %vm2823, %v2366, %v3175
  %v3528 = vsel %vm2824, %v2369, %v3176
  %v3529 = vsel %vm2825, %v2372, %v3177
  %v3530 = vsel %vm2826, %v2375, %v3178
  %v3531 = vsel %vm2827, %v2378, %v3179
  %v3532 = vsel %vm2828, %v2381, %v3180
  %v3533 = vsel %vm2829, %v2384, %v3181
  %v3534 = vsel %vm2830, %v2387, %v3182
  %v3535 = vsel %vm2831, %v2390, %v3183
  %v3536 = vsel %vm2832, %v2393, %v3184
  %v3537 = vsel %vm2833, %v2396, %v3185
  %v3538 = vsel %vm2834, %v2399, %v3186
  %v3539 = vsel %vm2835, %v2402, %v3187
  %v3540 = vsel %vm2836, %v2405, %v3188
  %v3541 = vsel %vm2837, %v2408, %v3189
  %v3542 = vsel %vm2838, %v2411, %v3190
  %v3543 = vsel %vm2839, %v2414, %v3191
  %v3544 = vsel %vm2840, %v2417, %v3192
  %v3545 = vsel %vm2841, %v2420, %v3193
  %v3546 = vsel %vm2842, %v2423, %v3194
  %v3547 = vsel %vm2843, %v2426, %v3195
  %v3548 = vsel %vm2844, %v2429, %v3196
  %v3549 = vsel %vm2845, %v2432, %v3197
  %v3550 = vsel %vm2846, %v2435, %v3198
  %v3551 = vsel %vm2847, %v2438, %v3199
  %v3552 = vsel %vm2848, %v2441, %v3200
  %v3553 = vsel %vm2849, %v2444, %v3201
  %v3554 = vsel %vm2850, %v2447, %v3202
  %v3555 = vsel %vm2851, %v2450, %v3203
  %v3556 = vsel %vm2852, %v2453, %v3204
  %v3557 = vsel %vm2853, %v2456, %v3205
  %v3558 = vsel %vm2854, %v2459, %v3206
  %v3559 = vsel %vm2855, %v2462, %v3207
  %v3560 = vsel %vm2856, %v2465, %v3208
  %v3561 = vsel %vm2857, %v2468, %v3209
  %v3562 = vsel %vm2858, %v2471, %v3210
  %v3563 = vsel %vm2859, %v2474, %v3211
  %v3564 = vsel %vm2860, %v2477, %v3212
  %v3565 = vsel %vm2861, %v2480, %v3213
  %v3566 = vsel %vm2862, %v2483, %v3214
  %v3567 = vsel %vm2863, %v2486, %v3215
  %v3568 = vsel %vm2864, %v2489, %v3216
  %v3569 = vsel %vm2865, %v2492, %v3217
  %v3570 = vsel %vm2866, %v2495, %v3218
  %v3571 = vsel %vm2867, %v2498, %v3219
  %v3572 = vsel %vm2868, %v2501, %v3220
  %v3573 = vsel %vm2869, %v2504, %v3221
  %v3574 = vsel %vm2870, %v2507, %v3222
  %v3575 = vsel %vm2871, %v2510, %v3223
  %v3576 = vsel %vm2872, %v2513, %v3224
  %v3577 = vsel %vm2873, %v2516, %v3225
  %v3578 = vsel %vm2874, %v2519, %v3226
  %v3579 = vsel %vm2875, %v2522, %v3227
  %v3580 = vmax.f32 %v3228, %v3239
  %v3581 = vmax.f32 %v3229, %v3240
  %v3582 = vmax.f32 %v3230, %v3241
  %v3583 = vmax.f32 %v3231, %v3242
  %v3584 = vmax.f32 %v3232, %v3243
  %v3585 = vmax.f32 %v3233, %v3244
  %v3586 = vmax.f32 %v3234, %v3245
  %v3587 = vmax.f32 %v3235, %v3246
  %v3588 = vmax.f32 %v3236, %v3247
  %v3589 = vmax.f32 %v3237, %v3248
  %v3590 = vmax.f32 %v3238, %v3249
  %v3591 = vmax.f32 %v3272, %v3283
  %v3592 = vmax.f32 %v3273, %v3284
  %v3593 = vmax.f32 %v3274, %v3285
  %v3594 = vmax.f32 %v3275, %v3286
  %v3595 = vmax.f32 %v3276, %v3287
  %v3596 = vmax.f32 %v3277, %v3288
  %v3597 = vmax.f32 %v3278, %v3289
  %v3598 = vmax.f32 %v3279, %v3290
  %v3599 = vmax.f32 %v3280, %v3291
  %v3600 = vmax.f32 %v3281, %v3292
  %v3601 = vmax.f32 %v3282, %v3293
  %v3602 = vmax.f32 %v3316, %v3327
  %v3603 = vmax.f32 %v3317, %v3328
  %v3604 = vmax.f32 %v3318, %v3329
  %v3605 = vmax.f32 %v3319, %v3330
  %v3606 = vmax.f32 %v3320, %v3331
  %v3607 = vmax.f32 %v3321, %v3332
  %v3608 = vmax.f32 %v3322, %v3333
  %v3609 = vmax.f32 %v3323, %v3334
  %v3610 = vmax.f32 %v3324, %v3335
  %v3611 = vmax.f32 %v3325, %v3336
  %v3612 = vmax.f32 %v3326, %v3337
  %v3613 = vmax.f32 %v3360, %v3371
  %v3614 = vmax.f32 %v3361, %v3372
  %v3615 = vmax.f32 %v3362, %v3373
  %v3616 = vmax.f32 %v3363, %v3374
  %v3617 = vmax.f32 %v3364, %v3375
  %v3618 = vmax.f32 %v3365, %v3376
  %v3619 = vmax.f32 %v3366, %v3377
  %v3620 = vmax.f32 %v3367, %v3378
  %v3621 = vmax.f32 %v3368, %v3379
  %v3622 = vmax.f32 %v3369, %v3380
  %v3623 = vmax.f32 %v3370, %v3381
  %v3624 = vmax.f32 %v3404, %v3415
  %v3625 = vmax.f32 %v3405, %v3416
  %v3626 = vmax.f32 %v3406, %v3417
  %v3627 = vmax.f32 %v3407, %v3418
  %v3628 = vmax.f32 %v3408, %v3419
  %v3629 = vmax.f32 %v3409, %v3420
  %v3630 = vmax.f32 %v3410, %v3421
  %v3631 = vmax.f32 %v3411, %v3422
  %v3632 = vmax.f32 %v3412, %v3423
  %v3633 = vmax.f32 %v3413, %v3424
  %v3634 = vmax.f32 %v3414, %v3425
  %v3635 = vmax.f32 %v3448, %v3459
  %v3636 = vmax.f32 %v3449, %v3460
  %v3637 = vmax.f32 %v3450, %v3461
  %v3638 = vmax.f32 %v3451, %v3462
  %v3639 = vmax.f32 %v3452, %v3463
  %v3640 = vmax.f32 %v3453, %v3464
  %v3641 = vmax.f32 %v3454, %v3465
  %v3642 = vmax.f32 %v3455, %v3466
  %v3643 = vmax.f32 %v3456, %v3467
  %v3644 = vmax.f32 %v3457, %v3468
  %v3645 = vmax.f32 %v3458, %v3469
  %v3646 = vmax.f32 %v3492, %v3503
  %v3647 = vmax.f32 %v3493, %v3504
  %v3648 = vmax.f32 %v3494, %v3505
  %v3649 = vmax.f32 %v3495, %v3506
  %v3650 = vmax.f32 %v3496, %v3507
  %v3651 = vmax.f32 %v3497, %v3508
  %v3652 = vmax.f32 %v3498, %v3509
  %v3653 = vmax.f32 %v3499, %v3510
  %v3654 = vmax.f32 %v3500, %v3511
  %v3655 = vmax.f32 %v3501, %v3512
  %v3656 = vmax.f32 %v3502, %v3513
  %v3657 = vmax.f32 %v3536, %v3547
  %v3658 = vmax.f32 %v3537, %v3548
  %v3659 = vmax.f32 %v3538, %v3549
  %v3660 = vmax.f32 %v3539, %v3550
  %v3661 = vmax.f32 %v3540, %v3551
  %v3662 = vmax.f32 %v3541, %v3552
  %v3663 = vmax.f32 %v3542, %v3553
  %v3664 = vmax.f32 %v3543, %v3554
  %v3665 = vmax.f32 %v3544, %v3555
  %v3666 = vmax.f32 %v3545, %v3556
  %v3667 = vmax.f32 %v3546, %v3557
  %v3668 = vmax.f32 %v3250, %v3261
  %v3669 = vmax.f32 %v3251, %v3262
  %v3670 = vmax.f32 %v3252, %v3263
  %v3671 = vmax.f32 %v3253, %v3264
  %v3672 = vmax.f32 %v3254, %v3265
  %v3673 = vmax.f32 %v3255, %v3266
  %v3674 = vmax.f32 %v3256, %v3267
  %v3675 = vmax.f32 %v3257, %v3268
  %v3676 = vmax.f32 %v3258, %v3269
  %v3677 = vmax.f32 %v3259, %v3270
  %v3678 = vmax.f32 %v3260, %v3271
  %v3679 = vmax.f32 %v3294, %v3305
  %v3680 = vmax.f32 %v3295, %v3306
  %v3681 = vmax.f32 %v3296, %v3307
  %v3682 = vmax.f32 %v3297, %v3308
  %v3683 = vmax.f32 %v3298, %v3309
  %v3684 = vmax.f32 %v3299, %v3310
  %v3685 = vmax.f32 %v3300, %v3311
  %v3686 = vmax.f32 %v3301, %v3312
  %v3687 = vmax.f32 %v3302, %v3313
  %v3688 = vmax.f32 %v3303, %v3314
  %v3689 = vmax.f32 %v3304, %v3315
  %v3690 = vmax.f32 %v3338, %v3349
  %v3691 = vmax.f32 %v3339, %v3350
  %v3692 = vmax.f32 %v3340, %v3351
  %v3693 = vmax.f32 %v3341, %v3352
  %v3694 = vmax.f32 %v3342, %v3353
  %v3695 = vmax.f32 %v3343, %v3354
  %v3696 = vmax.f32 %v3344, %v3355
  %v3697 = vmax.f32 %v3345, %v3356
  %v3698 = vmax.f32 %v3346, %v3357
  %v3699 = vmax.f32 %v3347, %v3358
  %v3700 = vmax.f32 %v3348, %v3359
  %v3701 = vmax.f32 %v3382, %v3393
  %v3702 = vmax.f32 %v3383, %v3394
  %v3703 = vmax.f32 %v3384, %v3395
  %v3704 = vmax.f32 %v3385, %v3396
  %v3705 = vmax.f32 %v3386, %v3397
  %v3706 = vmax.f32 %v3387, %v3398
  %v3707 = vmax.f32 %v3388, %v3399
  %v3708 = vmax.f32 %v3389, %v3400
  %v3709 = vmax.f32 %v3390, %v3401
  %v3710 = vmax.f32 %v3391, %v3402
  %v3711 = vmax.f32 %v3392, %v3403
  %v3712 = vmax.f32 %v3426, %v3437
  %v3713 = vmax.f32 %v3427, %v3438
  %v3714 = vmax.f32 %v3428, %v3439
  %v3715 = vmax.f32 %v3429, %v3440
  %v3716 = vmax.f32 %v3430, %v3441
  %v3717 = vmax.f32 %v3431, %v3442
  %v3718 = vmax.f32 %v3432, %v3443
  %v3719 = vmax.f32 %v3433, %v3444
  %v3720 = vmax.f32 %v3434, %v3445
  %v3721 = vmax.f32 %v3435, %v3446
  %v3722 = vmax.f32 %v3436, %v3447
  %v3723 = vmax.f32 %v3470, %v3481
  %v3724 = vmax.f32 %v3471, %v3482
  %v3725 = vmax.f32 %v3472, %v3483
  %v3726 = vmax.f32 %v3473, %v3484
  %v3727 = vmax.f32 %v3474, %v3485
  %v3728 = vmax.f32 %v3475, %v3486
  %v3729 = vmax.f32 %v3476, %v3487
  %v3730 = vmax.f32 %v3477, %v3488
  %v3731 = vmax.f32 %v3478, %v3489
  %v3732 = vmax.f32 %v3479, %v3490
  %v3733 = vmax.f32 %v3480, %v3491
  %v3734 = vmax.f32 %v3514, %v3525
  %v3735 = vmax.f32 %v3515, %v3526
  %v3736 = vmax.f32 %v3516, %v3527
  %v3737 = vmax.f32 %v3517, %v3528
  %v3738 = vmax.f32 %v3518, %v3529
  %v3739 = vmax.f32 %v3519, %v3530
  %v3740 = vmax.f32 %v3520, %v3531
  %v3741 = vmax.f32 %v3521, %v3532
  %v3742 = vmax.f32 %v3522, %v3533
  %v3743 = vmax.f32 %v3523, %v3534
  %v3744 = vmax.f32 %v3524, %v3535
  %v3745 = vmax.f32 %v3558, %v3569
  %v3746 = vmax.f32 %v3559, %v3570
  %v3747 = vmax.f32 %v3560, %v3571
  %v3748 = vmax.f32 %v3561, %v3572
  %v3749 = vmax.f32 %v3562, %v3573
  %v3750 = vmax.f32 %v3563, %v3574
  %v3751 = vmax.f32 %v3564, %v3575
  %v3752 = vmax.f32 %v3565, %v3576
  %v3753 = vmax.f32 %v3566, %v3577
  %v3754 = vmax.f32 %v3567, %v3578
  %v3755 = vmax.f32 %v3568, %v3579
  %vm3756 = vcmask 253952
  %3757 = vst.msk [vmem:[#allocation2] sm:$0x1] %vm3756, 0.0
  %3758 = vst.msk [vmem:[#allocation2 + $0x58] sm:$0x1] %vm3756, 0.0
  %3759 = vst.msk [vmem:[#allocation2 + $0xb0] sm:$0x1] %vm3756, 0.0
  %3760 = vst.msk [vmem:[#allocation2 + $0x108] sm:$0x1] %vm3756, 0.0
  %3761 = vst.msk [vmem:[#allocation2 + $0x160] sm:$0x1] %vm3756, 0.0
  %3762 = vst.msk [vmem:[#allocation2 + $0x1b8] sm:$0x1] %vm3756, 0.0
  %3763 = vst.msk [vmem:[#allocation2 + $0x210] sm:$0x1] %vm3756, 0.0
  %3764 = vst.msk [vmem:[#allocation2 + $0x268] sm:$0x1] %vm3756, 0.0
  %vm3765 = vcmask 261120
  %3766 = vst.msk [vmem:[#allocation2 + $0x1] sm:$0xff] %vm3765, %v3668
  %3767 = vst.msk [vmem:[#allocation2 + $0x9] sm:$0xff] %vm3765, %v3669
  %3768 = vst.msk [vmem:[#allocation2 + $0x11] sm:$0xff] %vm3765, %v3670
  %3769 = vst.msk [vmem:[#allocation2 + $0x19] sm:$0xff] %vm3765, %v3671
  %3770 = vst.msk [vmem:[#allocation2 + $0x21] sm:$0xff] %vm3765, %v3672
  %3771 = vst.msk [vmem:[#allocation2 + $0x29] sm:$0xff] %vm3765, %v3673
  %3772 = vst.msk [vmem:[#allocation2 + $0x31] sm:$0xff] %vm3765, %v3674
  %3773 = vst.msk [vmem:[#allocation2 + $0x39] sm:$0xff] %vm3765, %v3675
  %3774 = vst.msk [vmem:[#allocation2 + $0x41] sm:$0xff] %vm3765, %v3676
  %3775 = vst.msk [vmem:[#allocation2 + $0x49] sm:$0xff] %vm3765, %v3677
  %vm3776 = vcmask 260096
  %3777 = vst.msk [vmem:[#allocation2 + $0x51] sm:$0x7f] %vm3776, %v3678
  %3778 = vst.msk [vmem:[#allocation2 + $0x59] sm:$0xff] %vm3765, %v3679
  %3779 = vst.msk [vmem:[#allocation2 + $0x61] sm:$0xff] %vm3765, %v3680
  %3780 = vst.msk [vmem:[#allocation2 + $0x69] sm:$0xff] %vm3765, %v3681
  %3781 = vst.msk [vmem:[#allocation2 + $0x71] sm:$0xff] %vm3765, %v3682
  %3782 = vst.msk [vmem:[#allocation2 + $0x79] sm:$0xff] %vm3765, %v3683
  %3783 = vst.msk [vmem:[#allocation2 + $0x81] sm:$0xff] %vm3765, %v3684
  %3784 = vst.msk [vmem:[#allocation2 + $0x89] sm:$0xff] %vm3765, %v3685
  %3785 = vst.msk [vmem:[#allocation2 + $0x91] sm:$0xff] %vm3765, %v3686
  %3786 = vst.msk [vmem:[#allocation2 + $0x99] sm:$0xff] %vm3765, %v3687
  %3787 = vst.msk [vmem:[#allocation2 + $0xa1] sm:$0xff] %vm3765, %v3688
  %3788 = vst.msk [vmem:[#allocation2 + $0xa9] sm:$0x7f] %vm3776, %v3689
  %3789 = vst.msk [vmem:[#allocation2 + $0xb1] sm:$0xff] %vm3765, %v3690
  %3790 = vst.msk [vmem:[#allocation2 + $0xb9] sm:$0xff] %vm3765, %v3691
  %3791 = vst.msk [vmem:[#allocation2 + $0xc1] sm:$0xff] %vm3765, %v3692
  %3792 = vst.msk [vmem:[#allocation2 + $0xc9] sm:$0xff] %vm3765, %v3693
  %3793 = vst.msk [vmem:[#allocation2 + $0xd1] sm:$0xff] %vm3765, %v3694
  %3794 = vst.msk [vmem:[#allocation2 + $0xd9] sm:$0xff] %vm3765, %v3695
  %3795 = vst.msk [vmem:[#allocation2 + $0xe1] sm:$0xff] %vm3765, %v3696
  %3796 = vst.msk [vmem:[#allocation2 + $0xe9] sm:$0xff] %vm3765, %v3697
  %3797 = vst.msk [vmem:[#allocation2 + $0xf1] sm:$0xff] %vm3765, %v3698
  %3798 = vst.msk [vmem:[#allocation2 + $0xf9] sm:$0xff] %vm3765, %v3699
  %3799 = vst.msk [vmem:[#allocation2 + $0x101] sm:$0x7f] %vm3776, %v3700
  %3800 = vst.msk [vmem:[#allocation2 + $0x109] sm:$0xff] %vm3765, %v3701
  %3801 = vst.msk [vmem:[#allocation2 + $0x111] sm:$0xff] %vm3765, %v3702
  %3802 = vst.msk [vmem:[#allocation2 + $0x119] sm:$0xff] %vm3765, %v3703
  %3803 = vst.msk [vmem:[#allocation2 + $0x121] sm:$0xff] %vm3765, %v3704
  %3804 = vst.msk [vmem:[#allocation2 + $0x129] sm:$0xff] %vm3765, %v3705
  %3805 = vst.msk [vmem:[#allocation2 + $0x131] sm:$0xff] %vm3765, %v3706
  %3806 = vst.msk [vmem:[#allocation2 + $0x139] sm:$0xff] %vm3765, %v3707
  %3807 = vst.msk [vmem:[#allocation2 + $0x141] sm:$0xff] %vm3765, %v3708
  %3808 = vst.msk [vmem:[#allocation2 + $0x149] sm:$0xff] %vm3765, %v3709
  %3809 = vst.msk [vmem:[#allocation2 + $0x151] sm:$0xff] %vm3765, %v3710
  %3810 = vst.msk [vmem:[#allocation2 + $0x159] sm:$0x7f] %vm3776, %v3711
  %3811 = vst.msk [vmem:[#allocation2 + $0x161] sm:$0xff] %vm3765, %v3712
  %3812 = vst.msk [vmem:[#allocation2 + $0x169] sm:$0xff] %vm3765, %v3713
  %3813 = vst.msk [vmem:[#allocation2 + $0x171] sm:$0xff] %vm3765, %v3714
  %3814 = vst.msk [vmem:[#allocation2 + $0x179] sm:$0xff] %vm3765, %v3715
  %3815 = vst.msk [vmem:[#allocation2 + $0x181] sm:$0xff] %vm3765, %v3716
  %3816 = vst.msk [vmem:[#allocation2 + $0x189] sm:$0xff] %vm3765, %v3717
  %3817 = vst.msk [vmem:[#allocation2 + $0x191] sm:$0xff] %vm3765, %v3718
  %3818 = vst.msk [vmem:[#allocation2 + $0x199] sm:$0xff] %vm3765, %v3719
  %3819 = vst.msk [vmem:[#allocation2 + $0x1a1] sm:$0xff] %vm3765, %v3720
  %3820 = vst.msk [vmem:[#allocation2 + $0x1a9] sm:$0xff] %vm3765, %v3721
  %3821 = vst.msk [vmem:[#allocation2 + $0x1b1] sm:$0x7f] %vm3776, %v3722
  %3822 = vst.msk [vmem:[#allocation2 + $0x1b9] sm:$0xff] %vm3765, %v3723
  %3823 = vst.msk [vmem:[#allocation2 + $0x1c1] sm:$0xff] %vm3765, %v3724
  %3824 = vst.msk [vmem:[#allocation2 + $0x1c9] sm:$0xff] %vm3765, %v3725
  %3825 = vst.msk [vmem:[#allocation2 + $0x1d1] sm:$0xff] %vm3765, %v3726
  %3826 = vst.msk [vmem:[#allocation2 + $0x1d9] sm:$0xff] %vm3765, %v3727
  %3827 = vst.msk [vmem:[#allocation2 + $0x1e1] sm:$0xff] %vm3765, %v3728
  %3828 = vst.msk [vmem:[#allocation2 + $0x1e9] sm:$0xff] %vm3765, %v3729
  %3829 = vst.msk [vmem:[#allocation2 + $0x1f1] sm:$0xff] %vm3765, %v3730
  %3830 = vst.msk [vmem:[#allocation2 + $0x1f9] sm:$0xff] %vm3765, %v3731
  %3831 = vst.msk [vmem:[#allocation2 + $0x201] sm:$0xff] %vm3765, %v3732
  %3832 = vst.msk [vmem:[#allocation2 + $0x209] sm:$0x7f] %vm3776, %v3733
  %3833 = vst.msk [vmem:[#allocation2 + $0x211] sm:$0xff] %vm3765, %v3734
  %3834 = vst.msk [vmem:[#allocation2 + $0x219] sm:$0xff] %vm3765, %v3735
  %3835 = vst.msk [vmem:[#allocation2 + $0x221] sm:$0xff] %vm3765, %v3736
  %3836 = vst.msk [vmem:[#allocation2 + $0x229] sm:$0xff] %vm3765, %v3737
  %3837 = vst.msk [vmem:[#allocation2 + $0x231] sm:$0xff] %vm3765, %v3738
  %3838 = vst.msk [vmem:[#allocation2 + $0x239] sm:$0xff] %vm3765, %v3739
  %3839 = vst.msk [vmem:[#allocation2 + $0x241] sm:$0xff] %vm3765, %v3740
  %3840 = vst.msk [vmem:[#allocation2 + $0x249] sm:$0xff] %vm3765, %v3741
  %3841 = vst.msk [vmem:[#allocation2 + $0x251] sm:$0xff] %vm3765, %v3742
  %3842 = vst.msk [vmem:[#allocation2 + $0x259] sm:$0xff] %vm3765, %v3743
  %3843 = vst.msk [vmem:[#allocation2 + $0x261] sm:$0x7f] %vm3776, %v3744
  %3844 = vst.msk [vmem:[#allocation2 + $0x269] sm:$0xff] %vm3765, %v3745
  %3845 = vst.msk [vmem:[#allocation2 + $0x271] sm:$0xff] %vm3765, %v3746
  %3846 = vst.msk [vmem:[#allocation2 + $0x279] sm:$0xff] %vm3765, %v3747
  %3847 = vst.msk [vmem:[#allocation2 + $0x281] sm:$0xff] %vm3765, %v3748
  %3848 = vst.msk [vmem:[#allocation2 + $0x289] sm:$0xff] %vm3765, %v3749
  %3849 = vst.msk [vmem:[#allocation2 + $0x291] sm:$0xff] %vm3765, %v3750
  %3850 = vst.msk [vmem:[#allocation2 + $0x299] sm:$0xff] %vm3765, %v3751
  %3851 = vst.msk [vmem:[#allocation2 + $0x2a1] sm:$0xff] %vm3765, %v3752
  %3852 = vst.msk [vmem:[#allocation2 + $0x2a9] sm:$0xff] %vm3765, %v3753
  %3853 = vst.msk [vmem:[#allocation2 + $0x2b1] sm:$0xff] %vm3765, %v3754
  %3854 = vst.msk [vmem:[#allocation2 + $0x2b9] sm:$0x7f] %vm3776, %v3755
  %3943 = vrot.lane.b32.xlu0 %v3580, 32
  %v3944 = vpop.permute.xlu0 %3943
  %3945 = vrot.lane.b32.xlu0 %v3581, 32
  %v3946 = vpop.permute.xlu0 %3945
  %3947 = vrot.lane.b32.xlu0 %v3582, 32
  %v3948 = vpop.permute.xlu0 %3947
  %3949 = vrot.lane.b32.xlu0 %v3583, 32
  %v3950 = vpop.permute.xlu0 %3949
  %3951 = vrot.lane.b32.xlu0 %v3584, 32
  %v3952 = vpop.permute.xlu0 %3951
  %3953 = vrot.lane.b32.xlu0 %v3585, 32
  %v3954 = vpop.permute.xlu0 %3953
  %3955 = vrot.lane.b32.xlu0 %v3586, 32
  %v3956 = vpop.permute.xlu0 %3955
  %3957 = vrot.lane.b32.xlu0 %v3587, 32
  %v3958 = vpop.permute.xlu0 %3957
  %3959 = vrot.lane.b32.xlu0 %v3588, 32
  %v3960 = vpop.permute.xlu0 %3959
  %3961 = vrot.lane.b32.xlu0 %v3589, 32
  %v3962 = vpop.permute.xlu0 %3961
  %3963 = vrot.lane.b32.xlu0 %v3590, 32
  %v3964 = vpop.permute.xlu0 %3963
  %3965 = vrot.lane.b32.xlu0 %v3591, 32
  %v3966 = vpop.permute.xlu0 %3965
  %3967 = vrot.lane.b32.xlu0 %v3592, 32
  %v3968 = vpop.permute.xlu0 %3967
  %3969 = vrot.lane.b32.xlu0 %v3593, 32
  %v3970 = vpop.permute.xlu0 %3969
  %3971 = vrot.lane.b32.xlu0 %v3594, 32
  %v3972 = vpop.permute.xlu0 %3971
  %3973 = vrot.lane.b32.xlu0 %v3595, 32
  %v3974 = vpop.permute.xlu0 %3973
  %3975 = vrot.lane.b32.xlu0 %v3596, 32
  %v3976 = vpop.permute.xlu0 %3975
  %3977 = vrot.lane.b32.xlu0 %v3597, 32
  %v3978 = vpop.permute.xlu0 %3977
  %3979 = vrot.lane.b32.xlu0 %v3598, 32
  %v3980 = vpop.permute.xlu0 %3979
  %3981 = vrot.lane.b32.xlu0 %v3599, 32
  %v3982 = vpop.permute.xlu0 %3981
  %3983 = vrot.lane.b32.xlu0 %v3600, 32
  %v3984 = vpop.permute.xlu0 %3983
  %3985 = vrot.lane.b32.xlu0 %v3601, 32
  %v3986 = vpop.permute.xlu0 %3985
  %3987 = vrot.lane.b32.xlu0 %v3602, 32
  %v3988 = vpop.permute.xlu0 %3987
  %3989 = vrot.lane.b32.xlu0 %v3603, 32
  %v3990 = vpop.permute.xlu0 %3989
  %3991 = vrot.lane.b32.xlu0 %v3604, 32
  %v3992 = vpop.permute.xlu0 %3991
  %3993 = vrot.lane.b32.xlu0 %v3605, 32
  %v3994 = vpop.permute.xlu0 %3993
  %3995 = vrot.lane.b32.xlu0 %v3606, 32
  %v3996 = vpop.permute.xlu0 %3995
  %3997 = vrot.lane.b32.xlu0 %v3607, 32
  %v3998 = vpop.permute.xlu0 %3997
  %3999 = vrot.lane.b32.xlu0 %v3608, 32
  %v4000 = vpop.permute.xlu0 %3999
  %4001 = vrot.lane.b32.xlu0 %v3609, 32
  %v4002 = vpop.permute.xlu0 %4001
  %4003 = vrot.lane.b32.xlu0 %v3610, 32
  %v4004 = vpop.permute.xlu0 %4003
  %4005 = vrot.lane.b32.xlu0 %v3611, 32
  %v4006 = vpop.permute.xlu0 %4005
  %4007 = vrot.lane.b32.xlu0 %v3612, 32
  %v4008 = vpop.permute.xlu0 %4007
  %4009 = vrot.lane.b32.xlu0 %v3613, 32
  %v4010 = vpop.permute.xlu0 %4009
  %4011 = vrot.lane.b32.xlu0 %v3614, 32
  %v4012 = vpop.permute.xlu0 %4011
  %4013 = vrot.lane.b32.xlu0 %v3615, 32
  %v4014 = vpop.permute.xlu0 %4013
  %4015 = vrot.lane.b32.xlu0 %v3616, 32
  %v4016 = vpop.permute.xlu0 %4015
  %4017 = vrot.lane.b32.xlu0 %v3617, 32
  %v4018 = vpop.permute.xlu0 %4017
  %4019 = vrot.lane.b32.xlu0 %v3618, 32
  %v4020 = vpop.permute.xlu0 %4019
  %4021 = vrot.lane.b32.xlu0 %v3619, 32
  %v4022 = vpop.permute.xlu0 %4021
  %4023 = vrot.lane.b32.xlu0 %v3620, 32
  %v4024 = vpop.permute.xlu0 %4023
  %4025 = vrot.lane.b32.xlu0 %v3621, 32
  %v4026 = vpop.permute.xlu0 %4025
  %4027 = vrot.lane.b32.xlu0 %v3622, 32
  %v4028 = vpop.permute.xlu0 %4027
  %4029 = vrot.lane.b32.xlu0 %v3623, 32
  %v4030 = vpop.permute.xlu0 %4029
  %4031 = vrot.lane.b32.xlu0 %v3624, 32
  %v4032 = vpop.permute.xlu0 %4031
  %4033 = vrot.lane.b32.xlu0 %v3625, 32
  %v4034 = vpop.permute.xlu0 %4033
  %4035 = vrot.lane.b32.xlu0 %v3626, 32
  %v4036 = vpop.permute.xlu0 %4035
  %4037 = vrot.lane.b32.xlu0 %v3627, 32
  %v4038 = vpop.permute.xlu0 %4037
  %4039 = vrot.lane.b32.xlu0 %v3628, 32
  %v4040 = vpop.permute.xlu0 %4039
  %4041 = vrot.lane.b32.xlu0 %v3629, 32
  %v4042 = vpop.permute.xlu0 %4041
  %4043 = vrot.lane.b32.xlu0 %v3630, 32
  %v4044 = vpop.permute.xlu0 %4043
  %4045 = vrot.lane.b32.xlu0 %v3631, 32
  %v4046 = vpop.permute.xlu0 %4045
  %4047 = vrot.lane.b32.xlu0 %v3632, 32
  %v4048 = vpop.permute.xlu0 %4047
  %4049 = vrot.lane.b32.xlu0 %v3633, 32
  %v4050 = vpop.permute.xlu0 %4049
  %4051 = vrot.lane.b32.xlu0 %v3634, 32
  %v4052 = vpop.permute.xlu0 %4051
  %4053 = vrot.lane.b32.xlu0 %v3635, 32
  %v4054 = vpop.permute.xlu0 %4053
  %4055 = vrot.lane.b32.xlu0 %v3636, 32
  %v4056 = vpop.permute.xlu0 %4055
  %4057 = vrot.lane.b32.xlu0 %v3637, 32
  %v4058 = vpop.permute.xlu0 %4057
  %4059 = vrot.lane.b32.xlu0 %v3638, 32
  %v4060 = vpop.permute.xlu0 %4059
  %4061 = vrot.lane.b32.xlu0 %v3639, 32
  %v4062 = vpop.permute.xlu0 %4061
  %4063 = vrot.lane.b32.xlu0 %v3640, 32
  %v4064 = vpop.permute.xlu0 %4063
  %4065 = vrot.lane.b32.xlu0 %v3641, 32
  %v4066 = vpop.permute.xlu0 %4065
  %4067 = vrot.lane.b32.xlu0 %v3642, 32
  %v4068 = vpop.permute.xlu0 %4067
  %4069 = vrot.lane.b32.xlu0 %v3643, 32
  %v4070 = vpop.permute.xlu0 %4069
  %4071 = vrot.lane.b32.xlu0 %v3644, 32
  %v4072 = vpop.permute.xlu0 %4071
  %4073 = vrot.lane.b32.xlu0 %v3645, 32
  %v4074 = vpop.permute.xlu0 %4073
  %4075 = vrot.lane.b32.xlu0 %v3646, 32
  %v4076 = vpop.permute.xlu0 %4075
  %4077 = vrot.lane.b32.xlu0 %v3647, 32
  %v4078 = vpop.permute.xlu0 %4077
  %4079 = vrot.lane.b32.xlu0 %v3648, 32
  %v4080 = vpop.permute.xlu0 %4079
  %4081 = vrot.lane.b32.xlu0 %v3649, 32
  %v4082 = vpop.permute.xlu0 %4081
  %4083 = vrot.lane.b32.xlu0 %v3650, 32
  %v4084 = vpop.permute.xlu0 %4083
  %4085 = vrot.lane.b32.xlu0 %v3651, 32
  %v4086 = vpop.permute.xlu0 %4085
  %4087 = vrot.lane.b32.xlu0 %v3652, 32
  %v4088 = vpop.permute.xlu0 %4087
  %4089 = vrot.lane.b32.xlu0 %v3653, 32
  %v4090 = vpop.permute.xlu0 %4089
  %4091 = vrot.lane.b32.xlu0 %v3654, 32
  %v4092 = vpop.permute.xlu0 %4091
  %4093 = vrot.lane.b32.xlu0 %v3655, 32
  %v4094 = vpop.permute.xlu0 %4093
  %4095 = vrot.lane.b32.xlu0 %v3656, 32
  %v4096 = vpop.permute.xlu0 %4095
  %4097 = vrot.lane.b32.xlu0 %v3657, 32
  %v4098 = vpop.permute.xlu0 %4097
  %4099 = vrot.lane.b32.xlu0 %v3658, 32
  %v4100 = vpop.permute.xlu0 %4099
  %4101 = vrot.lane.b32.xlu0 %v3659, 32
  %v4102 = vpop.permute.xlu0 %4101
  %4103 = vrot.lane.b32.xlu0 %v3660, 32
  %v4104 = vpop.permute.xlu0 %4103
  %4105 = vrot.lane.b32.xlu0 %v3661, 32
  %v4106 = vpop.permute.xlu0 %4105
  %4107 = vrot.lane.b32.xlu0 %v3662, 32
  %v4108 = vpop.permute.xlu0 %4107
  %4109 = vrot.lane.b32.xlu0 %v3663, 32
  %v4110 = vpop.permute.xlu0 %4109
  %4111 = vrot.lane.b32.xlu0 %v3664, 32
  %v4112 = vpop.permute.xlu0 %4111
  %4113 = vrot.lane.b32.xlu0 %v3665, 32
  %v4114 = vpop.permute.xlu0 %4113
  %4115 = vrot.lane.b32.xlu0 %v3666, 32
  %v4116 = vpop.permute.xlu0 %4115
  %4117 = vrot.lane.b32.xlu0 %v3667, 32
  %v4118 = vpop.permute.xlu0 %4117
  %vm4207 = vcmask 523520
  %4208 = vst.msk [vmem:[#allocation2] sm:$0xff] %vm4207, %v3944
  %4209 = vst.msk [vmem:[#allocation2 + $0x8] sm:$0xff] %vm4207, %v3946
  %4210 = vst.msk [vmem:[#allocation2 + $0x10] sm:$0xff] %vm4207, %v3948
  %4211 = vst.msk [vmem:[#allocation2 + $0x18] sm:$0xff] %vm4207, %v3950
  %4212 = vst.msk [vmem:[#allocation2 + $0x20] sm:$0xff] %vm4207, %v3952
  %4213 = vst.msk [vmem:[#allocation2 + $0x28] sm:$0xff] %vm4207, %v3954
  %4214 = vst.msk [vmem:[#allocation2 + $0x30] sm:$0xff] %vm4207, %v3956
  %4215 = vst.msk [vmem:[#allocation2 + $0x38] sm:$0xff] %vm4207, %v3958
  %4216 = vst.msk [vmem:[#allocation2 + $0x40] sm:$0xff] %vm4207, %v3960
  %4217 = vst.msk [vmem:[#allocation2 + $0x48] sm:$0xff] %vm4207, %v3962
  %4218 = vst.msk [vmem:[#allocation2 + $0x50] sm:$0xff] %vm4207, %v3964
  %4219 = vst.msk [vmem:[#allocation2 + $0x58] sm:$0xff] %vm4207, %v3966
  %4220 = vst.msk [vmem:[#allocation2 + $0x60] sm:$0xff] %vm4207, %v3968
  %4221 = vst.msk [vmem:[#allocation2 + $0x68] sm:$0xff] %vm4207, %v3970
  %4222 = vst.msk [vmem:[#allocation2 + $0x70] sm:$0xff] %vm4207, %v3972
  %4223 = vst.msk [vmem:[#allocation2 + $0x78] sm:$0xff] %vm4207, %v3974
  %4224 = vst.msk [vmem:[#allocation2 + $0x80] sm:$0xff] %vm4207, %v3976
  %4225 = vst.msk [vmem:[#allocation2 + $0x88] sm:$0xff] %vm4207, %v3978
  %4226 = vst.msk [vmem:[#allocation2 + $0x90] sm:$0xff] %vm4207, %v3980
  %4227 = vst.msk [vmem:[#allocation2 + $0x98] sm:$0xff] %vm4207, %v3982
  %4228 = vst.msk [vmem:[#allocation2 + $0xa0] sm:$0xff] %vm4207, %v3984
  %4229 = vst.msk [vmem:[#allocation2 + $0xa8] sm:$0xff] %vm4207, %v3986
  %4230 = vst.msk [vmem:[#allocation2 + $0xb0] sm:$0xff] %vm4207, %v3988
  %4231 = vst.msk [vmem:[#allocation2 + $0xb8] sm:$0xff] %vm4207, %v3990
  %4232 = vst.msk [vmem:[#allocation2 + $0xc0] sm:$0xff] %vm4207, %v3992
  %4233 = vst.msk [vmem:[#allocation2 + $0xc8] sm:$0xff] %vm4207, %v3994
  %4234 = vst.msk [vmem:[#allocation2 + $0xd0] sm:$0xff] %vm4207, %v3996
  %4235 = vst.msk [vmem:[#allocation2 + $0xd8] sm:$0xff] %vm4207, %v3998
  %4236 = vst.msk [vmem:[#allocation2 + $0xe0] sm:$0xff] %vm4207, %v4000
  %4237 = vst.msk [vmem:[#allocation2 + $0xe8] sm:$0xff] %vm4207, %v4002
  %4238 = vst.msk [vmem:[#allocation2 + $0xf0] sm:$0xff] %vm4207, %v4004
  %4239 = vst.msk [vmem:[#allocation2 + $0xf8] sm:$0xff] %vm4207, %v4006
  %4240 = vst.msk [vmem:[#allocation2 + $0x100] sm:$0xff] %vm4207, %v4008
  %4241 = vst.msk [vmem:[#allocation2 + $0x108] sm:$0xff] %vm4207, %v4010
  %4242 = vst.msk [vmem:[#allocation2 + $0x110] sm:$0xff] %vm4207, %v4012
  %4243 = vst.msk [vmem:[#allocation2 + $0x118] sm:$0xff] %vm4207, %v4014
  %4244 = vst.msk [vmem:[#allocation2 + $0x120] sm:$0xff] %vm4207, %v4016
  %4245 = vst.msk [vmem:[#allocation2 + $0x128] sm:$0xff] %vm4207, %v4018
  %4246 = vst.msk [vmem:[#allocation2 + $0x130] sm:$0xff] %vm4207, %v4020
  %4247 = vst.msk [vmem:[#allocation2 + $0x138] sm:$0xff] %vm4207, %v4022
  %4248 = vst.msk [vmem:[#allocation2 + $0x140] sm:$0xff] %vm4207, %v4024
  %4249 = vst.msk [vmem:[#allocation2 + $0x148] sm:$0xff] %vm4207, %v4026
  %4250 = vst.msk [vmem:[#allocation2 + $0x150] sm:$0xff] %vm4207, %v4028
  %4251 = vst.msk [vmem:[#allocation2 + $0x158] sm:$0xff] %vm4207, %v4030
  %4252 = vst.msk [vmem:[#allocation2 + $0x160] sm:$0xff] %vm4207, %v4032
  %4253 = vst.msk [vmem:[#allocation2 + $0x168] sm:$0xff] %vm4207, %v4034
  %4254 = vst.msk [vmem:[#allocation2 + $0x170] sm:$0xff] %vm4207, %v4036
  %4255 = vst.msk [vmem:[#allocation2 + $0x178] sm:$0xff] %vm4207, %v4038
  %4256 = vst.msk [vmem:[#allocation2 + $0x180] sm:$0xff] %vm4207, %v4040
  %4257 = vst.msk [vmem:[#allocation2 + $0x188] sm:$0xff] %vm4207, %v4042
  %4258 = vst.msk [vmem:[#allocation2 + $0x190] sm:$0xff] %vm4207, %v4044
  %4259 = vst.msk [vmem:[#allocation2 + $0x198] sm:$0xff] %vm4207, %v4046
  %4260 = vst.msk [vmem:[#allocation2 + $0x1a0] sm:$0xff] %vm4207, %v4048
  %4261 = vst.msk [vmem:[#allocation2 + $0x1a8] sm:$0xff] %vm4207, %v4050
  %4262 = vst.msk [vmem:[#allocation2 + $0x1b0] sm:$0xff] %vm4207, %v4052
  %4263 = vst.msk [vmem:[#allocation2 + $0x1b8] sm:$0xff] %vm4207, %v4054
  %4264 = vst.msk [vmem:[#allocation2 + $0x1c0] sm:$0xff] %vm4207, %v4056
  %4265 = vst.msk [vmem:[#allocation2 + $0x1c8] sm:$0xff] %vm4207, %v4058
  %4266 = vst.msk [vmem:[#allocation2 + $0x1d0] sm:$0xff] %vm4207, %v4060
  %4267 = vst.msk [vmem:[#allocation2 + $0x1d8] sm:$0xff] %vm4207, %v4062
  %4268 = vst.msk [vmem:[#allocation2 + $0x1e0] sm:$0xff] %vm4207, %v4064
  %4269 = vst.msk [vmem:[#allocation2 + $0x1e8] sm:$0xff] %vm4207, %v4066
  %4270 = vst.msk [vmem:[#allocation2 + $0x1f0] sm:$0xff] %vm4207, %v4068
  %4271 = vst.msk [vmem:[#allocation2 + $0x1f8] sm:$0xff] %vm4207, %v4070
  %4272 = vst.msk [vmem:[#allocation2 + $0x200] sm:$0xff] %vm4207, %v4072
  %4273 = vst.msk [vmem:[#allocation2 + $0x208] sm:$0xff] %vm4207, %v4074
  %4274 = vst.msk [vmem:[#allocation2 + $0x210] sm:$0xff] %vm4207, %v4076
  %4275 = vst.msk [vmem:[#allocation2 + $0x218] sm:$0xff] %vm4207, %v4078
  %4276 = vst.msk [vmem:[#allocation2 + $0x220] sm:$0xff] %vm4207, %v4080
  %4277 = vst.msk [vmem:[#allocation2 + $0x228] sm:$0xff] %vm4207, %v4082
  %4278 = vst.msk [vmem:[#allocation2 + $0x230] sm:$0xff] %vm4207, %v4084
  %4279 = vst.msk [vmem:[#allocation2 + $0x238] sm:$0xff] %vm4207, %v4086
  %4280 = vst.msk [vmem:[#allocation2 + $0x240] sm:$0xff] %vm4207, %v4088
  %4281 = vst.msk [vmem:[#allocation2 + $0x248] sm:$0xff] %vm4207, %v4090
  %4282 = vst.msk [vmem:[#allocation2 + $0x250] sm:$0xff] %vm4207, %v4092
  %4283 = vst.msk [vmem:[#allocation2 + $0x258] sm:$0xff] %vm4207, %v4094
  %4284 = vst.msk [vmem:[#allocation2 + $0x260] sm:$0xff] %vm4207, %v4096
  %4285 = vst.msk [vmem:[#allocation2 + $0x268] sm:$0xff] %vm4207, %v4098
  %4286 = vst.msk [vmem:[#allocation2 + $0x270] sm:$0xff] %vm4207, %v4100
  %4287 = vst.msk [vmem:[#allocation2 + $0x278] sm:$0xff] %vm4207, %v4102
  %4288 = vst.msk [vmem:[#allocation2 + $0x280] sm:$0xff] %vm4207, %v4104
  %4289 = vst.msk [vmem:[#allocation2 + $0x288] sm:$0xff] %vm4207, %v4106
  %4290 = vst.msk [vmem:[#allocation2 + $0x290] sm:$0xff] %vm4207, %v4108
  %4291 = vst.msk [vmem:[#allocation2 + $0x298] sm:$0xff] %vm4207, %v4110
  %4292 = vst.msk [vmem:[#allocation2 + $0x2a0] sm:$0xff] %vm4207, %v4112
  %4293 = vst.msk [vmem:[#allocation2 + $0x2a8] sm:$0xff] %vm4207, %v4114
  %4294 = vst.msk [vmem:[#allocation2 + $0x2b0] sm:$0xff] %vm4207, %v4116
  %4295 = vst.msk [vmem:[#allocation2 + $0x2b8] sm:$0xff] %vm4207, %v4118
  %4384 = vrot.lane.b32.xlu0 %v3668, 64
  %v4385 = vpop.permute.xlu0 %4384
  %4386 = vrot.lane.b32.xlu0 %v3669, 64
  %v4387 = vpop.permute.xlu0 %4386
  %4388 = vrot.lane.b32.xlu0 %v3670, 64
  %v4389 = vpop.permute.xlu0 %4388
  %4390 = vrot.lane.b32.xlu0 %v3671, 64
  %v4391 = vpop.permute.xlu0 %4390
  %4392 = vrot.lane.b32.xlu0 %v3672, 64
  %v4393 = vpop.permute.xlu0 %4392
  %4394 = vrot.lane.b32.xlu0 %v3673, 64
  %v4395 = vpop.permute.xlu0 %4394
  %4396 = vrot.lane.b32.xlu0 %v3674, 64
  %v4397 = vpop.permute.xlu0 %4396
  %4398 = vrot.lane.b32.xlu0 %v3675, 64
  %v4399 = vpop.permute.xlu0 %4398
  %4400 = vrot.lane.b32.xlu0 %v3676, 64
  %v4401 = vpop.permute.xlu0 %4400
  %4402 = vrot.lane.b32.xlu0 %v3677, 64
  %v4403 = vpop.permute.xlu0 %4402
  %4404 = vrot.lane.b32.xlu0 %v3678, 64
  %v4405 = vpop.permute.xlu0 %4404
  %4406 = vrot.lane.b32.xlu0 %v3679, 64
  %v4407 = vpop.permute.xlu0 %4406
  %4408 = vrot.lane.b32.xlu0 %v3680, 64
  %v4409 = vpop.permute.xlu0 %4408
  %4410 = vrot.lane.b32.xlu0 %v3681, 64
  %v4411 = vpop.permute.xlu0 %4410
  %4412 = vrot.lane.b32.xlu0 %v3682, 64
  %v4413 = vpop.permute.xlu0 %4412
  %4414 = vrot.lane.b32.xlu0 %v3683, 64
  %v4415 = vpop.permute.xlu0 %4414
  %4416 = vrot.lane.b32.xlu0 %v3684, 64
  %v4417 = vpop.permute.xlu0 %4416
  %4418 = vrot.lane.b32.xlu0 %v3685, 64
  %v4419 = vpop.permute.xlu0 %4418
  %4420 = vrot.lane.b32.xlu0 %v3686, 64
  %v4421 = vpop.permute.xlu0 %4420
  %4422 = vrot.lane.b32.xlu0 %v3687, 64
  %v4423 = vpop.permute.xlu0 %4422
  %4424 = vrot.lane.b32.xlu0 %v3688, 64
  %v4425 = vpop.permute.xlu0 %4424
  %4426 = vrot.lane.b32.xlu0 %v3689, 64
  %v4427 = vpop.permute.xlu0 %4426
  %4428 = vrot.lane.b32.xlu0 %v3690, 64
  %v4429 = vpop.permute.xlu0 %4428
  %4430 = vrot.lane.b32.xlu0 %v3691, 64
  %v4431 = vpop.permute.xlu0 %4430
  %4432 = vrot.lane.b32.xlu0 %v3692, 64
  %v4433 = vpop.permute.xlu0 %4432
  %4434 = vrot.lane.b32.xlu0 %v3693, 64
  %v4435 = vpop.permute.xlu0 %4434
  %4436 = vrot.lane.b32.xlu0 %v3694, 64
  %v4437 = vpop.permute.xlu0 %4436
  %4438 = vrot.lane.b32.xlu0 %v3695, 64
  %v4439 = vpop.permute.xlu0 %4438
  %4440 = vrot.lane.b32.xlu0 %v3696, 64
  %v4441 = vpop.permute.xlu0 %4440
  %4442 = vrot.lane.b32.xlu0 %v3697, 64
  %v4443 = vpop.permute.xlu0 %4442
  %4444 = vrot.lane.b32.xlu0 %v3698, 64
  %v4445 = vpop.permute.xlu0 %4444
  %4446 = vrot.lane.b32.xlu0 %v3699, 64
  %v4447 = vpop.permute.xlu0 %4446
  %4448 = vrot.lane.b32.xlu0 %v3700, 64
  %v4449 = vpop.permute.xlu0 %4448
  %4450 = vrot.lane.b32.xlu0 %v3701, 64
  %v4451 = vpop.permute.xlu0 %4450
  %4452 = vrot.lane.b32.xlu0 %v3702, 64
  %v4453 = vpop.permute.xlu0 %4452
  %4454 = vrot.lane.b32.xlu0 %v3703, 64
  %v4455 = vpop.permute.xlu0 %4454
  %4456 = vrot.lane.b32.xlu0 %v3704, 64
  %v4457 = vpop.permute.xlu0 %4456
  %4458 = vrot.lane.b32.xlu0 %v3705, 64
  %v4459 = vpop.permute.xlu0 %4458
  %4460 = vrot.lane.b32.xlu0 %v3706, 64
  %v4461 = vpop.permute.xlu0 %4460
  %4462 = vrot.lane.b32.xlu0 %v3707, 64
  %v4463 = vpop.permute.xlu0 %4462
  %4464 = vrot.lane.b32.xlu0 %v3708, 64
  %v4465 = vpop.permute.xlu0 %4464
  %4466 = vrot.lane.b32.xlu0 %v3709, 64
  %v4467 = vpop.permute.xlu0 %4466
  %4468 = vrot.lane.b32.xlu0 %v3710, 64
  %v4469 = vpop.permute.xlu0 %4468
  %4470 = vrot.lane.b32.xlu0 %v3711, 64
  %v4471 = vpop.permute.xlu0 %4470
  %4472 = vrot.lane.b32.xlu0 %v3712, 64
  %v4473 = vpop.permute.xlu0 %4472
  %4474 = vrot.lane.b32.xlu0 %v3713, 64
  %v4475 = vpop.permute.xlu0 %4474
  %4476 = vrot.lane.b32.xlu0 %v3714, 64
  %v4477 = vpop.permute.xlu0 %4476
  %4478 = vrot.lane.b32.xlu0 %v3715, 64
  %v4479 = vpop.permute.xlu0 %4478
  %4480 = vrot.lane.b32.xlu0 %v3716, 64
  %v4481 = vpop.permute.xlu0 %4480
  %4482 = vrot.lane.b32.xlu0 %v3717, 64
  %v4483 = vpop.permute.xlu0 %4482
  %4484 = vrot.lane.b32.xlu0 %v3718, 64
  %v4485 = vpop.permute.xlu0 %4484
  %4486 = vrot.lane.b32.xlu0 %v3719, 64
  %v4487 = vpop.permute.xlu0 %4486
  %4488 = vrot.lane.b32.xlu0 %v3720, 64
  %v4489 = vpop.permute.xlu0 %4488
  %4490 = vrot.lane.b32.xlu0 %v3721, 64
  %v4491 = vpop.permute.xlu0 %4490
  %4492 = vrot.lane.b32.xlu0 %v3722, 64
  %v4493 = vpop.permute.xlu0 %4492
  %4494 = vrot.lane.b32.xlu0 %v3723, 64
  %v4495 = vpop.permute.xlu0 %4494
  %4496 = vrot.lane.b32.xlu0 %v3724, 64
  %v4497 = vpop.permute.xlu0 %4496
  %4498 = vrot.lane.b32.xlu0 %v3725, 64
  %v4499 = vpop.permute.xlu0 %4498
  %4500 = vrot.lane.b32.xlu0 %v3726, 64
  %v4501 = vpop.permute.xlu0 %4500
  %4502 = vrot.lane.b32.xlu0 %v3727, 64
  %v4503 = vpop.permute.xlu0 %4502
  %4504 = vrot.lane.b32.xlu0 %v3728, 64
  %v4505 = vpop.permute.xlu0 %4504
  %4506 = vrot.lane.b32.xlu0 %v3729, 64
  %v4507 = vpop.permute.xlu0 %4506
  %4508 = vrot.lane.b32.xlu0 %v3730, 64
  %v4509 = vpop.permute.xlu0 %4508
  %4510 = vrot.lane.b32.xlu0 %v3731, 64
  %v4511 = vpop.permute.xlu0 %4510
  %4512 = vrot.lane.b32.xlu0 %v3732, 64
  %v4513 = vpop.permute.xlu0 %4512
  %4514 = vrot.lane.b32.xlu0 %v3733, 64
  %v4515 = vpop.permute.xlu0 %4514
  %4516 = vrot.lane.b32.xlu0 %v3734, 64
  %v4517 = vpop.permute.xlu0 %4516
  %4518 = vrot.lane.b32.xlu0 %v3735, 64
  %v4519 = vpop.permute.xlu0 %4518
  %4520 = vrot.lane.b32.xlu0 %v3736, 64
  %v4521 = vpop.permute.xlu0 %4520
  %4522 = vrot.lane.b32.xlu0 %v3737, 64
  %v4523 = vpop.permute.xlu0 %4522
  %4524 = vrot.lane.b32.xlu0 %v3738, 64
  %v4525 = vpop.permute.xlu0 %4524
  %4526 = vrot.lane.b32.xlu0 %v3739, 64
  %v4527 = vpop.permute.xlu0 %4526
  %4528 = vrot.lane.b32.xlu0 %v3740, 64
  %v4529 = vpop.permute.xlu0 %4528
  %4530 = vrot.lane.b32.xlu0 %v3741, 64
  %v4531 = vpop.permute.xlu0 %4530
  %4532 = vrot.lane.b32.xlu0 %v3742, 64
  %v4533 = vpop.permute.xlu0 %4532
  %4534 = vrot.lane.b32.xlu0 %v3743, 64
  %v4535 = vpop.permute.xlu0 %4534
  %4536 = vrot.lane.b32.xlu0 %v3744, 64
  %v4537 = vpop.permute.xlu0 %4536
  %4538 = vrot.lane.b32.xlu0 %v3745, 64
  %v4539 = vpop.permute.xlu0 %4538
  %4540 = vrot.lane.b32.xlu0 %v3746, 64
  %v4541 = vpop.permute.xlu0 %4540
  %4542 = vrot.lane.b32.xlu0 %v3747, 64
  %v4543 = vpop.permute.xlu0 %4542
  %4544 = vrot.lane.b32.xlu0 %v3748, 64
  %v4545 = vpop.permute.xlu0 %4544
  %4546 = vrot.lane.b32.xlu0 %v3749, 64
  %v4547 = vpop.permute.xlu0 %4546
  %4548 = vrot.lane.b32.xlu0 %v3750, 64
  %v4549 = vpop.permute.xlu0 %4548
  %4550 = vrot.lane.b32.xlu0 %v3751, 64
  %v4551 = vpop.permute.xlu0 %4550
  %4552 = vrot.lane.b32.xlu0 %v3752, 64
  %v4553 = vpop.permute.xlu0 %4552
  %4554 = vrot.lane.b32.xlu0 %v3753, 64
  %v4555 = vpop.permute.xlu0 %4554
  %4556 = vrot.lane.b32.xlu0 %v3754, 64
  %v4557 = vpop.permute.xlu0 %4556
  %4558 = vrot.lane.b32.xlu0 %v3755, 64
  %v4559 = vpop.permute.xlu0 %4558
  %vm4648 = vcmask 785920
  %4649 = vst.msk [vmem:[#allocation2] sm:$0xff] %vm4648, %v4385
  %4650 = vst.msk [vmem:[#allocation2 + $0x8] sm:$0xff] %vm4648, %v4387
  %4651 = vst.msk [vmem:[#allocation2 + $0x10] sm:$0xff] %vm4648, %v4389
  %4652 = vst.msk [vmem:[#allocation2 + $0x18] sm:$0xff] %vm4648, %v4391
  %4653 = vst.msk [vmem:[#allocation2 + $0x20] sm:$0xff] %vm4648, %v4393
  %4654 = vst.msk [vmem:[#allocation2 + $0x28] sm:$0xff] %vm4648, %v4395
  %4655 = vst.msk [vmem:[#allocation2 + $0x30] sm:$0xff] %vm4648, %v4397
  %4656 = vst.msk [vmem:[#allocation2 + $0x38] sm:$0xff] %vm4648, %v4399
  %4657 = vst.msk [vmem:[#allocation2 + $0x40] sm:$0xff] %vm4648, %v4401
  %4658 = vst.msk [vmem:[#allocation2 + $0x48] sm:$0xff] %vm4648, %v4403
  %4659 = vst.msk [vmem:[#allocation2 + $0x50] sm:$0xff] %vm4648, %v4405
  %4660 = vst.msk [vmem:[#allocation2 + $0x58] sm:$0xff] %vm4648, %v4407
  %4661 = vst.msk [vmem:[#allocation2 + $0x60] sm:$0xff] %vm4648, %v4409
  %4662 = vst.msk [vmem:[#allocation2 + $0x68] sm:$0xff] %vm4648, %v4411
  %4663 = vst.msk [vmem:[#allocation2 + $0x70] sm:$0xff] %vm4648, %v4413
  %4664 = vst.msk [vmem:[#allocation2 + $0x78] sm:$0xff] %vm4648, %v4415
  %4665 = vst.msk [vmem:[#allocation2 + $0x80] sm:$0xff] %vm4648, %v4417
  %4666 = vst.msk [vmem:[#allocation2 + $0x88] sm:$0xff] %vm4648, %v4419
  %4667 = vst.msk [vmem:[#allocation2 + $0x90] sm:$0xff] %vm4648, %v4421
  %4668 = vst.msk [vmem:[#allocation2 + $0x98] sm:$0xff] %vm4648, %v4423
  %4669 = vst.msk [vmem:[#allocation2 + $0xa0] sm:$0xff] %vm4648, %v4425
  %4670 = vst.msk [vmem:[#allocation2 + $0xa8] sm:$0xff] %vm4648, %v4427
  %4671 = vst.msk [vmem:[#allocation2 + $0xb0] sm:$0xff] %vm4648, %v4429
  %4672 = vst.msk [vmem:[#allocation2 + $0xb8] sm:$0xff] %vm4648, %v4431
  %4673 = vst.msk [vmem:[#allocation2 + $0xc0] sm:$0xff] %vm4648, %v4433
  %4674 = vst.msk [vmem:[#allocation2 + $0xc8] sm:$0xff] %vm4648, %v4435
  %4675 = vst.msk [vmem:[#allocation2 + $0xd0] sm:$0xff] %vm4648, %v4437
  %4676 = vst.msk [vmem:[#allocation2 + $0xd8] sm:$0xff] %vm4648, %v4439
  %4677 = vst.msk [vmem:[#allocation2 + $0xe0] sm:$0xff] %vm4648, %v4441
  %4678 = vst.msk [vmem:[#allocation2 + $0xe8] sm:$0xff] %vm4648, %v4443
  %4679 = vst.msk [vmem:[#allocation2 + $0xf0] sm:$0xff] %vm4648, %v4445
  %4680 = vst.msk [vmem:[#allocation2 + $0xf8] sm:$0xff] %vm4648, %v4447
  %4681 = vst.msk [vmem:[#allocation2 + $0x100] sm:$0xff] %vm4648, %v4449
  %4682 = vst.msk [vmem:[#allocation2 + $0x108] sm:$0xff] %vm4648, %v4451
  %4683 = vst.msk [vmem:[#allocation2 + $0x110] sm:$0xff] %vm4648, %v4453
  %4684 = vst.msk [vmem:[#allocation2 + $0x118] sm:$0xff] %vm4648, %v4455
  %4685 = vst.msk [vmem:[#allocation2 + $0x120] sm:$0xff] %vm4648, %v4457
  %4686 = vst.msk [vmem:[#allocation2 + $0x128] sm:$0xff] %vm4648, %v4459
  %4687 = vst.msk [vmem:[#allocation2 + $0x130] sm:$0xff] %vm4648, %v4461
  %4688 = vst.msk [vmem:[#allocation2 + $0x138] sm:$0xff] %vm4648, %v4463
  %4689 = vst.msk [vmem:[#allocation2 + $0x140] sm:$0xff] %vm4648, %v4465
  %4690 = vst.msk [vmem:[#allocation2 + $0x148] sm:$0xff] %vm4648, %v4467
  %4691 = vst.msk [vmem:[#allocation2 + $0x150] sm:$0xff] %vm4648, %v4469
  %4692 = vst.msk [vmem:[#allocation2 + $0x158] sm:$0xff] %vm4648, %v4471
  %4693 = vst.msk [vmem:[#allocation2 + $0x160] sm:$0xff] %vm4648, %v4473
  %4694 = vst.msk [vmem:[#allocation2 + $0x168] sm:$0xff] %vm4648, %v4475
  %4695 = vst.msk [vmem:[#allocation2 + $0x170] sm:$0xff] %vm4648, %v4477
  %4696 = vst.msk [vmem:[#allocation2 + $0x178] sm:$0xff] %vm4648, %v4479
  %4697 = vst.msk [vmem:[#allocation2 + $0x180] sm:$0xff] %vm4648, %v4481
  %4698 = vst.msk [vmem:[#allocation2 + $0x188] sm:$0xff] %vm4648, %v4483
  %4699 = vst.msk [vmem:[#allocation2 + $0x190] sm:$0xff] %vm4648, %v4485
  %4700 = vst.msk [vmem:[#allocation2 + $0x198] sm:$0xff] %vm4648, %v4487
  %4701 = vst.msk [vmem:[#allocation2 + $0x1a0] sm:$0xff] %vm4648, %v4489
  %4702 = vst.msk [vmem:[#allocation2 + $0x1a8] sm:$0xff] %vm4648, %v4491
  %4703 = vst.msk [vmem:[#allocation2 + $0x1b0] sm:$0xff] %vm4648, %v4493
  %4704 = vst.msk [vmem:[#allocation2 + $0x1b8] sm:$0xff] %vm4648, %v4495
  %4705 = vst.msk [vmem:[#allocation2 + $0x1c0] sm:$0xff] %vm4648, %v4497
  %4706 = vst.msk [vmem:[#allocation2 + $0x1c8] sm:$0xff] %vm4648, %v4499
  %4707 = vst.msk [vmem:[#allocation2 + $0x1d0] sm:$0xff] %vm4648, %v4501
  %4708 = vst.msk [vmem:[#allocation2 + $0x1d8] sm:$0xff] %vm4648, %v4503
  %4709 = vst.msk [vmem:[#allocation2 + $0x1e0] sm:$0xff] %vm4648, %v4505
  %4710 = vst.msk [vmem:[#allocation2 + $0x1e8] sm:$0xff] %vm4648, %v4507
  %4711 = vst.msk [vmem:[#allocation2 + $0x1f0] sm:$0xff] %vm4648, %v4509
  %4712 = vst.msk [vmem:[#allocation2 + $0x1f8] sm:$0xff] %vm4648, %v4511
  %4713 = vst.msk [vmem:[#allocation2 + $0x200] sm:$0xff] %vm4648, %v4513
  %4714 = vst.msk [vmem:[#allocation2 + $0x208] sm:$0xff] %vm4648, %v4515
  %4715 = vst.msk [vmem:[#allocation2 + $0x210] sm:$0xff] %vm4648, %v4517
  %4716 = vst.msk [vmem:[#allocation2 + $0x218] sm:$0xff] %vm4648, %v4519
  %4717 = vst.msk [vmem:[#allocation2 + $0x220] sm:$0xff] %vm4648, %v4521
  %4718 = vst.msk [vmem:[#allocation2 + $0x228] sm:$0xff] %vm4648, %v4523
  %4719 = vst.msk [vmem:[#allocation2 + $0x230] sm:$0xff] %vm4648, %v4525
  %4720 = vst.msk [vmem:[#allocation2 + $0x238] sm:$0xff] %vm4648, %v4527
  %4721 = vst.msk [vmem:[#allocation2 + $0x240] sm:$0xff] %vm4648, %v4529
  %4722 = vst.msk [vmem:[#allocation2 + $0x248] sm:$0xff] %vm4648, %v4531
  %4723 = vst.msk [vmem:[#allocation2 + $0x250] sm:$0xff] %vm4648, %v4533
  %4724 = vst.msk [vmem:[#allocation2 + $0x258] sm:$0xff] %vm4648, %v4535
  %4725 = vst.msk [vmem:[#allocation2 + $0x260] sm:$0xff] %vm4648, %v4537
  %4726 = vst.msk [vmem:[#allocation2 + $0x268] sm:$0xff] %vm4648, %v4539
  %4727 = vst.msk [vmem:[#allocation2 + $0x270] sm:$0xff] %vm4648, %v4541
  %4728 = vst.msk [vmem:[#allocation2 + $0x278] sm:$0xff] %vm4648, %v4543
  %4729 = vst.msk [vmem:[#allocation2 + $0x280] sm:$0xff] %vm4648, %v4545
  %4730 = vst.msk [vmem:[#allocation2 + $0x288] sm:$0xff] %vm4648, %v4547
  %4731 = vst.msk [vmem:[#allocation2 + $0x290] sm:$0xff] %vm4648, %v4549
  %4732 = vst.msk [vmem:[#allocation2 + $0x298] sm:$0xff] %vm4648, %v4551
  %4733 = vst.msk [vmem:[#allocation2 + $0x2a0] sm:$0xff] %vm4648, %v4553
  %4734 = vst.msk [vmem:[#allocation2 + $0x2a8] sm:$0xff] %vm4648, %v4555
  %4735 = vst.msk [vmem:[#allocation2 + $0x2b0] sm:$0xff] %vm4648, %v4557
  %4736 = vst.msk [vmem:[#allocation2 + $0x2b8] sm:$0xff] %vm4648, %v4559
  %4737 = vrot.lane.b32.xlu0 %v3580, 96
  %v4738 = vpop.permute.xlu0 %4737
  %4739 = vrot.lane.b32.xlu0 %v3581, 96
  %v4740 = vpop.permute.xlu0 %4739
  %4741 = vrot.lane.b32.xlu0 %v3582, 96
  %v4742 = vpop.permute.xlu0 %4741
  %4743 = vrot.lane.b32.xlu0 %v3583, 96
  %v4744 = vpop.permute.xlu0 %4743
  %4745 = vrot.lane.b32.xlu0 %v3584, 96
  %v4746 = vpop.permute.xlu0 %4745
  %4747 = vrot.lane.b32.xlu0 %v3585, 96
  %v4748 = vpop.permute.xlu0 %4747
  %4749 = vrot.lane.b32.xlu0 %v3586, 96
  %v4750 = vpop.permute.xlu0 %4749
  %4751 = vrot.lane.b32.xlu0 %v3587, 96
  %v4752 = vpop.permute.xlu0 %4751
  %4753 = vrot.lane.b32.xlu0 %v3588, 96
  %v4754 = vpop.permute.xlu0 %4753
  %4755 = vrot.lane.b32.xlu0 %v3589, 96
  %v4756 = vpop.permute.xlu0 %4755
  %4757 = vrot.lane.b32.xlu0 %v3590, 96
  %v4758 = vpop.permute.xlu0 %4757
  %4759 = vrot.lane.b32.xlu0 %v3591, 96
  %v4760 = vpop.permute.xlu0 %4759
  %4761 = vrot.lane.b32.xlu0 %v3592, 96
  %v4762 = vpop.permute.xlu0 %4761
  %4763 = vrot.lane.b32.xlu0 %v3593, 96
  %v4764 = vpop.permute.xlu0 %4763
  %4765 = vrot.lane.b32.xlu0 %v3594, 96
  %v4766 = vpop.permute.xlu0 %4765
  %4767 = vrot.lane.b32.xlu0 %v3595, 96
  %v4768 = vpop.permute.xlu0 %4767
  %4769 = vrot.lane.b32.xlu0 %v3596, 96
  %v4770 = vpop.permute.xlu0 %4769
  %4771 = vrot.lane.b32.xlu0 %v3597, 96
  %v4772 = vpop.permute.xlu0 %4771
  %4773 = vrot.lane.b32.xlu0 %v3598, 96
  %v4774 = vpop.permute.xlu0 %4773
  %4775 = vrot.lane.b32.xlu0 %v3599, 96
  %v4776 = vpop.permute.xlu0 %4775
  %4777 = vrot.lane.b32.xlu0 %v3600, 96
  %v4778 = vpop.permute.xlu0 %4777
  %4779 = vrot.lane.b32.xlu0 %v3601, 96
  %v4780 = vpop.permute.xlu0 %4779
  %4781 = vrot.lane.b32.xlu0 %v3602, 96
  %v4782 = vpop.permute.xlu0 %4781
  %4783 = vrot.lane.b32.xlu0 %v3603, 96
  %v4784 = vpop.permute.xlu0 %4783
  %4785 = vrot.lane.b32.xlu0 %v3604, 96
  %v4786 = vpop.permute.xlu0 %4785
  %4787 = vrot.lane.b32.xlu0 %v3605, 96
  %v4788 = vpop.permute.xlu0 %4787
  %4789 = vrot.lane.b32.xlu0 %v3606, 96
  %v4790 = vpop.permute.xlu0 %4789
  %4791 = vrot.lane.b32.xlu0 %v3607, 96
  %v4792 = vpop.permute.xlu0 %4791
  %4793 = vrot.lane.b32.xlu0 %v3608, 96
  %v4794 = vpop.permute.xlu0 %4793
  %4795 = vrot.lane.b32.xlu0 %v3609, 96
  %v4796 = vpop.permute.xlu0 %4795
  %4797 = vrot.lane.b32.xlu0 %v3610, 96
  %v4798 = vpop.permute.xlu0 %4797
  %4799 = vrot.lane.b32.xlu0 %v3611, 96
  %v4800 = vpop.permute.xlu0 %4799
  %4801 = vrot.lane.b32.xlu0 %v3612, 96
  %v4802 = vpop.permute.xlu0 %4801
  %4803 = vrot.lane.b32.xlu0 %v3613, 96
  %v4804 = vpop.permute.xlu0 %4803
  %4805 = vrot.lane.b32.xlu0 %v3614, 96
  %v4806 = vpop.permute.xlu0 %4805
  %4807 = vrot.lane.b32.xlu0 %v3615, 96
  %v4808 = vpop.permute.xlu0 %4807
  %4809 = vrot.lane.b32.xlu0 %v3616, 96
  %v4810 = vpop.permute.xlu0 %4809
  %4811 = vrot.lane.b32.xlu0 %v3617, 96
  %v4812 = vpop.permute.xlu0 %4811
  %4813 = vrot.lane.b32.xlu0 %v3618, 96
  %v4814 = vpop.permute.xlu0 %4813
  %4815 = vrot.lane.b32.xlu0 %v3619, 96
  %v4816 = vpop.permute.xlu0 %4815
  %4817 = vrot.lane.b32.xlu0 %v3620, 96
  %v4818 = vpop.permute.xlu0 %4817
  %4819 = vrot.lane.b32.xlu0 %v3621, 96
  %v4820 = vpop.permute.xlu0 %4819
  %4821 = vrot.lane.b32.xlu0 %v3622, 96
  %v4822 = vpop.permute.xlu0 %4821
  %4823 = vrot.lane.b32.xlu0 %v3623, 96
  %v4824 = vpop.permute.xlu0 %4823
  %4825 = vrot.lane.b32.xlu0 %v3624, 96
  %v4826 = vpop.permute.xlu0 %4825
  %4827 = vrot.lane.b32.xlu0 %v3625, 96
  %v4828 = vpop.permute.xlu0 %4827
  %4829 = vrot.lane.b32.xlu0 %v3626, 96
  %v4830 = vpop.permute.xlu0 %4829
  %4831 = vrot.lane.b32.xlu0 %v3627, 96
  %v4832 = vpop.permute.xlu0 %4831
  %4833 = vrot.lane.b32.xlu0 %v3628, 96
  %v4834 = vpop.permute.xlu0 %4833
  %4835 = vrot.lane.b32.xlu0 %v3629, 96
  %v4836 = vpop.permute.xlu0 %4835
  %4837 = vrot.lane.b32.xlu0 %v3630, 96
  %v4838 = vpop.permute.xlu0 %4837
  %4839 = vrot.lane.b32.xlu0 %v3631, 96
  %v4840 = vpop.permute.xlu0 %4839
  %4841 = vrot.lane.b32.xlu0 %v3632, 96
  %v4842 = vpop.permute.xlu0 %4841
  %4843 = vrot.lane.b32.xlu0 %v3633, 96
  %v4844 = vpop.permute.xlu0 %4843
  %4845 = vrot.lane.b32.xlu0 %v3634, 96
  %v4846 = vpop.permute.xlu0 %4845
  %4847 = vrot.lane.b32.xlu0 %v3635, 96
  %v4848 = vpop.permute.xlu0 %4847
  %4849 = vrot.lane.b32.xlu0 %v3636, 96
  %v4850 = vpop.permute.xlu0 %4849
  %4851 = vrot.lane.b32.xlu0 %v3637, 96
  %v4852 = vpop.permute.xlu0 %4851
  %4853 = vrot.lane.b32.xlu0 %v3638, 96
  %v4854 = vpop.permute.xlu0 %4853
  %4855 = vrot.lane.b32.xlu0 %v3639, 96
  %v4856 = vpop.permute.xlu0 %4855
  %4857 = vrot.lane.b32.xlu0 %v3640, 96
  %v4858 = vpop.permute.xlu0 %4857
  %4859 = vrot.lane.b32.xlu0 %v3641, 96
  %v4860 = vpop.permute.xlu0 %4859
  %4861 = vrot.lane.b32.xlu0 %v3642, 96
  %v4862 = vpop.permute.xlu0 %4861
  %4863 = vrot.lane.b32.xlu0 %v3643, 96
  %v4864 = vpop.permute.xlu0 %4863
  %4865 = vrot.lane.b32.xlu0 %v3644, 96
  %v4866 = vpop.permute.xlu0 %4865
  %4867 = vrot.lane.b32.xlu0 %v3645, 96
  %v4868 = vpop.permute.xlu0 %4867
  %4869 = vrot.lane.b32.xlu0 %v3646, 96
  %v4870 = vpop.permute.xlu0 %4869
  %4871 = vrot.lane.b32.xlu0 %v3647, 96
  %v4872 = vpop.permute.xlu0 %4871
  %4873 = vrot.lane.b32.xlu0 %v3648, 96
  %v4874 = vpop.permute.xlu0 %4873
  %4875 = vrot.lane.b32.xlu0 %v3649, 96
  %v4876 = vpop.permute.xlu0 %4875
  %4877 = vrot.lane.b32.xlu0 %v3650, 96
  %v4878 = vpop.permute.xlu0 %4877
  %4879 = vrot.lane.b32.xlu0 %v3651, 96
  %v4880 = vpop.permute.xlu0 %4879
  %4881 = vrot.lane.b32.xlu0 %v3652, 96
  %v4882 = vpop.permute.xlu0 %4881
  %4883 = vrot.lane.b32.xlu0 %v3653, 96
  %v4884 = vpop.permute.xlu0 %4883
  %4885 = vrot.lane.b32.xlu0 %v3654, 96
  %v4886 = vpop.permute.xlu0 %4885
  %4887 = vrot.lane.b32.xlu0 %v3655, 96
  %v4888 = vpop.permute.xlu0 %4887
  %4889 = vrot.lane.b32.xlu0 %v3656, 96
  %v4890 = vpop.permute.xlu0 %4889
  %4891 = vrot.lane.b32.xlu0 %v3657, 96
  %v4892 = vpop.permute.xlu0 %4891
  %4893 = vrot.lane.b32.xlu0 %v3658, 96
  %v4894 = vpop.permute.xlu0 %4893
  %4895 = vrot.lane.b32.xlu0 %v3659, 96
  %v4896 = vpop.permute.xlu0 %4895
  %4897 = vrot.lane.b32.xlu0 %v3660, 96
  %v4898 = vpop.permute.xlu0 %4897
  %4899 = vrot.lane.b32.xlu0 %v3661, 96
  %v4900 = vpop.permute.xlu0 %4899
  %4901 = vrot.lane.b32.xlu0 %v3662, 96
  %v4902 = vpop.permute.xlu0 %4901
  %4903 = vrot.lane.b32.xlu0 %v3663, 96
  %v4904 = vpop.permute.xlu0 %4903
  %4905 = vrot.lane.b32.xlu0 %v3664, 96
  %v4906 = vpop.permute.xlu0 %4905
  %4907 = vrot.lane.b32.xlu0 %v3665, 96
  %v4908 = vpop.permute.xlu0 %4907
  %4909 = vrot.lane.b32.xlu0 %v3666, 96
  %v4910 = vpop.permute.xlu0 %4909
  %4911 = vrot.lane.b32.xlu0 %v3667, 96
  %v4912 = vpop.permute.xlu0 %4911
  %vm5001 = vcmask 1048321
  %5002 = vst.msk [vmem:[#allocation2 - $0x1] sm:$0xfe] %vm5001, %v4738
  %vm5003 = vcmask 1048320
  %5004 = vst.msk [vmem:[#allocation2 + $0x7] sm:$0xff] %vm5003, %v4740
  %5005 = vst.msk [vmem:[#allocation2 + $0xf] sm:$0xff] %vm5003, %v4742
  %5006 = vst.msk [vmem:[#allocation2 + $0x17] sm:$0xff] %vm5003, %v4744
  %5007 = vst.msk [vmem:[#allocation2 + $0x1f] sm:$0xff] %vm5003, %v4746
  %5008 = vst.msk [vmem:[#allocation2 + $0x27] sm:$0xff] %vm5003, %v4748
  %5009 = vst.msk [vmem:[#allocation2 + $0x2f] sm:$0xff] %vm5003, %v4750
  %5010 = vst.msk [vmem:[#allocation2 + $0x37] sm:$0xff] %vm5003, %v4752
  %5011 = vst.msk [vmem:[#allocation2 + $0x3f] sm:$0xff] %vm5003, %v4754
  %5012 = vst.msk [vmem:[#allocation2 + $0x47] sm:$0xff] %vm5003, %v4756
  %5013 = vst.msk [vmem:[#allocation2 + $0x4f] sm:$0xff] %vm5003, %v4758
  %5014 = vst.msk [vmem:[#allocation2 + $0x57] sm:$0xfe] %vm5001, %v4760
  %5015 = vst.msk [vmem:[#allocation2 + $0x5f] sm:$0xff] %vm5003, %v4762
  %5016 = vst.msk [vmem:[#allocation2 + $0x67] sm:$0xff] %vm5003, %v4764
  %5017 = vst.msk [vmem:[#allocation2 + $0x6f] sm:$0xff] %vm5003, %v4766
  %5018 = vst.msk [vmem:[#allocation2 + $0x77] sm:$0xff] %vm5003, %v4768
  %5019 = vst.msk [vmem:[#allocation2 + $0x7f] sm:$0xff] %vm5003, %v4770
  %5020 = vst.msk [vmem:[#allocation2 + $0x87] sm:$0xff] %vm5003, %v4772
  %5021 = vst.msk [vmem:[#allocation2 + $0x8f] sm:$0xff] %vm5003, %v4774
  %5022 = vst.msk [vmem:[#allocation2 + $0x97] sm:$0xff] %vm5003, %v4776
  %5023 = vst.msk [vmem:[#allocation2 + $0x9f] sm:$0xff] %vm5003, %v4778
  %5024 = vst.msk [vmem:[#allocation2 + $0xa7] sm:$0xff] %vm5003, %v4780
  %5025 = vst.msk [vmem:[#allocation2 + $0xaf] sm:$0xfe] %vm5001, %v4782
  %5026 = vst.msk [vmem:[#allocation2 + $0xb7] sm:$0xff] %vm5003, %v4784
  %5027 = vst.msk [vmem:[#allocation2 + $0xbf] sm:$0xff] %vm5003, %v4786
  %5028 = vst.msk [vmem:[#allocation2 + $0xc7] sm:$0xff] %vm5003, %v4788
  %5029 = vst.msk [vmem:[#allocation2 + $0xcf] sm:$0xff] %vm5003, %v4790
  %5030 = vst.msk [vmem:[#allocation2 + $0xd7] sm:$0xff] %vm5003, %v4792
  %5031 = vst.msk [vmem:[#allocation2 + $0xdf] sm:$0xff] %vm5003, %v4794
  %5032 = vst.msk [vmem:[#allocation2 + $0xe7] sm:$0xff] %vm5003, %v4796
  %5033 = vst.msk [vmem:[#allocation2 + $0xef] sm:$0xff] %vm5003, %v4798
  %5034 = vst.msk [vmem:[#allocation2 + $0xf7] sm:$0xff] %vm5003, %v4800
  %5035 = vst.msk [vmem:[#allocation2 + $0xff] sm:$0xff] %vm5003, %v4802
  %5036 = vst.msk [vmem:[#allocation2 + $0x107] sm:$0xfe] %vm5001, %v4804
  %5037 = vst.msk [vmem:[#allocation2 + $0x10f] sm:$0xff] %vm5003, %v4806
  %5038 = vst.msk [vmem:[#allocation2 + $0x117] sm:$0xff] %vm5003, %v4808
  %5039 = vst.msk [vmem:[#allocation2 + $0x11f] sm:$0xff] %vm5003, %v4810
  %5040 = vst.msk [vmem:[#allocation2 + $0x127] sm:$0xff] %vm5003, %v4812
  %5041 = vst.msk [vmem:[#allocation2 + $0x12f] sm:$0xff] %vm5003, %v4814
  %5042 = vst.msk [vmem:[#allocation2 + $0x137] sm:$0xff] %vm5003, %v4816
  %5043 = vst.msk [vmem:[#allocation2 + $0x13f] sm:$0xff] %vm5003, %v4818
  %5044 = vst.msk [vmem:[#allocation2 + $0x147] sm:$0xff] %vm5003, %v4820
  %5045 = vst.msk [vmem:[#allocation2 + $0x14f] sm:$0xff] %vm5003, %v4822
  %5046 = vst.msk [vmem:[#allocation2 + $0x157] sm:$0xff] %vm5003, %v4824
  %5047 = vst.msk [vmem:[#allocation2 + $0x15f] sm:$0xfe] %vm5001, %v4826
  %5048 = vst.msk [vmem:[#allocation2 + $0x167] sm:$0xff] %vm5003, %v4828
  %5049 = vst.msk [vmem:[#allocation2 + $0x16f] sm:$0xff] %vm5003, %v4830
  %5050 = vst.msk [vmem:[#allocation2 + $0x177] sm:$0xff] %vm5003, %v4832
  %5051 = vst.msk [vmem:[#allocation2 + $0x17f] sm:$0xff] %vm5003, %v4834
  %5052 = vst.msk [vmem:[#allocation2 + $0x187] sm:$0xff] %vm5003, %v4836
  %5053 = vst.msk [vmem:[#allocation2 + $0x18f] sm:$0xff] %vm5003, %v4838
  %5054 = vst.msk [vmem:[#allocation2 + $0x197] sm:$0xff] %vm5003, %v4840
  %5055 = vst.msk [vmem:[#allocation2 + $0x19f] sm:$0xff] %vm5003, %v4842
  %5056 = vst.msk [vmem:[#allocation2 + $0x1a7] sm:$0xff] %vm5003, %v4844
  %5057 = vst.msk [vmem:[#allocation2 + $0x1af] sm:$0xff] %vm5003, %v4846
  %5058 = vst.msk [vmem:[#allocation2 + $0x1b7] sm:$0xfe] %vm5001, %v4848
  %5059 = vst.msk [vmem:[#allocation2 + $0x1bf] sm:$0xff] %vm5003, %v4850
  %5060 = vst.msk [vmem:[#allocation2 + $0x1c7] sm:$0xff] %vm5003, %v4852
  %5061 = vst.msk [vmem:[#allocation2 + $0x1cf] sm:$0xff] %vm5003, %v4854
  %5062 = vst.msk [vmem:[#allocation2 + $0x1d7] sm:$0xff] %vm5003, %v4856
  %5063 = vst.msk [vmem:[#allocation2 + $0x1df] sm:$0xff] %vm5003, %v4858
  %5064 = vst.msk [vmem:[#allocation2 + $0x1e7] sm:$0xff] %vm5003, %v4860
  %5065 = vst.msk [vmem:[#allocation2 + $0x1ef] sm:$0xff] %vm5003, %v4862
  %5066 = vst.msk [vmem:[#allocation2 + $0x1f7] sm:$0xff] %vm5003, %v4864
  %5067 = vst.msk [vmem:[#allocation2 + $0x1ff] sm:$0xff] %vm5003, %v4866
  %5068 = vst.msk [vmem:[#allocation2 + $0x207] sm:$0xff] %vm5003, %v4868
  %5069 = vst.msk [vmem:[#allocation2 + $0x20f] sm:$0xfe] %vm5001, %v4870
  %5070 = vst.msk [vmem:[#allocation2 + $0x217] sm:$0xff] %vm5003, %v4872
  %5071 = vst.msk [vmem:[#allocation2 + $0x21f] sm:$0xff] %vm5003, %v4874
  %5072 = vst.msk [vmem:[#allocation2 + $0x227] sm:$0xff] %vm5003, %v4876
  %5073 = vst.msk [vmem:[#allocation2 + $0x22f] sm:$0xff] %vm5003, %v4878
  %5074 = vst.msk [vmem:[#allocation2 + $0x237] sm:$0xff] %vm5003, %v4880
  %5075 = vst.msk [vmem:[#allocation2 + $0x23f] sm:$0xff] %vm5003, %v4882
  %5076 = vst.msk [vmem:[#allocation2 + $0x247] sm:$0xff] %vm5003, %v4884
  %5077 = vst.msk [vmem:[#allocation2 + $0x24f] sm:$0xff] %vm5003, %v4886
  %5078 = vst.msk [vmem:[#allocation2 + $0x257] sm:$0xff] %vm5003, %v4888
  %5079 = vst.msk [vmem:[#allocation2 + $0x25f] sm:$0xff] %vm5003, %v4890
  %5080 = vst.msk [vmem:[#allocation2 + $0x267] sm:$0xfe] %vm5001, %v4892
  %5081 = vst.msk [vmem:[#allocation2 + $0x26f] sm:$0xff] %vm5003, %v4894
  %5082 = vst.msk [vmem:[#allocation2 + $0x277] sm:$0xff] %vm5003, %v4896
  %5083 = vst.msk [vmem:[#allocation2 + $0x27f] sm:$0xff] %vm5003, %v4898
  %5084 = vst.msk [vmem:[#allocation2 + $0x287] sm:$0xff] %vm5003, %v4900
  %5085 = vst.msk [vmem:[#allocation2 + $0x28f] sm:$0xff] %vm5003, %v4902
  %5086 = vst.msk [vmem:[#allocation2 + $0x297] sm:$0xff] %vm5003, %v4904
  %5087 = vst.msk [vmem:[#allocation2 + $0x29f] sm:$0xff] %vm5003, %v4906
  %5088 = vst.msk [vmem:[#allocation2 + $0x2a7] sm:$0xff] %vm5003, %v4908
  %5089 = vst.msk [vmem:[#allocation2 + $0x2af] sm:$0xff] %vm5003, %v4910
  %5090 = vst.msk [vmem:[#allocation2 + $0x2b7] sm:$0xff] %vm5003, %v4912
  %vm5091 = vcmask 1041152
  %5092 = vst.msk [vmem:[#allocation2 + $0x57] sm:$0x1] %vm5091, 0.0
  %5093 = vst.msk [vmem:[#allocation2 + $0xaf] sm:$0x1] %vm5091, 0.0
  %5094 = vst.msk [vmem:[#allocation2 + $0x107] sm:$0x1] %vm5091, 0.0
  %5095 = vst.msk [vmem:[#allocation2 + $0x15f] sm:$0x1] %vm5091, 0.0
  %5096 = vst.msk [vmem:[#allocation2 + $0x1b7] sm:$0x1] %vm5091, 0.0
  %5097 = vst.msk [vmem:[#allocation2 + $0x20f] sm:$0x1] %vm5091, 0.0
  %5098 = vst.msk [vmem:[#allocation2 + $0x267] sm:$0x1] %vm5091, 0.0
  %5099 = vst.msk [vmem:[#allocation2 + $0x2bf] sm:$0x1] %vm5091, 0.0
  %v5100 = vld [vmem:[#allocation2] sm:$0xff]
  %v5101 = vld [vmem:[#allocation2 + $0x8] sm:$0xff]
  %v5102 = vld [vmem:[#allocation2 + $0x10] sm:$0xff]
  %v5103 = vld [vmem:[#allocation2 + $0x18] sm:$0xff]
  %v5104 = vld [vmem:[#allocation2 + $0x20] sm:$0xff]
  %v5105 = vld [vmem:[#allocation2 + $0x28] sm:$0xff]
  %v5106 = vld [vmem:[#allocation2 + $0x30] sm:$0xff]
  %v5107 = vld [vmem:[#allocation2 + $0x38] sm:$0xff]
  %v5108 = vld [vmem:[#allocation2 + $0x40] sm:$0xff]
  %v5109 = vld [vmem:[#allocation2 + $0x48] sm:$0xff]
  %v5110 = vld [vmem:[#allocation2 + $0x50] sm:$0xff]
  %v5111 = vld [vmem:[#allocation2 + $0x58] sm:$0xff]
  %v5112 = vld [vmem:[#allocation2 + $0x60] sm:$0xff]
  %v5113 = vld [vmem:[#allocation2 + $0x68] sm:$0xff]
  %v5114 = vld [vmem:[#allocation2 + $0x70] sm:$0xff]
  %v5115 = vld [vmem:[#allocation2 + $0x78] sm:$0xff]
  %v5116 = vld [vmem:[#allocation2 + $0x80] sm:$0xff]
  %v5117 = vld [vmem:[#allocation2 + $0x88] sm:$0xff]
  %v5118 = vld [vmem:[#allocation2 + $0x90] sm:$0xff]
  %v5119 = vld [vmem:[#allocation2 + $0x98] sm:$0xff]
  %v5120 = vld [vmem:[#allocation2 + $0xa0] sm:$0xff]
  %v5121 = vld [vmem:[#allocation2 + $0xa8] sm:$0xff]
  %v5122 = vld [vmem:[#allocation2 + $0xb0] sm:$0xff]
  %v5123 = vld [vmem:[#allocation2 + $0xb8] sm:$0xff]
  %v5124 = vld [vmem:[#allocation2 + $0xc0] sm:$0xff]
  %v5125 = vld [vmem:[#allocation2 + $0xc8] sm:$0xff]
  %v5126 = vld [vmem:[#allocation2 + $0xd0] sm:$0xff]
  %v5127 = vld [vmem:[#allocation2 + $0xd8] sm:$0xff]
  %v5128 = vld [vmem:[#allocation2 + $0xe0] sm:$0xff]
  %v5129 = vld [vmem:[#allocation2 + $0xe8] sm:$0xff]
  %v5130 = vld [vmem:[#allocation2 + $0xf0] sm:$0xff]
  %v5131 = vld [vmem:[#allocation2 + $0xf8] sm:$0xff]
  %v5132 = vld [vmem:[#allocation2 + $0x100] sm:$0xff]
  %v5133 = vld [vmem:[#allocation2 + $0x108] sm:$0xff]
  %v5134 = vld [vmem:[#allocation2 + $0x110] sm:$0xff]
  %v5135 = vld [vmem:[#allocation2 + $0x118] sm:$0xff]
  %v5136 = vld [vmem:[#allocation2 + $0x120] sm:$0xff]
  %v5137 = vld [vmem:[#allocation2 + $0x128] sm:$0xff]
  %v5138 = vld [vmem:[#allocation2 + $0x130] sm:$0xff]
  %v5139 = vld [vmem:[#allocation2 + $0x138] sm:$0xff]
  %v5140 = vld [vmem:[#allocation2 + $0x140] sm:$0xff]
  %v5141 = vld [vmem:[#allocation2 + $0x148] sm:$0xff]
  %v5142 = vld [vmem:[#allocation2 + $0x150] sm:$0xff]
  %v5143 = vld [vmem:[#allocation2 + $0x158] sm:$0xff]
  %v5144 = vld [vmem:[#allocation2 + $0x160] sm:$0xff]
  %v5145 = vld [vmem:[#allocation2 + $0x168] sm:$0xff]
  %v5146 = vld [vmem:[#allocation2 + $0x170] sm:$0xff]
  %v5147 = vld [vmem:[#allocation2 + $0x178] sm:$0xff]
  %v5148 = vld [vmem:[#allocation2 + $0x180] sm:$0xff]
  %v5149 = vld [vmem:[#allocation2 + $0x188] sm:$0xff]
  %v5150 = vld [vmem:[#allocation2 + $0x190] sm:$0xff]
  %v5151 = vld [vmem:[#allocation2 + $0x198] sm:$0xff]
  %v5152 = vld [vmem:[#allocation2 + $0x1a0] sm:$0xff]
  %v5153 = vld [vmem:[#allocation2 + $0x1a8] sm:$0xff]
  %v5154 = vld [vmem:[#allocation2 + $0x1b0] sm:$0xff]
  %v5155 = vld [vmem:[#allocation2 + $0x1b8] sm:$0xff]
  %v5156 = vld [vmem:[#allocation2 + $0x1c0] sm:$0xff]
  %v5157 = vld [vmem:[#allocation2 + $0x1c8] sm:$0xff]
  %v5158 = vld [vmem:[#allocation2 + $0x1d0] sm:$0xff]
  %v5159 = vld [vmem:[#allocation2 + $0x1d8] sm:$0xff]
  %v5160 = vld [vmem:[#allocation2 + $0x1e0] sm:$0xff]
  %v5161 = vld [vmem:[#allocation2 + $0x1e8] sm:$0xff]
  %v5162 = vld [vmem:[#allocation2 + $0x1f0] sm:$0xff]
  %v5163 = vld [vmem:[#allocation2 + $0x1f8] sm:$0xff]
  %v5164 = vld [vmem:[#allocation2 + $0x200] sm:$0xff]
  %v5165 = vld [vmem:[#allocation2 + $0x208] sm:$0xff]
  %v5166 = vld [vmem:[#allocation2 + $0x210] sm:$0xff]
  %v5167 = vld [vmem:[#allocation2 + $0x218] sm:$0xff]
  %v5168 = vld [vmem:[#allocation2 + $0x220] sm:$0xff]
  %v5169 = vld [vmem:[#allocation2 + $0x228] sm:$0xff]
  %v5170 = vld [vmem:[#allocation2 + $0x230] sm:$0xff]
  %v5171 = vld [vmem:[#allocation2 + $0x238] sm:$0xff]
  %v5172 = vld [vmem:[#allocation2 + $0x240] sm:$0xff]
  %v5173 = vld [vmem:[#allocation2 + $0x248] sm:$0xff]
  %v5174 = vld [vmem:[#allocation2 + $0x250] sm:$0xff]
  %v5175 = vld [vmem:[#allocation2 + $0x258] sm:$0xff]
  %v5176 = vld [vmem:[#allocation2 + $0x260] sm:$0xff]
  %v5177 = vld [vmem:[#allocation2 + $0x268] sm:$0xff]
  %v5178 = vld [vmem:[#allocation2 + $0x270] sm:$0xff]
  %v5179 = vld [vmem:[#allocation2 + $0x278] sm:$0xff]
  %v5180 = vld [vmem:[#allocation2 + $0x280] sm:$0xff]
  %v5181 = vld [vmem:[#allocation2 + $0x288] sm:$0xff]
  %v5182 = vld [vmem:[#allocation2 + $0x290] sm:$0xff]
  %v5183 = vld [vmem:[#allocation2 + $0x298] sm:$0xff]
  %v5184 = vld [vmem:[#allocation2 + $0x2a0] sm:$0xff]
  %v5185 = vld [vmem:[#allocation2 + $0x2a8] sm:$0xff]
  %v5186 = vld [vmem:[#allocation2 + $0x2b0] sm:$0xff]
  %v5187 = vld [vmem:[#allocation2 + $0x2b8] sm:$0xff]
  %v5188 = vld [vmem:[%s3] sm:$0xff]
  %v5189 = vld [vmem:[%s3 + $0x8] sm:$0xff]
  %v5190 = vld [vmem:[%s3 + $0x10] sm:$0xff]
  %v5191 = vld [vmem:[%s3 + $0x18] sm:$0xff]
  %v5192 = vld [vmem:[%s3 + $0x20] sm:$0xff]
  %v5193 = vld [vmem:[%s3 + $0x28] sm:$0xff]
  %v5194 = vld [vmem:[%s3 + $0x30] sm:$0xff]
  %v5195 = vld [vmem:[%s3 + $0x38] sm:$0xff]
  %v5196 = vld [vmem:[%s3 + $0x40] sm:$0xff]
  %v5197 = vld [vmem:[%s3 + $0x48] sm:$0xff]
  %v5198 = vld [vmem:[%s3 + $0x50] sm:$0xff]
  %v5199 = vld [vmem:[%s3 + $0x58] sm:$0xff]
  %v5200 = vld [vmem:[%s3 + $0x60] sm:$0xff]
  %v5201 = vld [vmem:[%s3 + $0x68] sm:$0xff]
  %v5202 = vld [vmem:[%s3 + $0x70] sm:$0xff]
  %v5203 = vld [vmem:[%s3 + $0x78] sm:$0xff]
  %v5204 = vld [vmem:[%s4] sm:$0x1]
  %v5206 = vperm.slane %v5204, 0
  %5208 = vmatpush.msra.mxu0 %v5203
  %5209 = vmatpush.msra.mxu0 %v5202
  %5210 = vmatpush.msra.mxu0 %v5201
  %5211 = vmatpush.msra.mxu0 %v5200
  %5212 = vmatpush.msra.mxu0 %v5199
  %5213 = vmatpush.msra.mxu0 %v5198
  %5214 = vmatpush.msra.mxu0 %v5197
  %5215 = vmatpush.msra.mxu0 %v5196
  %5216 = vmatpush.msra.mxu0 %v5195
  %5217 = vmatpush.msra.mxu0 %v5194
  %5218 = vmatpush.msra.mxu0 %v5193
  %5219 = vmatpush.msra.mxu0 %v5192
  %5220 = vmatpush.msra.mxu0 %v5191
  %5221 = vmatpush.msra.mxu0 %v5190
  %5222 = vmatpush.msra.mxu0 %v5189
  %5223 = vmatpush.msra.mxu0 %v5188
  %5224 = vmatmul.f32.gmra.mxu0 %v5100
  %v5225 = vpop.f32.mrf.mxu0
  %v5226 = vadd.f32 %v5206, %v5225
  %5227 = vmatmul.f32.gmra.mxu0 %v5101
  %v5228 = vpop.f32.mrf.mxu0
  %v5229 = vadd.f32 %v5206, %v5228
  %5230 = vmatmul.f32.gmra.mxu0 %v5102
  %v5231 = vpop.f32.mrf.mxu0
  %v5232 = vadd.f32 %v5206, %v5231
  %5233 = vmatmul.f32.gmra.mxu0 %v5103
  %v5234 = vpop.f32.mrf.mxu0
  %v5235 = vadd.f32 %v5206, %v5234
  %5236 = vmatmul.f32.gmra.mxu0 %v5104
  %v5237 = vpop.f32.mrf.mxu0
  %v5238 = vadd.f32 %v5206, %v5237
  %5239 = vmatmul.f32.gmra.mxu0 %v5105
  %v5240 = vpop.f32.mrf.mxu0
  %v5241 = vadd.f32 %v5206, %v5240
  %5242 = vmatmul.f32.gmra.mxu0 %v5106
  %v5243 = vpop.f32.mrf.mxu0
  %v5244 = vadd.f32 %v5206, %v5243
  %5245 = vmatmul.f32.gmra.mxu0 %v5107
  %v5246 = vpop.f32.mrf.mxu0
  %v5247 = vadd.f32 %v5206, %v5246
  %5248 = vmatmul.f32.gmra.mxu0 %v5108
  %v5249 = vpop.f32.mrf.mxu0
  %v5250 = vadd.f32 %v5206, %v5249
  %5251 = vmatmul.f32.gmra.mxu0 %v5109
  %v5252 = vpop.f32.mrf.mxu0
  %v5253 = vadd.f32 %v5206, %v5252
  %5254 = vmatmul.f32.gmra.mxu0 %v5110
  %v5255 = vpop.f32.mrf.mxu0
  %v5256 = vadd.f32 %v5206, %v5255
  %5257 = vmatmul.f32.gmra.mxu0 %v5111
  %v5258 = vpop.f32.mrf.mxu0
  %v5259 = vadd.f32 %v5206, %v5258
  %5260 = vmatmul.f32.gmra.mxu0 %v5112
  %v5261 = vpop.f32.mrf.mxu0
  %v5262 = vadd.f32 %v5206, %v5261
  %5263 = vmatmul.f32.gmra.mxu0 %v5113
  %v5264 = vpop.f32.mrf.mxu0
  %v5265 = vadd.f32 %v5206, %v5264
  %5266 = vmatmul.f32.gmra.mxu0 %v5114
  %v5267 = vpop.f32.mrf.mxu0
  %v5268 = vadd.f32 %v5206, %v5267
  %5269 = vmatmul.f32.gmra.mxu0 %v5115
  %v5270 = vpop.f32.mrf.mxu0
  %v5271 = vadd.f32 %v5206, %v5270
  %5272 = vmatmul.f32.gmra.mxu0 %v5116
  %v5273 = vpop.f32.mrf.mxu0
  %v5274 = vadd.f32 %v5206, %v5273
  %5275 = vmatmul.f32.gmra.mxu0 %v5117
  %v5276 = vpop.f32.mrf.mxu0
  %v5277 = vadd.f32 %v5206, %v5276
  %5278 = vmatmul.f32.gmra.mxu0 %v5118
  %v5279 = vpop.f32.mrf.mxu0
  %v5280 = vadd.f32 %v5206, %v5279
  %5281 = vmatmul.f32.gmra.mxu0 %v5119
  %v5282 = vpop.f32.mrf.mxu0
  %v5283 = vadd.f32 %v5206, %v5282
  %5284 = vmatmul.f32.gmra.mxu0 %v5120
  %v5285 = vpop.f32.mrf.mxu0
  %v5286 = vadd.f32 %v5206, %v5285
  %5287 = vmatmul.f32.gmra.mxu0 %v5121
  %v5288 = vpop.f32.mrf.mxu0
  %v5289 = vadd.f32 %v5206, %v5288
  %5290 = vmatmul.f32.gmra.mxu0 %v5122
  %v5291 = vpop.f32.mrf.mxu0
  %v5292 = vadd.f32 %v5206, %v5291
  %5293 = vmatmul.f32.gmra.mxu0 %v5123
  %v5294 = vpop.f32.mrf.mxu0
  %v5295 = vadd.f32 %v5206, %v5294
  %5296 = vmatmul.f32.gmra.mxu0 %v5124
  %v5297 = vpop.f32.mrf.mxu0
  %v5298 = vadd.f32 %v5206, %v5297
  %5299 = vmatmul.f32.gmra.mxu0 %v5125
  %v5300 = vpop.f32.mrf.mxu0
  %v5301 = vadd.f32 %v5206, %v5300
  %5302 = vmatmul.f32.gmra.mxu0 %v5126
  %v5303 = vpop.f32.mrf.mxu0
  %v5304 = vadd.f32 %v5206, %v5303
  %5305 = vmatmul.f32.gmra.mxu0 %v5127
  %v5306 = vpop.f32.mrf.mxu0
  %v5307 = vadd.f32 %v5206, %v5306
  %5308 = vmatmul.f32.gmra.mxu0 %v5128
  %v5309 = vpop.f32.mrf.mxu0
  %v5310 = vadd.f32 %v5206, %v5309
  %5311 = vmatmul.f32.gmra.mxu0 %v5129
  %v5312 = vpop.f32.mrf.mxu0
  %v5313 = vadd.f32 %v5206, %v5312
  %5314 = vmatmul.f32.gmra.mxu0 %v5130
  %v5315 = vpop.f32.mrf.mxu0
  %v5316 = vadd.f32 %v5206, %v5315
  %5317 = vmatmul.f32.gmra.mxu0 %v5131
  %v5318 = vpop.f32.mrf.mxu0
  %v5319 = vadd.f32 %v5206, %v5318
  %5320 = vmatmul.f32.gmra.mxu0 %v5132
  %v5321 = vpop.f32.mrf.mxu0
  %v5322 = vadd.f32 %v5206, %v5321
  %5323 = vmatmul.f32.gmra.mxu0 %v5133
  %v5324 = vpop.f32.mrf.mxu0
  %v5325 = vadd.f32 %v5206, %v5324
  %5326 = vmatmul.f32.gmra.mxu0 %v5134
  %v5327 = vpop.f32.mrf.mxu0
  %v5328 = vadd.f32 %v5206, %v5327
  %5329 = vmatmul.f32.gmra.mxu0 %v5135
  %v5330 = vpop.f32.mrf.mxu0
  %v5331 = vadd.f32 %v5206, %v5330
  %5332 = vmatmul.f32.gmra.mxu0 %v5136
  %v5333 = vpop.f32.mrf.mxu0
  %v5334 = vadd.f32 %v5206, %v5333
  %5335 = vmatmul.f32.gmra.mxu0 %v5137
  %v5336 = vpop.f32.mrf.mxu0
  %v5337 = vadd.f32 %v5206, %v5336
  %5338 = vmatmul.f32.gmra.mxu0 %v5138
  %v5339 = vpop.f32.mrf.mxu0
  %v5340 = vadd.f32 %v5206, %v5339
  %5341 = vmatmul.f32.gmra.mxu0 %v5139
  %v5342 = vpop.f32.mrf.mxu0
  %v5343 = vadd.f32 %v5206, %v5342
  %5344 = vmatmul.f32.gmra.mxu0 %v5140
  %v5345 = vpop.f32.mrf.mxu0
  %v5346 = vadd.f32 %v5206, %v5345
  %5347 = vmatmul.f32.gmra.mxu0 %v5141
  %v5348 = vpop.f32.mrf.mxu0
  %v5349 = vadd.f32 %v5206, %v5348
  %5350 = vmatmul.f32.gmra.mxu0 %v5142
  %v5351 = vpop.f32.mrf.mxu0
  %v5352 = vadd.f32 %v5206, %v5351
  %5353 = vmatmul.f32.gmra.mxu0 %v5143
  %v5354 = vpop.f32.mrf.mxu0
  %v5355 = vadd.f32 %v5206, %v5354
  %5356 = vmatmul.f32.gmra.mxu0 %v5144
  %v5357 = vpop.f32.mrf.mxu0
  %v5358 = vadd.f32 %v5206, %v5357
  %5359 = vmatmul.f32.gmra.mxu0 %v5145
  %v5360 = vpop.f32.mrf.mxu0
  %v5361 = vadd.f32 %v5206, %v5360
  %5362 = vmatmul.f32.gmra.mxu0 %v5146
  %v5363 = vpop.f32.mrf.mxu0
  %v5364 = vadd.f32 %v5206, %v5363
  %5365 = vmatmul.f32.gmra.mxu0 %v5147
  %v5366 = vpop.f32.mrf.mxu0
  %v5367 = vadd.f32 %v5206, %v5366
  %5368 = vmatmul.f32.gmra.mxu0 %v5148
  %v5369 = vpop.f32.mrf.mxu0
  %v5370 = vadd.f32 %v5206, %v5369
  %5371 = vmatmul.f32.gmra.mxu0 %v5149
  %v5372 = vpop.f32.mrf.mxu0
  %v5373 = vadd.f32 %v5206, %v5372
  %5374 = vmatmul.f32.gmra.mxu0 %v5150
  %v5375 = vpop.f32.mrf.mxu0
  %v5376 = vadd.f32 %v5206, %v5375
  %5377 = vmatmul.f32.gmra.mxu0 %v5151
  %v5378 = vpop.f32.mrf.mxu0
  %v5379 = vadd.f32 %v5206, %v5378
  %5380 = vmatmul.f32.gmra.mxu0 %v5152
  %v5381 = vpop.f32.mrf.mxu0
  %v5382 = vadd.f32 %v5206, %v5381
  %5383 = vmatmul.f32.gmra.mxu0 %v5153
  %v5384 = vpop.f32.mrf.mxu0
  %v5385 = vadd.f32 %v5206, %v5384
  %5386 = vmatmul.f32.gmra.mxu0 %v5154
  %v5387 = vpop.f32.mrf.mxu0
  %v5388 = vadd.f32 %v5206, %v5387
  %5389 = vmatmul.f32.gmra.mxu0 %v5155
  %v5390 = vpop.f32.mrf.mxu0
  %v5391 = vadd.f32 %v5206, %v5390
  %5392 = vmatmul.f32.gmra.mxu0 %v5156
  %v5393 = vpop.f32.mrf.mxu0
  %v5394 = vadd.f32 %v5206, %v5393
  %5395 = vmatmul.f32.gmra.mxu0 %v5157
  %v5396 = vpop.f32.mrf.mxu0
  %v5397 = vadd.f32 %v5206, %v5396
  %5398 = vmatmul.f32.gmra.mxu0 %v5158
  %v5399 = vpop.f32.mrf.mxu0
  %v5400 = vadd.f32 %v5206, %v5399
  %5401 = vmatmul.f32.gmra.mxu0 %v5159
  %v5402 = vpop.f32.mrf.mxu0
  %v5403 = vadd.f32 %v5206, %v5402
  %5404 = vmatmul.f32.gmra.mxu0 %v5160
  %v5405 = vpop.f32.mrf.mxu0
  %v5406 = vadd.f32 %v5206, %v5405
  %5407 = vmatmul.f32.gmra.mxu0 %v5161
  %v5408 = vpop.f32.mrf.mxu0
  %v5409 = vadd.f32 %v5206, %v5408
  %5410 = vmatmul.f32.gmra.mxu0 %v5162
  %v5411 = vpop.f32.mrf.mxu0
  %v5412 = vadd.f32 %v5206, %v5411
  %5413 = vmatmul.f32.gmra.mxu0 %v5163
  %v5414 = vpop.f32.mrf.mxu0
  %v5415 = vadd.f32 %v5206, %v5414
  %5416 = vmatmul.f32.gmra.mxu0 %v5164
  %v5417 = vpop.f32.mrf.mxu0
  %v5418 = vadd.f32 %v5206, %v5417
  %5419 = vmatmul.f32.gmra.mxu0 %v5165
  %v5420 = vpop.f32.mrf.mxu0
  %v5421 = vadd.f32 %v5206, %v5420
  %5422 = vmatmul.f32.gmra.mxu0 %v5166
  %v5423 = vpop.f32.mrf.mxu0
  %v5424 = vadd.f32 %v5206, %v5423
  %5425 = vmatmul.f32.gmra.mxu0 %v5167
  %v5426 = vpop.f32.mrf.mxu0
  %v5427 = vadd.f32 %v5206, %v5426
  %5428 = vmatmul.f32.gmra.mxu0 %v5168
  %v5429 = vpop.f32.mrf.mxu0
  %v5430 = vadd.f32 %v5206, %v5429
  %5431 = vmatmul.f32.gmra.mxu0 %v5169
  %v5432 = vpop.f32.mrf.mxu0
  %v5433 = vadd.f32 %v5206, %v5432
  %5434 = vmatmul.f32.gmra.mxu0 %v5170
  %v5435 = vpop.f32.mrf.mxu0
  %v5436 = vadd.f32 %v5206, %v5435
  %5437 = vmatmul.f32.gmra.mxu0 %v5171
  %v5438 = vpop.f32.mrf.mxu0
  %v5439 = vadd.f32 %v5206, %v5438
  %5440 = vmatmul.f32.gmra.mxu0 %v5172
  %v5441 = vpop.f32.mrf.mxu0
  %v5442 = vadd.f32 %v5206, %v5441
  %5443 = vmatmul.f32.gmra.mxu0 %v5173
  %v5444 = vpop.f32.mrf.mxu0
  %v5445 = vadd.f32 %v5206, %v5444
  %5446 = vmatmul.f32.gmra.mxu0 %v5174
  %v5447 = vpop.f32.mrf.mxu0
  %v5448 = vadd.f32 %v5206, %v5447
  %5449 = vmatmul.f32.gmra.mxu0 %v5175
  %v5450 = vpop.f32.mrf.mxu0
  %v5451 = vadd.f32 %v5206, %v5450
  %5452 = vmatmul.f32.gmra.mxu0 %v5176
  %v5453 = vpop.f32.mrf.mxu0
  %v5454 = vadd.f32 %v5206, %v5453
  %5455 = vmatmul.f32.gmra.mxu0 %v5177
  %v5456 = vpop.f32.mrf.mxu0
  %v5457 = vadd.f32 %v5206, %v5456
  %5458 = vmatmul.f32.gmra.mxu0 %v5178
  %v5459 = vpop.f32.mrf.mxu0
  %v5460 = vadd.f32 %v5206, %v5459
  %5461 = vmatmul.f32.gmra.mxu0 %v5179
  %v5462 = vpop.f32.mrf.mxu0
  %v5463 = vadd.f32 %v5206, %v5462
  %5464 = vmatmul.f32.gmra.mxu0 %v5180
  %v5465 = vpop.f32.mrf.mxu0
  %v5466 = vadd.f32 %v5206, %v5465
  %5467 = vmatmul.f32.gmra.mxu0 %v5181
  %v5468 = vpop.f32.mrf.mxu0
  %v5469 = vadd.f32 %v5206, %v5468
  %5470 = vmatmul.f32.gmra.mxu0 %v5182
  %v5471 = vpop.f32.mrf.mxu0
  %v5472 = vadd.f32 %v5206, %v5471
  %5473 = vmatmul.f32.gmra.mxu0 %v5183
  %v5474 = vpop.f32.mrf.mxu0
  %v5475 = vadd.f32 %v5206, %v5474
  %5476 = vmatmul.f32.gmra.mxu0 %v5184
  %v5477 = vpop.f32.mrf.mxu0
  %v5478 = vadd.f32 %v5206, %v5477
  %5479 = vmatmul.f32.gmra.mxu0 %v5185
  %v5480 = vpop.f32.mrf.mxu0
  %v5481 = vadd.f32 %v5206, %v5480
  %5482 = vmatmul.f32.gmra.mxu0 %v5186
  %v5483 = vpop.f32.mrf.mxu0
  %v5484 = vadd.f32 %v5206, %v5483
  %5485 = vmatmul.f32.gmra.mxu0 %v5187
  %v5486 = vpop.f32.mrf.mxu0
  %v5487 = vadd.f32 %v5206, %v5486
  %5488 = vdwg.mxu0
  %vm5489 = vcmp.gt.f32.partialorder %v5226, 0.0
  %vm5490 = vcmp.gt.f32.partialorder %v5229, 0.0
  %vm5491 = vcmp.gt.f32.partialorder %v5232, 0.0
  %vm5492 = vcmp.gt.f32.partialorder %v5235, 0.0
  %vm5493 = vcmp.gt.f32.partialorder %v5238, 0.0
  %vm5494 = vcmp.gt.f32.partialorder %v5241, 0.0
  %vm5495 = vcmp.gt.f32.partialorder %v5244, 0.0
  %vm5496 = vcmp.gt.f32.partialorder %v5247, 0.0
  %vm5497 = vcmp.gt.f32.partialorder %v5250, 0.0
  %vm5498 = vcmp.gt.f32.partialorder %v5253, 0.0
  %vm5499 = vcmp.gt.f32.partialorder %v5256, 0.0
  %vm5500 = vcmp.gt.f32.partialorder %v5259, 0.0
  %vm5501 = vcmp.gt.f32.partialorder %v5262, 0.0
  %vm5502 = vcmp.gt.f32.partialorder %v5265, 0.0
  %vm5503 = vcmp.gt.f32.partialorder %v5268, 0.0
  %vm5504 = vcmp.gt.f32.partialorder %v5271, 0.0
  %vm5505 = vcmp.gt.f32.partialorder %v5274, 0.0
  %vm5506 = vcmp.gt.f32.partialorder %v5277, 0.0
  %vm5507 = vcmp.gt.f32.partialorder %v5280, 0.0
  %vm5508 = vcmp.gt.f32.partialorder %v5283, 0.0
  %vm5509 = vcmp.gt.f32.partialorder %v5286, 0.0
  %vm5510 = vcmp.gt.f32.partialorder %v5289, 0.0
  %vm5511 = vcmp.gt.f32.partialorder %v5292, 0.0
  %vm5512 = vcmp.gt.f32.partialorder %v5295, 0.0
  %vm5513 = vcmp.gt.f32.partialorder %v5298, 0.0
  %vm5514 = vcmp.gt.f32.partialorder %v5301, 0.0
  %vm5515 = vcmp.gt.f32.partialorder %v5304, 0.0
  %vm5516 = vcmp.gt.f32.partialorder %v5307, 0.0
  %vm5517 = vcmp.gt.f32.partialorder %v5310, 0.0
  %vm5518 = vcmp.gt.f32.partialorder %v5313, 0.0
  %vm5519 = vcmp.gt.f32.partialorder %v5316, 0.0
  %vm5520 = vcmp.gt.f32.partialorder %v5319, 0.0
  %vm5521 = vcmp.gt.f32.partialorder %v5322, 0.0
  %vm5522 = vcmp.gt.f32.partialorder %v5325, 0.0
  %vm5523 = vcmp.gt.f32.partialorder %v5328, 0.0
  %vm5524 = vcmp.gt.f32.partialorder %v5331, 0.0
  %vm5525 = vcmp.gt.f32.partialorder %v5334, 0.0
  %vm5526 = vcmp.gt.f32.partialorder %v5337, 0.0
  %vm5527 = vcmp.gt.f32.partialorder %v5340, 0.0
  %vm5528 = vcmp.gt.f32.partialorder %v5343, 0.0
  %vm5529 = vcmp.gt.f32.partialorder %v5346, 0.0
  %vm5530 = vcmp.gt.f32.partialorder %v5349, 0.0
  %vm5531 = vcmp.gt.f32.partialorder %v5352, 0.0
  %vm5532 = vcmp.gt.f32.partialorder %v5355, 0.0
  %vm5533 = vcmp.gt.f32.partialorder %v5358, 0.0
  %vm5534 = vcmp.gt.f32.partialorder %v5361, 0.0
  %vm5535 = vcmp.gt.f32.partialorder %v5364, 0.0
  %vm5536 = vcmp.gt.f32.partialorder %v5367, 0.0
  %vm5537 = vcmp.gt.f32.partialorder %v5370, 0.0
  %vm5538 = vcmp.gt.f32.partialorder %v5373, 0.0
  %vm5539 = vcmp.gt.f32.partialorder %v5376, 0.0
  %vm5540 = vcmp.gt.f32.partialorder %v5379, 0.0
  %vm5541 = vcmp.gt.f32.partialorder %v5382, 0.0
  %vm5542 = vcmp.gt.f32.partialorder %v5385, 0.0
  %vm5543 = vcmp.gt.f32.partialorder %v5388, 0.0
  %vm5544 = vcmp.gt.f32.partialorder %v5391, 0.0
  %vm5545 = vcmp.gt.f32.partialorder %v5394, 0.0
  %vm5546 = vcmp.gt.f32.partialorder %v5397, 0.0
  %vm5547 = vcmp.gt.f32.partialorder %v5400, 0.0
  %vm5548 = vcmp.gt.f32.partialorder %v5403, 0.0
  %vm5549 = vcmp.gt.f32.partialorder %v5406, 0.0
  %vm5550 = vcmp.gt.f32.partialorder %v5409, 0.0
  %vm5551 = vcmp.gt.f32.partialorder %v5412, 0.0
  %vm5552 = vcmp.gt.f32.partialorder %v5415, 0.0
  %vm5553 = vcmp.gt.f32.partialorder %v5418, 0.0
  %vm5554 = vcmp.gt.f32.partialorder %v5421, 0.0
  %vm5555 = vcmp.gt.f32.partialorder %v5424, 0.0
  %vm5556 = vcmp.gt.f32.partialorder %v5427, 0.0
  %vm5557 = vcmp.gt.f32.partialorder %v5430, 0.0
  %vm5558 = vcmp.gt.f32.partialorder %v5433, 0.0
  %vm5559 = vcmp.gt.f32.partialorder %v5436, 0.0
  %vm5560 = vcmp.gt.f32.partialorder %v5439, 0.0
  %vm5561 = vcmp.gt.f32.partialorder %v5442, 0.0
  %vm5562 = vcmp.gt.f32.partialorder %v5445, 0.0
  %vm5563 = vcmp.gt.f32.partialorder %v5448, 0.0
  %vm5564 = vcmp.gt.f32.partialorder %v5451, 0.0
  %vm5565 = vcmp.gt.f32.partialorder %v5454, 0.0
  %vm5566 = vcmp.gt.f32.partialorder %v5457, 0.0
  %vm5567 = vcmp.gt.f32.partialorder %v5460, 0.0
  %vm5568 = vcmp.gt.f32.partialorder %v5463, 0.0
  %vm5569 = vcmp.gt.f32.partialorder %v5466, 0.0
  %vm5570 = vcmp.gt.f32.partialorder %v5469, 0.0
  %vm5571 = vcmp.gt.f32.partialorder %v5472, 0.0
  %vm5572 = vcmp.gt.f32.partialorder %v5475, 0.0
  %vm5573 = vcmp.gt.f32.partialorder %v5478, 0.0
  %vm5574 = vcmp.gt.f32.partialorder %v5481, 0.0
  %vm5575 = vcmp.gt.f32.partialorder %v5484, 0.0
  %vm5576 = vcmp.gt.f32.partialorder %v5487, 0.0
  %v5577 = vmul.f32 %v5226, 0.01
  %v5578 = vmul.f32 %v5229, 0.01
  %v5579 = vmul.f32 %v5232, 0.01
  %v5580 = vmul.f32 %v5235, 0.01
  %v5581 = vmul.f32 %v5238, 0.01
  %v5582 = vmul.f32 %v5241, 0.01
  %v5583 = vmul.f32 %v5244, 0.01
  %v5584 = vmul.f32 %v5247, 0.01
  %v5585 = vmul.f32 %v5250, 0.01
  %v5586 = vmul.f32 %v5253, 0.01
  %v5587 = vmul.f32 %v5256, 0.01
  %v5588 = vmul.f32 %v5259, 0.01
  %v5589 = vmul.f32 %v5262, 0.01
  %v5590 = vmul.f32 %v5265, 0.01
  %v5591 = vmul.f32 %v5268, 0.01
  %v5592 = vmul.f32 %v5271, 0.01
  %v5593 = vmul.f32 %v5274, 0.01
  %v5594 = vmul.f32 %v5277, 0.01
  %v5595 = vmul.f32 %v5280, 0.01
  %v5596 = vmul.f32 %v5283, 0.01
  %v5597 = vmul.f32 %v5286, 0.01
  %v5598 = vmul.f32 %v5289, 0.01
  %v5599 = vmul.f32 %v5292, 0.01
  %v5600 = vmul.f32 %v5295, 0.01
  %v5601 = vmul.f32 %v5298, 0.01
  %v5602 = vmul.f32 %v5301, 0.01
  %v5603 = vmul.f32 %v5304, 0.01
  %v5604 = vmul.f32 %v5307, 0.01
  %v5605 = vmul.f32 %v5310, 0.01
  %v5606 = vmul.f32 %v5313, 0.01
  %v5607 = vmul.f32 %v5316, 0.01
  %v5608 = vmul.f32 %v5319, 0.01
  %v5609 = vmul.f32 %v5322, 0.01
  %v5610 = vmul.f32 %v5325, 0.01
  %v5611 = vmul.f32 %v5328, 0.01
  %v5612 = vmul.f32 %v5331, 0.01
  %v5613 = vmul.f32 %v5334, 0.01
  %v5614 = vmul.f32 %v5337, 0.01
  %v5615 = vmul.f32 %v5340, 0.01
  %v5616 = vmul.f32 %v5343, 0.01
  %v5617 = vmul.f32 %v5346, 0.01
  %v5618 = vmul.f32 %v5349, 0.01
  %v5619 = vmul.f32 %v5352, 0.01
  %v5620 = vmul.f32 %v5355, 0.01
  %v5621 = vmul.f32 %v5358, 0.01
  %v5622 = vmul.f32 %v5361, 0.01
  %v5623 = vmul.f32 %v5364, 0.01
  %v5624 = vmul.f32 %v5367, 0.01
  %v5625 = vmul.f32 %v5370, 0.01
  %v5626 = vmul.f32 %v5373, 0.01
  %v5627 = vmul.f32 %v5376, 0.01
  %v5628 = vmul.f32 %v5379, 0.01
  %v5629 = vmul.f32 %v5382, 0.01
  %v5630 = vmul.f32 %v5385, 0.01
  %v5631 = vmul.f32 %v5388, 0.01
  %v5632 = vmul.f32 %v5391, 0.01
  %v5633 = vmul.f32 %v5394, 0.01
  %v5634 = vmul.f32 %v5397, 0.01
  %v5635 = vmul.f32 %v5400, 0.01
  %v5636 = vmul.f32 %v5403, 0.01
  %v5637 = vmul.f32 %v5406, 0.01
  %v5638 = vmul.f32 %v5409, 0.01
  %v5639 = vmul.f32 %v5412, 0.01
  %v5640 = vmul.f32 %v5415, 0.01
  %v5641 = vmul.f32 %v5418, 0.01
  %v5642 = vmul.f32 %v5421, 0.01
  %v5643 = vmul.f32 %v5424, 0.01
  %v5644 = vmul.f32 %v5427, 0.01
  %v5645 = vmul.f32 %v5430, 0.01
  %v5646 = vmul.f32 %v5433, 0.01
  %v5647 = vmul.f32 %v5436, 0.01
  %v5648 = vmul.f32 %v5439, 0.01
  %v5649 = vmul.f32 %v5442, 0.01
  %v5650 = vmul.f32 %v5445, 0.01
  %v5651 = vmul.f32 %v5448, 0.01
  %v5652 = vmul.f32 %v5451, 0.01
  %v5653 = vmul.f32 %v5454, 0.01
  %v5654 = vmul.f32 %v5457, 0.01
  %v5655 = vmul.f32 %v5460, 0.01
  %v5656 = vmul.f32 %v5463, 0.01
  %v5657 = vmul.f32 %v5466, 0.01
  %v5658 = vmul.f32 %v5469, 0.01
  %v5659 = vmul.f32 %v5472, 0.01
  %v5660 = vmul.f32 %v5475, 0.01
  %v5661 = vmul.f32 %v5478, 0.01
  %v5662 = vmul.f32 %v5481, 0.01
  %v5663 = vmul.f32 %v5484, 0.01
  %v5664 = vmul.f32 %v5487, 0.01
  %v5665 = vsel %vm5489, %v5226, %v5577
  %v5666 = vsel %vm5490, %v5229, %v5578
  %v5667 = vsel %vm5491, %v5232, %v5579
  %v5668 = vsel %vm5492, %v5235, %v5580
  %v5669 = vsel %vm5493, %v5238, %v5581
  %v5670 = vsel %vm5494, %v5241, %v5582
  %v5671 = vsel %vm5495, %v5244, %v5583
  %v5672 = vsel %vm5496, %v5247, %v5584
  %v5673 = vsel %vm5497, %v5250, %v5585
  %v5674 = vsel %vm5498, %v5253, %v5586
  %v5675 = vsel %vm5499, %v5256, %v5587
  %v5676 = vsel %vm5500, %v5259, %v5588
  %v5677 = vsel %vm5501, %v5262, %v5589
  %v5678 = vsel %vm5502, %v5265, %v5590
  %v5679 = vsel %vm5503, %v5268, %v5591
  %v5680 = vsel %vm5504, %v5271, %v5592
  %v5681 = vsel %vm5505, %v5274, %v5593
  %v5682 = vsel %vm5506, %v5277, %v5594
  %v5683 = vsel %vm5507, %v5280, %v5595
  %v5684 = vsel %vm5508, %v5283, %v5596
  %v5685 = vsel %vm5509, %v5286, %v5597
  %v5686 = vsel %vm5510, %v5289, %v5598
  %v5687 = vsel %vm5511, %v5292, %v5599
  %v5688 = vsel %vm5512, %v5295, %v5600
  %v5689 = vsel %vm5513, %v5298, %v5601
  %v5690 = vsel %vm5514, %v5301, %v5602
  %v5691 = vsel %vm5515, %v5304, %v5603
  %v5692 = vsel %vm5516, %v5307, %v5604
  %v5693 = vsel %vm5517, %v5310, %v5605
  %v5694 = vsel %vm5518, %v5313, %v5606
  %v5695 = vsel %vm5519, %v5316, %v5607
  %v5696 = vsel %vm5520, %v5319, %v5608
  %v5697 = vsel %vm5521, %v5322, %v5609
  %v5698 = vsel %vm5522, %v5325, %v5610
  %v5699 = vsel %vm5523, %v5328, %v5611
  %v5700 = vsel %vm5524, %v5331, %v5612
  %v5701 = vsel %vm5525, %v5334, %v5613
  %v5702 = vsel %vm5526, %v5337, %v5614
  %v5703 = vsel %vm5527, %v5340, %v5615
  %v5704 = vsel %vm5528, %v5343, %v5616
  %v5705 = vsel %vm5529, %v5346, %v5617
  %v5706 = vsel %vm5530, %v5349, %v5618
  %v5707 = vsel %vm5531, %v5352, %v5619
  %v5708 = vsel %vm5532, %v5355, %v5620
  %v5709 = vsel %vm5533, %v5358, %v5621
  %v5710 = vsel %vm5534, %v5361, %v5622
  %v5711 = vsel %vm5535, %v5364, %v5623
  %v5712 = vsel %vm5536, %v5367, %v5624
  %v5713 = vsel %vm5537, %v5370, %v5625
  %v5714 = vsel %vm5538, %v5373, %v5626
  %v5715 = vsel %vm5539, %v5376, %v5627
  %v5716 = vsel %vm5540, %v5379, %v5628
  %v5717 = vsel %vm5541, %v5382, %v5629
  %v5718 = vsel %vm5542, %v5385, %v5630
  %v5719 = vsel %vm5543, %v5388, %v5631
  %v5720 = vsel %vm5544, %v5391, %v5632
  %v5721 = vsel %vm5545, %v5394, %v5633
  %v5722 = vsel %vm5546, %v5397, %v5634
  %v5723 = vsel %vm5547, %v5400, %v5635
  %v5724 = vsel %vm5548, %v5403, %v5636
  %v5725 = vsel %vm5549, %v5406, %v5637
  %v5726 = vsel %vm5550, %v5409, %v5638
  %v5727 = vsel %vm5551, %v5412, %v5639
  %v5728 = vsel %vm5552, %v5415, %v5640
  %v5729 = vsel %vm5553, %v5418, %v5641
  %v5730 = vsel %vm5554, %v5421, %v5642
  %v5731 = vsel %vm5555, %v5424, %v5643
  %v5732 = vsel %vm5556, %v5427, %v5644
  %v5733 = vsel %vm5557, %v5430, %v5645
  %v5734 = vsel %vm5558, %v5433, %v5646
  %v5735 = vsel %vm5559, %v5436, %v5647
  %v5736 = vsel %vm5560, %v5439, %v5648
  %v5737 = vsel %vm5561, %v5442, %v5649
  %v5738 = vsel %vm5562, %v5445, %v5650
  %v5739 = vsel %vm5563, %v5448, %v5651
  %v5740 = vsel %vm5564, %v5451, %v5652
  %v5741 = vsel %vm5565, %v5454, %v5653
  %v5742 = vsel %vm5566, %v5457, %v5654
  %v5743 = vsel %vm5567, %v5460, %v5655
  %v5744 = vsel %vm5568, %v5463, %v5656
  %v5745 = vsel %vm5569, %v5466, %v5657
  %v5746 = vsel %vm5570, %v5469, %v5658
  %v5747 = vsel %vm5571, %v5472, %v5659
  %v5748 = vsel %vm5572, %v5475, %v5660
  %v5749 = vsel %vm5573, %v5478, %v5661
  %v5750 = vsel %vm5574, %v5481, %v5662
  %v5751 = vsel %vm5575, %v5484, %v5663
  %v5752 = vsel %vm5576, %v5487, %v5664
  %5841 = vrot.lane.b32.xlu0 %v5665, 64
  %v5842 = vpop.permute.xlu0 %5841
  %5843 = vrot.lane.b32.xlu0 %v5666, 64
  %v5844 = vpop.permute.xlu0 %5843
  %5845 = vrot.lane.b32.xlu0 %v5667, 64
  %v5846 = vpop.permute.xlu0 %5845
  %5847 = vrot.lane.b32.xlu0 %v5668, 64
  %v5848 = vpop.permute.xlu0 %5847
  %5849 = vrot.lane.b32.xlu0 %v5669, 64
  %v5850 = vpop.permute.xlu0 %5849
  %5851 = vrot.lane.b32.xlu0 %v5670, 64
  %v5852 = vpop.permute.xlu0 %5851
  %5853 = vrot.lane.b32.xlu0 %v5671, 64
  %v5854 = vpop.permute.xlu0 %5853
  %5855 = vrot.lane.b32.xlu0 %v5672, 64
  %v5856 = vpop.permute.xlu0 %5855
  %5857 = vrot.lane.b32.xlu0 %v5673, 64
  %v5858 = vpop.permute.xlu0 %5857
  %5859 = vrot.lane.b32.xlu0 %v5674, 64
  %v5860 = vpop.permute.xlu0 %5859
  %5861 = vrot.lane.b32.xlu0 %v5675, 64
  %v5862 = vpop.permute.xlu0 %5861
  %5863 = vrot.lane.b32.xlu0 %v5676, 64
  %v5864 = vpop.permute.xlu0 %5863
  %5865 = vrot.lane.b32.xlu0 %v5677, 64
  %v5866 = vpop.permute.xlu0 %5865
  %5867 = vrot.lane.b32.xlu0 %v5678, 64
  %v5868 = vpop.permute.xlu0 %5867
  %5869 = vrot.lane.b32.xlu0 %v5679, 64
  %v5870 = vpop.permute.xlu0 %5869
  %5871 = vrot.lane.b32.xlu0 %v5680, 64
  %v5872 = vpop.permute.xlu0 %5871
  %5873 = vrot.lane.b32.xlu0 %v5681, 64
  %v5874 = vpop.permute.xlu0 %5873
  %5875 = vrot.lane.b32.xlu0 %v5682, 64
  %v5876 = vpop.permute.xlu0 %5875
  %5877 = vrot.lane.b32.xlu0 %v5683, 64
  %v5878 = vpop.permute.xlu0 %5877
  %5879 = vrot.lane.b32.xlu0 %v5684, 64
  %v5880 = vpop.permute.xlu0 %5879
  %5881 = vrot.lane.b32.xlu0 %v5685, 64
  %v5882 = vpop.permute.xlu0 %5881
  %5883 = vrot.lane.b32.xlu0 %v5686, 64
  %v5884 = vpop.permute.xlu0 %5883
  %5885 = vrot.lane.b32.xlu0 %v5687, 64
  %v5886 = vpop.permute.xlu0 %5885
  %5887 = vrot.lane.b32.xlu0 %v5688, 64
  %v5888 = vpop.permute.xlu0 %5887
  %5889 = vrot.lane.b32.xlu0 %v5689, 64
  %v5890 = vpop.permute.xlu0 %5889
  %5891 = vrot.lane.b32.xlu0 %v5690, 64
  %v5892 = vpop.permute.xlu0 %5891
  %5893 = vrot.lane.b32.xlu0 %v5691, 64
  %v5894 = vpop.permute.xlu0 %5893
  %5895 = vrot.lane.b32.xlu0 %v5692, 64
  %v5896 = vpop.permute.xlu0 %5895
  %5897 = vrot.lane.b32.xlu0 %v5693, 64
  %v5898 = vpop.permute.xlu0 %5897
  %5899 = vrot.lane.b32.xlu0 %v5694, 64
  %v5900 = vpop.permute.xlu0 %5899
  %5901 = vrot.lane.b32.xlu0 %v5695, 64
  %v5902 = vpop.permute.xlu0 %5901
  %5903 = vrot.lane.b32.xlu0 %v5696, 64
  %v5904 = vpop.permute.xlu0 %5903
  %5905 = vrot.lane.b32.xlu0 %v5697, 64
  %v5906 = vpop.permute.xlu0 %5905
  %5907 = vrot.lane.b32.xlu0 %v5698, 64
  %v5908 = vpop.permute.xlu0 %5907
  %5909 = vrot.lane.b32.xlu0 %v5699, 64
  %v5910 = vpop.permute.xlu0 %5909
  %5911 = vrot.lane.b32.xlu0 %v5700, 64
  %v5912 = vpop.permute.xlu0 %5911
  %5913 = vrot.lane.b32.xlu0 %v5701, 64
  %v5914 = vpop.permute.xlu0 %5913
  %5915 = vrot.lane.b32.xlu0 %v5702, 64
  %v5916 = vpop.permute.xlu0 %5915
  %5917 = vrot.lane.b32.xlu0 %v5703, 64
  %v5918 = vpop.permute.xlu0 %5917
  %5919 = vrot.lane.b32.xlu0 %v5704, 64
  %v5920 = vpop.permute.xlu0 %5919
  %5921 = vrot.lane.b32.xlu0 %v5705, 64
  %v5922 = vpop.permute.xlu0 %5921
  %5923 = vrot.lane.b32.xlu0 %v5706, 64
  %v5924 = vpop.permute.xlu0 %5923
  %5925 = vrot.lane.b32.xlu0 %v5707, 64
  %v5926 = vpop.permute.xlu0 %5925
  %5927 = vrot.lane.b32.xlu0 %v5708, 64
  %v5928 = vpop.permute.xlu0 %5927
  %5929 = vrot.lane.b32.xlu0 %v5709, 64
  %v5930 = vpop.permute.xlu0 %5929
  %5931 = vrot.lane.b32.xlu0 %v5710, 64
  %v5932 = vpop.permute.xlu0 %5931
  %5933 = vrot.lane.b32.xlu0 %v5711, 64
  %v5934 = vpop.permute.xlu0 %5933
  %5935 = vrot.lane.b32.xlu0 %v5712, 64
  %v5936 = vpop.permute.xlu0 %5935
  %5937 = vrot.lane.b32.xlu0 %v5713, 64
  %v5938 = vpop.permute.xlu0 %5937
  %5939 = vrot.lane.b32.xlu0 %v5714, 64
  %v5940 = vpop.permute.xlu0 %5939
  %5941 = vrot.lane.b32.xlu0 %v5715, 64
  %v5942 = vpop.permute.xlu0 %5941
  %5943 = vrot.lane.b32.xlu0 %v5716, 64
  %v5944 = vpop.permute.xlu0 %5943
  %5945 = vrot.lane.b32.xlu0 %v5717, 64
  %v5946 = vpop.permute.xlu0 %5945
  %5947 = vrot.lane.b32.xlu0 %v5718, 64
  %v5948 = vpop.permute.xlu0 %5947
  %5949 = vrot.lane.b32.xlu0 %v5719, 64
  %v5950 = vpop.permute.xlu0 %5949
  %5951 = vrot.lane.b32.xlu0 %v5720, 64
  %v5952 = vpop.permute.xlu0 %5951
  %5953 = vrot.lane.b32.xlu0 %v5721, 64
  %v5954 = vpop.permute.xlu0 %5953
  %5955 = vrot.lane.b32.xlu0 %v5722, 64
  %v5956 = vpop.permute.xlu0 %5955
  %5957 = vrot.lane.b32.xlu0 %v5723, 64
  %v5958 = vpop.permute.xlu0 %5957
  %5959 = vrot.lane.b32.xlu0 %v5724, 64
  %v5960 = vpop.permute.xlu0 %5959
  %5961 = vrot.lane.b32.xlu0 %v5725, 64
  %v5962 = vpop.permute.xlu0 %5961
  %5963 = vrot.lane.b32.xlu0 %v5726, 64
  %v5964 = vpop.permute.xlu0 %5963
  %5965 = vrot.lane.b32.xlu0 %v5727, 64
  %v5966 = vpop.permute.xlu0 %5965
  %5967 = vrot.lane.b32.xlu0 %v5728, 64
  %v5968 = vpop.permute.xlu0 %5967
  %5969 = vrot.lane.b32.xlu0 %v5729, 64
  %v5970 = vpop.permute.xlu0 %5969
  %5971 = vrot.lane.b32.xlu0 %v5730, 64
  %v5972 = vpop.permute.xlu0 %5971
  %5973 = vrot.lane.b32.xlu0 %v5731, 64
  %v5974 = vpop.permute.xlu0 %5973
  %5975 = vrot.lane.b32.xlu0 %v5732, 64
  %v5976 = vpop.permute.xlu0 %5975
  %5977 = vrot.lane.b32.xlu0 %v5733, 64
  %v5978 = vpop.permute.xlu0 %5977
  %5979 = vrot.lane.b32.xlu0 %v5734, 64
  %v5980 = vpop.permute.xlu0 %5979
  %5981 = vrot.lane.b32.xlu0 %v5735, 64
  %v5982 = vpop.permute.xlu0 %5981
  %5983 = vrot.lane.b32.xlu0 %v5736, 64
  %v5984 = vpop.permute.xlu0 %5983
  %5985 = vrot.lane.b32.xlu0 %v5737, 64
  %v5986 = vpop.permute.xlu0 %5985
  %5987 = vrot.lane.b32.xlu0 %v5738, 64
  %v5988 = vpop.permute.xlu0 %5987
  %5989 = vrot.lane.b32.xlu0 %v5739, 64
  %v5990 = vpop.permute.xlu0 %5989
  %5991 = vrot.lane.b32.xlu0 %v5740, 64
  %v5992 = vpop.permute.xlu0 %5991
  %5993 = vrot.lane.b32.xlu0 %v5741, 64
  %v5994 = vpop.permute.xlu0 %5993
  %5995 = vrot.lane.b32.xlu0 %v5742, 64
  %v5996 = vpop.permute.xlu0 %5995
  %5997 = vrot.lane.b32.xlu0 %v5743, 64
  %v5998 = vpop.permute.xlu0 %5997
  %5999 = vrot.lane.b32.xlu0 %v5744, 64
  %v6000 = vpop.permute.xlu0 %5999
  %6001 = vrot.lane.b32.xlu0 %v5745, 64
  %v6002 = vpop.permute.xlu0 %6001
  %6003 = vrot.lane.b32.xlu0 %v5746, 64
  %v6004 = vpop.permute.xlu0 %6003
  %6005 = vrot.lane.b32.xlu0 %v5747, 64
  %v6006 = vpop.permute.xlu0 %6005
  %6007 = vrot.lane.b32.xlu0 %v5748, 64
  %v6008 = vpop.permute.xlu0 %6007
  %6009 = vrot.lane.b32.xlu0 %v5749, 64
  %v6010 = vpop.permute.xlu0 %6009
  %6011 = vrot.lane.b32.xlu0 %v5750, 64
  %v6012 = vpop.permute.xlu0 %6011
  %6013 = vrot.lane.b32.xlu0 %v5751, 64
  %v6014 = vpop.permute.xlu0 %6013
  %6015 = vrot.lane.b32.xlu0 %v5752, 64
  %v6016 = vpop.permute.xlu0 %6015
  %v6105 = vmax.f32 %v5665, %v5842
  %v6106 = vmax.f32 %v5666, %v5844
  %v6107 = vmax.f32 %v5667, %v5846
  %v6108 = vmax.f32 %v5668, %v5848
  %v6109 = vmax.f32 %v5669, %v5850
  %v6110 = vmax.f32 %v5670, %v5852
  %v6111 = vmax.f32 %v5671, %v5854
  %v6112 = vmax.f32 %v5672, %v5856
  %v6113 = vmax.f32 %v5673, %v5858
  %v6114 = vmax.f32 %v5674, %v5860
  %v6115 = vmax.f32 %v5675, %v5862
  %v6116 = vmax.f32 %v5676, %v5864
  %v6117 = vmax.f32 %v5677, %v5866
  %v6118 = vmax.f32 %v5678, %v5868
  %v6119 = vmax.f32 %v5679, %v5870
  %v6120 = vmax.f32 %v5680, %v5872
  %v6121 = vmax.f32 %v5681, %v5874
  %v6122 = vmax.f32 %v5682, %v5876
  %v6123 = vmax.f32 %v5683, %v5878
  %v6124 = vmax.f32 %v5684, %v5880
  %v6125 = vmax.f32 %v5685, %v5882
  %v6126 = vmax.f32 %v5686, %v5884
  %v6127 = vmax.f32 %v5687, %v5886
  %v6128 = vmax.f32 %v5688, %v5888
  %v6129 = vmax.f32 %v5689, %v5890
  %v6130 = vmax.f32 %v5690, %v5892
  %v6131 = vmax.f32 %v5691, %v5894
  %v6132 = vmax.f32 %v5692, %v5896
  %v6133 = vmax.f32 %v5693, %v5898
  %v6134 = vmax.f32 %v5694, %v5900
  %v6135 = vmax.f32 %v5695, %v5902
  %v6136 = vmax.f32 %v5696, %v5904
  %v6137 = vmax.f32 %v5697, %v5906
  %v6138 = vmax.f32 %v5698, %v5908
  %v6139 = vmax.f32 %v5699, %v5910
  %v6140 = vmax.f32 %v5700, %v5912
  %v6141 = vmax.f32 %v5701, %v5914
  %v6142 = vmax.f32 %v5702, %v5916
  %v6143 = vmax.f32 %v5703, %v5918
  %v6144 = vmax.f32 %v5704, %v5920
  %v6145 = vmax.f32 %v5705, %v5922
  %v6146 = vmax.f32 %v5706, %v5924
  %v6147 = vmax.f32 %v5707, %v5926
  %v6148 = vmax.f32 %v5708, %v5928
  %v6149 = vmax.f32 %v5709, %v5930
  %v6150 = vmax.f32 %v5710, %v5932
  %v6151 = vmax.f32 %v5711, %v5934
  %v6152 = vmax.f32 %v5712, %v5936
  %v6153 = vmax.f32 %v5713, %v5938
  %v6154 = vmax.f32 %v5714, %v5940
  %v6155 = vmax.f32 %v5715, %v5942
  %v6156 = vmax.f32 %v5716, %v5944
  %v6157 = vmax.f32 %v5717, %v5946
  %v6158 = vmax.f32 %v5718, %v5948
  %v6159 = vmax.f32 %v5719, %v5950
  %v6160 = vmax.f32 %v5720, %v5952
  %v6161 = vmax.f32 %v5721, %v5954
  %v6162 = vmax.f32 %v5722, %v5956
  %v6163 = vmax.f32 %v5723, %v5958
  %v6164 = vmax.f32 %v5724, %v5960
  %v6165 = vmax.f32 %v5725, %v5962
  %v6166 = vmax.f32 %v5726, %v5964
  %v6167 = vmax.f32 %v5727, %v5966
  %v6168 = vmax.f32 %v5728, %v5968
  %v6169 = vmax.f32 %v5729, %v5970
  %v6170 = vmax.f32 %v5730, %v5972
  %v6171 = vmax.f32 %v5731, %v5974
  %v6172 = vmax.f32 %v5732, %v5976
  %v6173 = vmax.f32 %v5733, %v5978
  %v6174 = vmax.f32 %v5734, %v5980
  %v6175 = vmax.f32 %v5735, %v5982
  %v6176 = vmax.f32 %v5736, %v5984
  %v6177 = vmax.f32 %v5737, %v5986
  %v6178 = vmax.f32 %v5738, %v5988
  %v6179 = vmax.f32 %v5739, %v5990
  %v6180 = vmax.f32 %v5740, %v5992
  %v6181 = vmax.f32 %v5741, %v5994
  %v6182 = vmax.f32 %v5742, %v5996
  %v6183 = vmax.f32 %v5743, %v5998
  %v6184 = vmax.f32 %v5744, %v6000
  %v6185 = vmax.f32 %v5745, %v6002
  %v6186 = vmax.f32 %v5746, %v6004
  %v6187 = vmax.f32 %v5747, %v6006
  %v6188 = vmax.f32 %v5748, %v6008
  %v6189 = vmax.f32 %v5749, %v6010
  %v6190 = vmax.f32 %v5750, %v6012
  %v6191 = vmax.f32 %v5751, %v6014
  %v6192 = vmax.f32 %v5752, %v6016
  %v6193 = vlaneseq
  %v6194 = vand.u32 %v6193, 127
  %v6195 = vld [vmem:[%s5] sm:$0xff]
  %v6196 = vld [vmem:[%s5 + $0x8] sm:$0xff]
  %v6197 = vld [vmem:[%s5 + $0x10] sm:$0xff]
  %v6198 = vld [vmem:[%s5 + $0x18] sm:$0xff]
  %v6199 = vld [vmem:[%s5 + $0x20] sm:$0xff]
  %v6200 = vld [vmem:[%s5 + $0x28] sm:$0xff]
  %v6201 = vld [vmem:[%s5 + $0x30] sm:$0xff]
  %v6202 = vld [vmem:[%s5 + $0x38] sm:$0xff]
  %v6203 = vld [vmem:[%s5 + $0x40] sm:$0xff]
  %v6204 = vld [vmem:[%s5 + $0x48] sm:$0xff]
  %v6205 = vld [vmem:[%s5 + $0x50] sm:$0xff]
  %v6206 = vmul.f32 %v6105, %v6195
  %v6207 = vmul.f32 %v6106, %v6196
  %v6208 = vmul.f32 %v6107, %v6197
  %v6209 = vmul.f32 %v6108, %v6198
  %v6210 = vmul.f32 %v6109, %v6199
  %v6211 = vmul.f32 %v6110, %v6200
  %v6212 = vmul.f32 %v6111, %v6201
  %v6213 = vmul.f32 %v6112, %v6202
  %v6214 = vmul.f32 %v6113, %v6203
  %v6215 = vmul.f32 %v6114, %v6204
  %v6216 = vmul.f32 %v6115, %v6205
  %v6217 = vmul.f32 %v6116, %v6195
  %v6218 = vmul.f32 %v6117, %v6196
  %v6219 = vmul.f32 %v6118, %v6197
  %v6220 = vmul.f32 %v6119, %v6198
  %v6221 = vmul.f32 %v6120, %v6199
  %v6222 = vmul.f32 %v6121, %v6200
  %v6223 = vmul.f32 %v6122, %v6201
  %v6224 = vmul.f32 %v6123, %v6202
  %v6225 = vmul.f32 %v6124, %v6203
  %v6226 = vmul.f32 %v6125, %v6204
  %v6227 = vmul.f32 %v6126, %v6205
  %v6228 = vmul.f32 %v6127, %v6195
  %v6229 = vmul.f32 %v6128, %v6196
  %v6230 = vmul.f32 %v6129, %v6197
  %v6231 = vmul.f32 %v6130, %v6198
  %v6232 = vmul.f32 %v6131, %v6199
  %v6233 = vmul.f32 %v6132, %v6200
  %v6234 = vmul.f32 %v6133, %v6201
  %v6235 = vmul.f32 %v6134, %v6202
  %v6236 = vmul.f32 %v6135, %v6203
  %v6237 = vmul.f32 %v6136, %v6204
  %v6238 = vmul.f32 %v6137, %v6205
  %v6239 = vmul.f32 %v6138, %v6195
  %v6240 = vmul.f32 %v6139, %v6196
  %v6241 = vmul.f32 %v6140, %v6197
  %v6242 = vmul.f32 %v6141, %v6198
  %v6243 = vmul.f32 %v6142, %v6199
  %v6244 = vmul.f32 %v6143, %v6200
  %v6245 = vmul.f32 %v6144, %v6201
  %v6246 = vmul.f32 %v6145, %v6202
  %v6247 = vmul.f32 %v6146, %v6203
  %v6248 = vmul.f32 %v6147, %v6204
  %v6249 = vmul.f32 %v6148, %v6205
  %v6250 = vmul.f32 %v6149, %v6195
  %v6251 = vmul.f32 %v6150, %v6196
  %v6252 = vmul.f32 %v6151, %v6197
  %v6253 = vmul.f32 %v6152, %v6198
  %v6254 = vmul.f32 %v6153, %v6199
  %v6255 = vmul.f32 %v6154, %v6200
  %v6256 = vmul.f32 %v6155, %v6201
  %v6257 = vmul.f32 %v6156, %v6202
  %v6258 = vmul.f32 %v6157, %v6203
  %v6259 = vmul.f32 %v6158, %v6204
  %v6260 = vmul.f32 %v6159, %v6205
  %v6261 = vmul.f32 %v6160, %v6195
  %v6262 = vmul.f32 %v6161, %v6196
  %v6263 = vmul.f32 %v6162, %v6197
  %v6264 = vmul.f32 %v6163, %v6198
  %v6265 = vmul.f32 %v6164, %v6199
  %v6266 = vmul.f32 %v6165, %v6200
  %v6267 = vmul.f32 %v6166, %v6201
  %v6268 = vmul.f32 %v6167, %v6202
  %v6269 = vmul.f32 %v6168, %v6203
  %v6270 = vmul.f32 %v6169, %v6204
  %v6271 = vmul.f32 %v6170, %v6205
  %v6272 = vmul.f32 %v6171, %v6195
  %v6273 = vmul.f32 %v6172, %v6196
  %v6274 = vmul.f32 %v6173, %v6197
  %v6275 = vmul.f32 %v6174, %v6198
  %v6276 = vmul.f32 %v6175, %v6199
  %v6277 = vmul.f32 %v6176, %v6200
  %v6278 = vmul.f32 %v6177, %v6201
  %v6279 = vmul.f32 %v6178, %v6202
  %v6280 = vmul.f32 %v6179, %v6203
  %v6281 = vmul.f32 %v6180, %v6204
  %v6282 = vmul.f32 %v6181, %v6205
  %v6283 = vmul.f32 %v6182, %v6195
  %v6284 = vmul.f32 %v6183, %v6196
  %v6285 = vmul.f32 %v6184, %v6197
  %v6286 = vmul.f32 %v6185, %v6198
  %v6287 = vmul.f32 %v6186, %v6199
  %v6288 = vmul.f32 %v6187, %v6200
  %v6289 = vmul.f32 %v6188, %v6201
  %v6290 = vmul.f32 %v6189, %v6202
  %v6291 = vmul.f32 %v6190, %v6203
  %v6292 = vmul.f32 %v6191, %v6204
  %v6293 = vmul.f32 %v6192, %v6205
  %vm6294 = vcmask 523264
  %v6295 = vsel %vm6294, %v6206, 0.0
  %v6296 = vsel %vm6294, %v6207, 0.0
  %v6297 = vadd.f32 %v6295, %v6296
  %v6298 = vsel %vm6294, %v6208, 0.0
  %v6299 = vadd.f32 %v6297, %v6298
  %v6300 = vsel %vm6294, %v6209, 0.0
  %v6301 = vadd.f32 %v6299, %v6300
  %v6302 = vsel %vm6294, %v6210, 0.0
  %v6303 = vadd.f32 %v6301, %v6302
  %v6304 = vsel %vm6294, %v6211, 0.0
  %v6305 = vadd.f32 %v6303, %v6304
  %v6306 = vsel %vm6294, %v6212, 0.0
  %v6307 = vadd.f32 %v6305, %v6306
  %v6308 = vsel %vm6294, %v6213, 0.0
  %v6309 = vadd.f32 %v6307, %v6308
  %v6310 = vsel %vm6294, %v6214, 0.0
  %v6311 = vadd.f32 %v6309, %v6310
  %v6312 = vsel %vm6294, %v6215, 0.0
  %v6313 = vadd.f32 %v6311, %v6312
  %v6314 = vsel %vm6294, %v6216, 0.0
  %v6315 = vadd.f32 %v6313, %v6314
  %v6316 = vrot.slane %v6315, 4
  %v6317 = vadd.f32 %v6315, %v6316
  %v6318 = vrot.slane %v6317, 2
  %v6319 = vadd.f32 %v6317, %v6318
  %v6320 = vrot.slane %v6319, 1
  %v6321 = vadd.f32 %v6319, %v6320
  %v6322 = vsel %vm6294, %v6217, 0.0
  %v6323 = vsel %vm6294, %v6218, 0.0
  %v6324 = vadd.f32 %v6322, %v6323
  %v6325 = vsel %vm6294, %v6219, 0.0
  %v6326 = vadd.f32 %v6324, %v6325
  %v6327 = vsel %vm6294, %v6220, 0.0
  %v6328 = vadd.f32 %v6326, %v6327
  %v6329 = vsel %vm6294, %v6221, 0.0
  %v6330 = vadd.f32 %v6328, %v6329
  %v6331 = vsel %vm6294, %v6222, 0.0
  %v6332 = vadd.f32 %v6330, %v6331
  %v6333 = vsel %vm6294, %v6223, 0.0
  %v6334 = vadd.f32 %v6332, %v6333
  %v6335 = vsel %vm6294, %v6224, 0.0
  %v6336 = vadd.f32 %v6334, %v6335
  %v6337 = vsel %vm6294, %v6225, 0.0
  %v6338 = vadd.f32 %v6336, %v6337
  %v6339 = vsel %vm6294, %v6226, 0.0
  %v6340 = vadd.f32 %v6338, %v6339
  %v6341 = vsel %vm6294, %v6227, 0.0
  %v6342 = vadd.f32 %v6340, %v6341
  %v6343 = vrot.slane %v6342, 4
  %v6344 = vadd.f32 %v6342, %v6343
  %v6345 = vrot.slane %v6344, 2
  %v6346 = vadd.f32 %v6344, %v6345
  %v6347 = vrot.slane %v6346, 1
  %v6348 = vadd.f32 %v6346, %v6347
  %v6349 = vsel %vm6294, %v6228, 0.0
  %v6350 = vsel %vm6294, %v6229, 0.0
  %v6351 = vadd.f32 %v6349, %v6350
  %v6352 = vsel %vm6294, %v6230, 0.0
  %v6353 = vadd.f32 %v6351, %v6352
  %v6354 = vsel %vm6294, %v6231, 0.0
  %v6355 = vadd.f32 %v6353, %v6354
  %v6356 = vsel %vm6294, %v6232, 0.0
  %v6357 = vadd.f32 %v6355, %v6356
  %v6358 = vsel %vm6294, %v6233, 0.0
  %v6359 = vadd.f32 %v6357, %v6358
  %v6360 = vsel %vm6294, %v6234, 0.0
  %v6361 = vadd.f32 %v6359, %v6360
  %v6362 = vsel %vm6294, %v6235, 0.0
  %v6363 = vadd.f32 %v6361, %v6362
  %v6364 = vsel %vm6294, %v6236, 0.0
  %v6365 = vadd.f32 %v6363, %v6364
  %v6366 = vsel %vm6294, %v6237, 0.0
  %v6367 = vadd.f32 %v6365, %v6366
  %v6368 = vsel %vm6294, %v6238, 0.0
  %v6369 = vadd.f32 %v6367, %v6368
  %v6370 = vrot.slane %v6369, 4
  %v6371 = vadd.f32 %v6369, %v6370
  %v6372 = vrot.slane %v6371, 2
  %v6373 = vadd.f32 %v6371, %v6372
  %v6374 = vrot.slane %v6373, 1
  %v6375 = vadd.f32 %v6373, %v6374
  %v6376 = vsel %vm6294, %v6239, 0.0
  %v6377 = vsel %vm6294, %v6240, 0.0
  %v6378 = vadd.f32 %v6376, %v6377
  %v6379 = vsel %vm6294, %v6241, 0.0
  %v6380 = vadd.f32 %v6378, %v6379
  %v6381 = vsel %vm6294, %v6242, 0.0
  %v6382 = vadd.f32 %v6380, %v6381
  %v6383 = vsel %vm6294, %v6243, 0.0
  %v6384 = vadd.f32 %v6382, %v6383
  %v6385 = vsel %vm6294, %v6244, 0.0
  %v6386 = vadd.f32 %v6384, %v6385
  %v6387 = vsel %vm6294, %v6245, 0.0
  %v6388 = vadd.f32 %v6386, %v6387
  %v6389 = vsel %vm6294, %v6246, 0.0
  %v6390 = vadd.f32 %v6388, %v6389
  %v6391 = vsel %vm6294, %v6247, 0.0
  %v6392 = vadd.f32 %v6390, %v6391
  %v6393 = vsel %vm6294, %v6248, 0.0
  %v6394 = vadd.f32 %v6392, %v6393
  %v6395 = vsel %vm6294, %v6249, 0.0
  %v6396 = vadd.f32 %v6394, %v6395
  %v6397 = vrot.slane %v6396, 4
  %v6398 = vadd.f32 %v6396, %v6397
  %v6399 = vrot.slane %v6398, 2
  %v6400 = vadd.f32 %v6398, %v6399
  %v6401 = vrot.slane %v6400, 1
  %v6402 = vadd.f32 %v6400, %v6401
  %v6403 = vsel %vm6294, %v6250, 0.0
  %v6404 = vsel %vm6294, %v6251, 0.0
  %v6405 = vadd.f32 %v6403, %v6404
  %v6406 = vsel %vm6294, %v6252, 0.0
  %v6407 = vadd.f32 %v6405, %v6406
  %v6408 = vsel %vm6294, %v6253, 0.0
  %v6409 = vadd.f32 %v6407, %v6408
  %v6410 = vsel %vm6294, %v6254, 0.0
  %v6411 = vadd.f32 %v6409, %v6410
  %v6412 = vsel %vm6294, %v6255, 0.0
  %v6413 = vadd.f32 %v6411, %v6412
  %v6414 = vsel %vm6294, %v6256, 0.0
  %v6415 = vadd.f32 %v6413, %v6414
  %v6416 = vsel %vm6294, %v6257, 0.0
  %v6417 = vadd.f32 %v6415, %v6416
  %v6418 = vsel %vm6294, %v6258, 0.0
  %v6419 = vadd.f32 %v6417, %v6418
  %v6420 = vsel %vm6294, %v6259, 0.0
  %v6421 = vadd.f32 %v6419, %v6420
  %v6422 = vsel %vm6294, %v6260, 0.0
  %v6423 = vadd.f32 %v6421, %v6422
  %v6424 = vrot.slane %v6423, 4
  %v6425 = vadd.f32 %v6423, %v6424
  %v6426 = vrot.slane %v6425, 2
  %v6427 = vadd.f32 %v6425, %v6426
  %v6428 = vrot.slane %v6427, 1
  %v6429 = vadd.f32 %v6427, %v6428
  %v6430 = vsel %vm6294, %v6261, 0.0
  %v6431 = vsel %vm6294, %v6262, 0.0
  %v6432 = vadd.f32 %v6430, %v6431
  %v6433 = vsel %vm6294, %v6263, 0.0
  %v6434 = vadd.f32 %v6432, %v6433
  %v6435 = vsel %vm6294, %v6264, 0.0
  %v6436 = vadd.f32 %v6434, %v6435
  %v6437 = vsel %vm6294, %v6265, 0.0
  %v6438 = vadd.f32 %v6436, %v6437
  %v6439 = vsel %vm6294, %v6266, 0.0
  %v6440 = vadd.f32 %v6438, %v6439
  %v6441 = vsel %vm6294, %v6267, 0.0
  %v6442 = vadd.f32 %v6440, %v6441
  %v6443 = vsel %vm6294, %v6268, 0.0
  %v6444 = vadd.f32 %v6442, %v6443
  %v6445 = vsel %vm6294, %v6269, 0.0
  %v6446 = vadd.f32 %v6444, %v6445
  %v6447 = vsel %vm6294, %v6270, 0.0
  %v6448 = vadd.f32 %v6446, %v6447
  %v6449 = vsel %vm6294, %v6271, 0.0
  %v6450 = vadd.f32 %v6448, %v6449
  %v6451 = vrot.slane %v6450, 4
  %v6452 = vadd.f32 %v6450, %v6451
  %v6453 = vrot.slane %v6452, 2
  %v6454 = vadd.f32 %v6452, %v6453
  %v6455 = vrot.slane %v6454, 1
  %v6456 = vadd.f32 %v6454, %v6455
  %v6457 = vsel %vm6294, %v6272, 0.0
  %v6458 = vsel %vm6294, %v6273, 0.0
  %v6459 = vadd.f32 %v6457, %v6458
  %v6460 = vsel %vm6294, %v6274, 0.0
  %v6461 = vadd.f32 %v6459, %v6460
  %v6462 = vsel %vm6294, %v6275, 0.0
  %v6463 = vadd.f32 %v6461, %v6462
  %v6464 = vsel %vm6294, %v6276, 0.0
  %v6465 = vadd.f32 %v6463, %v6464
  %v6466 = vsel %vm6294, %v6277, 0.0
  %v6467 = vadd.f32 %v6465, %v6466
  %v6468 = vsel %vm6294, %v6278, 0.0
  %v6469 = vadd.f32 %v6467, %v6468
  %v6470 = vsel %vm6294, %v6279, 0.0
  %v6471 = vadd.f32 %v6469, %v6470
  %v6472 = vsel %vm6294, %v6280, 0.0
  %v6473 = vadd.f32 %v6471, %v6472
  %v6474 = vsel %vm6294, %v6281, 0.0
  %v6475 = vadd.f32 %v6473, %v6474
  %v6476 = vsel %vm6294, %v6282, 0.0
  %v6477 = vadd.f32 %v6475, %v6476
  %v6478 = vrot.slane %v6477, 4
  %v6479 = vadd.f32 %v6477, %v6478
  %v6480 = vrot.slane %v6479, 2
  %v6481 = vadd.f32 %v6479, %v6480
  %v6482 = vrot.slane %v6481, 1
  %v6483 = vadd.f32 %v6481, %v6482
  %v6484 = vsel %vm6294, %v6283, 0.0
  %v6485 = vsel %vm6294, %v6284, 0.0
  %v6486 = vadd.f32 %v6484, %v6485
  %v6487 = vsel %vm6294, %v6285, 0.0
  %v6488 = vadd.f32 %v6486, %v6487
  %v6489 = vsel %vm6294, %v6286, 0.0
  %v6490 = vadd.f32 %v6488, %v6489
  %v6491 = vsel %vm6294, %v6287, 0.0
  %v6492 = vadd.f32 %v6490, %v6491
  %v6493 = vsel %vm6294, %v6288, 0.0
  %v6494 = vadd.f32 %v6492, %v6493
  %v6495 = vsel %vm6294, %v6289, 0.0
  %v6496 = vadd.f32 %v6494, %v6495
  %v6497 = vsel %vm6294, %v6290, 0.0
  %v6498 = vadd.f32 %v6496, %v6497
  %v6499 = vsel %vm6294, %v6291, 0.0
  %v6500 = vadd.f32 %v6498, %v6499
  %v6501 = vsel %vm6294, %v6292, 0.0
  %v6502 = vadd.f32 %v6500, %v6501
  %v6503 = vsel %vm6294, %v6293, 0.0
  %v6504 = vadd.f32 %v6502, %v6503
  %v6505 = vrot.slane %v6504, 4
  %v6506 = vadd.f32 %v6504, %v6505
  %v6507 = vrot.slane %v6506, 2
  %v6508 = vadd.f32 %v6506, %v6507
  %v6509 = vrot.slane %v6508, 1
  %v6510 = vadd.f32 %v6508, %v6509
  %vm6519 = vcmask 1041409
  %v6520 = vsel %vm6519, %v6348, %v6321
  %vm6521 = vcmask 1042434
  %v6522 = vsel %vm6521, %v6375, %v6520
  %vm6523 = vcmask 1043459
  %v6524 = vsel %vm6523, %v6402, %v6522
  %vm6525 = vcmask 1044484
  %v6526 = vsel %vm6525, %v6429, %v6524
  %vm6527 = vcmask 1045509
  %v6528 = vsel %vm6527, %v6456, %v6526
  %vm6529 = vcmask 1046534
  %v6530 = vsel %vm6529, %v6483, %v6528
  %vm6531 = vcmask 1047559
  %v6532 = vsel %vm6531, %v6510, %v6530
  %v6534 = vsel %vm6294, %v6532, 0.0
  %6535 = vadd.xlane.f32.xlu0 %v6534
  %v6536 = vpop.xlane.xlu0 %6535
  %vm6537 = vcmp.eq.s32.totalorder %v6194, 0
  %v6538 = vsel %vm6537, %v6536, 0.0
  %v6539 = vadd.f32 %v6538, 0.0
  %s6540 = scalar_lea.vmem %s5, 88
  %v6541 = vld [vmem:[%s6540] sm:$0xff]
  %v6542 = vld [vmem:[%s6540 + $0x8] sm:$0xff]
  %v6543 = vld [vmem:[%s6540 + $0x10] sm:$0xff]
  %v6544 = vld [vmem:[%s6540 + $0x18] sm:$0xff]
  %v6545 = vld [vmem:[%s6540 + $0x20] sm:$0xff]
  %v6546 = vld [vmem:[%s6540 + $0x28] sm:$0xff]
  %v6547 = vld [vmem:[%s6540 + $0x30] sm:$0xff]
  %v6548 = vld [vmem:[%s6540 + $0x38] sm:$0xff]
  %v6549 = vld [vmem:[%s6540 + $0x40] sm:$0xff]
  %v6550 = vld [vmem:[%s6540 + $0x48] sm:$0xff]
  %v6551 = vld [vmem:[%s6540 + $0x50] sm:$0xff]
  %v6552 = vmul.f32 %v6105, %v6541
  %v6553 = vmul.f32 %v6106, %v6542
  %v6554 = vmul.f32 %v6107, %v6543
  %v6555 = vmul.f32 %v6108, %v6544
  %v6556 = vmul.f32 %v6109, %v6545
  %v6557 = vmul.f32 %v6110, %v6546
  %v6558 = vmul.f32 %v6111, %v6547
  %v6559 = vmul.f32 %v6112, %v6548
  %v6560 = vmul.f32 %v6113, %v6549
  %v6561 = vmul.f32 %v6114, %v6550
  %v6562 = vmul.f32 %v6115, %v6551
  %v6563 = vmul.f32 %v6116, %v6541
  %v6564 = vmul.f32 %v6117, %v6542
  %v6565 = vmul.f32 %v6118, %v6543
  %v6566 = vmul.f32 %v6119, %v6544
  %v6567 = vmul.f32 %v6120, %v6545
  %v6568 = vmul.f32 %v6121, %v6546
  %v6569 = vmul.f32 %v6122, %v6547
  %v6570 = vmul.f32 %v6123, %v6548
  %v6571 = vmul.f32 %v6124, %v6549
  %v6572 = vmul.f32 %v6125, %v6550
  %v6573 = vmul.f32 %v6126, %v6551
  %v6574 = vmul.f32 %v6127, %v6541
  %v6575 = vmul.f32 %v6128, %v6542
  %v6576 = vmul.f32 %v6129, %v6543
  %v6577 = vmul.f32 %v6130, %v6544
  %v6578 = vmul.f32 %v6131, %v6545
  %v6579 = vmul.f32 %v6132, %v6546
  %v6580 = vmul.f32 %v6133, %v6547
  %v6581 = vmul.f32 %v6134, %v6548
  %v6582 = vmul.f32 %v6135, %v6549
  %v6583 = vmul.f32 %v6136, %v6550
  %v6584 = vmul.f32 %v6137, %v6551
  %v6585 = vmul.f32 %v6138, %v6541
  %v6586 = vmul.f32 %v6139, %v6542
  %v6587 = vmul.f32 %v6140, %v6543
  %v6588 = vmul.f32 %v6141, %v6544
  %v6589 = vmul.f32 %v6142, %v6545
  %v6590 = vmul.f32 %v6143, %v6546
  %v6591 = vmul.f32 %v6144, %v6547
  %v6592 = vmul.f32 %v6145, %v6548
  %v6593 = vmul.f32 %v6146, %v6549
  %v6594 = vmul.f32 %v6147, %v6550
  %v6595 = vmul.f32 %v6148, %v6551
  %v6596 = vmul.f32 %v6149, %v6541
  %v6597 = vmul.f32 %v6150, %v6542
  %v6598 = vmul.f32 %v6151, %v6543
  %v6599 = vmul.f32 %v6152, %v6544
  %v6600 = vmul.f32 %v6153, %v6545
  %v6601 = vmul.f32 %v6154, %v6546
  %v6602 = vmul.f32 %v6155, %v6547
  %v6603 = vmul.f32 %v6156, %v6548
  %v6604 = vmul.f32 %v6157, %v6549
  %v6605 = vmul.f32 %v6158, %v6550
  %v6606 = vmul.f32 %v6159, %v6551
  %v6607 = vmul.f32 %v6160, %v6541
  %v6608 = vmul.f32 %v6161, %v6542
  %v6609 = vmul.f32 %v6162, %v6543
  %v6610 = vmul.f32 %v6163, %v6544
  %v6611 = vmul.f32 %v6164, %v6545
  %v6612 = vmul.f32 %v6165, %v6546
  %v6613 = vmul.f32 %v6166, %v6547
  %v6614 = vmul.f32 %v6167, %v6548
  %v6615 = vmul.f32 %v6168, %v6549
  %v6616 = vmul.f32 %v6169, %v6550
  %v6617 = vmul.f32 %v6170, %v6551
  %v6618 = vmul.f32 %v6171, %v6541
  %v6619 = vmul.f32 %v6172, %v6542
  %v6620 = vmul.f32 %v6173, %v6543
  %v6621 = vmul.f32 %v6174, %v6544
  %v6622 = vmul.f32 %v6175, %v6545
  %v6623 = vmul.f32 %v6176, %v6546
  %v6624 = vmul.f32 %v6177, %v6547
  %v6625 = vmul.f32 %v6178, %v6548
  %v6626 = vmul.f32 %v6179, %v6549
  %v6627 = vmul.f32 %v6180, %v6550
  %v6628 = vmul.f32 %v6181, %v6551
  %v6629 = vmul.f32 %v6182, %v6541
  %v6630 = vmul.f32 %v6183, %v6542
  %v6631 = vmul.f32 %v6184, %v6543
  %v6632 = vmul.f32 %v6185, %v6544
  %v6633 = vmul.f32 %v6186, %v6545
  %v6634 = vmul.f32 %v6187, %v6546
  %v6635 = vmul.f32 %v6188, %v6547
  %v6636 = vmul.f32 %v6189, %v6548
  %v6637 = vmul.f32 %v6190, %v6549
  %v6638 = vmul.f32 %v6191, %v6550
  %v6639 = vmul.f32 %v6192, %v6551
  %v6640 = vsel %vm6294, %v6552, 0.0
  %v6641 = vsel %vm6294, %v6553, 0.0
  %v6642 = vadd.f32 %v6640, %v6641
  %v6643 = vsel %vm6294, %v6554, 0.0
  %v6644 = vadd.f32 %v6642, %v6643
  %v6645 = vsel %vm6294, %v6555, 0.0
  %v6646 = vadd.f32 %v6644, %v6645
  %v6647 = vsel %vm6294, %v6556, 0.0
  %v6648 = vadd.f32 %v6646, %v6647
  %v6649 = vsel %vm6294, %v6557, 0.0
  %v6650 = vadd.f32 %v6648, %v6649
  %v6651 = vsel %vm6294, %v6558, 0.0
  %v6652 = vadd.f32 %v6650, %v6651
  %v6653 = vsel %vm6294, %v6559, 0.0
  %v6654 = vadd.f32 %v6652, %v6653
  %v6655 = vsel %vm6294, %v6560, 0.0
  %v6656 = vadd.f32 %v6654, %v6655
  %v6657 = vsel %vm6294, %v6561, 0.0
  %v6658 = vadd.f32 %v6656, %v6657
  %v6659 = vsel %vm6294, %v6562, 0.0
  %v6660 = vadd.f32 %v6658, %v6659
  %v6661 = vrot.slane %v6660, 4
  %v6662 = vadd.f32 %v6660, %v6661
  %v6663 = vrot.slane %v6662, 2
  %v6664 = vadd.f32 %v6662, %v6663
  %v6665 = vrot.slane %v6664, 1
  %v6666 = vadd.f32 %v6664, %v6665
  %v6667 = vsel %vm6294, %v6563, 0.0
  %v6668 = vsel %vm6294, %v6564, 0.0
  %v6669 = vadd.f32 %v6667, %v6668
  %v6670 = vsel %vm6294, %v6565, 0.0
  %v6671 = vadd.f32 %v6669, %v6670
  %v6672 = vsel %vm6294, %v6566, 0.0
  %v6673 = vadd.f32 %v6671, %v6672
  %v6674 = vsel %vm6294, %v6567, 0.0
  %v6675 = vadd.f32 %v6673, %v6674
  %v6676 = vsel %vm6294, %v6568, 0.0
  %v6677 = vadd.f32 %v6675, %v6676
  %v6678 = vsel %vm6294, %v6569, 0.0
  %v6679 = vadd.f32 %v6677, %v6678
  %v6680 = vsel %vm6294, %v6570, 0.0
  %v6681 = vadd.f32 %v6679, %v6680
  %v6682 = vsel %vm6294, %v6571, 0.0
  %v6683 = vadd.f32 %v6681, %v6682
  %v6684 = vsel %vm6294, %v6572, 0.0
  %v6685 = vadd.f32 %v6683, %v6684
  %v6686 = vsel %vm6294, %v6573, 0.0
  %v6687 = vadd.f32 %v6685, %v6686
  %v6688 = vrot.slane %v6687, 4
  %v6689 = vadd.f32 %v6687, %v6688
  %v6690 = vrot.slane %v6689, 2
  %v6691 = vadd.f32 %v6689, %v6690
  %v6692 = vrot.slane %v6691, 1
  %v6693 = vadd.f32 %v6691, %v6692
  %v6694 = vsel %vm6294, %v6574, 0.0
  %v6695 = vsel %vm6294, %v6575, 0.0
  %v6696 = vadd.f32 %v6694, %v6695
  %v6697 = vsel %vm6294, %v6576, 0.0
  %v6698 = vadd.f32 %v6696, %v6697
  %v6699 = vsel %vm6294, %v6577, 0.0
  %v6700 = vadd.f32 %v6698, %v6699
  %v6701 = vsel %vm6294, %v6578, 0.0
  %v6702 = vadd.f32 %v6700, %v6701
  %v6703 = vsel %vm6294, %v6579, 0.0
  %v6704 = vadd.f32 %v6702, %v6703
  %v6705 = vsel %vm6294, %v6580, 0.0
  %v6706 = vadd.f32 %v6704, %v6705
  %v6707 = vsel %vm6294, %v6581, 0.0
  %v6708 = vadd.f32 %v6706, %v6707
  %v6709 = vsel %vm6294, %v6582, 0.0
  %v6710 = vadd.f32 %v6708, %v6709
  %v6711 = vsel %vm6294, %v6583, 0.0
  %v6712 = vadd.f32 %v6710, %v6711
  %v6713 = vsel %vm6294, %v6584, 0.0
  %v6714 = vadd.f32 %v6712, %v6713
  %v6715 = vrot.slane %v6714, 4
  %v6716 = vadd.f32 %v6714, %v6715
  %v6717 = vrot.slane %v6716, 2
  %v6718 = vadd.f32 %v6716, %v6717
  %v6719 = vrot.slane %v6718, 1
  %v6720 = vadd.f32 %v6718, %v6719
  %v6721 = vsel %vm6294, %v6585, 0.0
  %v6722 = vsel %vm6294, %v6586, 0.0
  %v6723 = vadd.f32 %v6721, %v6722
  %v6724 = vsel %vm6294, %v6587, 0.0
  %v6725 = vadd.f32 %v6723, %v6724
  %v6726 = vsel %vm6294, %v6588, 0.0
  %v6727 = vadd.f32 %v6725, %v6726
  %v6728 = vsel %vm6294, %v6589, 0.0
  %v6729 = vadd.f32 %v6727, %v6728
  %v6730 = vsel %vm6294, %v6590, 0.0
  %v6731 = vadd.f32 %v6729, %v6730
  %v6732 = vsel %vm6294, %v6591, 0.0
  %v6733 = vadd.f32 %v6731, %v6732
  %v6734 = vsel %vm6294, %v6592, 0.0
  %v6735 = vadd.f32 %v6733, %v6734
  %v6736 = vsel %vm6294, %v6593, 0.0
  %v6737 = vadd.f32 %v6735, %v6736
  %v6738 = vsel %vm6294, %v6594, 0.0
  %v6739 = vadd.f32 %v6737, %v6738
  %v6740 = vsel %vm6294, %v6595, 0.0
  %v6741 = vadd.f32 %v6739, %v6740
  %v6742 = vrot.slane %v6741, 4
  %v6743 = vadd.f32 %v6741, %v6742
  %v6744 = vrot.slane %v6743, 2
  %v6745 = vadd.f32 %v6743, %v6744
  %v6746 = vrot.slane %v6745, 1
  %v6747 = vadd.f32 %v6745, %v6746
  %v6748 = vsel %vm6294, %v6596, 0.0
  %v6749 = vsel %vm6294, %v6597, 0.0
  %v6750 = vadd.f32 %v6748, %v6749
  %v6751 = vsel %vm6294, %v6598, 0.0
  %v6752 = vadd.f32 %v6750, %v6751
  %v6753 = vsel %vm6294, %v6599, 0.0
  %v6754 = vadd.f32 %v6752, %v6753
  %v6755 = vsel %vm6294, %v6600, 0.0
  %v6756 = vadd.f32 %v6754, %v6755
  %v6757 = vsel %vm6294, %v6601, 0.0
  %v6758 = vadd.f32 %v6756, %v6757
  %v6759 = vsel %vm6294, %v6602, 0.0
  %v6760 = vadd.f32 %v6758, %v6759
  %v6761 = vsel %vm6294, %v6603, 0.0
  %v6762 = vadd.f32 %v6760, %v6761
  %v6763 = vsel %vm6294, %v6604, 0.0
  %v6764 = vadd.f32 %v6762, %v6763
  %v6765 = vsel %vm6294, %v6605, 0.0
  %v6766 = vadd.f32 %v6764, %v6765
  %v6767 = vsel %vm6294, %v6606, 0.0
  %v6768 = vadd.f32 %v6766, %v6767
  %v6769 = vrot.slane %v6768, 4
  %v6770 = vadd.f32 %v6768, %v6769
  %v6771 = vrot.slane %v6770, 2
  %v6772 = vadd.f32 %v6770, %v6771
  %v6773 = vrot.slane %v6772, 1
  %v6774 = vadd.f32 %v6772, %v6773
  %v6775 = vsel %vm6294, %v6607, 0.0
  %v6776 = vsel %vm6294, %v6608, 0.0
  %v6777 = vadd.f32 %v6775, %v6776
  %v6778 = vsel %vm6294, %v6609, 0.0
  %v6779 = vadd.f32 %v6777, %v6778
  %v6780 = vsel %vm6294, %v6610, 0.0
  %v6781 = vadd.f32 %v6779, %v6780
  %v6782 = vsel %vm6294, %v6611, 0.0
  %v6783 = vadd.f32 %v6781, %v6782
  %v6784 = vsel %vm6294, %v6612, 0.0
  %v6785 = vadd.f32 %v6783, %v6784
  %v6786 = vsel %vm6294, %v6613, 0.0
  %v6787 = vadd.f32 %v6785, %v6786
  %v6788 = vsel %vm6294, %v6614, 0.0
  %v6789 = vadd.f32 %v6787, %v6788
  %v6790 = vsel %vm6294, %v6615, 0.0
  %v6791 = vadd.f32 %v6789, %v6790
  %v6792 = vsel %vm6294, %v6616, 0.0
  %v6793 = vadd.f32 %v6791, %v6792
  %v6794 = vsel %vm6294, %v6617, 0.0
  %v6795 = vadd.f32 %v6793, %v6794
  %v6796 = vrot.slane %v6795, 4
  %v6797 = vadd.f32 %v6795, %v6796
  %v6798 = vrot.slane %v6797, 2
  %v6799 = vadd.f32 %v6797, %v6798
  %v6800 = vrot.slane %v6799, 1
  %v6801 = vadd.f32 %v6799, %v6800
  %v6802 = vsel %vm6294, %v6618, 0.0
  %v6803 = vsel %vm6294, %v6619, 0.0
  %v6804 = vadd.f32 %v6802, %v6803
  %v6805 = vsel %vm6294, %v6620, 0.0
  %v6806 = vadd.f32 %v6804, %v6805
  %v6807 = vsel %vm6294, %v6621, 0.0
  %v6808 = vadd.f32 %v6806, %v6807
  %v6809 = vsel %vm6294, %v6622, 0.0
  %v6810 = vadd.f32 %v6808, %v6809
  %v6811 = vsel %vm6294, %v6623, 0.0
  %v6812 = vadd.f32 %v6810, %v6811
  %v6813 = vsel %vm6294, %v6624, 0.0
  %v6814 = vadd.f32 %v6812, %v6813
  %v6815 = vsel %vm6294, %v6625, 0.0
  %v6816 = vadd.f32 %v6814, %v6815
  %v6817 = vsel %vm6294, %v6626, 0.0
  %v6818 = vadd.f32 %v6816, %v6817
  %v6819 = vsel %vm6294, %v6627, 0.0
  %v6820 = vadd.f32 %v6818, %v6819
  %v6821 = vsel %vm6294, %v6628, 0.0
  %v6822 = vadd.f32 %v6820, %v6821
  %v6823 = vrot.slane %v6822, 4
  %v6824 = vadd.f32 %v6822, %v6823
  %v6825 = vrot.slane %v6824, 2
  %v6826 = vadd.f32 %v6824, %v6825
  %v6827 = vrot.slane %v6826, 1
  %v6828 = vadd.f32 %v6826, %v6827
  %v6829 = vsel %vm6294, %v6629, 0.0
  %v6830 = vsel %vm6294, %v6630, 0.0
  %v6831 = vadd.f32 %v6829, %v6830
  %v6832 = vsel %vm6294, %v6631, 0.0
  %v6833 = vadd.f32 %v6831, %v6832
  %v6834 = vsel %vm6294, %v6632, 0.0
  %v6835 = vadd.f32 %v6833, %v6834
  %v6836 = vsel %vm6294, %v6633, 0.0
  %v6837 = vadd.f32 %v6835, %v6836
  %v6838 = vsel %vm6294, %v6634, 0.0
  %v6839 = vadd.f32 %v6837, %v6838
  %v6840 = vsel %vm6294, %v6635, 0.0
  %v6841 = vadd.f32 %v6839, %v6840
  %v6842 = vsel %vm6294, %v6636, 0.0
  %v6843 = vadd.f32 %v6841, %v6842
  %v6844 = vsel %vm6294, %v6637, 0.0
  %v6845 = vadd.f32 %v6843, %v6844
  %v6846 = vsel %vm6294, %v6638, 0.0
  %v6847 = vadd.f32 %v6845, %v6846
  %v6848 = vsel %vm6294, %v6639, 0.0
  %v6849 = vadd.f32 %v6847, %v6848
  %v6850 = vrot.slane %v6849, 4
  %v6851 = vadd.f32 %v6849, %v6850
  %v6852 = vrot.slane %v6851, 2
  %v6853 = vadd.f32 %v6851, %v6852
  %v6854 = vrot.slane %v6853, 1
  %v6855 = vadd.f32 %v6853, %v6854
  %v6864 = vsel %vm6519, %v6693, %v6666
  %v6865 = vsel %vm6521, %v6720, %v6864
  %v6866 = vsel %vm6523, %v6747, %v6865
  %v6867 = vsel %vm6525, %v6774, %v6866
  %v6868 = vsel %vm6527, %v6801, %v6867
  %v6869 = vsel %vm6529, %v6828, %v6868
  %v6870 = vsel %vm6531, %v6855, %v6869
  %v6872 = vsel %vm6294, %v6870, 0.0
  %6873 = vadd.xlane.f32.xlu0 %v6872
  %v6874 = vpop.xlane.xlu0 %6873
  %vm6875 = vcmp.eq.s32.totalorder %v6194, 1
  %v6876 = vsel %vm6875, %v6874, 0.0
  %v6877 = vadd.f32 %v6539, %v6876
  %s6878 = scalar_lea.vmem %s5, 176
  %v6879 = vld [vmem:[%s6878] sm:$0xff]
  %v6880 = vld [vmem:[%s6878 + $0x8] sm:$0xff]
  %v6881 = vld [vmem:[%s6878 + $0x10] sm:$0xff]
  %v6882 = vld [vmem:[%s6878 + $0x18] sm:$0xff]
  %v6883 = vld [vmem:[%s6878 + $0x20] sm:$0xff]
  %v6884 = vld [vmem:[%s6878 + $0x28] sm:$0xff]
  %v6885 = vld [vmem:[%s6878 + $0x30] sm:$0xff]
  %v6886 = vld [vmem:[%s6878 + $0x38] sm:$0xff]
  %v6887 = vld [vmem:[%s6878 + $0x40] sm:$0xff]
  %v6888 = vld [vmem:[%s6878 + $0x48] sm:$0xff]
  %v6889 = vld [vmem:[%s6878 + $0x50] sm:$0xff]
  %v6890 = vmul.f32 %v6105, %v6879
  %v6891 = vmul.f32 %v6106, %v6880
  %v6892 = vmul.f32 %v6107, %v6881
  %v6893 = vmul.f32 %v6108, %v6882
  %v6894 = vmul.f32 %v6109, %v6883
  %v6895 = vmul.f32 %v6110, %v6884
  %v6896 = vmul.f32 %v6111, %v6885
  %v6897 = vmul.f32 %v6112, %v6886
  %v6898 = vmul.f32 %v6113, %v6887
  %v6899 = vmul.f32 %v6114, %v6888
  %v6900 = vmul.f32 %v6115, %v6889
  %v6901 = vmul.f32 %v6116, %v6879
  %v6902 = vmul.f32 %v6117, %v6880
  %v6903 = vmul.f32 %v6118, %v6881
  %v6904 = vmul.f32 %v6119, %v6882
  %v6905 = vmul.f32 %v6120, %v6883
  %v6906 = vmul.f32 %v6121, %v6884
  %v6907 = vmul.f32 %v6122, %v6885
  %v6908 = vmul.f32 %v6123, %v6886
  %v6909 = vmul.f32 %v6124, %v6887
  %v6910 = vmul.f32 %v6125, %v6888
  %v6911 = vmul.f32 %v6126, %v6889
  %v6912 = vmul.f32 %v6127, %v6879
  %v6913 = vmul.f32 %v6128, %v6880
  %v6914 = vmul.f32 %v6129, %v6881
  %v6915 = vmul.f32 %v6130, %v6882
  %v6916 = vmul.f32 %v6131, %v6883
  %v6917 = vmul.f32 %v6132, %v6884
  %v6918 = vmul.f32 %v6133, %v6885
  %v6919 = vmul.f32 %v6134, %v6886
  %v6920 = vmul.f32 %v6135, %v6887
  %v6921 = vmul.f32 %v6136, %v6888
  %v6922 = vmul.f32 %v6137, %v6889
  %v6923 = vmul.f32 %v6138, %v6879
  %v6924 = vmul.f32 %v6139, %v6880
  %v6925 = vmul.f32 %v6140, %v6881
  %v6926 = vmul.f32 %v6141, %v6882
  %v6927 = vmul.f32 %v6142, %v6883
  %v6928 = vmul.f32 %v6143, %v6884
  %v6929 = vmul.f32 %v6144, %v6885
  %v6930 = vmul.f32 %v6145, %v6886
  %v6931 = vmul.f32 %v6146, %v6887
  %v6932 = vmul.f32 %v6147, %v6888
  %v6933 = vmul.f32 %v6148, %v6889
  %v6934 = vmul.f32 %v6149, %v6879
  %v6935 = vmul.f32 %v6150, %v6880
  %v6936 = vmul.f32 %v6151, %v6881
  %v6937 = vmul.f32 %v6152, %v6882
  %v6938 = vmul.f32 %v6153, %v6883
  %v6939 = vmul.f32 %v6154, %v6884
  %v6940 = vmul.f32 %v6155, %v6885
  %v6941 = vmul.f32 %v6156, %v6886
  %v6942 = vmul.f32 %v6157, %v6887
  %v6943 = vmul.f32 %v6158, %v6888
  %v6944 = vmul.f32 %v6159, %v6889
  %v6945 = vmul.f32 %v6160, %v6879
  %v6946 = vmul.f32 %v6161, %v6880
  %v6947 = vmul.f32 %v6162, %v6881
  %v6948 = vmul.f32 %v6163, %v6882
  %v6949 = vmul.f32 %v6164, %v6883
  %v6950 = vmul.f32 %v6165, %v6884
  %v6951 = vmul.f32 %v6166, %v6885
  %v6952 = vmul.f32 %v6167, %v6886
  %v6953 = vmul.f32 %v6168, %v6887
  %v6954 = vmul.f32 %v6169, %v6888
  %v6955 = vmul.f32 %v6170, %v6889
  %v6956 = vmul.f32 %v6171, %v6879
  %v6957 = vmul.f32 %v6172, %v6880
  %v6958 = vmul.f32 %v6173, %v6881
  %v6959 = vmul.f32 %v6174, %v6882
  %v6960 = vmul.f32 %v6175, %v6883
  %v6961 = vmul.f32 %v6176, %v6884
  %v6962 = vmul.f32 %v6177, %v6885
  %v6963 = vmul.f32 %v6178, %v6886
  %v6964 = vmul.f32 %v6179, %v6887
  %v6965 = vmul.f32 %v6180, %v6888
  %v6966 = vmul.f32 %v6181, %v6889
  %v6967 = vmul.f32 %v6182, %v6879
  %v6968 = vmul.f32 %v6183, %v6880
  %v6969 = vmul.f32 %v6184, %v6881
  %v6970 = vmul.f32 %v6185, %v6882
  %v6971 = vmul.f32 %v6186, %v6883
  %v6972 = vmul.f32 %v6187, %v6884
  %v6973 = vmul.f32 %v6188, %v6885
  %v6974 = vmul.f32 %v6189, %v6886
  %v6975 = vmul.f32 %v6190, %v6887
  %v6976 = vmul.f32 %v6191, %v6888
  %v6977 = vmul.f32 %v6192, %v6889
  %v6978 = vsel %vm6294, %v6890, 0.0
  %v6979 = vsel %vm6294, %v6891, 0.0
  %v6980 = vadd.f32 %v6978, %v6979
  %v6981 = vsel %vm6294, %v6892, 0.0
  %v6982 = vadd.f32 %v6980, %v6981
  %v6983 = vsel %vm6294, %v6893, 0.0
  %v6984 = vadd.f32 %v6982, %v6983
  %v6985 = vsel %vm6294, %v6894, 0.0
  %v6986 = vadd.f32 %v6984, %v6985
  %v6987 = vsel %vm6294, %v6895, 0.0
  %v6988 = vadd.f32 %v6986, %v6987
  %v6989 = vsel %vm6294, %v6896, 0.0
  %v6990 = vadd.f32 %v6988, %v6989
  %v6991 = vsel %vm6294, %v6897, 0.0
  %v6992 = vadd.f32 %v6990, %v6991
  %v6993 = vsel %vm6294, %v6898, 0.0
  %v6994 = vadd.f32 %v6992, %v6993
  %v6995 = vsel %vm6294, %v6899, 0.0
  %v6996 = vadd.f32 %v6994, %v6995
  %v6997 = vsel %vm6294, %v6900, 0.0
  %v6998 = vadd.f32 %v6996, %v6997
  %v6999 = vrot.slane %v6998, 4
  %v7000 = vadd.f32 %v6998, %v6999
  %v7001 = vrot.slane %v7000, 2
  %v7002 = vadd.f32 %v7000, %v7001
  %v7003 = vrot.slane %v7002, 1
  %v7004 = vadd.f32 %v7002, %v7003
  %v7005 = vsel %vm6294, %v6901, 0.0
  %v7006 = vsel %vm6294, %v6902, 0.0
  %v7007 = vadd.f32 %v7005, %v7006
  %v7008 = vsel %vm6294, %v6903, 0.0
  %v7009 = vadd.f32 %v7007, %v7008
  %v7010 = vsel %vm6294, %v6904, 0.0
  %v7011 = vadd.f32 %v7009, %v7010
  %v7012 = vsel %vm6294, %v6905, 0.0
  %v7013 = vadd.f32 %v7011, %v7012
  %v7014 = vsel %vm6294, %v6906, 0.0
  %v7015 = vadd.f32 %v7013, %v7014
  %v7016 = vsel %vm6294, %v6907, 0.0
  %v7017 = vadd.f32 %v7015, %v7016
  %v7018 = vsel %vm6294, %v6908, 0.0
  %v7019 = vadd.f32 %v7017, %v7018
  %v7020 = vsel %vm6294, %v6909, 0.0
  %v7021 = vadd.f32 %v7019, %v7020
  %v7022 = vsel %vm6294, %v6910, 0.0
  %v7023 = vadd.f32 %v7021, %v7022
  %v7024 = vsel %vm6294, %v6911, 0.0
  %v7025 = vadd.f32 %v7023, %v7024
  %v7026 = vrot.slane %v7025, 4
  %v7027 = vadd.f32 %v7025, %v7026
  %v7028 = vrot.slane %v7027, 2
  %v7029 = vadd.f32 %v7027, %v7028
  %v7030 = vrot.slane %v7029, 1
  %v7031 = vadd.f32 %v7029, %v7030
  %v7032 = vsel %vm6294, %v6912, 0.0
  %v7033 = vsel %vm6294, %v6913, 0.0
  %v7034 = vadd.f32 %v7032, %v7033
  %v7035 = vsel %vm6294, %v6914, 0.0
  %v7036 = vadd.f32 %v7034, %v7035
  %v7037 = vsel %vm6294, %v6915, 0.0
  %v7038 = vadd.f32 %v7036, %v7037
  %v7039 = vsel %vm6294, %v6916, 0.0
  %v7040 = vadd.f32 %v7038, %v7039
  %v7041 = vsel %vm6294, %v6917, 0.0
  %v7042 = vadd.f32 %v7040, %v7041
  %v7043 = vsel %vm6294, %v6918, 0.0
  %v7044 = vadd.f32 %v7042, %v7043
  %v7045 = vsel %vm6294, %v6919, 0.0
  %v7046 = vadd.f32 %v7044, %v7045
  %v7047 = vsel %vm6294, %v6920, 0.0
  %v7048 = vadd.f32 %v7046, %v7047
  %v7049 = vsel %vm6294, %v6921, 0.0
  %v7050 = vadd.f32 %v7048, %v7049
  %v7051 = vsel %vm6294, %v6922, 0.0
  %v7052 = vadd.f32 %v7050, %v7051
  %v7053 = vrot.slane %v7052, 4
  %v7054 = vadd.f32 %v7052, %v7053
  %v7055 = vrot.slane %v7054, 2
  %v7056 = vadd.f32 %v7054, %v7055
  %v7057 = vrot.slane %v7056, 1
  %v7058 = vadd.f32 %v7056, %v7057
  %v7059 = vsel %vm6294, %v6923, 0.0
  %v7060 = vsel %vm6294, %v6924, 0.0
  %v7061 = vadd.f32 %v7059, %v7060
  %v7062 = vsel %vm6294, %v6925, 0.0
  %v7063 = vadd.f32 %v7061, %v7062
  %v7064 = vsel %vm6294, %v6926, 0.0
  %v7065 = vadd.f32 %v7063, %v7064
  %v7066 = vsel %vm6294, %v6927, 0.0
  %v7067 = vadd.f32 %v7065, %v7066
  %v7068 = vsel %vm6294, %v6928, 0.0
  %v7069 = vadd.f32 %v7067, %v7068
  %v7070 = vsel %vm6294, %v6929, 0.0
  %v7071 = vadd.f32 %v7069, %v7070
  %v7072 = vsel %vm6294, %v6930, 0.0
  %v7073 = vadd.f32 %v7071, %v7072
  %v7074 = vsel %vm6294, %v6931, 0.0
  %v7075 = vadd.f32 %v7073, %v7074
  %v7076 = vsel %vm6294, %v6932, 0.0
  %v7077 = vadd.f32 %v7075, %v7076
  %v7078 = vsel %vm6294, %v6933, 0.0
  %v7079 = vadd.f32 %v7077, %v7078
  %v7080 = vrot.slane %v7079, 4
  %v7081 = vadd.f32 %v7079, %v7080
  %v7082 = vrot.slane %v7081, 2
  %v7083 = vadd.f32 %v7081, %v7082
  %v7084 = vrot.slane %v7083, 1
  %v7085 = vadd.f32 %v7083, %v7084
  %v7086 = vsel %vm6294, %v6934, 0.0
  %v7087 = vsel %vm6294, %v6935, 0.0
  %v7088 = vadd.f32 %v7086, %v7087
  %v7089 = vsel %vm6294, %v6936, 0.0
  %v7090 = vadd.f32 %v7088, %v7089
  %v7091 = vsel %vm6294, %v6937, 0.0
  %v7092 = vadd.f32 %v7090, %v7091
  %v7093 = vsel %vm6294, %v6938, 0.0
  %v7094 = vadd.f32 %v7092, %v7093
  %v7095 = vsel %vm6294, %v6939, 0.0
  %v7096 = vadd.f32 %v7094, %v7095
  %v7097 = vsel %vm6294, %v6940, 0.0
  %v7098 = vadd.f32 %v7096, %v7097
  %v7099 = vsel %vm6294, %v6941, 0.0
  %v7100 = vadd.f32 %v7098, %v7099
  %v7101 = vsel %vm6294, %v6942, 0.0
  %v7102 = vadd.f32 %v7100, %v7101
  %v7103 = vsel %vm6294, %v6943, 0.0
  %v7104 = vadd.f32 %v7102, %v7103
  %v7105 = vsel %vm6294, %v6944, 0.0
  %v7106 = vadd.f32 %v7104, %v7105
  %v7107 = vrot.slane %v7106, 4
  %v7108 = vadd.f32 %v7106, %v7107
  %v7109 = vrot.slane %v7108, 2
  %v7110 = vadd.f32 %v7108, %v7109
  %v7111 = vrot.slane %v7110, 1
  %v7112 = vadd.f32 %v7110, %v7111
  %v7113 = vsel %vm6294, %v6945, 0.0
  %v7114 = vsel %vm6294, %v6946, 0.0
  %v7115 = vadd.f32 %v7113, %v7114
  %v7116 = vsel %vm6294, %v6947, 0.0
  %v7117 = vadd.f32 %v7115, %v7116
  %v7118 = vsel %vm6294, %v6948, 0.0
  %v7119 = vadd.f32 %v7117, %v7118
  %v7120 = vsel %vm6294, %v6949, 0.0
  %v7121 = vadd.f32 %v7119, %v7120
  %v7122 = vsel %vm6294, %v6950, 0.0
  %v7123 = vadd.f32 %v7121, %v7122
  %v7124 = vsel %vm6294, %v6951, 0.0
  %v7125 = vadd.f32 %v7123, %v7124
  %v7126 = vsel %vm6294, %v6952, 0.0
  %v7127 = vadd.f32 %v7125, %v7126
  %v7128 = vsel %vm6294, %v6953, 0.0
  %v7129 = vadd.f32 %v7127, %v7128
  %v7130 = vsel %vm6294, %v6954, 0.0
  %v7131 = vadd.f32 %v7129, %v7130
  %v7132 = vsel %vm6294, %v6955, 0.0
  %v7133 = vadd.f32 %v7131, %v7132
  %v7134 = vrot.slane %v7133, 4
  %v7135 = vadd.f32 %v7133, %v7134
  %v7136 = vrot.slane %v7135, 2
  %v7137 = vadd.f32 %v7135, %v7136
  %v7138 = vrot.slane %v7137, 1
  %v7139 = vadd.f32 %v7137, %v7138
  %v7140 = vsel %vm6294, %v6956, 0.0
  %v7141 = vsel %vm6294, %v6957, 0.0
  %v7142 = vadd.f32 %v7140, %v7141
  %v7143 = vsel %vm6294, %v6958, 0.0
  %v7144 = vadd.f32 %v7142, %v7143
  %v7145 = vsel %vm6294, %v6959, 0.0
  %v7146 = vadd.f32 %v7144, %v7145
  %v7147 = vsel %vm6294, %v6960, 0.0
  %v7148 = vadd.f32 %v7146, %v7147
  %v7149 = vsel %vm6294, %v6961, 0.0
  %v7150 = vadd.f32 %v7148, %v7149
  %v7151 = vsel %vm6294, %v6962, 0.0
  %v7152 = vadd.f32 %v7150, %v7151
  %v7153 = vsel %vm6294, %v6963, 0.0
  %v7154 = vadd.f32 %v7152, %v7153
  %v7155 = vsel %vm6294, %v6964, 0.0
  %v7156 = vadd.f32 %v7154, %v7155
  %v7157 = vsel %vm6294, %v6965, 0.0
  %v7158 = vadd.f32 %v7156, %v7157
  %v7159 = vsel %vm6294, %v6966, 0.0
  %v7160 = vadd.f32 %v7158, %v7159
  %v7161 = vrot.slane %v7160, 4
  %v7162 = vadd.f32 %v7160, %v7161
  %v7163 = vrot.slane %v7162, 2
  %v7164 = vadd.f32 %v7162, %v7163
  %v7165 = vrot.slane %v7164, 1
  %v7166 = vadd.f32 %v7164, %v7165
  %v7167 = vsel %vm6294, %v6967, 0.0
  %v7168 = vsel %vm6294, %v6968, 0.0
  %v7169 = vadd.f32 %v7167, %v7168
  %v7170 = vsel %vm6294, %v6969, 0.0
  %v7171 = vadd.f32 %v7169, %v7170
  %v7172 = vsel %vm6294, %v6970, 0.0
  %v7173 = vadd.f32 %v7171, %v7172
  %v7174 = vsel %vm6294, %v6971, 0.0
  %v7175 = vadd.f32 %v7173, %v7174
  %v7176 = vsel %vm6294, %v6972, 0.0
  %v7177 = vadd.f32 %v7175, %v7176
  %v7178 = vsel %vm6294, %v6973, 0.0
  %v7179 = vadd.f32 %v7177, %v7178
  %v7180 = vsel %vm6294, %v6974, 0.0
  %v7181 = vadd.f32 %v7179, %v7180
  %v7182 = vsel %vm6294, %v6975, 0.0
  %v7183 = vadd.f32 %v7181, %v7182
  %v7184 = vsel %vm6294, %v6976, 0.0
  %v7185 = vadd.f32 %v7183, %v7184
  %v7186 = vsel %vm6294, %v6977, 0.0
  %v7187 = vadd.f32 %v7185, %v7186
  %v7188 = vrot.slane %v7187, 4
  %v7189 = vadd.f32 %v7187, %v7188
  %v7190 = vrot.slane %v7189, 2
  %v7191 = vadd.f32 %v7189, %v7190
  %v7192 = vrot.slane %v7191, 1
  %v7193 = vadd.f32 %v7191, %v7192
  %v7202 = vsel %vm6519, %v7031, %v7004
  %v7203 = vsel %vm6521, %v7058, %v7202
  %v7204 = vsel %vm6523, %v7085, %v7203
  %v7205 = vsel %vm6525, %v7112, %v7204
  %v7206 = vsel %vm6527, %v7139, %v7205
  %v7207 = vsel %vm6529, %v7166, %v7206
  %v7208 = vsel %vm6531, %v7193, %v7207
  %v7210 = vsel %vm6294, %v7208, 0.0
  %7211 = vadd.xlane.f32.xlu0 %v7210
  %v7212 = vpop.xlane.xlu0 %7211
  %vm7213 = vcmp.eq.s32.totalorder %v6194, 2
  %v7214 = vsel %vm7213, %v7212, 0.0
  %v7215 = vadd.f32 %v6877, %v7214
  %s7216 = scalar_lea.vmem %s5, 264
  %v7217 = vld [vmem:[%s7216] sm:$0xff]
  %v7218 = vld [vmem:[%s7216 + $0x8] sm:$0xff]
  %v7219 = vld [vmem:[%s7216 + $0x10] sm:$0xff]
  %v7220 = vld [vmem:[%s7216 + $0x18] sm:$0xff]
  %v7221 = vld [vmem:[%s7216 + $0x20] sm:$0xff]
  %v7222 = vld [vmem:[%s7216 + $0x28] sm:$0xff]
  %v7223 = vld [vmem:[%s7216 + $0x30] sm:$0xff]
  %v7224 = vld [vmem:[%s7216 + $0x38] sm:$0xff]
  %v7225 = vld [vmem:[%s7216 + $0x40] sm:$0xff]
  %v7226 = vld [vmem:[%s7216 + $0x48] sm:$0xff]
  %v7227 = vld [vmem:[%s7216 + $0x50] sm:$0xff]
  %v7228 = vmul.f32 %v6105, %v7217
  %v7229 = vmul.f32 %v6106, %v7218
  %v7230 = vmul.f32 %v6107, %v7219
  %v7231 = vmul.f32 %v6108, %v7220
  %v7232 = vmul.f32 %v6109, %v7221
  %v7233 = vmul.f32 %v6110, %v7222
  %v7234 = vmul.f32 %v6111, %v7223
  %v7235 = vmul.f32 %v6112, %v7224
  %v7236 = vmul.f32 %v6113, %v7225
  %v7237 = vmul.f32 %v6114, %v7226
  %v7238 = vmul.f32 %v6115, %v7227
  %v7239 = vmul.f32 %v6116, %v7217
  %v7240 = vmul.f32 %v6117, %v7218
  %v7241 = vmul.f32 %v6118, %v7219
  %v7242 = vmul.f32 %v6119, %v7220
  %v7243 = vmul.f32 %v6120, %v7221
  %v7244 = vmul.f32 %v6121, %v7222
  %v7245 = vmul.f32 %v6122, %v7223
  %v7246 = vmul.f32 %v6123, %v7224
  %v7247 = vmul.f32 %v6124, %v7225
  %v7248 = vmul.f32 %v6125, %v7226
  %v7249 = vmul.f32 %v6126, %v7227
  %v7250 = vmul.f32 %v6127, %v7217
  %v7251 = vmul.f32 %v6128, %v7218
  %v7252 = vmul.f32 %v6129, %v7219
  %v7253 = vmul.f32 %v6130, %v7220
  %v7254 = vmul.f32 %v6131, %v7221
  %v7255 = vmul.f32 %v6132, %v7222
  %v7256 = vmul.f32 %v6133, %v7223
  %v7257 = vmul.f32 %v6134, %v7224
  %v7258 = vmul.f32 %v6135, %v7225
  %v7259 = vmul.f32 %v6136, %v7226
  %v7260 = vmul.f32 %v6137, %v7227
  %v7261 = vmul.f32 %v6138, %v7217
  %v7262 = vmul.f32 %v6139, %v7218
  %v7263 = vmul.f32 %v6140, %v7219
  %v7264 = vmul.f32 %v6141, %v7220
  %v7265 = vmul.f32 %v6142, %v7221
  %v7266 = vmul.f32 %v6143, %v7222
  %v7267 = vmul.f32 %v6144, %v7223
  %v7268 = vmul.f32 %v6145, %v7224
  %v7269 = vmul.f32 %v6146, %v7225
  %v7270 = vmul.f32 %v6147, %v7226
  %v7271 = vmul.f32 %v6148, %v7227
  %v7272 = vmul.f32 %v6149, %v7217
  %v7273 = vmul.f32 %v6150, %v7218
  %v7274 = vmul.f32 %v6151, %v7219
  %v7275 = vmul.f32 %v6152, %v7220
  %v7276 = vmul.f32 %v6153, %v7221
  %v7277 = vmul.f32 %v6154, %v7222
  %v7278 = vmul.f32 %v6155, %v7223
  %v7279 = vmul.f32 %v6156, %v7224
  %v7280 = vmul.f32 %v6157, %v7225
  %v7281 = vmul.f32 %v6158, %v7226
  %v7282 = vmul.f32 %v6159, %v7227
  %v7283 = vmul.f32 %v6160, %v7217
  %v7284 = vmul.f32 %v6161, %v7218
  %v7285 = vmul.f32 %v6162, %v7219
  %v7286 = vmul.f32 %v6163, %v7220
  %v7287 = vmul.f32 %v6164, %v7221
  %v7288 = vmul.f32 %v6165, %v7222
  %v7289 = vmul.f32 %v6166, %v7223
  %v7290 = vmul.f32 %v6167, %v7224
  %v7291 = vmul.f32 %v6168, %v7225
  %v7292 = vmul.f32 %v6169, %v7226
  %v7293 = vmul.f32 %v6170, %v7227
  %v7294 = vmul.f32 %v6171, %v7217
  %v7295 = vmul.f32 %v6172, %v7218
  %v7296 = vmul.f32 %v6173, %v7219
  %v7297 = vmul.f32 %v6174, %v7220
  %v7298 = vmul.f32 %v6175, %v7221
  %v7299 = vmul.f32 %v6176, %v7222
  %v7300 = vmul.f32 %v6177, %v7223
  %v7301 = vmul.f32 %v6178, %v7224
  %v7302 = vmul.f32 %v6179, %v7225
  %v7303 = vmul.f32 %v6180, %v7226
  %v7304 = vmul.f32 %v6181, %v7227
  %v7305 = vmul.f32 %v6182, %v7217
  %v7306 = vmul.f32 %v6183, %v7218
  %v7307 = vmul.f32 %v6184, %v7219
  %v7308 = vmul.f32 %v6185, %v7220
  %v7309 = vmul.f32 %v6186, %v7221
  %v7310 = vmul.f32 %v6187, %v7222
  %v7311 = vmul.f32 %v6188, %v7223
  %v7312 = vmul.f32 %v6189, %v7224
  %v7313 = vmul.f32 %v6190, %v7225
  %v7314 = vmul.f32 %v6191, %v7226
  %v7315 = vmul.f32 %v6192, %v7227
  %v7316 = vsel %vm6294, %v7228, 0.0
  %v7317 = vsel %vm6294, %v7229, 0.0
  %v7318 = vadd.f32 %v7316, %v7317
  %v7319 = vsel %vm6294, %v7230, 0.0
  %v7320 = vadd.f32 %v7318, %v7319
  %v7321 = vsel %vm6294, %v7231, 0.0
  %v7322 = vadd.f32 %v7320, %v7321
  %v7323 = vsel %vm6294, %v7232, 0.0
  %v7324 = vadd.f32 %v7322, %v7323
  %v7325 = vsel %vm6294, %v7233, 0.0
  %v7326 = vadd.f32 %v7324, %v7325
  %v7327 = vsel %vm6294, %v7234, 0.0
  %v7328 = vadd.f32 %v7326, %v7327
  %v7329 = vsel %vm6294, %v7235, 0.0
  %v7330 = vadd.f32 %v7328, %v7329
  %v7331 = vsel %vm6294, %v7236, 0.0
  %v7332 = vadd.f32 %v7330, %v7331
  %v7333 = vsel %vm6294, %v7237, 0.0
  %v7334 = vadd.f32 %v7332, %v7333
  %v7335 = vsel %vm6294, %v7238, 0.0
  %v7336 = vadd.f32 %v7334, %v7335
  %v7337 = vrot.slane %v7336, 4
  %v7338 = vadd.f32 %v7336, %v7337
  %v7339 = vrot.slane %v7338, 2
  %v7340 = vadd.f32 %v7338, %v7339
  %v7341 = vrot.slane %v7340, 1
  %v7342 = vadd.f32 %v7340, %v7341
  %v7343 = vsel %vm6294, %v7239, 0.0
  %v7344 = vsel %vm6294, %v7240, 0.0
  %v7345 = vadd.f32 %v7343, %v7344
  %v7346 = vsel %vm6294, %v7241, 0.0
  %v7347 = vadd.f32 %v7345, %v7346
  %v7348 = vsel %vm6294, %v7242, 0.0
  %v7349 = vadd.f32 %v7347, %v7348
  %v7350 = vsel %vm6294, %v7243, 0.0
  %v7351 = vadd.f32 %v7349, %v7350
  %v7352 = vsel %vm6294, %v7244, 0.0
  %v7353 = vadd.f32 %v7351, %v7352
  %v7354 = vsel %vm6294, %v7245, 0.0
  %v7355 = vadd.f32 %v7353, %v7354
  %v7356 = vsel %vm6294, %v7246, 0.0
  %v7357 = vadd.f32 %v7355, %v7356
  %v7358 = vsel %vm6294, %v7247, 0.0
  %v7359 = vadd.f32 %v7357, %v7358
  %v7360 = vsel %vm6294, %v7248, 0.0
  %v7361 = vadd.f32 %v7359, %v7360
  %v7362 = vsel %vm6294, %v7249, 0.0
  %v7363 = vadd.f32 %v7361, %v7362
  %v7364 = vrot.slane %v7363, 4
  %v7365 = vadd.f32 %v7363, %v7364
  %v7366 = vrot.slane %v7365, 2
  %v7367 = vadd.f32 %v7365, %v7366
  %v7368 = vrot.slane %v7367, 1
  %v7369 = vadd.f32 %v7367, %v7368
  %v7370 = vsel %vm6294, %v7250, 0.0
  %v7371 = vsel %vm6294, %v7251, 0.0
  %v7372 = vadd.f32 %v7370, %v7371
  %v7373 = vsel %vm6294, %v7252, 0.0
  %v7374 = vadd.f32 %v7372, %v7373
  %v7375 = vsel %vm6294, %v7253, 0.0
  %v7376 = vadd.f32 %v7374, %v7375
  %v7377 = vsel %vm6294, %v7254, 0.0
  %v7378 = vadd.f32 %v7376, %v7377
  %v7379 = vsel %vm6294, %v7255, 0.0
  %v7380 = vadd.f32 %v7378, %v7379
  %v7381 = vsel %vm6294, %v7256, 0.0
  %v7382 = vadd.f32 %v7380, %v7381
  %v7383 = vsel %vm6294, %v7257, 0.0
  %v7384 = vadd.f32 %v7382, %v7383
  %v7385 = vsel %vm6294, %v7258, 0.0
  %v7386 = vadd.f32 %v7384, %v7385
  %v7387 = vsel %vm6294, %v7259, 0.0
  %v7388 = vadd.f32 %v7386, %v7387
  %v7389 = vsel %vm6294, %v7260, 0.0
  %v7390 = vadd.f32 %v7388, %v7389
  %v7391 = vrot.slane %v7390, 4
  %v7392 = vadd.f32 %v7390, %v7391
  %v7393 = vrot.slane %v7392, 2
  %v7394 = vadd.f32 %v7392, %v7393
  %v7395 = vrot.slane %v7394, 1
  %v7396 = vadd.f32 %v7394, %v7395
  %v7397 = vsel %vm6294, %v7261, 0.0
  %v7398 = vsel %vm6294, %v7262, 0.0
  %v7399 = vadd.f32 %v7397, %v7398
  %v7400 = vsel %vm6294, %v7263, 0.0
  %v7401 = vadd.f32 %v7399, %v7400
  %v7402 = vsel %vm6294, %v7264, 0.0
  %v7403 = vadd.f32 %v7401, %v7402
  %v7404 = vsel %vm6294, %v7265, 0.0
  %v7405 = vadd.f32 %v7403, %v7404
  %v7406 = vsel %vm6294, %v7266, 0.0
  %v7407 = vadd.f32 %v7405, %v7406
  %v7408 = vsel %vm6294, %v7267, 0.0
  %v7409 = vadd.f32 %v7407, %v7408
  %v7410 = vsel %vm6294, %v7268, 0.0
  %v7411 = vadd.f32 %v7409, %v7410
  %v7412 = vsel %vm6294, %v7269, 0.0
  %v7413 = vadd.f32 %v7411, %v7412
  %v7414 = vsel %vm6294, %v7270, 0.0
  %v7415 = vadd.f32 %v7413, %v7414
  %v7416 = vsel %vm6294, %v7271, 0.0
  %v7417 = vadd.f32 %v7415, %v7416
  %v7418 = vrot.slane %v7417, 4
  %v7419 = vadd.f32 %v7417, %v7418
  %v7420 = vrot.slane %v7419, 2
  %v7421 = vadd.f32 %v7419, %v7420
  %v7422 = vrot.slane %v7421, 1
  %v7423 = vadd.f32 %v7421, %v7422
  %v7424 = vsel %vm6294, %v7272, 0.0
  %v7425 = vsel %vm6294, %v7273, 0.0
  %v7426 = vadd.f32 %v7424, %v7425
  %v7427 = vsel %vm6294, %v7274, 0.0
  %v7428 = vadd.f32 %v7426, %v7427
  %v7429 = vsel %vm6294, %v7275, 0.0
  %v7430 = vadd.f32 %v7428, %v7429
  %v7431 = vsel %vm6294, %v7276, 0.0
  %v7432 = vadd.f32 %v7430, %v7431
  %v7433 = vsel %vm6294, %v7277, 0.0
  %v7434 = vadd.f32 %v7432, %v7433
  %v7435 = vsel %vm6294, %v7278, 0.0
  %v7436 = vadd.f32 %v7434, %v7435
  %v7437 = vsel %vm6294, %v7279, 0.0
  %v7438 = vadd.f32 %v7436, %v7437
  %v7439 = vsel %vm6294, %v7280, 0.0
  %v7440 = vadd.f32 %v7438, %v7439
  %v7441 = vsel %vm6294, %v7281, 0.0
  %v7442 = vadd.f32 %v7440, %v7441
  %v7443 = vsel %vm6294, %v7282, 0.0
  %v7444 = vadd.f32 %v7442, %v7443
  %v7445 = vrot.slane %v7444, 4
  %v7446 = vadd.f32 %v7444, %v7445
  %v7447 = vrot.slane %v7446, 2
  %v7448 = vadd.f32 %v7446, %v7447
  %v7449 = vrot.slane %v7448, 1
  %v7450 = vadd.f32 %v7448, %v7449
  %v7451 = vsel %vm6294, %v7283, 0.0
  %v7452 = vsel %vm6294, %v7284, 0.0
  %v7453 = vadd.f32 %v7451, %v7452
  %v7454 = vsel %vm6294, %v7285, 0.0
  %v7455 = vadd.f32 %v7453, %v7454
  %v7456 = vsel %vm6294, %v7286, 0.0
  %v7457 = vadd.f32 %v7455, %v7456
  %v7458 = vsel %vm6294, %v7287, 0.0
  %v7459 = vadd.f32 %v7457, %v7458
  %v7460 = vsel %vm6294, %v7288, 0.0
  %v7461 = vadd.f32 %v7459, %v7460
  %v7462 = vsel %vm6294, %v7289, 0.0
  %v7463 = vadd.f32 %v7461, %v7462
  %v7464 = vsel %vm6294, %v7290, 0.0
  %v7465 = vadd.f32 %v7463, %v7464
  %v7466 = vsel %vm6294, %v7291, 0.0
  %v7467 = vadd.f32 %v7465, %v7466
  %v7468 = vsel %vm6294, %v7292, 0.0
  %v7469 = vadd.f32 %v7467, %v7468
  %v7470 = vsel %vm6294, %v7293, 0.0
  %v7471 = vadd.f32 %v7469, %v7470
  %v7472 = vrot.slane %v7471, 4
  %v7473 = vadd.f32 %v7471, %v7472
  %v7474 = vrot.slane %v7473, 2
  %v7475 = vadd.f32 %v7473, %v7474
  %v7476 = vrot.slane %v7475, 1
  %v7477 = vadd.f32 %v7475, %v7476
  %v7478 = vsel %vm6294, %v7294, 0.0
  %v7479 = vsel %vm6294, %v7295, 0.0
  %v7480 = vadd.f32 %v7478, %v7479
  %v7481 = vsel %vm6294, %v7296, 0.0
  %v7482 = vadd.f32 %v7480, %v7481
  %v7483 = vsel %vm6294, %v7297, 0.0
  %v7484 = vadd.f32 %v7482, %v7483
  %v7485 = vsel %vm6294, %v7298, 0.0
  %v7486 = vadd.f32 %v7484, %v7485
  %v7487 = vsel %vm6294, %v7299, 0.0
  %v7488 = vadd.f32 %v7486, %v7487
  %v7489 = vsel %vm6294, %v7300, 0.0
  %v7490 = vadd.f32 %v7488, %v7489
  %v7491 = vsel %vm6294, %v7301, 0.0
  %v7492 = vadd.f32 %v7490, %v7491
  %v7493 = vsel %vm6294, %v7302, 0.0
  %v7494 = vadd.f32 %v7492, %v7493
  %v7495 = vsel %vm6294, %v7303, 0.0
  %v7496 = vadd.f32 %v7494, %v7495
  %v7497 = vsel %vm6294, %v7304, 0.0
  %v7498 = vadd.f32 %v7496, %v7497
  %v7499 = vrot.slane %v7498, 4
  %v7500 = vadd.f32 %v7498, %v7499
  %v7501 = vrot.slane %v7500, 2
  %v7502 = vadd.f32 %v7500, %v7501
  %v7503 = vrot.slane %v7502, 1
  %v7504 = vadd.f32 %v7502, %v7503
  %v7505 = vsel %vm6294, %v7305, 0.0
  %v7506 = vsel %vm6294, %v7306, 0.0
  %v7507 = vadd.f32 %v7505, %v7506
  %v7508 = vsel %vm6294, %v7307, 0.0
  %v7509 = vadd.f32 %v7507, %v7508
  %v7510 = vsel %vm6294, %v7308, 0.0
  %v7511 = vadd.f32 %v7509, %v7510
  %v7512 = vsel %vm6294, %v7309, 0.0
  %v7513 = vadd.f32 %v7511, %v7512
  %v7514 = vsel %vm6294, %v7310, 0.0
  %v7515 = vadd.f32 %v7513, %v7514
  %v7516 = vsel %vm6294, %v7311, 0.0
  %v7517 = vadd.f32 %v7515, %v7516
  %v7518 = vsel %vm6294, %v7312, 0.0
  %v7519 = vadd.f32 %v7517, %v7518
  %v7520 = vsel %vm6294, %v7313, 0.0
  %v7521 = vadd.f32 %v7519, %v7520
  %v7522 = vsel %vm6294, %v7314, 0.0
  %v7523 = vadd.f32 %v7521, %v7522
  %v7524 = vsel %vm6294, %v7315, 0.0
  %v7525 = vadd.f32 %v7523, %v7524
  %v7526 = vrot.slane %v7525, 4
  %v7527 = vadd.f32 %v7525, %v7526
  %v7528 = vrot.slane %v7527, 2
  %v7529 = vadd.f32 %v7527, %v7528
  %v7530 = vrot.slane %v7529, 1
  %v7531 = vadd.f32 %v7529, %v7530
  %v7540 = vsel %vm6519, %v7369, %v7342
  %v7541 = vsel %vm6521, %v7396, %v7540
  %v7542 = vsel %vm6523, %v7423, %v7541
  %v7543 = vsel %vm6525, %v7450, %v7542
  %v7544 = vsel %vm6527, %v7477, %v7543
  %v7545 = vsel %vm6529, %v7504, %v7544
  %v7546 = vsel %vm6531, %v7531, %v7545
  %v7548 = vsel %vm6294, %v7546, 0.0
  %7549 = vadd.xlane.f32.xlu0 %v7548
  %v7550 = vpop.xlane.xlu0 %7549
  %vm7551 = vcmp.eq.s32.totalorder %v6194, 3
  %v7552 = vsel %vm7551, %v7550, 0.0
  %v7553 = vadd.f32 %v7215, %v7552
  %s7554 = scalar_lea.vmem %s5, 352
  %v7555 = vld [vmem:[%s7554] sm:$0xff]
  %v7556 = vld [vmem:[%s7554 + $0x8] sm:$0xff]
  %v7557 = vld [vmem:[%s7554 + $0x10] sm:$0xff]
  %v7558 = vld [vmem:[%s7554 + $0x18] sm:$0xff]
  %v7559 = vld [vmem:[%s7554 + $0x20] sm:$0xff]
  %v7560 = vld [vmem:[%s7554 + $0x28] sm:$0xff]
  %v7561 = vld [vmem:[%s7554 + $0x30] sm:$0xff]
  %v7562 = vld [vmem:[%s7554 + $0x38] sm:$0xff]
  %v7563 = vld [vmem:[%s7554 + $0x40] sm:$0xff]
  %v7564 = vld [vmem:[%s7554 + $0x48] sm:$0xff]
  %v7565 = vld [vmem:[%s7554 + $0x50] sm:$0xff]
  %v7566 = vmul.f32 %v6105, %v7555
  %v7567 = vmul.f32 %v6106, %v7556
  %v7568 = vmul.f32 %v6107, %v7557
  %v7569 = vmul.f32 %v6108, %v7558
  %v7570 = vmul.f32 %v6109, %v7559
  %v7571 = vmul.f32 %v6110, %v7560
  %v7572 = vmul.f32 %v6111, %v7561
  %v7573 = vmul.f32 %v6112, %v7562
  %v7574 = vmul.f32 %v6113, %v7563
  %v7575 = vmul.f32 %v6114, %v7564
  %v7576 = vmul.f32 %v6115, %v7565
  %v7577 = vmul.f32 %v6116, %v7555
  %v7578 = vmul.f32 %v6117, %v7556
  %v7579 = vmul.f32 %v6118, %v7557
  %v7580 = vmul.f32 %v6119, %v7558
  %v7581 = vmul.f32 %v6120, %v7559
  %v7582 = vmul.f32 %v6121, %v7560
  %v7583 = vmul.f32 %v6122, %v7561
  %v7584 = vmul.f32 %v6123, %v7562
  %v7585 = vmul.f32 %v6124, %v7563
  %v7586 = vmul.f32 %v6125, %v7564
  %v7587 = vmul.f32 %v6126, %v7565
  %v7588 = vmul.f32 %v6127, %v7555
  %v7589 = vmul.f32 %v6128, %v7556
  %v7590 = vmul.f32 %v6129, %v7557
  %v7591 = vmul.f32 %v6130, %v7558
  %v7592 = vmul.f32 %v6131, %v7559
  %v7593 = vmul.f32 %v6132, %v7560
  %v7594 = vmul.f32 %v6133, %v7561
  %v7595 = vmul.f32 %v6134, %v7562
  %v7596 = vmul.f32 %v6135, %v7563
  %v7597 = vmul.f32 %v6136, %v7564
  %v7598 = vmul.f32 %v6137, %v7565
  %v7599 = vmul.f32 %v6138, %v7555
  %v7600 = vmul.f32 %v6139, %v7556
  %v7601 = vmul.f32 %v6140, %v7557
  %v7602 = vmul.f32 %v6141, %v7558
  %v7603 = vmul.f32 %v6142, %v7559
  %v7604 = vmul.f32 %v6143, %v7560
  %v7605 = vmul.f32 %v6144, %v7561
  %v7606 = vmul.f32 %v6145, %v7562
  %v7607 = vmul.f32 %v6146, %v7563
  %v7608 = vmul.f32 %v6147, %v7564
  %v7609 = vmul.f32 %v6148, %v7565
  %v7610 = vmul.f32 %v6149, %v7555
  %v7611 = vmul.f32 %v6150, %v7556
  %v7612 = vmul.f32 %v6151, %v7557
  %v7613 = vmul.f32 %v6152, %v7558
  %v7614 = vmul.f32 %v6153, %v7559
  %v7615 = vmul.f32 %v6154, %v7560
  %v7616 = vmul.f32 %v6155, %v7561
  %v7617 = vmul.f32 %v6156, %v7562
  %v7618 = vmul.f32 %v6157, %v7563
  %v7619 = vmul.f32 %v6158, %v7564
  %v7620 = vmul.f32 %v6159, %v7565
  %v7621 = vmul.f32 %v6160, %v7555
  %v7622 = vmul.f32 %v6161, %v7556
  %v7623 = vmul.f32 %v6162, %v7557
  %v7624 = vmul.f32 %v6163, %v7558
  %v7625 = vmul.f32 %v6164, %v7559
  %v7626 = vmul.f32 %v6165, %v7560
  %v7627 = vmul.f32 %v6166, %v7561
  %v7628 = vmul.f32 %v6167, %v7562
  %v7629 = vmul.f32 %v6168, %v7563
  %v7630 = vmul.f32 %v6169, %v7564
  %v7631 = vmul.f32 %v6170, %v7565
  %v7632 = vmul.f32 %v6171, %v7555
  %v7633 = vmul.f32 %v6172, %v7556
  %v7634 = vmul.f32 %v6173, %v7557
  %v7635 = vmul.f32 %v6174, %v7558
  %v7636 = vmul.f32 %v6175, %v7559
  %v7637 = vmul.f32 %v6176, %v7560
  %v7638 = vmul.f32 %v6177, %v7561
  %v7639 = vmul.f32 %v6178, %v7562
  %v7640 = vmul.f32 %v6179, %v7563
  %v7641 = vmul.f32 %v6180, %v7564
  %v7642 = vmul.f32 %v6181, %v7565
  %v7643 = vmul.f32 %v6182, %v7555
  %v7644 = vmul.f32 %v6183, %v7556
  %v7645 = vmul.f32 %v6184, %v7557
  %v7646 = vmul.f32 %v6185, %v7558
  %v7647 = vmul.f32 %v6186, %v7559
  %v7648 = vmul.f32 %v6187, %v7560
  %v7649 = vmul.f32 %v6188, %v7561
  %v7650 = vmul.f32 %v6189, %v7562
  %v7651 = vmul.f32 %v6190, %v7563
  %v7652 = vmul.f32 %v6191, %v7564
  %v7653 = vmul.f32 %v6192, %v7565
  %v7654 = vsel %vm6294, %v7566, 0.0
  %v7655 = vsel %vm6294, %v7567, 0.0
  %v7656 = vadd.f32 %v7654, %v7655
  %v7657 = vsel %vm6294, %v7568, 0.0
  %v7658 = vadd.f32 %v7656, %v7657
  %v7659 = vsel %vm6294, %v7569, 0.0
  %v7660 = vadd.f32 %v7658, %v7659
  %v7661 = vsel %vm6294, %v7570, 0.0
  %v7662 = vadd.f32 %v7660, %v7661
  %v7663 = vsel %vm6294, %v7571, 0.0
  %v7664 = vadd.f32 %v7662, %v7663
  %v7665 = vsel %vm6294, %v7572, 0.0
  %v7666 = vadd.f32 %v7664, %v7665
  %v7667 = vsel %vm6294, %v7573, 0.0
  %v7668 = vadd.f32 %v7666, %v7667
  %v7669 = vsel %vm6294, %v7574, 0.0
  %v7670 = vadd.f32 %v7668, %v7669
  %v7671 = vsel %vm6294, %v7575, 0.0
  %v7672 = vadd.f32 %v7670, %v7671
  %v7673 = vsel %vm6294, %v7576, 0.0
  %v7674 = vadd.f32 %v7672, %v7673
  %v7675 = vrot.slane %v7674, 4
  %v7676 = vadd.f32 %v7674, %v7675
  %v7677 = vrot.slane %v7676, 2
  %v7678 = vadd.f32 %v7676, %v7677
  %v7679 = vrot.slane %v7678, 1
  %v7680 = vadd.f32 %v7678, %v7679
  %v7681 = vsel %vm6294, %v7577, 0.0
  %v7682 = vsel %vm6294, %v7578, 0.0
  %v7683 = vadd.f32 %v7681, %v7682
  %v7684 = vsel %vm6294, %v7579, 0.0
  %v7685 = vadd.f32 %v7683, %v7684
  %v7686 = vsel %vm6294, %v7580, 0.0
  %v7687 = vadd.f32 %v7685, %v7686
  %v7688 = vsel %vm6294, %v7581, 0.0
  %v7689 = vadd.f32 %v7687, %v7688
  %v7690 = vsel %vm6294, %v7582, 0.0
  %v7691 = vadd.f32 %v7689, %v7690
  %v7692 = vsel %vm6294, %v7583, 0.0
  %v7693 = vadd.f32 %v7691, %v7692
  %v7694 = vsel %vm6294, %v7584, 0.0
  %v7695 = vadd.f32 %v7693, %v7694
  %v7696 = vsel %vm6294, %v7585, 0.0
  %v7697 = vadd.f32 %v7695, %v7696
  %v7698 = vsel %vm6294, %v7586, 0.0
  %v7699 = vadd.f32 %v7697, %v7698
  %v7700 = vsel %vm6294, %v7587, 0.0
  %v7701 = vadd.f32 %v7699, %v7700
  %v7702 = vrot.slane %v7701, 4
  %v7703 = vadd.f32 %v7701, %v7702
  %v7704 = vrot.slane %v7703, 2
  %v7705 = vadd.f32 %v7703, %v7704
  %v7706 = vrot.slane %v7705, 1
  %v7707 = vadd.f32 %v7705, %v7706
  %v7708 = vsel %vm6294, %v7588, 0.0
  %v7709 = vsel %vm6294, %v7589, 0.0
  %v7710 = vadd.f32 %v7708, %v7709
  %v7711 = vsel %vm6294, %v7590, 0.0
  %v7712 = vadd.f32 %v7710, %v7711
  %v7713 = vsel %vm6294, %v7591, 0.0
  %v7714 = vadd.f32 %v7712, %v7713
  %v7715 = vsel %vm6294, %v7592, 0.0
  %v7716 = vadd.f32 %v7714, %v7715
  %v7717 = vsel %vm6294, %v7593, 0.0
  %v7718 = vadd.f32 %v7716, %v7717
  %v7719 = vsel %vm6294, %v7594, 0.0
  %v7720 = vadd.f32 %v7718, %v7719
  %v7721 = vsel %vm6294, %v7595, 0.0
  %v7722 = vadd.f32 %v7720, %v7721
  %v7723 = vsel %vm6294, %v7596, 0.0
  %v7724 = vadd.f32 %v7722, %v7723
  %v7725 = vsel %vm6294, %v7597, 0.0
  %v7726 = vadd.f32 %v7724, %v7725
  %v7727 = vsel %vm6294, %v7598, 0.0
  %v7728 = vadd.f32 %v7726, %v7727
  %v7729 = vrot.slane %v7728, 4
  %v7730 = vadd.f32 %v7728, %v7729
  %v7731 = vrot.slane %v7730, 2
  %v7732 = vadd.f32 %v7730, %v7731
  %v7733 = vrot.slane %v7732, 1
  %v7734 = vadd.f32 %v7732, %v7733
  %v7735 = vsel %vm6294, %v7599, 0.0
  %v7736 = vsel %vm6294, %v7600, 0.0
  %v7737 = vadd.f32 %v7735, %v7736
  %v7738 = vsel %vm6294, %v7601, 0.0
  %v7739 = vadd.f32 %v7737, %v7738
  %v7740 = vsel %vm6294, %v7602, 0.0
  %v7741 = vadd.f32 %v7739, %v7740
  %v7742 = vsel %vm6294, %v7603, 0.0
  %v7743 = vadd.f32 %v7741, %v7742
  %v7744 = vsel %vm6294, %v7604, 0.0
  %v7745 = vadd.f32 %v7743, %v7744
  %v7746 = vsel %vm6294, %v7605, 0.0
  %v7747 = vadd.f32 %v7745, %v7746
  %v7748 = vsel %vm6294, %v7606, 0.0
  %v7749 = vadd.f32 %v7747, %v7748
  %v7750 = vsel %vm6294, %v7607, 0.0
  %v7751 = vadd.f32 %v7749, %v7750
  %v7752 = vsel %vm6294, %v7608, 0.0
  %v7753 = vadd.f32 %v7751, %v7752
  %v7754 = vsel %vm6294, %v7609, 0.0
  %v7755 = vadd.f32 %v7753, %v7754
  %v7756 = vrot.slane %v7755, 4
  %v7757 = vadd.f32 %v7755, %v7756
  %v7758 = vrot.slane %v7757, 2
  %v7759 = vadd.f32 %v7757, %v7758
  %v7760 = vrot.slane %v7759, 1
  %v7761 = vadd.f32 %v7759, %v7760
  %v7762 = vsel %vm6294, %v7610, 0.0
  %v7763 = vsel %vm6294, %v7611, 0.0
  %v7764 = vadd.f32 %v7762, %v7763
  %v7765 = vsel %vm6294, %v7612, 0.0
  %v7766 = vadd.f32 %v7764, %v7765
  %v7767 = vsel %vm6294, %v7613, 0.0
  %v7768 = vadd.f32 %v7766, %v7767
  %v7769 = vsel %vm6294, %v7614, 0.0
  %v7770 = vadd.f32 %v7768, %v7769
  %v7771 = vsel %vm6294, %v7615, 0.0
  %v7772 = vadd.f32 %v7770, %v7771
  %v7773 = vsel %vm6294, %v7616, 0.0
  %v7774 = vadd.f32 %v7772, %v7773
  %v7775 = vsel %vm6294, %v7617, 0.0
  %v7776 = vadd.f32 %v7774, %v7775
  %v7777 = vsel %vm6294, %v7618, 0.0
  %v7778 = vadd.f32 %v7776, %v7777
  %v7779 = vsel %vm6294, %v7619, 0.0
  %v7780 = vadd.f32 %v7778, %v7779
  %v7781 = vsel %vm6294, %v7620, 0.0
  %v7782 = vadd.f32 %v7780, %v7781
  %v7783 = vrot.slane %v7782, 4
  %v7784 = vadd.f32 %v7782, %v7783
  %v7785 = vrot.slane %v7784, 2
  %v7786 = vadd.f32 %v7784, %v7785
  %v7787 = vrot.slane %v7786, 1
  %v7788 = vadd.f32 %v7786, %v7787
  %v7789 = vsel %vm6294, %v7621, 0.0
  %v7790 = vsel %vm6294, %v7622, 0.0
  %v7791 = vadd.f32 %v7789, %v7790
  %v7792 = vsel %vm6294, %v7623, 0.0
  %v7793 = vadd.f32 %v7791, %v7792
  %v7794 = vsel %vm6294, %v7624, 0.0
  %v7795 = vadd.f32 %v7793, %v7794
  %v7796 = vsel %vm6294, %v7625, 0.0
  %v7797 = vadd.f32 %v7795, %v7796
  %v7798 = vsel %vm6294, %v7626, 0.0
  %v7799 = vadd.f32 %v7797, %v7798
  %v7800 = vsel %vm6294, %v7627, 0.0
  %v7801 = vadd.f32 %v7799, %v7800
  %v7802 = vsel %vm6294, %v7628, 0.0
  %v7803 = vadd.f32 %v7801, %v7802
  %v7804 = vsel %vm6294, %v7629, 0.0
  %v7805 = vadd.f32 %v7803, %v7804
  %v7806 = vsel %vm6294, %v7630, 0.0
  %v7807 = vadd.f32 %v7805, %v7806
  %v7808 = vsel %vm6294, %v7631, 0.0
  %v7809 = vadd.f32 %v7807, %v7808
  %v7810 = vrot.slane %v7809, 4
  %v7811 = vadd.f32 %v7809, %v7810
  %v7812 = vrot.slane %v7811, 2
  %v7813 = vadd.f32 %v7811, %v7812
  %v7814 = vrot.slane %v7813, 1
  %v7815 = vadd.f32 %v7813, %v7814
  %v7816 = vsel %vm6294, %v7632, 0.0
  %v7817 = vsel %vm6294, %v7633, 0.0
  %v7818 = vadd.f32 %v7816, %v7817
  %v7819 = vsel %vm6294, %v7634, 0.0
  %v7820 = vadd.f32 %v7818, %v7819
  %v7821 = vsel %vm6294, %v7635, 0.0
  %v7822 = vadd.f32 %v7820, %v7821
  %v7823 = vsel %vm6294, %v7636, 0.0
  %v7824 = vadd.f32 %v7822, %v7823
  %v7825 = vsel %vm6294, %v7637, 0.0
  %v7826 = vadd.f32 %v7824, %v7825
  %v7827 = vsel %vm6294, %v7638, 0.0
  %v7828 = vadd.f32 %v7826, %v7827
  %v7829 = vsel %vm6294, %v7639, 0.0
  %v7830 = vadd.f32 %v7828, %v7829
  %v7831 = vsel %vm6294, %v7640, 0.0
  %v7832 = vadd.f32 %v7830, %v7831
  %v7833 = vsel %vm6294, %v7641, 0.0
  %v7834 = vadd.f32 %v7832, %v7833
  %v7835 = vsel %vm6294, %v7642, 0.0
  %v7836 = vadd.f32 %v7834, %v7835
  %v7837 = vrot.slane %v7836, 4
  %v7838 = vadd.f32 %v7836, %v7837
  %v7839 = vrot.slane %v7838, 2
  %v7840 = vadd.f32 %v7838, %v7839
  %v7841 = vrot.slane %v7840, 1
  %v7842 = vadd.f32 %v7840, %v7841
  %v7843 = vsel %vm6294, %v7643, 0.0
  %v7844 = vsel %vm6294, %v7644, 0.0
  %v7845 = vadd.f32 %v7843, %v7844
  %v7846 = vsel %vm6294, %v7645, 0.0
  %v7847 = vadd.f32 %v7845, %v7846
  %v7848 = vsel %vm6294, %v7646, 0.0
  %v7849 = vadd.f32 %v7847, %v7848
  %v7850 = vsel %vm6294, %v7647, 0.0
  %v7851 = vadd.f32 %v7849, %v7850
  %v7852 = vsel %vm6294, %v7648, 0.0
  %v7853 = vadd.f32 %v7851, %v7852
  %v7854 = vsel %vm6294, %v7649, 0.0
  %v7855 = vadd.f32 %v7853, %v7854
  %v7856 = vsel %vm6294, %v7650, 0.0
  %v7857 = vadd.f32 %v7855, %v7856
  %v7858 = vsel %vm6294, %v7651, 0.0
  %v7859 = vadd.f32 %v7857, %v7858
  %v7860 = vsel %vm6294, %v7652, 0.0
  %v7861 = vadd.f32 %v7859, %v7860
  %v7862 = vsel %vm6294, %v7653, 0.0
  %v7863 = vadd.f32 %v7861, %v7862
  %v7864 = vrot.slane %v7863, 4
  %v7865 = vadd.f32 %v7863, %v7864
  %v7866 = vrot.slane %v7865, 2
  %v7867 = vadd.f32 %v7865, %v7866
  %v7868 = vrot.slane %v7867, 1
  %v7869 = vadd.f32 %v7867, %v7868
  %v7878 = vsel %vm6519, %v7707, %v7680
  %v7879 = vsel %vm6521, %v7734, %v7878
  %v7880 = vsel %vm6523, %v7761, %v7879
  %v7881 = vsel %vm6525, %v7788, %v7880
  %v7882 = vsel %vm6527, %v7815, %v7881
  %v7883 = vsel %vm6529, %v7842, %v7882
  %v7884 = vsel %vm6531, %v7869, %v7883
  %v7886 = vsel %vm6294, %v7884, 0.0
  %7887 = vadd.xlane.f32.xlu0 %v7886
  %v7888 = vpop.xlane.xlu0 %7887
  %vm7889 = vcmp.eq.s32.totalorder %v6194, 4
  %v7890 = vsel %vm7889, %v7888, 0.0
  %v7891 = vadd.f32 %v7553, %v7890
  %v7892 = vld [vmem:[%s6] sm:$0x1]
  %v7894 = vperm.slane %v7892, 0
  %v7896 = vadd.f32 %v7891, %v7894
  %v7897 = vmax.f32 %v7896, 0.0
  %vm7898 = vcmask 39936
  %7899 = vst.msk [vmem:[%s7] sm:$0xff] %vm7898, %v7897
  // Predicated region
  $region30: #{abundance_disentangler.1} parent=0 // pred_check
    _
  $region31: #{abundance_disentangler.1} parent=0 // pred_check_branch
    %7901 = sbr.rel (0) target = $region33
  $region32: #{abundance_disentangler.1} parent=0 // pred_region
    _
  $region33: #{abundance_disentangler.1} parent=0 // pred_fallthru
    _
  // Predicated region
  $region34: #{abundance_disentangler.1} parent=0 // pred_check
    _
  $region35: #{abundance_disentangler.1} parent=0 // pred_check_branch
    %7903 = sbr.rel (0) target = $region37
  $region36: #{abundance_disentangler.1} parent=0 // pred_region
    _
  $region37: #{abundance_disentangler.1} parent=0 // pred_fallthru
    _

</llo_original>
